<compile_context>
chip_gen: v7x
topology: tpu7x:2x2x1
jax: 0.10.0
libtpu: 0.0.40
codegen_flags: <defaults>
</compile_context>

<pallas_src>
import functools

import jax
import jax.numpy as jnp
import numpy as np
from jax import lax
from jax.experimental import pallas as pl
from jax.experimental.pallas import tpu as pltpu

EPS = 1e-5          # nn.BatchNorm2d default eps
LANE = 128          # TPU lane width
_VMEM_LIMIT = 32 * 1024 * 1024


# ----------------------------------------------------------------------------
# small helpers
# ----------------------------------------------------------------------------
def _round_up(x, m):
    return ((x + m - 1) // m) * m


def _choose_tile(m):
    """Row-tile size: big enough for HBM roofline, >=2 grid steps when possible."""
    for c in (512, 256, 128, 64, 32, 16, 8):
        if m % c == 0 and m // c >= 2:
            return c
    return m


def _compiler_params():
    return pltpu.CompilerParams(
        dimension_semantics=("parallel",),
        vmem_limit_bytes=_VMEM_LIMIT,
    )


def _cost(flops, bytes_accessed):
    return pl.CostEstimate(flops=int(flops), transcendentals=0,
                           bytes_accessed=int(bytes_accessed))


def _bn_scale_shift(s, ss, count, gamma, beta):
    """Turn per-tile partial (sum, sumsq) into the per-channel affine (scale, shift).

    s, ss: (T, 1, C) fp32 partial sums; gamma, beta: (1, C).
    Padded (dummy) channels have s=ss=0 and gamma=beta=0 -> scale=shift=0.
    """
    total = jnp.sum(s, axis=0)       # (1, C)
    total2 = jnp.sum(ss, axis=0)     # (1, C)
    mean = total / count
    var = jnp.maximum(total2 / count - mean * mean, 0.0)   # biased, like PyTorch
    scale = gamma * lax.rsqrt(var + EPS)
    shift = beta - mean * scale
    return scale, shift


# ----------------------------------------------------------------------------
# kernels
# ----------------------------------------------------------------------------
def conv1x1_stats_kernel(x_ref, w_ref, y_ref, s_ref, ss_ref):
    """1x1 conv (matmul, bf16 in / fp32 acc) + per-tile BN partial stats."""
    y = jnp.dot(x_ref[...], w_ref[...], preferred_element_type=jnp.float32)
    y_ref[...] = y.astype(y_ref.dtype)
    s_ref[...] = jnp.sum(y, axis=0, keepdims=True)[None]
    ss_ref[...] = jnp.sum(y * y, axis=0, keepdims=True)[None]


def conv3x3_stats_kernel(y1_ref, sc_ref, sh_ref, w2_ref, y2_ref, s_ref, ss_ref,
                         xpad_ref, acc_ref, *, stride):
    """Fused: BN1 affine + ReLU, zero-pad, 3x3 conv (9 shifted matmuls into a
    VMEM f32 scratch accumulator), per-image BN2 partial stats.

    y1_ref: (1, H, W, C) raw conv1 output (bf16); y2_ref: (Ho*Wo, C).
    """
    _, h, w, c = y1_ref.shape
    ho = (h + 2 - 3) // stride + 1
    wo = (w + 2 - 3) // stride + 1

    # BN1 affine + ReLU fused here; write into the interior of a zeroed
    # padded scratch (pad=1) so no wrapper-side jnp.pad HBM pass is needed.
    xpad_ref[...] = jnp.zeros_like(xpad_ref)
    a = jnp.maximum(
        y1_ref[0].astype(jnp.float32) * sc_ref[...] + sh_ref[...], 0.0)
    xpad_ref[1:h + 1, 1:w + 1, :] = a.astype(xpad_ref.dtype)

    # 3x3 conv as 9 shifted matmuls, accumulated in a VMEM f32 scratch.
    acc_ref[...] = jnp.zeros_like(acc_ref)
    if stride == 1:
        for dy in range(3):
            for dx in range(3):
                patch = xpad_ref[dy:dy + ho, dx:dx + wo, :]
                acc_ref[...] += jnp.dot(
                    patch.reshape(ho * wo, c), w2_ref[dy * 3 + dx],
                    preferred_element_type=jnp.float32)
    else:
        # TODO(synk): stride>1 tap gathers done via strided lax.slice on the
        # loaded value (reference pattern); not exercised by the test below.
        xp = xpad_ref[...]
        for dy in range(3):
            for dx in range(3):
                patch = lax.slice(
                    xp, (dy, dx, 0),
                    (dy + (ho - 1) * stride + 1, dx + (wo - 1) * stride + 1, c),
                    (stride, stride, 1))
                acc_ref[...] += jnp.dot(
                    patch.reshape(ho * wo, c), w2_ref[dy * 3 + dx],
                    preferred_element_type=jnp.float32)

    acc = acc_ref[...]
    y2_ref[...] = acc.astype(y2_ref.dtype)
    s_ref[...] = jnp.sum(acc, axis=0, keepdims=True)[None]
    ss_ref[...] = jnp.sum(acc * acc, axis=0, keepdims=True)[None]


def conv3_shortcut_stats_kernel(y2_ref, sc_ref, sh_ref, w3_ref, xs_ref, wsc_ref,
                                r_ref, rs_ref, rss_ref, q_ref, qs_ref, qss_ref):
    """Fused: BN2 affine + ReLU, conv3 (1x1), projection-shortcut conv (1x1),
    per-tile BN partial stats for both branches."""
    a = jnp.maximum(
        y2_ref[...].astype(jnp.float32) * sc_ref[...] + sh_ref[...], 0.0)
    r = jnp.dot(a.astype(jnp.bfloat16), w3_ref[...],
                preferred_element_type=jnp.float32)
    r_ref[...] = r.astype(r_ref.dtype)
    rs_ref[...] = jnp.sum(r, axis=0, keepdims=True)[None]
    rss_ref[...] = jnp.sum(r * r, axis=0, keepdims=True)[None]

    q = jnp.dot(xs_ref[...], wsc_ref[...], preferred_element_type=jnp.float32)
    q_ref[...] = q.astype(q_ref.dtype)
    qs_ref[...] = jnp.sum(q, axis=0, keepdims=True)[None]
    qss_ref[...] = jnp.sum(q * q, axis=0, keepdims=True)[None]


def conv3_stats_kernel(y2_ref, sc_ref, sh_ref, w3_ref, r_ref, rs_ref, rss_ref):
    """Fused: BN2 affine + ReLU, conv3 (1x1), per-tile BN3 partial stats."""
    a = jnp.maximum(
        y2_ref[...].astype(jnp.float32) * sc_ref[...] + sh_ref[...], 0.0)
    r = jnp.dot(a.astype(jnp.bfloat16), w3_ref[...],
                preferred_element_type=jnp.float32)
    r_ref[...] = r.astype(r_ref.dtype)
    rs_ref[...] = jnp.sum(r, axis=0, keepdims=True)[None]
    rss_ref[...] = jnp.sum(r * r, axis=0, keepdims=True)[None]


def final_add_relu_kernel(r_ref, a3_ref, b3_ref, q_ref, asc_ref, bsc_ref, o_ref):
    """BN3 affine + shortcut-BN affine + residual add + final ReLU."""
    r = r_ref[...].astype(jnp.float32) * a3_ref[...] + b3_ref[...]
    q = q_ref[...].astype(jnp.float32) * asc_ref[...] + bsc_ref[...]
    o_ref[...] = jnp.maximum(r + q, 0.0)


def final_add_relu_identity_kernel(r_ref, a3_ref, b3_ref, x_ref, o_ref):
    """BN3 affine + identity shortcut + residual add + final ReLU."""
    r = r_ref[...].astype(jnp.float32) * a3_ref[...] + b3_ref[...]
    o_ref[...] = jnp.maximum(r + x_ref[...].astype(jnp.float32), 0.0)


# ----------------------------------------------------------------------------
# forward wrapper
# ----------------------------------------------------------------------------
@functools.partial(jax.jit, static_argnames=("stride",))
def bottleneck_forward(x_nchw, params, *, stride=1):
    """Forward pass of BottleNeck.  Input/output are NCHW float32."""
    n, cin, h, w = x_nchw.shape
    cmid = params["w1"].shape[1]
    cout = params["w3"].shape[1]
    cin_p = _round_up(cin, LANE)
    cmid_p = _round_up(cmid, LANE)
    cout_p = _round_up(cout, LANE)
    ho = (h + 2 - 3) // stride + 1
    wo = (w + 2 - 3) // stride + 1
    m1 = n * h * w
    m2 = n * ho * wo
    f32, bf16 = jnp.float32, jnp.bfloat16

    # ---- layout glue: NCHW -> NHWC, channels padded to the 128-lane width ----
    x_nhwc = jnp.transpose(x_nchw, (0, 2, 3, 1)).astype(f32)
    x_p = jnp.pad(x_nhwc, ((0, 0), (0, 0), (0, 0), (0, cin_p - cin)))
    x2d_bf16 = x_p.reshape(m1, cin_p).astype(bf16)

    w1p = jnp.pad(params["w1"], ((0, cin_p - cin), (0, cmid_p - cmid))).astype(bf16)
    w2p = jnp.pad(params["w2"],
                  ((0, 0), (0, cmid_p - cmid), (0, cmid_p - cmid))).astype(bf16)
    w3p = jnp.pad(params["w3"], ((0, cmid_p - cmid), (0, cout_p - cout))).astype(bf16)
    g1 = jnp.pad(params["g1"], ((0, 0), (0, cmid_p - cmid)))
    b1 = jnp.pad(params["b1"], ((0, 0), (0, cmid_p - cmid)))
    g2 = jnp.pad(params["g2"], ((0, 0), (0, cmid_p - cmid)))
    b2 = jnp.pad(params["b2"], ((0, 0), (0, cmid_p - cmid)))
    g3 = jnp.pad(params["g3"], ((0, 0), (0, cout_p - cout)))
    b3 = jnp.pad(params["b3"], ((0, 0), (0, cout_p - cout)))

    # ------------- stage 1: conv1 (1x1) + BN1 partial statistics --------------
    tile1 = _choose_tile(m1)
    nt1 = m1 // tile1
    y1, s1, ss1 = pl.pallas_call(
        conv1x1_stats_kernel,
        grid=(nt1,),
        in_specs=[
            pl.BlockSpec((tile1, cin_p), lambda i: (i, 0)),
            pl.BlockSpec((cin_p, cmid_p), lambda i: (0, 0)),
        ],
        out_specs=[
            pl.BlockSpec((tile1, cmid_p), lambda i: (i, 0)),
            pl.BlockSpec((1, 1, cmid_p), lambda i: (i, 0, 0)),
            pl.BlockSpec((1, 1, cmid_p), lambda i: (i, 0, 0)),
        ],
        out_shape=[
            jax.ShapeDtypeStruct((m1, cmid_p), bf16),
            jax.ShapeDtypeStruct((nt1, 1, cmid_p), f32),
            jax.ShapeDtypeStruct((nt1, 1, cmid_p), f32),
        ],
        compiler_params=_compiler_params(),
        cost_estimate=_cost(2 * m1 * cin_p * cmid_p,
                            2 * (m1 * cin_p + cin_p * cmid_p + m1 * cmid_p)),
    )(x2d_bf16, w1p)
    scale1, shift1 = _bn_scale_shift(s1, ss1, m1, g1, b1)

    # ----- stage 2: fused BN1 affine+ReLU, pad, 3x3 conv, BN2 partial stats ----
    y1_4d = y1.reshape(n, h, w, cmid_p)
    y2, s2, ss2 = pl.pallas_call(
        functools.partial(conv3x3_stats_kernel, stride=stride),
        grid=(n,),
        in_specs=[
            pl.BlockSpec((1, h, w, cmid_p), lambda b: (b, 0, 0, 0)),
            pl.BlockSpec((1, cmid_p), lambda b: (0, 0)),
            pl.BlockSpec((1, cmid_p), lambda b: (0, 0)),
            pl.BlockSpec((9, cmid_p, cmid_p), lambda b: (0, 0, 0)),
        ],
        out_specs=[
            pl.BlockSpec((ho * wo, cmid_p), lambda b: (b, 0)),
            pl.BlockSpec((1, 1, cmid_p), lambda b: (b, 0, 0)),
            pl.BlockSpec((1, 1, cmid_p), lambda b: (b, 0, 0)),
        ],
        out_shape=[
            jax.ShapeDtypeStruct((m2, cmid_p), bf16),
            jax.ShapeDtypeStruct((n, 1, cmid_p), f32),
            jax.ShapeDtypeStruct((n, 1, cmid_p), f32),
        ],
        scratch_shapes=[
            pltpu.VMEM((h + 2, w + 2, cmid_p), bf16),
            pltpu.VMEM((ho * wo, cmid_p), f32),
        ],
        compiler_params=_compiler_params(),
        cost_estimate=_cost(2 * m2 * 9 * cmid_p * cmid_p,
                            2 * (m1 * cmid_p + 9 * cmid_p * cmid_p + m2 * cmid_p)),
    )(y1_4d, scale1, shift1, w2p)
    scale2, shift2 = _bn_scale_shift(s2, ss2, m2, g2, b2)

    # ---- stage 3: fused BN2 affine+ReLU + conv3 (1x1) (+ shortcut conv) -------
    tile2 = _choose_tile(m2)
    nt2 = m2 // tile2

    if "wsc" in params:  # projection shortcut (1x1 conv, stride) + BN
        wscp = jnp.pad(params["wsc"],
                       ((0, cin_p - cin), (0, cout_p - cout))).astype(bf16)
        gsc = jnp.pad(params["gsc"], ((0, 0), (0, cout_p - cout)))
        bsc = jnp.pad(params["bsc"], ((0, 0), (0, cout_p - cout)))
        if stride == 1:
            xs2d = x2d_bf16
        else:
            # TODO(synk): fold this output-sized strided gather into the final
            # kernel via a strided/Element index_map instead of an XLA slice.
            xs2d = x_p[:, ::stride, ::stride, :].reshape(m2, cin_p).astype(bf16)

        r_raw, s3, ss3, q_raw, ssc, sssc = pl.pallas_call(
            conv3_shortcut_stats_kernel,
            grid=(nt2,),
            in_specs=[
                pl.BlockSpec((tile2, cmid_p), lambda i: (i, 0)),
                pl.BlockSpec((1, cmid_p), lambda i: (0, 0)),
                pl.BlockSpec((1, cmid_p), lambda i: (0, 0)),
                pl.BlockSpec((cmid_p, cout_p), lambda i: (0, 0)),
                pl.BlockSpec((tile2, cin_p), lambda i: (i, 0)),
                pl.BlockSpec((cin_p, cout_p), lambda i: (0, 0)),
            ],
            out_specs=[
                pl.BlockSpec((tile2, cout_p), lambda i: (i, 0)),
                pl.BlockSpec((1, 1, cout_p), lambda i: (i, 0, 0)),
                pl.BlockSpec((1, 1, cout_p), lambda i: (i, 0, 0)),
                pl.BlockSpec((tile2, cout_p), lambda i: (i, 0)),
                pl.BlockSpec((1, 1, cout_p), lambda i: (i, 0, 0)),
                pl.BlockSpec((1, 1, cout_p), lambda i: (i, 0, 0)),
            ],
            out_shape=[
                jax.ShapeDtypeStruct((m2, cout_p), bf16),
                jax.ShapeDtypeStruct((nt2, 1, cout_p), f32),
                jax.ShapeDtypeStruct((nt2, 1, cout_p), f32),
                jax.ShapeDtypeStruct((m2, cout_p), bf16),
                jax.ShapeDtypeStruct((nt2, 1, cout_p), f32),
                jax.ShapeDtypeStruct((nt2, 1, cout_p), f32),
            ],
            compiler_params=_compiler_params(),
            cost_estimate=_cost(2 * m2 * cout_p * (cmid_p + cin_p),
                                2 * m2 * (cmid_p + cin_p + 2 * cout_p)),
        )(y2, scale2, shift2, w3p, xs2d, wscp)
        scale3, shift3 = _bn_scale_shift(s3, ss3, m2, g3, b3)
        scalesc, shiftsc = _bn_scale_shift(ssc, sssc, m2, gsc, bsc)

        out2d = pl.pallas_call(
            final_add_relu_kernel,
            grid=(nt2,),
            in_specs=[
                pl.BlockSpec((tile2, cout_p), lambda i: (i, 0)),
                pl.BlockSpec((1, cout_p), lambda i: (0, 0)),
                pl.BlockSpec((1, cout_p), lambda i: (0, 0)),
                pl.BlockSpec((tile2, cout_p), lambda i: (i, 0)),
                pl.BlockSpec((1, cout_p), lambda i: (0, 0)),
                pl.BlockSpec((1, cout_p), lambda i: (0, 0)),
            ],
            out_specs=pl.BlockSpec((tile2, cout_p), lambda i: (i, 0)),
            out_shape=jax.ShapeDtypeStruct((m2, cout_p), f32),
            compiler_params=_compiler_params(),
        )(r_raw, scale3, shift3, q_raw, scalesc, shiftsc)
    else:  # identity shortcut (stride == 1 and cin == cout)
        x_id = x_p.reshape(m2, cin_p)  # fp32; cin_p == cout_p here
        r_raw, s3, ss3 = pl.pallas_call(
            conv3_stats_kernel,
            grid=(nt2,),
            in_specs=[
                pl.BlockSpec((tile2, cmid_p), lambda i: (i, 0)),
                pl.BlockSpec((1, cmid_p), lambda i: (0, 0)),
                pl.BlockSpec((1, cmid_p), lambda i: (0, 0)),
                pl.BlockSpec((cmid_p, cout_p), lambda i: (0, 0)),
            ],
            out_specs=[
                pl.BlockSpec((tile2, cout_p), lambda i: (i, 0)),
                pl.BlockSpec((1, 1, cout_p), lambda i: (i, 0, 0)),
                pl.BlockSpec((1, 1, cout_p), lambda i: (i, 0, 0)),
            ],
            out_shape=[
                jax.ShapeDtypeStruct((m2, cout_p), bf16),
                jax.ShapeDtypeStruct((nt2, 1, cout_p), f32),
                jax.ShapeDtypeStruct((nt2, 1, cout_p), f32),
            ],
            compiler_params=_compiler_params(),
            cost_estimate=_cost(2 * m2 * cmid_p * cout_p,
                                2 * m2 * (cmid_p + cout_p)),
        )(y2, scale2, shift2, w3p)
        scale3, shift3 = _bn_scale_shift(s3, ss3, m2, g3, b3)

        out2d = pl.pallas_call(
            final_add_relu_identity_kernel,
            grid=(nt2,),
            in_specs=[
                pl.BlockSpec((tile2, cout_p), lambda i: (i, 0)),
                pl.BlockSpec((1, cout_p), lambda i: (0, 0)),
                pl.BlockSpec((1, cout_p), lambda i: (0, 0)),
                pl.BlockSpec((tile2, cout_p), lambda i: (i, 0)),
            ],
            out_specs=pl.BlockSpec((tile2, cout_p), lambda i: (i, 0)),
            out_shape=jax.ShapeDtypeStruct((m2, cout_p), f32),
            compiler_params=_compiler_params(),
        )(r_raw, scale3, shift3, x_id)

    out = out2d.reshape(n, ho, wo, cout_p)[..., :cout]
    return jnp.transpose(out, (0, 3, 1, 2))  # back to NCHW


# ----------------------------------------------------------------------------
# Deterministic parameter init (shapes follow BottleNeck.__init__, expansion=4)
# ----------------------------------------------------------------------------
def init_params(key, in_channels, out_channels, stride):
    expansion = 4
    cout = out_channels * expansion
    ks = jax.random.split(key, 10)

    def w(k, shape, fan_in):
        return jax.random.normal(k, shape, jnp.float32) / np.sqrt(fan_in)

    p = {
        # conv weights stored (kh*kw, Cin, Cout) / (Cin, Cout) channels-last
        "w1": w(ks[0], (in_channels, out_channels), in_channels),
        "w2": w(ks[1], (9, out_channels, out_channels), 9 * out_channels),
        "w3": w(ks[2], (out_channels, cout), out_channels),
        "g1": 1.0 + 0.1 * jax.random.normal(ks[3], (1, out_channels), jnp.float32),
        "b1": 0.1 * jax.random.normal(ks[4], (1, out_channels), jnp.float32),
        "g2": 1.0 + 0.1 * jax.random.normal(ks[5], (1, out_channels), jnp.float32),
        "b2": 0.1 * jax.random.normal(ks[6], (1, out_channels), jnp.float32),
        "g3": 1.0 + 0.1 * jax.random.normal(ks[7], (1, cout), jnp.float32),
        "b3": 0.1 * jax.random.normal(ks[8], (1, cout), jnp.float32),
    }
    if stride != 1 or in_channels != cout:
        ks2 = jax.random.split(ks[9], 3)
        p["wsc"] = w(ks2[0], (in_channels, cout), in_channels)
        p["gsc"] = 1.0 + 0.1 * jax.random.normal(ks2[1], (1, cout), jnp.float32)
        p["bsc"] = 0.1 * jax.random.normal(ks2[2], (1, cout), jnp.float32)
    return p


# ----------------------------------------------------------------------------
# Pure-JAX reference (for correctness check only)
# ----------------------------------------------------------------------------
def reference_forward(x_nchw, params, stride=1):
    x = jnp.transpose(x_nchw, (0, 2, 3, 1)).astype(jnp.float32)
    cin = x.shape[-1]
    cmid = params["w1"].shape[1]
    cout = params["w3"].shape[1]
    hi = jax.lax.Precision.HIGHEST

    def conv(x, w_hwio, s, pad):
        return jax.lax.conv_general_dilated(
            x, w_hwio, (s, s), pad,
            dimension_numbers=("NHWC", "HWIO", "NHWC"), precision=hi)

    def bn(y, g, b):
        mean = jnp.mean(y, axis=(0, 1, 2), keepdims=True)
        var = jnp.mean((y - mean) ** 2, axis=(0, 1, 2), keepdims=True)
        return (y - mean) * jax.lax.rsqrt(var + EPS) * g.reshape(1, 1, 1, -1) \
            + b.reshape(1, 1, 1, -1)

    y = conv(x, params["w1"].reshape(1, 1, cin, cmid), 1, [(0, 0), (0, 0)])
    y = jnp.maximum(bn(y, params["g1"], params["b1"]), 0.0)
    y = conv(y, params["w2"].reshape(3, 3, cmid, cmid), stride, [(1, 1), (1, 1)])
    y = jnp.maximum(bn(y, params["g2"], params["b2"]), 0.0)
    y = conv(y, params["w3"].reshape(1, 1, cmid, cout), 1, [(0, 0), (0, 0)])
    y = bn(y, params["g3"], params["b3"])

    if stride != 1 or cin != cout:
        sc = conv(x, params["wsc"].reshape(1, 1, cin, cout), stride,
                  [(0, 0), (0, 0)])
        sc = bn(sc, params["gsc"], params["bsc"])
    else:
        sc = x
    out = jnp.maximum(y + sc, 0.0)
    return jnp.transpose(out, (0, 3, 1, 2))


if __name__ == "__main__":
    key = jax.random.PRNGKey(0)
    k1, k2, k3, k4 = jax.random.split(key, 4)

    # ---- config 1: projection shortcut (in_channels != out_channels*4) ------
    N, Cin, H, W = 2, 4, 16, 16
    out_channels, stride = 4, 1
    x = jax.random.normal(k1, (N, Cin, H, W), jnp.float32)
    params = init_params(k2, Cin, out_channels, stride)

    out = jax.block_until_ready(bottleneck_forward(x, params, stride=stride))
    ref = jax.block_until_ready(reference_forward(x, params, stride=stride))
    assert out.shape == (N, out_channels * 4, H, W), out.shape
    np.testing.assert_allclose(np.asarray(out), np.asarray(ref),
                               rtol=5e-2, atol=5e-2)

    # ---- config 2: identity shortcut (in_channels == out_channels*4) --------
    Cin2 = 16
    x2 = jax.random.normal(k3, (N, Cin2, H, W), jnp.float32)
    params2 = init_params(k4, Cin2, out_channels, 1)

    out2 = jax.block_until_ready(bottleneck_forward(x2, params2, stride=1))
    ref2 = jax.block_until_ready(reference_forward(x2, params2, stride=1))
    assert out2.shape == (N, out_channels * 4, H, W), out2.shape
    np.testing.assert_allclose(np.asarray(out2), np.asarray(ref2),
                               rtol=5e-2, atol=5e-2)

    print("KERNEL_OK")
</pallas_src>

<mosaic_0001>
module attributes {stable_mosaic.version = 11 : i64} {
  func.func @conv3x3_stats_kernel(%arg0: i32, %arg1: memref<1x16x16x128xbf16, #tpu.memory_space<vmem>>, %arg2: memref<1x128xf32, #tpu.memory_space<vmem>>, %arg3: memref<1x128xf32, #tpu.memory_space<vmem>>, %arg4: memref<9x128x128xbf16, #tpu.memory_space<vmem>>, %arg5: memref<256x128xbf16, #tpu.memory_space<vmem>>, %arg6: memref<1x1x128xf32, #tpu.memory_space<vmem>>, %arg7: memref<1x1x128xf32, #tpu.memory_space<vmem>>, %arg8: memref<18x18x128xbf16, #tpu.memory_space<vmem>>, %arg9: memref<256x128xf32, #tpu.memory_space<vmem>>) attributes {dimension_semantics = [#tpu.dimension_semantics<parallel>], iteration_bounds = array<i64: 2>, scalar_prefetch = 0 : i64, scratch_operands = 2 : i64, tpu.core_type = #tpu.core_type<tc>, window_params = [{transform_indices = @transform_0, window_bounds = array<i64: 1, 16, 16, 128>}, {pipeline_mode = #tpu.pipeline_mode<synchronous>, transform_indices = @transform_1, window_bounds = array<i64: 1, 128>}, {pipeline_mode = #tpu.pipeline_mode<synchronous>, transform_indices = @transform_2, window_bounds = array<i64: 1, 128>}, {pipeline_mode = #tpu.pipeline_mode<synchronous>, transform_indices = @transform_3, window_bounds = array<i64: 9, 128, 128>}, {transform_indices = @transform_4, window_bounds = array<i64: 256, 128>}, {transform_indices = @transform_5, window_bounds = array<i64: 1, 1, 128>}, {transform_indices = @transform_6, window_bounds = array<i64: 1, 1, 128>}]} {
    %cst = arith.constant 0.000000e+00 : bf16
    %0 = vector.broadcast %cst : bf16 to vector<18x18x128xbf16>
    %c0 = arith.constant 0 : index
    %c0_0 = arith.constant 0 : index
    %c0_1 = arith.constant 0 : index
    %1 = vector.load %arg8[%c0, %c0_0, %c0_1] : memref<18x18x128xbf16, #tpu.memory_space<vmem>>, vector<18x18x128xbf16>
    tpu.vector_store %arg8[%c0, %c0_0, %c0_1], %0 {strides = array<i32>} : memref<18x18x128xbf16, #tpu.memory_space<vmem>>, vector<18x18x128xbf16>,
    %c0_2 = arith.constant 0 : index
    %c0_3 = arith.constant 0 : index
    %c0_4 = arith.constant 0 : index
    %c0_5 = arith.constant 0 : index
    %2 = vector.load %arg1[%c0_2, %c0_3, %c0_4, %c0_5] : memref<1x16x16x128xbf16, #tpu.memory_space<vmem>>, vector<1x16x16x128xbf16>
    %3 = vector.shape_cast %2 : vector<1x16x16x128xbf16> to vector<16x16x128xbf16>
    %4 = arith.extf %3 : vector<16x16x128xbf16> to vector<16x16x128xf32>
    %c0_6 = arith.constant 0 : index
    %c0_7 = arith.constant 0 : index
    %5 = vector.load %arg2[%c0_6, %c0_7] : memref<1x128xf32, #tpu.memory_space<vmem>>, vector<1x128xf32>
    %6 = vector.shape_cast %5 : vector<1x128xf32> to vector<1x1x128xf32>
    %7 = vector.broadcast %6 : vector<1x1x128xf32> to vector<16x16x128xf32>
    %8 = arith.mulf %4, %7 : vector<16x16x128xf32>
    %c0_8 = arith.constant 0 : index
    %c0_9 = arith.constant 0 : index
    %9 = vector.load %arg3[%c0_8, %c0_9] : memref<1x128xf32, #tpu.memory_space<vmem>>, vector<1x128xf32>
    %10 = vector.shape_cast %9 : vector<1x128xf32> to vector<1x1x128xf32>
    %11 = vector.broadcast %10 : vector<1x1x128xf32> to vector<16x16x128xf32>
    %12 = arith.addf %8, %11 : vector<16x16x128xf32>
    %cst_10 = arith.constant 0.000000e+00 : f32
    %13 = vector.broadcast %cst_10 : f32 to vector<16x16x128xf32>
    %14 = arith.maximumf %12, %13 : vector<16x16x128xf32>
    %15 = arith.truncf %14 : vector<16x16x128xf32> to vector<16x16x128xbf16>
    %c1 = arith.constant 1 : index
    %c1_11 = arith.constant 1 : index
    %c0_12 = arith.constant 0 : index
    %16 = vector.load %arg8[%c1, %c1_11, %c0_12] : memref<18x18x128xbf16, #tpu.memory_space<vmem>>, vector<16x16x128xbf16>
    tpu.vector_store %arg8[%c1, %c1_11, %c0_12], %15 {strides = array<i32>} : memref<18x18x128xbf16, #tpu.memory_space<vmem>>, vector<16x16x128xbf16>,
    %cst_13 = arith.constant 0.000000e+00 : f32
    %17 = vector.broadcast %cst_13 : f32 to vector<256x128xf32>
    %c0_14 = arith.constant 0 : index
    %c0_15 = arith.constant 0 : index
    %18 = vector.load %arg9[%c0_14, %c0_15] : memref<256x128xf32, #tpu.memory_space<vmem>>, vector<256x128xf32>
    tpu.vector_store %arg9[%c0_14, %c0_15], %17 {strides = array<i32>} : memref<256x128xf32, #tpu.memory_space<vmem>>, vector<256x128xf32>,
    %c0_16 = arith.constant 0 : index
    %c0_17 = arith.constant 0 : index
    %c0_18 = arith.constant 0 : index
    %19 = vector.load %arg8[%c0_16, %c0_17, %c0_18] : memref<18x18x128xbf16, #tpu.memory_space<vmem>>, vector<16x16x128xbf16>
    %c0_19 = arith.constant 0 : index
    %c0_20 = arith.constant 0 : index
    %20 = vector.load %arg9[%c0_19, %c0_20] : memref<256x128xf32, #tpu.memory_space<vmem>>, vector<256x128xf32>
    %21 = vector.shape_cast %19 : vector<16x16x128xbf16> to vector<256x128xbf16>
    %c0_21 = arith.constant 0 : index
    %c0_22 = arith.constant 0 : index
    %c0_23 = arith.constant 0 : index
    %22 = vector.load %arg4[%c0_21, %c0_22, %c0_23] : memref<9x128x128xbf16, #tpu.memory_space<vmem>>, vector<1x128x128xbf16>
    %23 = vector.shape_cast %22 : vector<1x128x128xbf16> to vector<128x128xbf16>
    %cst_24 = arith.constant dense<0.000000e+00> : vector<256x128xf32>
    %24 = tpu.matmul %21, %23, %cst_24 {dimension_numbers = #tpu.dot_dimension_numbers<[1], [0], [0], [1], [0, 0, 1, 1], [], []>} : vector<256x128xbf16>, vector<128x128xbf16>, vector<256x128xf32> -> vector<256x128xf32>
    %25 = arith.addf %20, %24 : vector<256x128xf32>
    %c0_25 = arith.constant 0 : index
    %c0_26 = arith.constant 0 : index
    %26 = vector.load %arg9[%c0_25, %c0_26] : memref<256x128xf32, #tpu.memory_space<vmem>>, vector<256x128xf32>
    tpu.vector_store %arg9[%c0_25, %c0_26], %25 {strides = array<i32>} : memref<256x128xf32, #tpu.memory_space<vmem>>, vector<256x128xf32>,
    %c0_27 = arith.constant 0 : index
    %c1_28 = arith.constant 1 : index
    %c0_29 = arith.constant 0 : index
    %27 = vector.load %arg8[%c0_27, %c1_28, %c0_29] : memref<18x18x128xbf16, #tpu.memory_space<vmem>>, vector<16x16x128xbf16>
    %c0_30 = arith.constant 0 : index
    %c0_31 = arith.constant 0 : index
    %28 = vector.load %arg9[%c0_30, %c0_31] : memref<256x128xf32, #tpu.memory_space<vmem>>, vector<256x128xf32>
    %29 = vector.shape_cast %27 : vector<16x16x128xbf16> to vector<256x128xbf16>
    %c1_32 = arith.constant 1 : index
    %c0_33 = arith.constant 0 : index
    %c0_34 = arith.constant 0 : index
    %30 = vector.load %arg4[%c1_32, %c0_33, %c0_34] : memref<9x128x128xbf16, #tpu.memory_space<vmem>>, vector<1x128x128xbf16>
    %31 = vector.shape_cast %30 : vector<1x128x128xbf16> to vector<128x128xbf16>
    %cst_35 = arith.constant dense<0.000000e+00> : vector<256x128xf32>
    %32 = tpu.matmul %29, %31, %cst_35 {dimension_numbers = #tpu.dot_dimension_numbers<[1], [0], [0], [1], [0, 0, 1, 1], [], []>} : vector<256x128xbf16>, vector<128x128xbf16>, vector<256x128xf32> -> vector<256x128xf32>
    %33 = arith.addf %28, %32 : vector<256x128xf32>
    %c0_36 = arith.constant 0 : index
    %c0_37 = arith.constant 0 : index
    %34 = vector.load %arg9[%c0_36, %c0_37] : memref<256x128xf32, #tpu.memory_space<vmem>>, vector<256x128xf32>
    tpu.vector_store %arg9[%c0_36, %c0_37], %33 {strides = array<i32>} : memref<256x128xf32, #tpu.memory_space<vmem>>, vector<256x128xf32>,
    %c0_38 = arith.constant 0 : index
    %c2 = arith.constant 2 : index
    %c0_39 = arith.constant 0 : index
    %35 = vector.load %arg8[%c0_38, %c2, %c0_39] : memref<18x18x128xbf16, #tpu.memory_space<vmem>>, vector<16x16x128xbf16>
    %c0_40 = arith.constant 0 : index
    %c0_41 = arith.constant 0 : index
    %36 = vector.load %arg9[%c0_40, %c0_41] : memref<256x128xf32, #tpu.memory_space<vmem>>, vector<256x128xf32>
    %37 = vector.shape_cast %35 : vector<16x16x128xbf16> to vector<256x128xbf16>
    %c2_42 = arith.constant 2 : index
    %c0_43 = arith.constant 0 : index
    %c0_44 = arith.constant 0 : index
    %38 = vector.load %arg4[%c2_42, %c0_43, %c0_44] : memref<9x128x128xbf16, #tpu.memory_space<vmem>>, vector<1x128x128xbf16>
    %39 = vector.shape_cast %38 : vector<1x128x128xbf16> to vector<128x128xbf16>
    %cst_45 = arith.constant dense<0.000000e+00> : vector<256x128xf32>
    %40 = tpu.matmul %37, %39, %cst_45 {dimension_numbers = #tpu.dot_dimension_numbers<[1], [0], [0], [1], [0, 0, 1, 1], [], []>} : vector<256x128xbf16>, vector<128x128xbf16>, vector<256x128xf32> -> vector<256x128xf32>
    %41 = arith.addf %36, %40 : vector<256x128xf32>
    %c0_46 = arith.constant 0 : index
    %c0_47 = arith.constant 0 : index
    %42 = vector.load %arg9[%c0_46, %c0_47] : memref<256x128xf32, #tpu.memory_space<vmem>>, vector<256x128xf32>
    tpu.vector_store %arg9[%c0_46, %c0_47], %41 {strides = array<i32>} : memref<256x128xf32, #tpu.memory_space<vmem>>, vector<256x128xf32>,
    %c1_48 = arith.constant 1 : index
    %c0_49 = arith.constant 0 : index
    %c0_50 = arith.constant 0 : index
    %43 = vector.load %arg8[%c1_48, %c0_49, %c0_50] : memref<18x18x128xbf16, #tpu.memory_space<vmem>>, vector<16x16x128xbf16>
    %c0_51 = arith.constant 0 : index
    %c0_52 = arith.constant 0 : index
    %44 = vector.load %arg9[%c0_51, %c0_52] : memref<256x128xf32, #tpu.memory_space<vmem>>, vector<256x128xf32>
    %45 = vector.shape_cast %43 : vector<16x16x128xbf16> to vector<256x128xbf16>
    %c3 = arith.constant 3 : index
    %c0_53 = arith.constant 0 : index
    %c0_54 = arith.constant 0 : index
    %46 = vector.load %arg4[%c3, %c0_53, %c0_54] : memref<9x128x128xbf16, #tpu.memory_space<vmem>>, vector<1x128x128xbf16>
    %47 = vector.shape_cast %46 : vector<1x128x128xbf16> to vector<128x128xbf16>
    %cst_55 = arith.constant dense<0.000000e+00> : vector<256x128xf32>
    %48 = tpu.matmul %45, %47, %cst_55 {dimension_numbers = #tpu.dot_dimension_numbers<[1], [0], [0], [1], [0, 0, 1, 1], [], []>} : vector<256x128xbf16>, vector<128x128xbf16>, vector<256x128xf32> -> vector<256x128xf32>
    %49 = arith.addf %44, %48 : vector<256x128xf32>
    %c0_56 = arith.constant 0 : index
    %c0_57 = arith.constant 0 : index
    %50 = vector.load %arg9[%c0_56, %c0_57] : memref<256x128xf32, #tpu.memory_space<vmem>>, vector<256x128xf32>
    tpu.vector_store %arg9[%c0_56, %c0_57], %49 {strides = array<i32>} : memref<256x128xf32, #tpu.memory_space<vmem>>, vector<256x128xf32>,
    %c1_58 = arith.constant 1 : index
    %c1_59 = arith.constant 1 : index
    %c0_60 = arith.constant 0 : index
    %51 = vector.load %arg8[%c1_58, %c1_59, %c0_60] : memref<18x18x128xbf16, #tpu.memory_space<vmem>>, vector<16x16x128xbf16>
    %c0_61 = arith.constant 0 : index
    %c0_62 = arith.constant 0 : index
    %52 = vector.load %arg9[%c0_61, %c0_62] : memref<256x128xf32, #tpu.memory_space<vmem>>, vector<256x128xf32>
    %53 = vector.shape_cast %51 : vector<16x16x128xbf16> to vector<256x128xbf16>
    %c4 = arith.constant 4 : index
    %c0_63 = arith.constant 0 : index
    %c0_64 = arith.constant 0 : index
    %54 = vector.load %arg4[%c4, %c0_63, %c0_64] : memref<9x128x128xbf16, #tpu.memory_space<vmem>>, vector<1x128x128xbf16>
    %55 = vector.shape_cast %54 : vector<1x128x128xbf16> to vector<128x128xbf16>
    %cst_65 = arith.constant dense<0.000000e+00> : vector<256x128xf32>
    %56 = tpu.matmul %53, %55, %cst_65 {dimension_numbers = #tpu.dot_dimension_numbers<[1], [0], [0], [1], [0, 0, 1, 1], [], []>} : vector<256x128xbf16>, vector<128x128xbf16>, vector<256x128xf32> -> vector<256x128xf32>
    %57 = arith.addf %52, %56 : vector<256x128xf32>
    %c0_66 = arith.constant 0 : index
    %c0_67 = arith.constant 0 : index
    %58 = vector.load %arg9[%c0_66, %c0_67] : memref<256x128xf32, #tpu.memory_space<vmem>>, vector<256x128xf32>
    tpu.vector_store %arg9[%c0_66, %c0_67], %57 {strides = array<i32>} : memref<256x128xf32, #tpu.memory_space<vmem>>, vector<256x128xf32>,
    %c1_68 = arith.constant 1 : index
    %c2_69 = arith.constant 2 : index
    %c0_70 = arith.constant 0 : index
    %59 = vector.load %arg8[%c1_68, %c2_69, %c0_70] : memref<18x18x128xbf16, #tpu.memory_space<vmem>>, vector<16x16x128xbf16>
    %c0_71 = arith.constant 0 : index
    %c0_72 = arith.constant 0 : index
    %60 = vector.load %arg9[%c0_71, %c0_72] : memref<256x128xf32, #tpu.memory_space<vmem>>, vector<256x128xf32>
    %61 = vector.shape_cast %59 : vector<16x16x128xbf16> to vector<256x128xbf16>
    %c5 = arith.constant 5 : index
    %c0_73 = arith.constant 0 : index
    %c0_74 = arith.constant 0 : index
    %62 = vector.load %arg4[%c5, %c0_73, %c0_74] : memref<9x128x128xbf16, #tpu.memory_space<vmem>>, vector<1x128x128xbf16>
    %63 = vector.shape_cast %62 : vector<1x128x128xbf16> to vector<128x128xbf16>
    %cst_75 = arith.constant dense<0.000000e+00> : vector<256x128xf32>
    %64 = tpu.matmul %61, %63, %cst_75 {dimension_numbers = #tpu.dot_dimension_numbers<[1], [0], [0], [1], [0, 0, 1, 1], [], []>} : vector<256x128xbf16>, vector<128x128xbf16>, vector<256x128xf32> -> vector<256x128xf32>
    %65 = arith.addf %60, %64 : vector<256x128xf32>
    %c0_76 = arith.constant 0 : index
    %c0_77 = arith.constant 0 : index
    %66 = vector.load %arg9[%c0_76, %c0_77] : memref<256x128xf32, #tpu.memory_space<vmem>>, vector<256x128xf32>
    tpu.vector_store %arg9[%c0_76, %c0_77], %65 {strides = array<i32>} : memref<256x128xf32, #tpu.memory_space<vmem>>, vector<256x128xf32>,
    %c2_78 = arith.constant 2 : index
    %c0_79 = arith.constant 0 : index
    %c0_80 = arith.constant 0 : index
    %67 = vector.load %arg8[%c2_78, %c0_79, %c0_80] : memref<18x18x128xbf16, #tpu.memory_space<vmem>>, vector<16x16x128xbf16>
    %c0_81 = arith.constant 0 : index
    %c0_82 = arith.constant 0 : index
    %68 = vector.load %arg9[%c0_81, %c0_82] : memref<256x128xf32, #tpu.memory_space<vmem>>, vector<256x128xf32>
    %69 = vector.shape_cast %67 : vector<16x16x128xbf16> to vector<256x128xbf16>
    %c6 = arith.constant 6 : index
    %c0_83 = arith.constant 0 : index
    %c0_84 = arith.constant 0 : index
    %70 = vector.load %arg4[%c6, %c0_83, %c0_84] : memref<9x128x128xbf16, #tpu.memory_space<vmem>>, vector<1x128x128xbf16>
    %71 = vector.shape_cast %70 : vector<1x128x128xbf16> to vector<128x128xbf16>
    %cst_85 = arith.constant dense<0.000000e+00> : vector<256x128xf32>
    %72 = tpu.matmul %69, %71, %cst_85 {dimension_numbers = #tpu.dot_dimension_numbers<[1], [0], [0], [1], [0, 0, 1, 1], [], []>} : vector<256x128xbf16>, vector<128x128xbf16>, vector<256x128xf32> -> vector<256x128xf32>
    %73 = arith.addf %68, %72 : vector<256x128xf32>
    %c0_86 = arith.constant 0 : index
    %c0_87 = arith.constant 0 : index
    %74 = vector.load %arg9[%c0_86, %c0_87] : memref<256x128xf32, #tpu.memory_space<vmem>>, vector<256x128xf32>
    tpu.vector_store %arg9[%c0_86, %c0_87], %73 {strides = array<i32>} : memref<256x128xf32, #tpu.memory_space<vmem>>, vector<256x128xf32>,
    %c2_88 = arith.constant 2 : index
    %c1_89 = arith.constant 1 : index
    %c0_90 = arith.constant 0 : index
    %75 = vector.load %arg8[%c2_88, %c1_89, %c0_90] : memref<18x18x128xbf16, #tpu.memory_space<vmem>>, vector<16x16x128xbf16>
    %c0_91 = arith.constant 0 : index
    %c0_92 = arith.constant 0 : index
    %76 = vector.load %arg9[%c0_91, %c0_92] : memref<256x128xf32, #tpu.memory_space<vmem>>, vector<256x128xf32>
    %77 = vector.shape_cast %75 : vector<16x16x128xbf16> to vector<256x128xbf16>
    %c7 = arith.constant 7 : index
    %c0_93 = arith.constant 0 : index
    %c0_94 = arith.constant 0 : index
    %78 = vector.load %arg4[%c7, %c0_93, %c0_94] : memref<9x128x128xbf16, #tpu.memory_space<vmem>>, vector<1x128x128xbf16>
    %79 = vector.shape_cast %78 : vector<1x128x128xbf16> to vector<128x128xbf16>
    %cst_95 = arith.constant dense<0.000000e+00> : vector<256x128xf32>
    %80 = tpu.matmul %77, %79, %cst_95 {dimension_numbers = #tpu.dot_dimension_numbers<[1], [0], [0], [1], [0, 0, 1, 1], [], []>} : vector<256x128xbf16>, vector<128x128xbf16>, vector<256x128xf32> -> vector<256x128xf32>
    %81 = arith.addf %76, %80 : vector<256x128xf32>
    %c0_96 = arith.constant 0 : index
    %c0_97 = arith.constant 0 : index
    %82 = vector.load %arg9[%c0_96, %c0_97] : memref<256x128xf32, #tpu.memory_space<vmem>>, vector<256x128xf32>
    tpu.vector_store %arg9[%c0_96, %c0_97], %81 {strides = array<i32>} : memref<256x128xf32, #tpu.memory_space<vmem>>, vector<256x128xf32>,
    %c2_98 = arith.constant 2 : index
    %c2_99 = arith.constant 2 : index
    %c0_100 = arith.constant 0 : index
    %83 = vector.load %arg8[%c2_98, %c2_99, %c0_100] : memref<18x18x128xbf16, #tpu.memory_space<vmem>>, vector<16x16x128xbf16>
    %c0_101 = arith.constant 0 : index
    %c0_102 = arith.constant 0 : index
    %84 = vector.load %arg9[%c0_101, %c0_102] : memref<256x128xf32, #tpu.memory_space<vmem>>, vector<256x128xf32>
    %85 = vector.shape_cast %83 : vector<16x16x128xbf16> to vector<256x128xbf16>
    %c8 = arith.constant 8 : index
    %c0_103 = arith.constant 0 : index
    %c0_104 = arith.constant 0 : index
    %86 = vector.load %arg4[%c8, %c0_103, %c0_104] : memref<9x128x128xbf16, #tpu.memory_space<vmem>>, vector<1x128x128xbf16>
    %87 = vector.shape_cast %86 : vector<1x128x128xbf16> to vector<128x128xbf16>
    %cst_105 = arith.constant dense<0.000000e+00> : vector<256x128xf32>
    %88 = tpu.matmul %85, %87, %cst_105 {dimension_numbers = #tpu.dot_dimension_numbers<[1], [0], [0], [1], [0, 0, 1, 1], [], []>} : vector<256x128xbf16>, vector<128x128xbf16>, vector<256x128xf32> -> vector<256x128xf32>
    %89 = arith.addf %84, %88 : vector<256x128xf32>
    %c0_106 = arith.constant 0 : index
    %c0_107 = arith.constant 0 : index
    %90 = vector.load %arg9[%c0_106, %c0_107] : memref<256x128xf32, #tpu.memory_space<vmem>>, vector<256x128xf32>
    tpu.vector_store %arg9[%c0_106, %c0_107], %89 {strides = array<i32>} : memref<256x128xf32, #tpu.memory_space<vmem>>, vector<256x128xf32>,
    %c0_108 = arith.constant 0 : index
    %c0_109 = arith.constant 0 : index
    %91 = vector.load %arg9[%c0_108, %c0_109] : memref<256x128xf32, #tpu.memory_space<vmem>>, vector<256x128xf32>
    %92 = arith.truncf %91 : vector<256x128xf32> to vector<256x128xbf16>
    %c0_110 = arith.constant 0 : index
    %c0_111 = arith.constant 0 : index
    %93 = vector.load %arg5[%c0_110, %c0_111] : memref<256x128xbf16, #tpu.memory_space<vmem>>, vector<256x128xbf16>
    tpu.vector_store %arg5[%c0_110, %c0_111], %92 {strides = array<i32>} : memref<256x128xbf16, #tpu.memory_space<vmem>>, vector<256x128xbf16>,
    %cst_112 = arith.constant dense<0.000000e+00> : vector<128xf32>
    %94 = vector.multi_reduction <add>, %91, %cst_112 [0] : vector<256x128xf32> to vector<128xf32>
    %95 = vector.shape_cast %94 : vector<128xf32> to vector<1x128xf32>
    %96 = vector.shape_cast %95 : vector<1x128xf32> to vector<1x1x128xf32>
    %c0_113 = arith.constant 0 : index
    %c0_114 = arith.constant 0 : index
    %c0_115 = arith.constant 0 : index
    %97 = vector.load %arg6[%c0_113, %c0_114, %c0_115] : memref<1x1x128xf32, #tpu.memory_space<vmem>>, vector<1x1x128xf32>
    tpu.vector_store %arg6[%c0_113, %c0_114, %c0_115], %96 {strides = array<i32>} : memref<1x1x128xf32, #tpu.memory_space<vmem>>, vector<1x1x128xf32>,
    %98 = arith.mulf %91, %91 : vector<256x128xf32>
    %cst_116 = arith.constant dense<0.000000e+00> : vector<128xf32>
    %99 = vector.multi_reduction <add>, %98, %cst_116 [0] : vector<256x128xf32> to vector<128xf32>
    %100 = vector.shape_cast %99 : vector<128xf32> to vector<1x128xf32>
    %101 = vector.shape_cast %100 : vector<1x128xf32> to vector<1x1x128xf32>
    %c0_117 = arith.constant 0 : index
    %c0_118 = arith.constant 0 : index
    %c0_119 = arith.constant 0 : index
    %102 = vector.load %arg7[%c0_117, %c0_118, %c0_119] : memref<1x1x128xf32, #tpu.memory_space<vmem>>, vector<1x1x128xf32>
    tpu.vector_store %arg7[%c0_117, %c0_118, %c0_119], %101 {strides = array<i32>} : memref<1x1x128xf32, #tpu.memory_space<vmem>>, vector<1x1x128xf32>,
    return
  }
  func.func @transform_0(%arg0: i32) -> (i32, i32, i32, i32) {
    %c0_i32 = arith.constant 0 : i32
    %c0_i32_0 = arith.constant 0 : i32
    %c0_i32_1 = arith.constant 0 : i32
    %c0_i32_2 = arith.constant 0 : i32
    return %arg0, %c0_i32, %c0_i32_0, %c0_i32_1 : i32, i32, i32, i32
  }
  func.func @transform_1(%arg0: i32) -> (i32, i32) {
    %c0_i32 = arith.constant 0 : i32
    %c0_i32_0 = arith.constant 0 : i32
    %c0_i32_1 = arith.constant 0 : i32
    return %c0_i32, %c0_i32_0 : i32, i32
  }
  func.func @transform_2(%arg0: i32) -> (i32, i32) {
    %c0_i32 = arith.constant 0 : i32
    %c0_i32_0 = arith.constant 0 : i32
    %c0_i32_1 = arith.constant 0 : i32
    return %c0_i32, %c0_i32_0 : i32, i32
  }
  func.func @transform_3(%arg0: i32) -> (i32, i32, i32) {
    %c0_i32 = arith.constant 0 : i32
    %c0_i32_0 = arith.constant 0 : i32
    %c0_i32_1 = arith.constant 0 : i32
    %c0_i32_2 = arith.constant 0 : i32
    return %c0_i32, %c0_i32_0, %c0_i32_1 : i32, i32, i32
  }
  func.func @transform_4(%arg0: i32) -> (i32, i32) {
    %c0_i32 = arith.constant 0 : i32
    %c0_i32_0 = arith.constant 0 : i32
    return %arg0, %c0_i32 : i32, i32
  }
  func.func @transform_5(%arg0: i32) -> (i32, i32, i32) {
    %c0_i32 = arith.constant 0 : i32
    %c0_i32_0 = arith.constant 0 : i32
    %c0_i32_1 = arith.constant 0 : i32
    return %arg0, %c0_i32, %c0_i32_0 : i32, i32, i32
  }
  func.func @transform_6(%arg0: i32) -> (i32, i32, i32) {
    %c0_i32 = arith.constant 0 : i32
    %c0_i32_0 = arith.constant 0 : i32
    %c0_i32_1 = arith.constant 0 : i32
    return %arg0, %c0_i32, %c0_i32_0 : i32, i32, i32
  }
}

module attributes {stable_mosaic.version = 11 : i64} {
  func.func @conv1x1_stats_kernel(%arg0: i32, %arg1: memref<256x128xbf16, #tpu.memory_space<vmem>>, %arg2: memref<128x128xbf16, #tpu.memory_space<vmem>>, %arg3: memref<256x128xbf16, #tpu.memory_space<vmem>>, %arg4: memref<1x1x128xf32, #tpu.memory_space<vmem>>, %arg5: memref<1x1x128xf32, #tpu.memory_space<vmem>>) attributes {dimension_semantics = [#tpu.dimension_semantics<parallel>], iteration_bounds = array<i64: 2>, scalar_prefetch = 0 : i64, scratch_operands = 0 : i64, tpu.core_type = #tpu.core_type<tc>, window_params = [{transform_indices = @transform_0, window_bounds = array<i64: 256, 128>}, {pipeline_mode = #tpu.pipeline_mode<synchronous>, transform_indices = @transform_1, window_bounds = array<i64: 128, 128>}, {transform_indices = @transform_2, window_bounds = array<i64: 256, 128>}, {transform_indices = @transform_3, window_bounds = array<i64: 1, 1, 128>}, {transform_indices = @transform_4, window_bounds = array<i64: 1, 1, 128>}]} {
    %c0 = arith.constant 0 : index
    %c0_0 = arith.constant 0 : index
    %0 = vector.load %arg1[%c0, %c0_0] : memref<256x128xbf16, #tpu.memory_space<vmem>>, vector<256x128xbf16>
    %c0_1 = arith.constant 0 : index
    %c0_2 = arith.constant 0 : index
    %1 = vector.load %arg2[%c0_1, %c0_2] : memref<128x128xbf16, #tpu.memory_space<vmem>>, vector<128x128xbf16>
    %cst = arith.constant dense<0.000000e+00> : vector<256x128xf32>
    %2 = tpu.matmul %0, %1, %cst {dimension_numbers = #tpu.dot_dimension_numbers<[1], [0], [0], [1], [0, 0, 1, 1], [], []>} : vector<256x128xbf16>, vector<128x128xbf16>, vector<256x128xf32> -> vector<256x128xf32>
    %3 = arith.truncf %2 : vector<256x128xf32> to vector<256x128xbf16>
    %c0_3 = arith.constant 0 : index
    %c0_4 = arith.constant 0 : index
    %4 = vector.load %arg3[%c0_3, %c0_4] : memref<256x128xbf16, #tpu.memory_space<vmem>>, vector<256x128xbf16>
    tpu.vector_store %arg3[%c0_3, %c0_4], %3 {strides = array<i32>} : memref<256x128xbf16, #tpu.memory_space<vmem>>, vector<256x128xbf16>,
    %cst_5 = arith.constant dense<0.000000e+00> : vector<128xf32>
    %5 = vector.multi_reduction <add>, %2, %cst_5 [0] : vector<256x128xf32> to vector<128xf32>
    %6 = vector.shape_cast %5 : vector<128xf32> to vector<1x128xf32>
    %7 = vector.shape_cast %6 : vector<1x128xf32> to vector<1x1x128xf32>
    %c0_6 = arith.constant 0 : index
    %c0_7 = arith.constant 0 : index
    %c0_8 = arith.constant 0 : index
    %8 = vector.load %arg4[%c0_6, %c0_7, %c0_8] : memref<1x1x128xf32, #tpu.memory_space<vmem>>, vector<1x1x128xf32>
    tpu.vector_store %arg4[%c0_6, %c0_7, %c0_8], %7 {strides = array<i32>} : memref<1x1x128xf32, #tpu.memory_space<vmem>>, vector<1x1x128xf32>,
    %9 = arith.mulf %2, %2 : vector<256x128xf32>
    %cst_9 = arith.constant dense<0.000000e+00> : vector<128xf32>
    %10 = vector.multi_reduction <add>, %9, %cst_9 [0] : vector<256x128xf32> to vector<128xf32>
    %11 = vector.shape_cast %10 : vector<128xf32> to vector<1x128xf32>
    %12 = vector.shape_cast %11 : vector<1x128xf32> to vector<1x1x128xf32>
    %c0_10 = arith.constant 0 : index
    %c0_11 = arith.constant 0 : index
    %c0_12 = arith.constant 0 : index
    %13 = vector.load %arg5[%c0_10, %c0_11, %c0_12] : memref<1x1x128xf32, #tpu.memory_space<vmem>>, vector<1x1x128xf32>
    tpu.vector_store %arg5[%c0_10, %c0_11, %c0_12], %12 {strides = array<i32>} : memref<1x1x128xf32, #tpu.memory_space<vmem>>, vector<1x1x128xf32>,
    return
  }
  func.func @transform_0(%arg0: i32) -> (i32, i32) {
    %c0_i32 = arith.constant 0 : i32
    %c0_i32_0 = arith.constant 0 : i32
    return %arg0, %c0_i32 : i32, i32
  }
  func.func @transform_1(%arg0: i32) -> (i32, i32) {
    %c0_i32 = arith.constant 0 : i32
    %c0_i32_0 = arith.constant 0 : i32
    %c0_i32_1 = arith.constant 0 : i32
    return %c0_i32, %c0_i32_0 : i32, i32
  }
  func.func @transform_2(%arg0: i32) -> (i32, i32) {
    %c0_i32 = arith.constant 0 : i32
    %c0_i32_0 = arith.constant 0 : i32
    return %arg0, %c0_i32 : i32, i32
  }
  func.func @transform_3(%arg0: i32) -> (i32, i32, i32) {
    %c0_i32 = arith.constant 0 : i32
    %c0_i32_0 = arith.constant 0 : i32
    %c0_i32_1 = arith.constant 0 : i32
    return %arg0, %c0_i32, %c0_i32_0 : i32, i32, i32
  }
  func.func @transform_4(%arg0: i32) -> (i32, i32, i32) {
    %c0_i32 = arith.constant 0 : i32
    %c0_i32_0 = arith.constant 0 : i32
    %c0_i32_1 = arith.constant 0 : i32
    return %arg0, %c0_i32, %c0_i32_0 : i32, i32, i32
  }
}

module attributes {stable_mosaic.version = 11 : i64} {
  func.func @conv3_shortcut_stats_kernel(%arg0: i32, %arg1: memref<256x128xbf16, #tpu.memory_space<vmem>>, %arg2: memref<1x128xf32, #tpu.memory_space<vmem>>, %arg3: memref<1x128xf32, #tpu.memory_space<vmem>>, %arg4: memref<128x128xbf16, #tpu.memory_space<vmem>>, %arg5: memref<256x128xbf16, #tpu.memory_space<vmem>>, %arg6: memref<128x128xbf16, #tpu.memory_space<vmem>>, %arg7: memref<256x128xbf16, #tpu.memory_space<vmem>>, %arg8: memref<1x1x128xf32, #tpu.memory_space<vmem>>, %arg9: memref<1x1x128xf32, #tpu.memory_space<vmem>>, %arg10: memref<256x128xbf16, #tpu.memory_space<vmem>>, %arg11: memref<1x1x128xf32, #tpu.memory_space<vmem>>, %arg12: memref<1x1x128xf32, #tpu.memory_space<vmem>>) attributes {dimension_semantics = [#tpu.dimension_semantics<parallel>], iteration_bounds = array<i64: 2>, scalar_prefetch = 0 : i64, scratch_operands = 0 : i64, tpu.core_type = #tpu.core_type<tc>, window_params = [{transform_indices = @transform_0, window_bounds = array<i64: 256, 128>}, {pipeline_mode = #tpu.pipeline_mode<synchronous>, transform_indices = @transform_1, window_bounds = array<i64: 1, 128>}, {pipeline_mode = #tpu.pipeline_mode<synchronous>, transform_indices = @transform_2, window_bounds = array<i64: 1, 128>}, {pipeline_mode = #tpu.pipeline_mode<synchronous>, transform_indices = @transform_3, window_bounds = array<i64: 128, 128>}, {transform_indices = @transform_4, window_bounds = array<i64: 256, 128>}, {pipeline_mode = #tpu.pipeline_mode<synchronous>, transform_indices = @transform_5, window_bounds = array<i64: 128, 128>}, {transform_indices = @transform_6, window_bounds = array<i64: 256, 128>}, {transform_indices = @transform_7, window_bounds = array<i64: 1, 1, 128>}, {transform_indices = @transform_8, window_bounds = array<i64: 1, 1, 128>}, {transform_indices = @transform_9, window_bounds = array<i64: 256, 128>}, {transform_indices = @transform_10, window_bounds = array<i64: 1, 1, 128>}, {transform_indices = @transform_11, window_bounds = array<i64: 1, 1, 128>}]} {
    %c0 = arith.constant 0 : index
    %c0_0 = arith.constant 0 : index
    %0 = vector.load %arg1[%c0, %c0_0] : memref<256x128xbf16, #tpu.memory_space<vmem>>, vector<256x128xbf16>
    %1 = arith.extf %0 : vector<256x128xbf16> to vector<256x128xf32>
    %c0_1 = arith.constant 0 : index
    %c0_2 = arith.constant 0 : index
    %2 = vector.load %arg2[%c0_1, %c0_2] : memref<1x128xf32, #tpu.memory_space<vmem>>, vector<1x128xf32>
    %3 = vector.broadcast %2 : vector<1x128xf32> to vector<256x128xf32>
    %4 = arith.mulf %1, %3 : vector<256x128xf32>
    %c0_3 = arith.constant 0 : index
    %c0_4 = arith.constant 0 : index
    %5 = vector.load %arg3[%c0_3, %c0_4] : memref<1x128xf32, #tpu.memory_space<vmem>>, vector<1x128xf32>
    %6 = vector.broadcast %5 : vector<1x128xf32> to vector<256x128xf32>
    %7 = arith.addf %4, %6 : vector<256x128xf32>
    %cst = arith.constant 0.000000e+00 : f32
    %8 = vector.broadcast %cst : f32 to vector<256x128xf32>
    %9 = arith.maximumf %7, %8 : vector<256x128xf32>
    %10 = arith.truncf %9 : vector<256x128xf32> to vector<256x128xbf16>
    %c0_5 = arith.constant 0 : index
    %c0_6 = arith.constant 0 : index
    %11 = vector.load %arg4[%c0_5, %c0_6] : memref<128x128xbf16, #tpu.memory_space<vmem>>, vector<128x128xbf16>
    %cst_7 = arith.constant dense<0.000000e+00> : vector<256x128xf32>
    %12 = tpu.matmul %10, %11, %cst_7 {dimension_numbers = #tpu.dot_dimension_numbers<[1], [0], [0], [1], [0, 0, 1, 1], [], []>} : vector<256x128xbf16>, vector<128x128xbf16>, vector<256x128xf32> -> vector<256x128xf32>
    %13 = arith.truncf %12 : vector<256x128xf32> to vector<256x128xbf16>
    %c0_8 = arith.constant 0 : index
    %c0_9 = arith.constant 0 : index
    %14 = vector.load %arg7[%c0_8, %c0_9] : memref<256x128xbf16, #tpu.memory_space<vmem>>, vector<256x128xbf16>
    tpu.vector_store %arg7[%c0_8, %c0_9], %13 {strides = array<i32>} : memref<256x128xbf16, #tpu.memory_space<vmem>>, vector<256x128xbf16>,
    %cst_10 = arith.constant dense<0.000000e+00> : vector<128xf32>
    %15 = vector.multi_reduction <add>, %12, %cst_10 [0] : vector<256x128xf32> to vector<128xf32>
    %16 = vector.shape_cast %15 : vector<128xf32> to vector<1x128xf32>
    %17 = vector.shape_cast %16 : vector<1x128xf32> to vector<1x1x128xf32>
    %c0_11 = arith.constant 0 : index
    %c0_12 = arith.constant 0 : index
    %c0_13 = arith.constant 0 : index
    %18 = vector.load %arg8[%c0_11, %c0_12, %c0_13] : memref<1x1x128xf32, #tpu.memory_space<vmem>>, vector<1x1x128xf32>
    tpu.vector_store %arg8[%c0_11, %c0_12, %c0_13], %17 {strides = array<i32>} : memref<1x1x128xf32, #tpu.memory_space<vmem>>, vector<1x1x128xf32>,
    %19 = arith.mulf %12, %12 : vector<256x128xf32>
    %cst_14 = arith.constant dense<0.000000e+00> : vector<128xf32>
    %20 = vector.multi_reduction <add>, %19, %cst_14 [0] : vector<256x128xf32> to vector<128xf32>
    %21 = vector.shape_cast %20 : vector<128xf32> to vector<1x128xf32>
    %22 = vector.shape_cast %21 : vector<1x128xf32> to vector<1x1x128xf32>
    %c0_15 = arith.constant 0 : index
    %c0_16 = arith.constant 0 : index
    %c0_17 = arith.constant 0 : index
    %23 = vector.load %arg9[%c0_15, %c0_16, %c0_17] : memref<1x1x128xf32, #tpu.memory_space<vmem>>, vector<1x1x128xf32>
    tpu.vector_store %arg9[%c0_15, %c0_16, %c0_17], %22 {strides = array<i32>} : memref<1x1x128xf32, #tpu.memory_space<vmem>>, vector<1x1x128xf32>,
    %c0_18 = arith.constant 0 : index
    %c0_19 = arith.constant 0 : index
    %24 = vector.load %arg5[%c0_18, %c0_19] : memref<256x128xbf16, #tpu.memory_space<vmem>>, vector<256x128xbf16>
    %c0_20 = arith.constant 0 : index
    %c0_21 = arith.constant 0 : index
    %25 = vector.load %arg6[%c0_20, %c0_21] : memref<128x128xbf16, #tpu.memory_space<vmem>>, vector<128x128xbf16>
    %cst_22 = arith.constant dense<0.000000e+00> : vector<256x128xf32>
    %26 = tpu.matmul %24, %25, %cst_22 {dimension_numbers = #tpu.dot_dimension_numbers<[1], [0], [0], [1], [0, 0, 1, 1], [], []>} : vector<256x128xbf16>, vector<128x128xbf16>, vector<256x128xf32> -> vector<256x128xf32>
    %27 = arith.truncf %26 : vector<256x128xf32> to vector<256x128xbf16>
    %c0_23 = arith.constant 0 : index
    %c0_24 = arith.constant 0 : index
    %28 = vector.load %arg10[%c0_23, %c0_24] : memref<256x128xbf16, #tpu.memory_space<vmem>>, vector<256x128xbf16>
    tpu.vector_store %arg10[%c0_23, %c0_24], %27 {strides = array<i32>} : memref<256x128xbf16, #tpu.memory_space<vmem>>, vector<256x128xbf16>,
    %cst_25 = arith.constant dense<0.000000e+00> : vector<128xf32>
    %29 = vector.multi_reduction <add>, %26, %cst_25 [0] : vector<256x128xf32> to vector<128xf32>
    %30 = vector.shape_cast %29 : vector<128xf32> to vector<1x128xf32>
    %31 = vector.shape_cast %30 : vector<1x128xf32> to vector<1x1x128xf32>
    %c0_26 = arith.constant 0 : index
    %c0_27 = arith.constant 0 : index
    %c0_28 = arith.constant 0 : index
    %32 = vector.load %arg11[%c0_26, %c0_27, %c0_28] : memref<1x1x128xf32, #tpu.memory_space<vmem>>, vector<1x1x128xf32>
    tpu.vector_store %arg11[%c0_26, %c0_27, %c0_28], %31 {strides = array<i32>} : memref<1x1x128xf32, #tpu.memory_space<vmem>>, vector<1x1x128xf32>,
    %33 = arith.mulf %26, %26 : vector<256x128xf32>
    %cst_29 = arith.constant dense<0.000000e+00> : vector<128xf32>
    %34 = vector.multi_reduction <add>, %33, %cst_29 [0] : vector<256x128xf32> to vector<128xf32>
    %35 = vector.shape_cast %34 : vector<128xf32> to vector<1x128xf32>
    %36 = vector.shape_cast %35 : vector<1x128xf32> to vector<1x1x128xf32>
    %c0_30 = arith.constant 0 : index
    %c0_31 = arith.constant 0 : index
    %c0_32 = arith.constant 0 : index
    %37 = vector.load %arg12[%c0_30, %c0_31, %c0_32] : memref<1x1x128xf32, #tpu.memory_space<vmem>>, vector<1x1x128xf32>
    tpu.vector_store %arg12[%c0_30, %c0_31, %c0_32], %36 {strides = array<i32>} : memref<1x1x128xf32, #tpu.memory_space<vmem>>, vector<1x1x128xf32>,
    return
  }
  func.func @transform_0(%arg0: i32) -> (i32, i32) {
    %c0_i32 = arith.constant 0 : i32
    %c0_i32_0 = arith.constant 0 : i32
    return %arg0, %c0_i32 : i32, i32
  }
  func.func @transform_1(%arg0: i32) -> (i32, i32) {
    %c0_i32 = arith.constant 0 : i32
    %c0_i32_0 = arith.constant 0 : i32
    %c0_i32_1 = arith.constant 0 : i32
    return %c0_i32, %c0_i32_0 : i32, i32
  }
  func.func @transform_2(%arg0: i32) -> (i32, i32) {
    %c0_i32 = arith.constant 0 : i32
    %c0_i32_0 = arith.constant 0 : i32
    %c0_i32_1 = arith.constant 0 : i32
    return %c0_i32, %c0_i32_0 : i32, i32
  }
  func.func @transform_3(%arg0: i32) -> (i32, i32) {
    %c0_i32 = arith.constant 0 : i32
    %c0_i32_0 = arith.constant 0 : i32
    %c0_i32_1 = arith.constant 0 : i32
    return %c0_i32, %c0_i32_0 : i32, i32
  }
  func.func @transform_4(%arg0: i32) -> (i32, i32) {
    %c0_i32 = arith.constant 0 : i32
    %c0_i32_0 = arith.constant 0 : i32
    return %arg0, %c0_i32 : i32, i32
  }
  func.func @transform_5(%arg0: i32) -> (i32, i32) {
    %c0_i32 = arith.constant 0 : i32
    %c0_i32_0 = arith.constant 0 : i32
    %c0_i32_1 = arith.constant 0 : i32
    return %c0_i32, %c0_i32_0 : i32, i32
  }
  func.func @transform_6(%arg0: i32) -> (i32, i32) {
    %c0_i32 = arith.constant 0 : i32
    %c0_i32_0 = arith.constant 0 : i32
    return %arg0, %c0_i32 : i32, i32
  }
  func.func @transform_7(%arg0: i32) -> (i32, i32, i32) {
    %c0_i32 = arith.constant 0 : i32
    %c0_i32_0 = arith.constant 0 : i32
    %c0_i32_1 = arith.constant 0 : i32
    return %arg0, %c0_i32, %c0_i32_0 : i32, i32, i32
  }
  func.func @transform_8(%arg0: i32) -> (i32, i32, i32) {
    %c0_i32 = arith.constant 0 : i32
    %c0_i32_0 = arith.constant 0 : i32
    %c0_i32_1 = arith.constant 0 : i32
    return %arg0, %c0_i32, %c0_i32_0 : i32, i32, i32
  }
  func.func @transform_9(%arg0: i32) -> (i32, i32) {
    %c0_i32 = arith.constant 0 : i32
    %c0_i32_0 = arith.constant 0 : i32
    return %arg0, %c0_i32 : i32, i32
  }
  func.func @transform_10(%arg0: i32) -> (i32, i32, i32) {
    %c0_i32 = arith.constant 0 : i32
    %c0_i32_0 = arith.constant 0 : i32
    %c0_i32_1 = arith.constant 0 : i32
    return %arg0, %c0_i32, %c0_i32_0 : i32, i32, i32
  }
  func.func @transform_11(%arg0: i32) -> (i32, i32, i32) {
    %c0_i32 = arith.constant 0 : i32
    %c0_i32_0 = arith.constant 0 : i32
    %c0_i32_1 = arith.constant 0 : i32
    return %arg0, %c0_i32, %c0_i32_0 : i32, i32, i32
  }
}

module attributes {stable_mosaic.version = 11 : i64} {
  func.func @final_add_relu_kernel(%arg0: i32, %arg1: memref<256x128xbf16, #tpu.memory_space<vmem>>, %arg2: memref<1x128xf32, #tpu.memory_space<vmem>>, %arg3: memref<1x128xf32, #tpu.memory_space<vmem>>, %arg4: memref<256x128xbf16, #tpu.memory_space<vmem>>, %arg5: memref<1x128xf32, #tpu.memory_space<vmem>>, %arg6: memref<1x128xf32, #tpu.memory_space<vmem>>, %arg7: memref<256x128xf32, #tpu.memory_space<vmem>>) attributes {dimension_semantics = [#tpu.dimension_semantics<parallel>], iteration_bounds = array<i64: 2>, scalar_prefetch = 0 : i64, scratch_operands = 0 : i64, tpu.core_type = #tpu.core_type<tc>, window_params = [{transform_indices = @transform_0, window_bounds = array<i64: 256, 128>}, {pipeline_mode = #tpu.pipeline_mode<synchronous>, transform_indices = @transform_1, window_bounds = array<i64: 1, 128>}, {pipeline_mode = #tpu.pipeline_mode<synchronous>, transform_indices = @transform_2, window_bounds = array<i64: 1, 128>}, {transform_indices = @transform_3, window_bounds = array<i64: 256, 128>}, {pipeline_mode = #tpu.pipeline_mode<synchronous>, transform_indices = @transform_4, window_bounds = array<i64: 1, 128>}, {pipeline_mode = #tpu.pipeline_mode<synchronous>, transform_indices = @transform_5, window_bounds = array<i64: 1, 128>}, {transform_indices = @transform_6, window_bounds = array<i64: 256, 128>}]} {
    %c0 = arith.constant 0 : index
    %c0_0 = arith.constant 0 : index
    %0 = vector.load %arg1[%c0, %c0_0] : memref<256x128xbf16, #tpu.memory_space<vmem>>, vector<256x128xbf16>
    %1 = arith.extf %0 : vector<256x128xbf16> to vector<256x128xf32>
    %c0_1 = arith.constant 0 : index
    %c0_2 = arith.constant 0 : index
    %2 = vector.load %arg2[%c0_1, %c0_2] : memref<1x128xf32, #tpu.memory_space<vmem>>, vector<1x128xf32>
    %3 = vector.broadcast %2 : vector<1x128xf32> to vector<256x128xf32>
    %4 = arith.mulf %1, %3 : vector<256x128xf32>
    %c0_3 = arith.constant 0 : index
    %c0_4 = arith.constant 0 : index
    %5 = vector.load %arg3[%c0_3, %c0_4] : memref<1x128xf32, #tpu.memory_space<vmem>>, vector<1x128xf32>
    %6 = vector.broadcast %5 : vector<1x128xf32> to vector<256x128xf32>
    %7 = arith.addf %4, %6 : vector<256x128xf32>
    %c0_5 = arith.constant 0 : index
    %c0_6 = arith.constant 0 : index
    %8 = vector.load %arg4[%c0_5, %c0_6] : memref<256x128xbf16, #tpu.memory_space<vmem>>, vector<256x128xbf16>
    %9 = arith.extf %8 : vector<256x128xbf16> to vector<256x128xf32>
    %c0_7 = arith.constant 0 : index
    %c0_8 = arith.constant 0 : index
    %10 = vector.load %arg5[%c0_7, %c0_8] : memref<1x128xf32, #tpu.memory_space<vmem>>, vector<1x128xf32>
    %11 = vector.broadcast %10 : vector<1x128xf32> to vector<256x128xf32>
    %12 = arith.mulf %9, %11 : vector<256x128xf32>
    %c0_9 = arith.constant 0 : index
    %c0_10 = arith.constant 0 : index
    %13 = vector.load %arg6[%c0_9, %c0_10] : memref<1x128xf32, #tpu.memory_space<vmem>>, vector<1x128xf32>
    %14 = vector.broadcast %13 : vector<1x128xf32> to vector<256x128xf32>
    %15 = arith.addf %12, %14 : vector<256x128xf32>
    %16 = arith.addf %7, %15 : vector<256x128xf32>
    %cst = arith.constant 0.000000e+00 : f32
    %17 = vector.broadcast %cst : f32 to vector<256x128xf32>
    %18 = arith.maximumf %16, %17 : vector<256x128xf32>
    %c0_11 = arith.constant 0 : index
    %c0_12 = arith.constant 0 : index
    %19 = vector.load %arg7[%c0_11, %c0_12] : memref<256x128xf32, #tpu.memory_space<vmem>>, vector<256x128xf32>
    tpu.vector_store %arg7[%c0_11, %c0_12], %18 {strides = array<i32>} : memref<256x128xf32, #tpu.memory_space<vmem>>, vector<256x128xf32>,
    return
  }
  func.func @transform_0(%arg0: i32) -> (i32, i32) {
    %c0_i32 = arith.constant 0 : i32
    %c0_i32_0 = arith.constant 0 : i32
    return %arg0, %c0_i32 : i32, i32
  }
  func.func @transform_1(%arg0: i32) -> (i32, i32) {
    %c0_i32 = arith.constant 0 : i32
    %c0_i32_0 = arith.constant 0 : i32
    %c0_i32_1 = arith.constant 0 : i32
    return %c0_i32, %c0_i32_0 : i32, i32
  }
  func.func @transform_2(%arg0: i32) -> (i32, i32) {
    %c0_i32 = arith.constant 0 : i32
    %c0_i32_0 = arith.constant 0 : i32
    %c0_i32_1 = arith.constant 0 : i32
    return %c0_i32, %c0_i32_0 : i32, i32
  }
  func.func @transform_3(%arg0: i32) -> (i32, i32) {
    %c0_i32 = arith.constant 0 : i32
    %c0_i32_0 = arith.constant 0 : i32
    return %arg0, %c0_i32 : i32, i32
  }
  func.func @transform_4(%arg0: i32) -> (i32, i32) {
    %c0_i32 = arith.constant 0 : i32
    %c0_i32_0 = arith.constant 0 : i32
    %c0_i32_1 = arith.constant 0 : i32
    return %c0_i32, %c0_i32_0 : i32, i32
  }
  func.func @transform_5(%arg0: i32) -> (i32, i32) {
    %c0_i32 = arith.constant 0 : i32
    %c0_i32_0 = arith.constant 0 : i32
    %c0_i32_1 = arith.constant 0 : i32
    return %c0_i32, %c0_i32_0 : i32, i32
  }
  func.func @transform_6(%arg0: i32) -> (i32, i32) {
    %c0_i32 = arith.constant 0 : i32
    %c0_i32_0 = arith.constant 0 : i32
    return %arg0, %c0_i32 : i32, i32
  }
}

</mosaic_0001>

<llo_original>
// kernel: bottleneck_forward.7
$region0: #{bottleneck_forward.7}
  #allocation0 [shape = 'u32[]', space=smem, size = 0x4, offset = 0x4, fixed_abs, tag = 'smem constant byte address 0x4 - core index']
  #allocation1 [shape = 'u32[144,128]{1,0:T(1,128)}', space=vmem, size = 0x12000, scoped, tag = 'internal scratch']
  %s0 = inlined_call_operand.vmem [shape: bf16[512,128], index: 0, kind: input, shape index: {}]
  %s1 = inlined_call_operand.vmem [shape: f32[1,128], index: 1, kind: input, shape index: {}]
  %s2 = inlined_call_operand.vmem [shape: f32[1,128], index: 2, kind: input, shape index: {}]
  %s3 = inlined_call_operand.vmem [shape: bf16[512,128], index: 3, kind: input, shape index: {}]
  %s4 = inlined_call_operand.vmem [shape: f32[1,128], index: 4, kind: input, shape index: {}]
  %s5 = inlined_call_operand.vmem [shape: f32[1,128], index: 5, kind: input, shape index: {}]
  %s6 = inlined_call_operand.vmem [shape: f32[512,128], index: 6, kind: output, shape index: {}]
  %s7 = sld [smem:[#allocation0]]
  $region57: #{bottleneck_forward.7} parent=0
    _
  %s9 = ssub.s32 1, %s7
  %s10 = scalar_select 0, %s9, %s7
  loop: start=0, step=1, limit=4
  $region2: #{bottleneck_forward.7} parent=0 // loop_pre_header
    _
  $region3: #{bottleneck_forward.7} parent=0 // loop_header
    %s12 = sphi 0, %s16
    %p13 = scmp.ge.s32.totalorder %s12, 4
    %s22 = sphi 0, %s24
    %s25 = sphi 0, %s22
    %s26 = sphi 0, %s25
    %s42 = sphi 0, %s26
    %s46 = sphi 0, %s46
    %s48 = sphi 0, %s46
    %s49 = sphi 0, %s48
    %s63 = sphi 0, %s49
    %s67 = sphi 0, %s67
    %s69 = sphi 0, %s67
    %s70 = sphi 0, %s69
    %s84 = sphi 0, %s70
    %s90 = sphi 0, %s92
    %s93 = sphi 0, %s90
    %s94 = sphi 0, %s93
    %s110 = sphi 0, %s94
    %s114 = sphi 0, %s114
    %s116 = sphi 0, %s114
    %s117 = sphi 0, %s116
    %s131 = sphi 0, %s117
    %s135 = sphi 0, %s135
    %s137 = sphi 0, %s135
    %s138 = sphi 0, %s137
    %s152 = sphi 0, %s138
    %s158 = sphi 0, %s160
    %s161 = sphi 0, %s158
    %s162 = sphi 0, %s161
    %s178 = sphi 0, %s162
  $region4: #{bottleneck_forward.7} parent=0 // loop_header_branch
    %15 = sbr.rel (%p13) target = $region8
  $region5: #{bottleneck_forward.7} parent=0 // loop_body
    %s17 = ssub.s32 %s12, 1
    %s18 = ssub.s32 %s12, 2
    %s19 = sadd.s32 %s12, 1
    %s20 = ssub.s32 %s12, %s19
    %p21 = scmp.eq.s32.totalorder %s20, 0
    %s23 = sadd.s32 %s22, 1
    %s24 = scalar_select %p21, %s22, %s23
    %p27 = pneg %p21
    %p28 = scmp.eq.s32.totalorder %s12, 1
    %p29 = por %p27, %p28
    %p30 = scmp.ne.s32.totalorder %s22, %s25
    %p31 = scmp.eq.s32.totalorder %s12, 0
    %p32 = por %p30, %p31
    %p33 = scmp.ne.s32.totalorder %s22, %s25
    %p34 = scmp.eq.s32.totalorder %s17, 1
    %p35 = por %p33, %p34
    %p36 = scmp.ne.s32.totalorder %s25, %s26
    %p37 = scmp.eq.s32.totalorder %s17, 0
    %p38 = por %p36, %p37
    %p39 = scmp.ne.s32.totalorder %s25, %s26
    %p40 = scmp.eq.s32.totalorder %s18, 1
    %p41 = por %p39, %p40
    %p43 = scmp.ne.s32.totalorder %s26, %s42
    %p44 = scmp.eq.s32.totalorder %s18, 0
    %p45 = por %p43, %p44
    %s47 = sadd.s32 %s46, 1
    %p50 = scmp.eq.s32.totalorder %s12, 1
    %p51 = scmp.ne.s32.totalorder %s46, %s48
    %p52 = scmp.eq.s32.totalorder %s12, 0
    %p53 = por %p51, %p52
    %p54 = scmp.ne.s32.totalorder %s46, %s48
    %p55 = scmp.eq.s32.totalorder %s17, 1
    %p56 = por %p54, %p55
    %p57 = scmp.ne.s32.totalorder %s48, %s49
    %p58 = scmp.eq.s32.totalorder %s17, 0
    %p59 = por %p57, %p58
    %p60 = scmp.ne.s32.totalorder %s48, %s49
    %p61 = scmp.eq.s32.totalorder %s18, 1
    %p62 = por %p60, %p61
    %p64 = scmp.ne.s32.totalorder %s49, %s63
    %p65 = scmp.eq.s32.totalorder %s18, 0
    %p66 = por %p64, %p65
    %s68 = sadd.s32 %s67, 1
    %p71 = scmp.eq.s32.totalorder %s12, 1
    %p72 = scmp.ne.s32.totalorder %s67, %s69
    %p73 = scmp.eq.s32.totalorder %s12, 0
    %p74 = por %p72, %p73
    %p75 = scmp.ne.s32.totalorder %s67, %s69
    %p76 = scmp.eq.s32.totalorder %s17, 1
    %p77 = por %p75, %p76
    %p78 = scmp.ne.s32.totalorder %s69, %s70
    %p79 = scmp.eq.s32.totalorder %s17, 0
    %p80 = por %p78, %p79
    %p81 = scmp.ne.s32.totalorder %s69, %s70
    %p82 = scmp.eq.s32.totalorder %s18, 1
    %p83 = por %p81, %p82
    %p85 = scmp.ne.s32.totalorder %s70, %s84
    %p86 = scmp.eq.s32.totalorder %s18, 0
    %p87 = por %p85, %p86
    %s88 = ssub.s32 %s12, %s19
    %p89 = scmp.eq.s32.totalorder %s88, 0
    %s91 = sadd.s32 %s90, 1
    %s92 = scalar_select %p89, %s90, %s91
    %p95 = pneg %p89
    %p96 = scmp.eq.s32.totalorder %s12, 1
    %p97 = por %p95, %p96
    %p98 = scmp.ne.s32.totalorder %s90, %s93
    %p99 = scmp.eq.s32.totalorder %s12, 0
    %p100 = por %p98, %p99
    %p101 = scmp.ne.s32.totalorder %s90, %s93
    %p102 = scmp.eq.s32.totalorder %s17, 1
    %p103 = por %p101, %p102
    %p104 = scmp.ne.s32.totalorder %s93, %s94
    %p105 = scmp.eq.s32.totalorder %s17, 0
    %p106 = por %p104, %p105
    %p107 = scmp.ne.s32.totalorder %s93, %s94
    %p108 = scmp.eq.s32.totalorder %s18, 1
    %p109 = por %p107, %p108
    %p111 = scmp.ne.s32.totalorder %s94, %s110
    %p112 = scmp.eq.s32.totalorder %s18, 0
    %p113 = por %p111, %p112
    %s115 = sadd.s32 %s114, 1
    %p118 = scmp.eq.s32.totalorder %s12, 1
    %p119 = scmp.ne.s32.totalorder %s114, %s116
    %p120 = scmp.eq.s32.totalorder %s12, 0
    %p121 = por %p119, %p120
    %p122 = scmp.ne.s32.totalorder %s114, %s116
    %p123 = scmp.eq.s32.totalorder %s17, 1
    %p124 = por %p122, %p123
    %p125 = scmp.ne.s32.totalorder %s116, %s117
    %p126 = scmp.eq.s32.totalorder %s17, 0
    %p127 = por %p125, %p126
    %p128 = scmp.ne.s32.totalorder %s116, %s117
    %p129 = scmp.eq.s32.totalorder %s18, 1
    %p130 = por %p128, %p129
    %p132 = scmp.ne.s32.totalorder %s117, %s131
    %p133 = scmp.eq.s32.totalorder %s18, 0
    %p134 = por %p132, %p133
    %s136 = sadd.s32 %s135, 1
    %p139 = scmp.eq.s32.totalorder %s12, 1
    %p140 = scmp.ne.s32.totalorder %s135, %s137
    %p141 = scmp.eq.s32.totalorder %s12, 0
    %p142 = por %p140, %p141
    %p143 = scmp.ne.s32.totalorder %s135, %s137
    %p144 = scmp.eq.s32.totalorder %s17, 1
    %p145 = por %p143, %p144
    %p146 = scmp.ne.s32.totalorder %s137, %s138
    %p147 = scmp.eq.s32.totalorder %s17, 0
    %p148 = por %p146, %p147
    %p149 = scmp.ne.s32.totalorder %s137, %s138
    %p150 = scmp.eq.s32.totalorder %s18, 1
    %p151 = por %p149, %p150
    %p153 = scmp.ne.s32.totalorder %s138, %s152
    %p154 = scmp.eq.s32.totalorder %s18, 0
    %p155 = por %p153, %p154
    %s156 = ssub.s32 %s12, %s19
    %p157 = scmp.eq.s32.totalorder %s156, 0
    %s159 = sadd.s32 %s158, 1
    %s160 = scalar_select %p157, %s158, %s159
    %p163 = pneg %p157
    %p164 = scmp.eq.s32.totalorder %s12, 1
    %p165 = por %p163, %p164
    %p166 = scmp.ne.s32.totalorder %s158, %s161
    %p167 = scmp.eq.s32.totalorder %s12, 0
    %p168 = por %p166, %p167
    %p169 = scmp.ne.s32.totalorder %s158, %s161
    %p170 = scmp.eq.s32.totalorder %s17, 1
    %p171 = por %p169, %p170
    %p172 = scmp.ne.s32.totalorder %s161, %s162
    %p173 = scmp.eq.s32.totalorder %s17, 0
    %p174 = por %p172, %p173
    %p175 = scmp.ne.s32.totalorder %s161, %s162
    %p176 = scmp.eq.s32.totalorder %s18, 1
    %p177 = por %p175, %p176
    %p179 = scmp.ne.s32.totalorder %s162, %s178
    %p180 = scmp.eq.s32.totalorder %s18, 0
    %p181 = por %p179, %p180
    %p182 = scmp.le.s32.totalorder 1, %s12
    %p183 = scmp.lt.s32.totalorder %s12, 3
    %p184 = pnand %p182, %p183
    %p185 = pneg %p184
    // Predicated region
    $region9: #{bottleneck_forward.7} parent=5 // pred_check
      _
    $region10: #{bottleneck_forward.7} parent=5 // pred_check_branch
      %187 = sbr.rel (%p184) target = $region12
    $region11: #{bottleneck_forward.7} parent=5 // pred_region
      %s188 = ssub.s32 %s12, 1
      // Predicated region
      $region13: #{bottleneck_forward.7} parent=11 // pred_check
        %p189 = pneg %p59
      $region14: #{bottleneck_forward.7} parent=11 // pred_check_branch
        %191 = sbr.rel (%p189) target = $region16
      $region15: #{bottleneck_forward.7} parent=11 // pred_region
        _
      $region16: #{bottleneck_forward.7} parent=11 // pred_fallthru
        _
      // Predicated region
      $region17: #{bottleneck_forward.7} parent=11 // pred_check
        %p192 = pneg %p80
      $region18: #{bottleneck_forward.7} parent=11 // pred_check_branch
        %194 = sbr.rel (%p192) target = $region20
      $region19: #{bottleneck_forward.7} parent=11 // pred_region
        _
      $region20: #{bottleneck_forward.7} parent=11 // pred_fallthru
        _
      // Predicated region
      $region21: #{bottleneck_forward.7} parent=11 // pred_check
        %p195 = pneg %p127
      $region22: #{bottleneck_forward.7} parent=11 // pred_check_branch
        %197 = sbr.rel (%p195) target = $region24
      $region23: #{bottleneck_forward.7} parent=11 // pred_region
        _
      $region24: #{bottleneck_forward.7} parent=11 // pred_fallthru
        _
      // Predicated region
      $region25: #{bottleneck_forward.7} parent=11 // pred_check
        %p198 = pneg %p148
      $region26: #{bottleneck_forward.7} parent=11 // pred_check_branch
        %200 = sbr.rel (%p198) target = $region28
      $region27: #{bottleneck_forward.7} parent=11 // pred_region
        _
      $region28: #{bottleneck_forward.7} parent=11 // pred_fallthru
        _
    $region12: #{bottleneck_forward.7} parent=5 // pred_fallthru
      _
    %p201 = scmp.lt.s32.totalorder %s12, 2
    // Predicated region
    $region29: #{bottleneck_forward.7} parent=5 // pred_check
      %p202 = pneg %p201
    $region30: #{bottleneck_forward.7} parent=5 // pred_check_branch
      %204 = sbr.rel (%p202) target = $region32
    $region31: #{bottleneck_forward.7} parent=5 // pred_region
      // Predicated region
      $region33: #{bottleneck_forward.7} parent=31 // pred_check
        %p205 = pneg %p32
      $region34: #{bottleneck_forward.7} parent=31 // pred_check_branch
        %207 = sbr.rel (%p205) target = $region36
      $region35: #{bottleneck_forward.7} parent=31 // pred_region
        %s208 = smul.u32 32, %s12
        %p209 = scmp.lt.s32.totalorder %s208, 63
        %s210 = scalar_select %p209, %s208, 63
        %s211 = smul.addr %s210, 4
        %s212 = scalar_lea.vmem %s0, %s211
        %s213 = smul.u32 32, %s12
      $region36: #{bottleneck_forward.7} parent=31 // pred_fallthru
        _
      // Predicated region
      $region37: #{bottleneck_forward.7} parent=31 // pred_check
        %p214 = pneg %p100
      $region38: #{bottleneck_forward.7} parent=31 // pred_check_branch
        %216 = sbr.rel (%p214) target = $region40
      $region39: #{bottleneck_forward.7} parent=31 // pred_region
        %s217 = smul.u32 32, %s12
        %p218 = scmp.lt.s32.totalorder %s217, 63
        %s219 = scalar_select %p218, %s217, 63
        %s220 = smul.addr %s219, 4
        %s221 = scalar_lea.vmem %s3, %s220
        %s222 = smul.u32 32, %s12
      $region40: #{bottleneck_forward.7} parent=31 // pred_fallthru
        _
    $region32: #{bottleneck_forward.7} parent=5 // pred_fallthru
      _
    %p223 = scmp.le.s32.totalorder 1, %s12
    %p224 = scmp.lt.s32.totalorder %s12, 3
    %p225 = pnand %p223, %p224
    %p226 = pneg %p225
    // Predicated region
    $region41: #{bottleneck_forward.7} parent=5 // pred_check
      _
    $region42: #{bottleneck_forward.7} parent=5 // pred_check_branch
      %228 = sbr.rel (%p225) target = $region44
    $region43: #{bottleneck_forward.7} parent=5 // pred_region
      %s229 = ssub.s32 %s12, 1
      %s230 = smul.u32 32, %s17
      %p231 = scmp.lt.s32.totalorder %s230, 63
      %s232 = scalar_select %p231, %s230, 63
      %s233 = smul.addr %s232, 4
      %s234 = scalar_lea.vmem %s0, %s233
      %p235 = pneg %p38
      %p236 = pneg %p35
      %p237 = pneg %p59
      %p238 = pneg %p56
      %p239 = pneg %p80
      %p240 = pneg %p77
      %s241 = smul.u32 32, %s17
      %p242 = scmp.lt.s32.totalorder %s241, 63
      %s243 = scalar_select %p242, %s241, 63
      %s244 = smul.addr %s243, 4
      %s245 = scalar_lea.vmem %s3, %s244
      %p246 = pneg %p106
      %p247 = pneg %p103
      %p248 = pneg %p127
      %p249 = pneg %p124
      %p250 = pneg %p148
      %p251 = pneg %p145
      %p252 = pneg %p174
      %p253 = pneg %p171
      %s254 = smul.u32 32, %s17
      %p255 = scmp.lt.s32.totalorder %s254, 63
      %s256 = scalar_select %p255, %s254, 63
      %s257 = smul.addr %s256, 8
      %s258 = scalar_lea.vmem %s6, %s257
      %s259 = smul.u32 32, %s17
      %p260 = scmp.lt.s32.totalorder %s259, 63
      %s261 = scalar_select %p260, %s259, 63
      %s262 = smul.addr %s261, 4
      %s263 = scalar_lea.vmem %s0, %s262
      %s264 = smul.u32 32, %s17
      %s265 = smul.u32 32, %s17
      %p266 = scmp.lt.s32.totalorder %s265, 63
      %s267 = scalar_select %p266, %s265, 63
      %s268 = smul.addr %s267, 4
      %s269 = scalar_lea.vmem %s3, %s268
      %s270 = smul.u32 32, %s17
      %s271 = smul.u32 32, %s17
      %p272 = scmp.lt.s32.totalorder %s271, 63
      %s273 = scalar_select %p272, %s271, 63
      %s274 = smul.addr %s273, 8
      %s275 = scalar_lea.vmem %s6, %s274
      %s276 = smul.u32 32, %s17
      %v277 = vld [vmem:[%s263] sm:$0xf]
      %v278 = vld [vmem:[%s263 + $0x4] sm:$0xf]
      %v279 = vld [vmem:[%s263 + $0x8] sm:$0xf]
      %v280 = vld [vmem:[%s263 + $0xc] sm:$0xf]
      %v281 = vld [vmem:[%s263 + $0x10] sm:$0xf]
      %v282 = vld [vmem:[%s263 + $0x14] sm:$0xf]
      %v283 = vld [vmem:[%s263 + $0x18] sm:$0xf]
      %v284 = vld [vmem:[%s263 + $0x1c] sm:$0xf]
      %v285 = vld [vmem:[%s263 + $0x20] sm:$0xf]
      %v286 = vld [vmem:[%s263 + $0x24] sm:$0xf]
      %v287 = vld [vmem:[%s263 + $0x28] sm:$0xf]
      %v288 = vld [vmem:[%s263 + $0x2c] sm:$0xf]
      %v289 = vld [vmem:[%s263 + $0x30] sm:$0xf]
      %v290 = vld [vmem:[%s263 + $0x34] sm:$0xf]
      %v291 = vld [vmem:[%s263 + $0x38] sm:$0xf]
      %v292 = vld [vmem:[%s263 + $0x3c] sm:$0xf]
      %v293 = vld [vmem:[%s263 + $0x40] sm:$0xf]
      %v294 = vld [vmem:[%s263 + $0x44] sm:$0xf]
      %v295 = vld [vmem:[%s263 + $0x48] sm:$0xf]
      %v296 = vld [vmem:[%s263 + $0x4c] sm:$0xf]
      %v297 = vld [vmem:[%s263 + $0x50] sm:$0xf]
      %v298 = vld [vmem:[%s263 + $0x54] sm:$0xf]
      %v299 = vld [vmem:[%s263 + $0x58] sm:$0xf]
      %v300 = vld [vmem:[%s263 + $0x5c] sm:$0xf]
      %v301 = vld [vmem:[%s263 + $0x60] sm:$0xf]
      %v302 = vld [vmem:[%s263 + $0x64] sm:$0xf]
      %v303 = vld [vmem:[%s263 + $0x68] sm:$0xf]
      %v304 = vld [vmem:[%s263 + $0x6c] sm:$0xf]
      %v305 = vld [vmem:[%s263 + $0x70] sm:$0xf]
      %v306 = vld [vmem:[%s263 + $0x74] sm:$0xf]
      %v307 = vld [vmem:[%s263 + $0x78] sm:$0xf]
      %v308 = vld [vmem:[%s263 + $0x7c] sm:$0xf]
      %v309 = vunpack.c.l.bf16 %v277
      %v310 = vunpack.c.l.bf16 %v278
      %v311 = vunpack.c.l.bf16 %v279
      %v312 = vunpack.c.l.bf16 %v280
      %v313 = vunpack.c.l.bf16 %v281
      %v314 = vunpack.c.l.bf16 %v282
      %v315 = vunpack.c.l.bf16 %v283
      %v316 = vunpack.c.l.bf16 %v284
      %v317 = vunpack.c.l.bf16 %v285
      %v318 = vunpack.c.l.bf16 %v286
      %v319 = vunpack.c.l.bf16 %v287
      %v320 = vunpack.c.l.bf16 %v288
      %v321 = vunpack.c.l.bf16 %v289
      %v322 = vunpack.c.l.bf16 %v290
      %v323 = vunpack.c.l.bf16 %v291
      %v324 = vunpack.c.l.bf16 %v292
      %v325 = vunpack.c.l.bf16 %v293
      %v326 = vunpack.c.l.bf16 %v294
      %v327 = vunpack.c.l.bf16 %v295
      %v328 = vunpack.c.l.bf16 %v296
      %v329 = vunpack.c.l.bf16 %v297
      %v330 = vunpack.c.l.bf16 %v298
      %v331 = vunpack.c.l.bf16 %v299
      %v332 = vunpack.c.l.bf16 %v300
      %v333 = vunpack.c.l.bf16 %v301
      %v334 = vunpack.c.l.bf16 %v302
      %v335 = vunpack.c.l.bf16 %v303
      %v336 = vunpack.c.l.bf16 %v304
      %v337 = vunpack.c.l.bf16 %v305
      %v338 = vunpack.c.l.bf16 %v306
      %v339 = vunpack.c.l.bf16 %v307
      %v340 = vunpack.c.l.bf16 %v308
      %v341 = vld [vmem:[%s1] sm:$0x1]
      %v343 = vlaneseq
      %v344 = vshrl.u32 %v343, 7
      %v345 = vsub.s32 0, %v344
      %v346 = vrot.slane %v341, %v345
      %v348 = vmul.f32 %v309, %v346
      %v349 = vmul.f32 %v310, %v346
      %v350 = vmul.f32 %v311, %v346
      %v351 = vmul.f32 %v312, %v346
      %v352 = vmul.f32 %v313, %v346
      %v353 = vmul.f32 %v314, %v346
      %v354 = vmul.f32 %v315, %v346
      %v355 = vmul.f32 %v316, %v346
      %v356 = vmul.f32 %v317, %v346
      %v357 = vmul.f32 %v318, %v346
      %v358 = vmul.f32 %v319, %v346
      %v359 = vmul.f32 %v320, %v346
      %v360 = vmul.f32 %v321, %v346
      %v361 = vmul.f32 %v322, %v346
      %v362 = vmul.f32 %v323, %v346
      %v363 = vmul.f32 %v324, %v346
      %v364 = vmul.f32 %v325, %v346
      %v365 = vmul.f32 %v326, %v346
      %v366 = vmul.f32 %v327, %v346
      %v367 = vmul.f32 %v328, %v346
      %v368 = vmul.f32 %v329, %v346
      %v369 = vmul.f32 %v330, %v346
      %v370 = vmul.f32 %v331, %v346
      %v371 = vmul.f32 %v332, %v346
      %v372 = vmul.f32 %v333, %v346
      %v373 = vmul.f32 %v334, %v346
      %v374 = vmul.f32 %v335, %v346
      %v375 = vmul.f32 %v336, %v346
      %v376 = vmul.f32 %v337, %v346
      %v377 = vmul.f32 %v338, %v346
      %v378 = vmul.f32 %v339, %v346
      %v379 = vmul.f32 %v340, %v346
      %v380 = vld [vmem:[%s2] sm:$0x1]
      %v382 = vlaneseq
      %v383 = vshrl.u32 %v382, 7
      %v384 = vsub.s32 0, %v383
      %v385 = vrot.slane %v380, %v384
      %v387 = vadd.f32 %v348, %v385
      %v388 = vadd.f32 %v349, %v385
      %v389 = vadd.f32 %v350, %v385
      %v390 = vadd.f32 %v351, %v385
      %v391 = vadd.f32 %v352, %v385
      %v392 = vadd.f32 %v353, %v385
      %v393 = vadd.f32 %v354, %v385
      %v394 = vadd.f32 %v355, %v385
      %v395 = vadd.f32 %v356, %v385
      %v396 = vadd.f32 %v357, %v385
      %v397 = vadd.f32 %v358, %v385
      %v398 = vadd.f32 %v359, %v385
      %v399 = vadd.f32 %v360, %v385
      %v400 = vadd.f32 %v361, %v385
      %v401 = vadd.f32 %v362, %v385
      %v402 = vadd.f32 %v363, %v385
      %v403 = vadd.f32 %v364, %v385
      %v404 = vadd.f32 %v365, %v385
      %v405 = vadd.f32 %v366, %v385
      %v406 = vadd.f32 %v367, %v385
      %v407 = vadd.f32 %v368, %v385
      %v408 = vadd.f32 %v369, %v385
      %v409 = vadd.f32 %v370, %v385
      %v410 = vadd.f32 %v371, %v385
      %v411 = vadd.f32 %v372, %v385
      %v412 = vadd.f32 %v373, %v385
      %v413 = vadd.f32 %v374, %v385
      %v414 = vadd.f32 %v375, %v385
      %v415 = vadd.f32 %v376, %v385
      %v416 = vadd.f32 %v377, %v385
      %v417 = vadd.f32 %v378, %v385
      %v418 = vadd.f32 %v379, %v385
      %v419 = vld [vmem:[%s269] sm:$0xf]
      %v420 = vld [vmem:[%s269 + $0x4] sm:$0xf]
      %v421 = vld [vmem:[%s269 + $0x8] sm:$0xf]
      %v422 = vld [vmem:[%s269 + $0xc] sm:$0xf]
      %v423 = vld [vmem:[%s269 + $0x10] sm:$0xf]
      %v424 = vld [vmem:[%s269 + $0x14] sm:$0xf]
      %v425 = vld [vmem:[%s269 + $0x18] sm:$0xf]
      %v426 = vld [vmem:[%s269 + $0x1c] sm:$0xf]
      %v427 = vld [vmem:[%s269 + $0x20] sm:$0xf]
      %v428 = vld [vmem:[%s269 + $0x24] sm:$0xf]
      %v429 = vld [vmem:[%s269 + $0x28] sm:$0xf]
      %v430 = vld [vmem:[%s269 + $0x2c] sm:$0xf]
      %v431 = vld [vmem:[%s269 + $0x30] sm:$0xf]
      %v432 = vld [vmem:[%s269 + $0x34] sm:$0xf]
      %v433 = vld [vmem:[%s269 + $0x38] sm:$0xf]
      %v434 = vld [vmem:[%s269 + $0x3c] sm:$0xf]
      %v435 = vld [vmem:[%s269 + $0x40] sm:$0xf]
      %v436 = vld [vmem:[%s269 + $0x44] sm:$0xf]
      %v437 = vld [vmem:[%s269 + $0x48] sm:$0xf]
      %v438 = vld [vmem:[%s269 + $0x4c] sm:$0xf]
      %v439 = vld [vmem:[%s269 + $0x50] sm:$0xf]
      %v440 = vld [vmem:[%s269 + $0x54] sm:$0xf]
      %v441 = vld [vmem:[%s269 + $0x58] sm:$0xf]
      %v442 = vld [vmem:[%s269 + $0x5c] sm:$0xf]
      %v443 = vld [vmem:[%s269 + $0x60] sm:$0xf]
      %v444 = vld [vmem:[%s269 + $0x64] sm:$0xf]
      %v445 = vld [vmem:[%s269 + $0x68] sm:$0xf]
      %v446 = vld [vmem:[%s269 + $0x6c] sm:$0xf]
      %v447 = vld [vmem:[%s269 + $0x70] sm:$0xf]
      %v448 = vld [vmem:[%s269 + $0x74] sm:$0xf]
      %v449 = vld [vmem:[%s269 + $0x78] sm:$0xf]
      %v450 = vld [vmem:[%s269 + $0x7c] sm:$0xf]
      %v451 = vunpack.c.l.bf16 %v419
      %v452 = vunpack.c.l.bf16 %v420
      %v453 = vunpack.c.l.bf16 %v421
      %v454 = vunpack.c.l.bf16 %v422
      %v455 = vunpack.c.l.bf16 %v423
      %v456 = vunpack.c.l.bf16 %v424
      %v457 = vunpack.c.l.bf16 %v425
      %v458 = vunpack.c.l.bf16 %v426
      %v459 = vunpack.c.l.bf16 %v427
      %v460 = vunpack.c.l.bf16 %v428
      %v461 = vunpack.c.l.bf16 %v429
      %v462 = vunpack.c.l.bf16 %v430
      %v463 = vunpack.c.l.bf16 %v431
      %v464 = vunpack.c.l.bf16 %v432
      %v465 = vunpack.c.l.bf16 %v433
      %v466 = vunpack.c.l.bf16 %v434
      %v467 = vunpack.c.l.bf16 %v435
      %v468 = vunpack.c.l.bf16 %v436
      %v469 = vunpack.c.l.bf16 %v437
      %v470 = vunpack.c.l.bf16 %v438
      %v471 = vunpack.c.l.bf16 %v439
      %v472 = vunpack.c.l.bf16 %v440
      %v473 = vunpack.c.l.bf16 %v441
      %v474 = vunpack.c.l.bf16 %v442
      %v475 = vunpack.c.l.bf16 %v443
      %v476 = vunpack.c.l.bf16 %v444
      %v477 = vunpack.c.l.bf16 %v445
      %v478 = vunpack.c.l.bf16 %v446
      %v479 = vunpack.c.l.bf16 %v447
      %v480 = vunpack.c.l.bf16 %v448
      %v481 = vunpack.c.l.bf16 %v449
      %v482 = vunpack.c.l.bf16 %v450
      %v483 = vld [vmem:[%s4] sm:$0x1]
      %v485 = vlaneseq
      %v486 = vshrl.u32 %v485, 7
      %v487 = vsub.s32 0, %v486
      %v488 = vrot.slane %v483, %v487
      %v490 = vmul.f32 %v451, %v488
      %v491 = vmul.f32 %v452, %v488
      %v492 = vmul.f32 %v453, %v488
      %v493 = vmul.f32 %v454, %v488
      %v494 = vmul.f32 %v455, %v488
      %v495 = vmul.f32 %v456, %v488
      %v496 = vmul.f32 %v457, %v488
      %v497 = vmul.f32 %v458, %v488
      %v498 = vmul.f32 %v459, %v488
      %v499 = vmul.f32 %v460, %v488
      %v500 = vmul.f32 %v461, %v488
      %v501 = vmul.f32 %v462, %v488
      %v502 = vmul.f32 %v463, %v488
      %v503 = vmul.f32 %v464, %v488
      %v504 = vmul.f32 %v465, %v488
      %v505 = vmul.f32 %v466, %v488
      %v506 = vmul.f32 %v467, %v488
      %v507 = vmul.f32 %v468, %v488
      %v508 = vmul.f32 %v469, %v488
      %v509 = vmul.f32 %v470, %v488
      %v510 = vmul.f32 %v471, %v488
      %v511 = vmul.f32 %v472, %v488
      %v512 = vmul.f32 %v473, %v488
      %v513 = vmul.f32 %v474, %v488
      %v514 = vmul.f32 %v475, %v488
      %v515 = vmul.f32 %v476, %v488
      %v516 = vmul.f32 %v477, %v488
      %v517 = vmul.f32 %v478, %v488
      %v518 = vmul.f32 %v479, %v488
      %v519 = vmul.f32 %v480, %v488
      %v520 = vmul.f32 %v481, %v488
      %v521 = vmul.f32 %v482, %v488
      %v522 = vld [vmem:[%s5] sm:$0x1]
      %v524 = vlaneseq
      %v525 = vshrl.u32 %v524, 7
      %v526 = vsub.s32 0, %v525
      %v527 = vrot.slane %v522, %v526
      %v529 = vadd.f32 %v490, %v527
      %v530 = vadd.f32 %v491, %v527
      %v531 = vadd.f32 %v492, %v527
      %v532 = vadd.f32 %v493, %v527
      %v533 = vadd.f32 %v494, %v527
      %v534 = vadd.f32 %v495, %v527
      %v535 = vadd.f32 %v496, %v527
      %v536 = vadd.f32 %v497, %v527
      %v537 = vadd.f32 %v498, %v527
      %v538 = vadd.f32 %v499, %v527
      %v539 = vadd.f32 %v500, %v527
      %v540 = vadd.f32 %v501, %v527
      %v541 = vadd.f32 %v502, %v527
      %v542 = vadd.f32 %v503, %v527
      %v543 = vadd.f32 %v504, %v527
      %v544 = vadd.f32 %v505, %v527
      %v545 = vadd.f32 %v506, %v527
      %v546 = vadd.f32 %v507, %v527
      %v547 = vadd.f32 %v508, %v527
      %v548 = vadd.f32 %v509, %v527
      %v549 = vadd.f32 %v510, %v527
      %v550 = vadd.f32 %v511, %v527
      %v551 = vadd.f32 %v512, %v527
      %v552 = vadd.f32 %v513, %v527
      %v553 = vadd.f32 %v514, %v527
      %v554 = vadd.f32 %v515, %v527
      %v555 = vadd.f32 %v516, %v527
      %v556 = vadd.f32 %v517, %v527
      %v557 = vadd.f32 %v518, %v527
      %v558 = vadd.f32 %v519, %v527
      %v559 = vadd.f32 %v520, %v527
      %v560 = vadd.f32 %v521, %v527
      %v561 = vadd.f32 %v387, %v529
      %v562 = vadd.f32 %v388, %v530
      %v563 = vadd.f32 %v389, %v531
      %v564 = vadd.f32 %v390, %v532
      %v565 = vadd.f32 %v391, %v533
      %v566 = vadd.f32 %v392, %v534
      %v567 = vadd.f32 %v393, %v535
      %v568 = vadd.f32 %v394, %v536
      %v569 = vadd.f32 %v395, %v537
      %v570 = vadd.f32 %v396, %v538
      %v571 = vadd.f32 %v397, %v539
      %v572 = vadd.f32 %v398, %v540
      %v573 = vadd.f32 %v399, %v541
      %v574 = vadd.f32 %v400, %v542
      %v575 = vadd.f32 %v401, %v543
      %v576 = vadd.f32 %v402, %v544
      %v577 = vadd.f32 %v403, %v545
      %v578 = vadd.f32 %v404, %v546
      %v579 = vadd.f32 %v405, %v547
      %v580 = vadd.f32 %v406, %v548
      %v581 = vadd.f32 %v407, %v549
      %v582 = vadd.f32 %v408, %v550
      %v583 = vadd.f32 %v409, %v551
      %v584 = vadd.f32 %v410, %v552
      %v585 = vadd.f32 %v411, %v553
      %v586 = vadd.f32 %v412, %v554
      %v587 = vadd.f32 %v413, %v555
      %v588 = vadd.f32 %v414, %v556
      %v589 = vadd.f32 %v415, %v557
      %v590 = vadd.f32 %v416, %v558
      %v591 = vadd.f32 %v417, %v559
      %v592 = vadd.f32 %v418, %v560
      %v593 = vmax.f32 %v561, 0.0
      %v594 = vmax.f32 %v562, 0.0
      %v595 = vmax.f32 %v563, 0.0
      %v596 = vmax.f32 %v564, 0.0
      %v597 = vmax.f32 %v565, 0.0
      %v598 = vmax.f32 %v566, 0.0
      %v599 = vmax.f32 %v567, 0.0
      %v600 = vmax.f32 %v568, 0.0
      %v601 = vmax.f32 %v569, 0.0
      %v602 = vmax.f32 %v570, 0.0
      %v603 = vmax.f32 %v571, 0.0
      %v604 = vmax.f32 %v572, 0.0
      %v605 = vmax.f32 %v573, 0.0
      %v606 = vmax.f32 %v574, 0.0
      %v607 = vmax.f32 %v575, 0.0
      %v608 = vmax.f32 %v576, 0.0
      %v609 = vmax.f32 %v577, 0.0
      %v610 = vmax.f32 %v578, 0.0
      %v611 = vmax.f32 %v579, 0.0
      %v612 = vmax.f32 %v580, 0.0
      %v613 = vmax.f32 %v581, 0.0
      %v614 = vmax.f32 %v582, 0.0
      %v615 = vmax.f32 %v583, 0.0
      %v616 = vmax.f32 %v584, 0.0
      %v617 = vmax.f32 %v585, 0.0
      %v618 = vmax.f32 %v586, 0.0
      %v619 = vmax.f32 %v587, 0.0
      %v620 = vmax.f32 %v588, 0.0
      %v621 = vmax.f32 %v589, 0.0
      %v622 = vmax.f32 %v590, 0.0
      %v623 = vmax.f32 %v591, 0.0
      %v624 = vmax.f32 %v592, 0.0
      %625 = vst [vmem:[%s275] sm:$0xff] %v593
      %626 = vst [vmem:[%s275 + $0x8] sm:$0xff] %v594
      %627 = vst [vmem:[%s275 + $0x10] sm:$0xff] %v595
      %628 = vst [vmem:[%s275 + $0x18] sm:$0xff] %v596
      %629 = vst [vmem:[%s275 + $0x20] sm:$0xff] %v597
      %630 = vst [vmem:[%s275 + $0x28] sm:$0xff] %v598
      %631 = vst [vmem:[%s275 + $0x30] sm:$0xff] %v599
      %632 = vst [vmem:[%s275 + $0x38] sm:$0xff] %v600
      %633 = vst [vmem:[%s275 + $0x40] sm:$0xff] %v601
      %634 = vst [vmem:[%s275 + $0x48] sm:$0xff] %v602
      %635 = vst [vmem:[%s275 + $0x50] sm:$0xff] %v603
      %636 = vst [vmem:[%s275 + $0x58] sm:$0xff] %v604
      %637 = vst [vmem:[%s275 + $0x60] sm:$0xff] %v605
      %638 = vst [vmem:[%s275 + $0x68] sm:$0xff] %v606
      %639 = vst [vmem:[%s275 + $0x70] sm:$0xff] %v607
      %640 = vst [vmem:[%s275 + $0x78] sm:$0xff] %v608
      %641 = vst [vmem:[%s275 + $0x80] sm:$0xff] %v609
      %642 = vst [vmem:[%s275 + $0x88] sm:$0xff] %v610
      %643 = vst [vmem:[%s275 + $0x90] sm:$0xff] %v611
      %644 = vst [vmem:[%s275 + $0x98] sm:$0xff] %v612
      %645 = vst [vmem:[%s275 + $0xa0] sm:$0xff] %v613
      %646 = vst [vmem:[%s275 + $0xa8] sm:$0xff] %v614
      %647 = vst [vmem:[%s275 + $0xb0] sm:$0xff] %v615
      %648 = vst [vmem:[%s275 + $0xb8] sm:$0xff] %v616
      %649 = vst [vmem:[%s275 + $0xc0] sm:$0xff] %v617
      %650 = vst [vmem:[%s275 + $0xc8] sm:$0xff] %v618
      %651 = vst [vmem:[%s275 + $0xd0] sm:$0xff] %v619
      %652 = vst [vmem:[%s275 + $0xd8] sm:$0xff] %v620
      %653 = vst [vmem:[%s275 + $0xe0] sm:$0xff] %v621
      %654 = vst [vmem:[%s275 + $0xe8] sm:$0xff] %v622
      %655 = vst [vmem:[%s275 + $0xf0] sm:$0xff] %v623
      %656 = vst [vmem:[%s275 + $0xf8] sm:$0xff] %v624
      %s657 = smul.u32 32, %s17
      %p658 = scmp.lt.s32.totalorder %s657, 63
      %s659 = scalar_select %p658, %s657, 63
      %s660 = smul.addr %s659, 8
      %s661 = scalar_lea.vmem %s6, %s660
      // Predicated region
      $region45: #{bottleneck_forward.7} parent=43 // pred_check
        %p662 = pneg %p171
      $region46: #{bottleneck_forward.7} parent=43 // pred_check_branch
        %664 = sbr.rel (%p662) target = $region48
      $region47: #{bottleneck_forward.7} parent=43 // pred_region
        %s665 = smul.u32 32, %s17
      $region48: #{bottleneck_forward.7} parent=43 // pred_fallthru
        _
    $region44: #{bottleneck_forward.7} parent=5 // pred_fallthru
      _
    %p666 = scmp.le.s32.totalorder 2, %s12
    // Predicated region
    $region49: #{bottleneck_forward.7} parent=5 // pred_check
      %p667 = pneg %p666
    $region50: #{bottleneck_forward.7} parent=5 // pred_check_branch
      %669 = sbr.rel (%p667) target = $region52
    $region51: #{bottleneck_forward.7} parent=5 // pred_region
      %s670 = ssub.s32 %s12, 2
      // Predicated region
      $region53: #{bottleneck_forward.7} parent=51 // pred_check
        %p671 = pneg %p177
      $region54: #{bottleneck_forward.7} parent=51 // pred_check_branch
        %673 = sbr.rel (%p671) target = $region56
      $region55: #{bottleneck_forward.7} parent=51 // pred_region
        %s674 = smul.u32 32, %s18
        %p675 = scmp.lt.s32.totalorder %s674, 63
        %s676 = scalar_select %p675, %s674, 63
        %s677 = smul.addr %s676, 8
        %s678 = scalar_lea.vmem %s6, %s677
      $region56: #{bottleneck_forward.7} parent=51 // pred_fallthru
        _
    $region52: #{bottleneck_forward.7} parent=5 // pred_fallthru
      _
  $region6: #{bottleneck_forward.7} parent=0 // loop_footer
    %s16 = sadd.s32 1, %s12
  $region7: #{bottleneck_forward.7} parent=0 // loop_footer_branch
    %11 = sbr.rel target = $region3
  $region8: #{bottleneck_forward.7} parent=0 // loop_exit
    _

// kernel: bottleneck_forward.4
$region0: #{bottleneck_forward.4}
  #allocation0 [shape = 'u32[]', space=smem, size = 0x4, offset = 0x4, fixed_abs, tag = 'smem constant byte address 0x4 - core index']
  #allocation1 [shape = 'u32[144,128]{1,0:T(1,128)}', space=vmem, size = 0x12000, scoped, tag = 'internal scratch']
  %s0 = inlined_call_operand.vmem [shape: bf16[512,128], index: 0, kind: input, shape index: {}]
  %s1 = inlined_call_operand.vmem [shape: bf16[128,128], index: 1, kind: input, shape index: {}]
  %s2 = inlined_call_operand.vmem [shape: bf16[512,128], index: 2, kind: output, shape index: {0}]
  %s3 = inlined_call_operand.vmem [shape: f32[2,1,128], index: 3, kind: output, shape index: {1}]
  %s4 = inlined_call_operand.vmem [shape: f32[2,1,128], index: 4, kind: output, shape index: {2}]
  %5 = xla_tuple %s2, %s3, %s4
  %s6 = sld [smem:[#allocation0]]
  $region57: #{bottleneck_forward.4} parent=0
    _
  %s8 = ssub.s32 1, %s6
  %s9 = scalar_select 0, %s8, %s6
  loop: start=0, step=1, limit=4
  $region2: #{bottleneck_forward.4} parent=0 // loop_pre_header
    _
  $region3: #{bottleneck_forward.4} parent=0 // loop_header
    %s11 = sphi 0, %s15
    %p12 = scmp.ge.s32.totalorder %s11, 4
    %s21 = sphi 0, %s23
    %s24 = sphi 0, %s21
    %s25 = sphi 0, %s24
    %s41 = sphi 0, %s25
    %s45 = sphi 0, %s45
    %s47 = sphi 0, %s45
    %s48 = sphi 0, %s47
    %s62 = sphi 0, %s48
    %s68 = sphi 0, %s70
    %s71 = sphi 0, %s68
    %s72 = sphi 0, %s71
    %s88 = sphi 0, %s72
    %s94 = sphi 0, %s96
    %s97 = sphi 0, %s94
    %s98 = sphi 0, %s97
    %s114 = sphi 0, %s98
    %s120 = sphi 0, %s122
    %s123 = sphi 0, %s120
    %s124 = sphi 0, %s123
    %s140 = sphi 0, %s124
  $region4: #{bottleneck_forward.4} parent=0 // loop_header_branch
    %14 = sbr.rel (%p12) target = $region8
  $region5: #{bottleneck_forward.4} parent=0 // loop_body
    %s16 = ssub.s32 %s11, 1
    %s17 = ssub.s32 %s11, 2
    %s18 = sadd.s32 %s11, 1
    %s19 = ssub.s32 %s11, %s18
    %p20 = scmp.eq.s32.totalorder %s19, 0
    %s22 = sadd.s32 %s21, 1
    %s23 = scalar_select %p20, %s21, %s22
    %p26 = pneg %p20
    %p27 = scmp.eq.s32.totalorder %s11, 1
    %p28 = por %p26, %p27
    %p29 = scmp.ne.s32.totalorder %s21, %s24
    %p30 = scmp.eq.s32.totalorder %s11, 0
    %p31 = por %p29, %p30
    %p32 = scmp.ne.s32.totalorder %s21, %s24
    %p33 = scmp.eq.s32.totalorder %s16, 1
    %p34 = por %p32, %p33
    %p35 = scmp.ne.s32.totalorder %s24, %s25
    %p36 = scmp.eq.s32.totalorder %s16, 0
    %p37 = por %p35, %p36
    %p38 = scmp.ne.s32.totalorder %s24, %s25
    %p39 = scmp.eq.s32.totalorder %s17, 1
    %p40 = por %p38, %p39
    %p42 = scmp.ne.s32.totalorder %s25, %s41
    %p43 = scmp.eq.s32.totalorder %s17, 0
    %p44 = por %p42, %p43
    %s46 = sadd.s32 %s45, 1
    %p49 = scmp.eq.s32.totalorder %s11, 1
    %p50 = scmp.ne.s32.totalorder %s45, %s47
    %p51 = scmp.eq.s32.totalorder %s11, 0
    %p52 = por %p50, %p51
    %p53 = scmp.ne.s32.totalorder %s45, %s47
    %p54 = scmp.eq.s32.totalorder %s16, 1
    %p55 = por %p53, %p54
    %p56 = scmp.ne.s32.totalorder %s47, %s48
    %p57 = scmp.eq.s32.totalorder %s16, 0
    %p58 = por %p56, %p57
    %p59 = scmp.ne.s32.totalorder %s47, %s48
    %p60 = scmp.eq.s32.totalorder %s17, 1
    %p61 = por %p59, %p60
    %p63 = scmp.ne.s32.totalorder %s48, %s62
    %p64 = scmp.eq.s32.totalorder %s17, 0
    %p65 = por %p63, %p64
    %s66 = ssub.s32 %s11, %s18
    %p67 = scmp.eq.s32.totalorder %s66, 0
    %s69 = sadd.s32 %s68, 1
    %s70 = scalar_select %p67, %s68, %s69
    %p73 = pneg %p67
    %p74 = scmp.eq.s32.totalorder %s11, 1
    %p75 = por %p73, %p74
    %p76 = scmp.ne.s32.totalorder %s68, %s71
    %p77 = scmp.eq.s32.totalorder %s11, 0
    %p78 = por %p76, %p77
    %p79 = scmp.ne.s32.totalorder %s68, %s71
    %p80 = scmp.eq.s32.totalorder %s16, 1
    %p81 = por %p79, %p80
    %p82 = scmp.ne.s32.totalorder %s71, %s72
    %p83 = scmp.eq.s32.totalorder %s16, 0
    %p84 = por %p82, %p83
    %p85 = scmp.ne.s32.totalorder %s71, %s72
    %p86 = scmp.eq.s32.totalorder %s17, 1
    %p87 = por %p85, %p86
    %p89 = scmp.ne.s32.totalorder %s72, %s88
    %p90 = scmp.eq.s32.totalorder %s17, 0
    %p91 = por %p89, %p90
    %s92 = ssub.s32 %s11, %s18
    %p93 = scmp.eq.s32.totalorder %s92, 0
    %s95 = sadd.s32 %s94, 1
    %s96 = scalar_select %p93, %s94, %s95
    %p99 = pneg %p93
    %p100 = scmp.eq.s32.totalorder %s11, 1
    %p101 = por %p99, %p100
    %p102 = scmp.ne.s32.totalorder %s94, %s97
    %p103 = scmp.eq.s32.totalorder %s11, 0
    %p104 = por %p102, %p103
    %p105 = scmp.ne.s32.totalorder %s94, %s97
    %p106 = scmp.eq.s32.totalorder %s16, 1
    %p107 = por %p105, %p106
    %p108 = scmp.ne.s32.totalorder %s97, %s98
    %p109 = scmp.eq.s32.totalorder %s16, 0
    %p110 = por %p108, %p109
    %p111 = scmp.ne.s32.totalorder %s97, %s98
    %p112 = scmp.eq.s32.totalorder %s17, 1
    %p113 = por %p111, %p112
    %p115 = scmp.ne.s32.totalorder %s98, %s114
    %p116 = scmp.eq.s32.totalorder %s17, 0
    %p117 = por %p115, %p116
    %s118 = ssub.s32 %s11, %s18
    %p119 = scmp.eq.s32.totalorder %s118, 0
    %s121 = sadd.s32 %s120, 1
    %s122 = scalar_select %p119, %s120, %s121
    %p125 = pneg %p119
    %p126 = scmp.eq.s32.totalorder %s11, 1
    %p127 = por %p125, %p126
    %p128 = scmp.ne.s32.totalorder %s120, %s123
    %p129 = scmp.eq.s32.totalorder %s11, 0
    %p130 = por %p128, %p129
    %p131 = scmp.ne.s32.totalorder %s120, %s123
    %p132 = scmp.eq.s32.totalorder %s16, 1
    %p133 = por %p131, %p132
    %p134 = scmp.ne.s32.totalorder %s123, %s124
    %p135 = scmp.eq.s32.totalorder %s16, 0
    %p136 = por %p134, %p135
    %p137 = scmp.ne.s32.totalorder %s123, %s124
    %p138 = scmp.eq.s32.totalorder %s17, 1
    %p139 = por %p137, %p138
    %p141 = scmp.ne.s32.totalorder %s124, %s140
    %p142 = scmp.eq.s32.totalorder %s17, 0
    %p143 = por %p141, %p142
    %p144 = scmp.le.s32.totalorder 1, %s11
    %p145 = scmp.lt.s32.totalorder %s11, 3
    %p146 = pnand %p144, %p145
    %p147 = pneg %p146
    // Predicated region
    $region9: #{bottleneck_forward.4} parent=5 // pred_check
      _
    $region10: #{bottleneck_forward.4} parent=5 // pred_check_branch
      %149 = sbr.rel (%p146) target = $region12
    $region11: #{bottleneck_forward.4} parent=5 // pred_region
      %s150 = ssub.s32 %s11, 1
      // Predicated region
      $region13: #{bottleneck_forward.4} parent=11 // pred_check
        %p151 = pneg %p58
      $region14: #{bottleneck_forward.4} parent=11 // pred_check_branch
        %153 = sbr.rel (%p151) target = $region16
      $region15: #{bottleneck_forward.4} parent=11 // pred_region
        _
      $region16: #{bottleneck_forward.4} parent=11 // pred_fallthru
        _
    $region12: #{bottleneck_forward.4} parent=5 // pred_fallthru
      _
    %p154 = scmp.lt.s32.totalorder %s11, 2
    // Predicated region
    $region17: #{bottleneck_forward.4} parent=5 // pred_check
      %p155 = pneg %p154
    $region18: #{bottleneck_forward.4} parent=5 // pred_check_branch
      %157 = sbr.rel (%p155) target = $region20
    $region19: #{bottleneck_forward.4} parent=5 // pred_region
      // Predicated region
      $region21: #{bottleneck_forward.4} parent=19 // pred_check
        %p158 = pneg %p31
      $region22: #{bottleneck_forward.4} parent=19 // pred_check_branch
        %160 = sbr.rel (%p158) target = $region24
      $region23: #{bottleneck_forward.4} parent=19 // pred_region
        %s161 = smul.u32 32, %s11
        %p162 = scmp.lt.s32.totalorder %s161, 63
        %s163 = scalar_select %p162, %s161, 63
        %s164 = smul.addr %s163, 4
        %s165 = scalar_lea.vmem %s0, %s164
        %s166 = smul.u32 32, %s11
      $region24: #{bottleneck_forward.4} parent=19 // pred_fallthru
        _
    $region20: #{bottleneck_forward.4} parent=5 // pred_fallthru
      _
    %p167 = scmp.le.s32.totalorder 1, %s11
    %p168 = scmp.lt.s32.totalorder %s11, 3
    %p169 = pnand %p167, %p168
    %p170 = pneg %p169
    // Predicated region
    $region25: #{bottleneck_forward.4} parent=5 // pred_check
      _
    $region26: #{bottleneck_forward.4} parent=5 // pred_check_branch
      %172 = sbr.rel (%p169) target = $region28
    $region27: #{bottleneck_forward.4} parent=5 // pred_region
      %s173 = ssub.s32 %s11, 1
      %s174 = smul.u32 32, %s16
      %p175 = scmp.lt.s32.totalorder %s174, 63
      %s176 = scalar_select %p175, %s174, 63
      %s177 = smul.addr %s176, 4
      %s178 = scalar_lea.vmem %s0, %s177
      %p179 = pneg %p37
      %p180 = pneg %p34
      %p181 = pneg %p58
      %p182 = pneg %p55
      %p183 = pneg %p84
      %p184 = pneg %p81
      %s185 = smul.u32 32, %s16
      %p186 = scmp.lt.s32.totalorder %s185, 63
      %s187 = scalar_select %p186, %s185, 63
      %s188 = smul.addr %s187, 4
      %s189 = scalar_lea.vmem %s2, %s188
      %p190 = pneg %p110
      %p191 = pneg %p107
      %p192 = scmp.lt.s32.totalorder %s16, 1
      %s193 = scalar_select %p192, %s16, 1
      %s194 = scalar_lea.vmem %s3, %s193
      %p195 = pneg %p136
      %p196 = pneg %p133
      %p197 = scmp.lt.s32.totalorder %s16, 1
      %s198 = scalar_select %p197, %s16, 1
      %s199 = scalar_lea.vmem %s4, %s198
      %s200 = smul.u32 32, %s16
      %p201 = scmp.lt.s32.totalorder %s200, 63
      %s202 = scalar_select %p201, %s200, 63
      %s203 = smul.addr %s202, 4
      %s204 = scalar_lea.vmem %s0, %s203
      %s205 = smul.u32 32, %s16
      %s206 = smul.u32 32, %s16
      %p207 = scmp.lt.s32.totalorder %s206, 63
      %s208 = scalar_select %p207, %s206, 63
      %s209 = smul.addr %s208, 4
      %s210 = scalar_lea.vmem %s2, %s209
      %s211 = smul.u32 32, %s16
      %p212 = scmp.lt.s32.totalorder %s16, 1
      %s213 = scalar_select %p212, %s16, 1
      %s214 = scalar_lea.vmem %s3, %s213
      %p215 = scmp.lt.s32.totalorder %s16, 1
      %s216 = scalar_select %p215, %s16, 1
      %s217 = scalar_lea.vmem %s4, %s216
      %v219 = vld [vmem:[%s204] sm:$0xf]
      %v220 = vld [vmem:[%s204 + $0x4] sm:$0xf]
      %v221 = vld [vmem:[%s204 + $0x8] sm:$0xf]
      %v222 = vld [vmem:[%s204 + $0xc] sm:$0xf]
      %v223 = vld [vmem:[%s204 + $0x10] sm:$0xf]
      %v224 = vld [vmem:[%s204 + $0x14] sm:$0xf]
      %v225 = vld [vmem:[%s204 + $0x18] sm:$0xf]
      %v226 = vld [vmem:[%s204 + $0x1c] sm:$0xf]
      %v227 = vld [vmem:[%s204 + $0x20] sm:$0xf]
      %v228 = vld [vmem:[%s204 + $0x24] sm:$0xf]
      %v229 = vld [vmem:[%s204 + $0x28] sm:$0xf]
      %v230 = vld [vmem:[%s204 + $0x2c] sm:$0xf]
      %v231 = vld [vmem:[%s204 + $0x30] sm:$0xf]
      %v232 = vld [vmem:[%s204 + $0x34] sm:$0xf]
      %v233 = vld [vmem:[%s204 + $0x38] sm:$0xf]
      %v234 = vld [vmem:[%s204 + $0x3c] sm:$0xf]
      %v235 = vld [vmem:[%s204 + $0x40] sm:$0xf]
      %v236 = vld [vmem:[%s204 + $0x44] sm:$0xf]
      %v237 = vld [vmem:[%s204 + $0x48] sm:$0xf]
      %v238 = vld [vmem:[%s204 + $0x4c] sm:$0xf]
      %v239 = vld [vmem:[%s204 + $0x50] sm:$0xf]
      %v240 = vld [vmem:[%s204 + $0x54] sm:$0xf]
      %v241 = vld [vmem:[%s204 + $0x58] sm:$0xf]
      %v242 = vld [vmem:[%s204 + $0x5c] sm:$0xf]
      %v243 = vld [vmem:[%s204 + $0x60] sm:$0xf]
      %v244 = vld [vmem:[%s204 + $0x64] sm:$0xf]
      %v245 = vld [vmem:[%s204 + $0x68] sm:$0xf]
      %v246 = vld [vmem:[%s204 + $0x6c] sm:$0xf]
      %v247 = vld [vmem:[%s204 + $0x70] sm:$0xf]
      %v248 = vld [vmem:[%s204 + $0x74] sm:$0xf]
      %v249 = vld [vmem:[%s204 + $0x78] sm:$0xf]
      %v250 = vld [vmem:[%s204 + $0x7c] sm:$0xf]
      %v251 = vld [vmem:[%s1] sm:$0xf]
      %v252 = vld [vmem:[%s1 + $0x4] sm:$0xf]
      %v253 = vld [vmem:[%s1 + $0x8] sm:$0xf]
      %v254 = vld [vmem:[%s1 + $0xc] sm:$0xf]
      %v255 = vld [vmem:[%s1 + $0x10] sm:$0xf]
      %v256 = vld [vmem:[%s1 + $0x14] sm:$0xf]
      %v257 = vld [vmem:[%s1 + $0x18] sm:$0xf]
      %v258 = vld [vmem:[%s1 + $0x1c] sm:$0xf]
      %v259 = vld [vmem:[%s1 + $0x20] sm:$0xf]
      %v260 = vld [vmem:[%s1 + $0x24] sm:$0xf]
      %v261 = vld [vmem:[%s1 + $0x28] sm:$0xf]
      %v262 = vld [vmem:[%s1 + $0x2c] sm:$0xf]
      %v263 = vld [vmem:[%s1 + $0x30] sm:$0xf]
      %v264 = vld [vmem:[%s1 + $0x34] sm:$0xf]
      %v265 = vld [vmem:[%s1 + $0x38] sm:$0xf]
      %v266 = vld [vmem:[%s1 + $0x3c] sm:$0xf]
      %v299 = vunpack.c.l.b16 %v219
      %v300 = vunpack.c.l.b16 %v220
      %v301 = vunpack.c.l.b16 %v221
      %v302 = vunpack.c.l.b16 %v222
      %v303 = vunpack.c.l.b16 %v223
      %v304 = vunpack.c.l.b16 %v224
      %v305 = vunpack.c.l.b16 %v225
      %v306 = vunpack.c.l.b16 %v226
      %v307 = vunpack.c.l.b16 %v227
      %v308 = vunpack.c.l.b16 %v228
      %v309 = vunpack.c.l.b16 %v229
      %v310 = vunpack.c.l.b16 %v230
      %v311 = vunpack.c.l.b16 %v231
      %v312 = vunpack.c.l.b16 %v232
      %v313 = vunpack.c.l.b16 %v233
      %v314 = vunpack.c.l.b16 %v234
      %v315 = vunpack.c.l.b16 %v235
      %v316 = vunpack.c.l.b16 %v236
      %v317 = vunpack.c.l.b16 %v237
      %v318 = vunpack.c.l.b16 %v238
      %v319 = vunpack.c.l.b16 %v239
      %v320 = vunpack.c.l.b16 %v240
      %v321 = vunpack.c.l.b16 %v241
      %v322 = vunpack.c.l.b16 %v242
      %v323 = vunpack.c.l.b16 %v243
      %v324 = vunpack.c.l.b16 %v244
      %v325 = vunpack.c.l.b16 %v245
      %v326 = vunpack.c.l.b16 %v246
      %v327 = vunpack.c.l.b16 %v247
      %v328 = vunpack.c.l.b16 %v248
      %v329 = vunpack.c.l.b16 %v249
      %v330 = vunpack.c.l.b16 %v250
      %v331 = vpack.c.b16 %v300, %v299
      %v332 = vpack.c.b16 %v302, %v301
      %v333 = vpack.c.b16 %v304, %v303
      %v334 = vpack.c.b16 %v306, %v305
      %v335 = vpack.c.b16 %v308, %v307
      %v336 = vpack.c.b16 %v310, %v309
      %v337 = vpack.c.b16 %v312, %v311
      %v338 = vpack.c.b16 %v314, %v313
      %v339 = vpack.c.b16 %v316, %v315
      %v340 = vpack.c.b16 %v318, %v317
      %v341 = vpack.c.b16 %v320, %v319
      %v342 = vpack.c.b16 %v322, %v321
      %v343 = vpack.c.b16 %v324, %v323
      %v344 = vpack.c.b16 %v326, %v325
      %v345 = vpack.c.b16 %v328, %v327
      %v346 = vpack.c.b16 %v330, %v329
      %v379 = vunpack.c.l.b16 %v251
      %v380 = vunpack.c.l.b16 %v252
      %v381 = vunpack.c.l.b16 %v253
      %v382 = vunpack.c.l.b16 %v254
      %v383 = vunpack.c.l.b16 %v255
      %v384 = vunpack.c.l.b16 %v256
      %v385 = vunpack.c.l.b16 %v257
      %v386 = vunpack.c.l.b16 %v258
      %v387 = vunpack.c.l.b16 %v259
      %v388 = vunpack.c.l.b16 %v260
      %v389 = vunpack.c.l.b16 %v261
      %v390 = vunpack.c.l.b16 %v262
      %v391 = vunpack.c.l.b16 %v263
      %v392 = vunpack.c.l.b16 %v264
      %v393 = vunpack.c.l.b16 %v265
      %v394 = vunpack.c.l.b16 %v266
      %v395 = vpack.c.b16 %v380, %v379
      %v396 = vpack.c.b16 %v382, %v381
      %v397 = vpack.c.b16 %v384, %v383
      %v398 = vpack.c.b16 %v386, %v385
      %v399 = vpack.c.b16 %v388, %v387
      %v400 = vpack.c.b16 %v390, %v389
      %v401 = vpack.c.b16 %v392, %v391
      %v402 = vpack.c.b16 %v394, %v393
      %411 = vmatprep.subr.bf16.mxu0 0
      %412 = vmatpush1.bf16.msra.mxu0 %v395
      %413 = vmatprep.subr.bf16.mxu0 0
      %414 = vmatpush1.bf16.msra.mxu0 %v396
      %415 = vmatprep.subr.bf16.mxu0 0
      %416 = vmatpush1.bf16.msra.mxu0 %v397
      %417 = vmatprep.subr.bf16.mxu0 0
      %418 = vmatpush1.bf16.msra.mxu0 %v398
      %419 = vmatprep.subr.bf16.mxu0 0
      %420 = vmatpush1.bf16.msra.mxu0 %v399
      %421 = vmatprep.subr.bf16.mxu0 0
      %422 = vmatpush1.bf16.msra.mxu0 %v400
      %423 = vmatprep.subr.bf16.mxu0 0
      %424 = vmatpush1.bf16.msra.mxu0 %v401
      %425 = vmatprep.subr.bf16.mxu0 0
      %426 = vmatpush1.bf16.msra.mxu0 %v402
      %427 = vmatprep.subr.bf16.mxu0 0
      %428 = vmatpush1.bf16.msra.mxu0 0
      %429 = vmatprep.subr.bf16.mxu0 0
      %430 = vmatpush1.bf16.msra.mxu0 0
      %431 = vmatprep.subr.bf16.mxu0 0
      %432 = vmatpush1.bf16.msra.mxu0 0
      %433 = vmatprep.subr.bf16.mxu0 0
      %434 = vmatpush1.bf16.msra.mxu0 0
      %435 = vmatprep.subr.bf16.mxu0 0
      %436 = vmatpush1.bf16.msra.mxu0 0
      %437 = vmatprep.subr.bf16.mxu0 0
      %438 = vmatpush1.bf16.msra.mxu0 0
      %439 = vmatprep.subr.bf16.mxu0 0
      %440 = vmatpush1.bf16.msra.mxu0 0
      %441 = vmatprep.subr.bf16.mxu0 0
      %442 = vmatpush1.bf16.msra.mxu0 0
      %443 = vmatprep.mubr.bf16.mxu0 0
      %444 = vmatmul.mubr.bf16.gmra.mrb[0].mxu0 %v331
      %v445 = vpop.f32.mrb[0].mxu0
      %v446 = vadd.f32 0.0, %v445
      %v447 = vpop.f32.mrb[0].mxu0
      %v448 = vpop.f32.mrb[0].mxu0
      %v449 = vadd.f32 0.0, %v448
      %v450 = vpop.f32.mrb[0].mxu0
      %451 = vmatprep.mubr.bf16.mxu0 0
      %452 = vmatmul.mubr.bf16.gmra.mrb[0].mxu0 %v332
      %v453 = vpop.f32.mrb[0].mxu0
      %v454 = vadd.f32 0.0, %v453
      %v455 = vpop.f32.mrb[0].mxu0
      %v456 = vpop.f32.mrb[0].mxu0
      %v457 = vadd.f32 0.0, %v456
      %v458 = vpop.f32.mrb[0].mxu0
      %459 = vmatprep.mubr.bf16.mxu0 0
      %460 = vmatmul.mubr.bf16.gmra.mrb[0].mxu0 %v333
      %v461 = vpop.f32.mrb[0].mxu0
      %v462 = vadd.f32 0.0, %v461
      %v463 = vpop.f32.mrb[0].mxu0
      %v464 = vpop.f32.mrb[0].mxu0
      %v465 = vadd.f32 0.0, %v464
      %v466 = vpop.f32.mrb[0].mxu0
      %467 = vmatprep.mubr.bf16.mxu0 0
      %468 = vmatmul.mubr.bf16.gmra.mrb[0].mxu0 %v334
      %v469 = vpop.f32.mrb[0].mxu0
      %v470 = vadd.f32 0.0, %v469
      %v471 = vpop.f32.mrb[0].mxu0
      %v472 = vpop.f32.mrb[0].mxu0
      %v473 = vadd.f32 0.0, %v472
      %v474 = vpop.f32.mrb[0].mxu0
      %475 = vmatprep.mubr.bf16.mxu0 0
      %476 = vmatmul.mubr.bf16.gmra.mrb[0].mxu0 %v335
      %v477 = vpop.f32.mrb[0].mxu0
      %v478 = vadd.f32 0.0, %v477
      %v479 = vpop.f32.mrb[0].mxu0
      %v480 = vpop.f32.mrb[0].mxu0
      %v481 = vadd.f32 0.0, %v480
      %v482 = vpop.f32.mrb[0].mxu0
      %483 = vmatprep.mubr.bf16.mxu0 0
      %484 = vmatmul.mubr.bf16.gmra.mrb[0].mxu0 %v336
      %v485 = vpop.f32.mrb[0].mxu0
      %v486 = vadd.f32 0.0, %v485
      %v487 = vpop.f32.mrb[0].mxu0
      %v488 = vpop.f32.mrb[0].mxu0
      %v489 = vadd.f32 0.0, %v488
      %v490 = vpop.f32.mrb[0].mxu0
      %491 = vmatprep.mubr.bf16.mxu0 0
      %492 = vmatmul.mubr.bf16.gmra.mrb[0].mxu0 %v337
      %v493 = vpop.f32.mrb[0].mxu0
      %v494 = vadd.f32 0.0, %v493
      %v495 = vpop.f32.mrb[0].mxu0
      %v496 = vpop.f32.mrb[0].mxu0
      %v497 = vadd.f32 0.0, %v496
      %v498 = vpop.f32.mrb[0].mxu0
      %499 = vmatprep.mubr.bf16.mxu0 0
      %500 = vmatmul.mubr.bf16.gmra.mrb[0].mxu0 %v338
      %v501 = vpop.f32.mrb[0].mxu0
      %v502 = vadd.f32 0.0, %v501
      %v503 = vpop.f32.mrb[0].mxu0
      %v504 = vpop.f32.mrb[0].mxu0
      %v505 = vadd.f32 0.0, %v504
      %v506 = vpop.f32.mrb[0].mxu0
      %507 = vmatprep.mubr.bf16.mxu0 0
      %508 = vmatmul.mubr.bf16.gmra.mrb[0].mxu0 %v339
      %v509 = vpop.f32.mrb[0].mxu0
      %v510 = vadd.f32 0.0, %v509
      %v511 = vpop.f32.mrb[0].mxu0
      %v512 = vpop.f32.mrb[0].mxu0
      %v513 = vadd.f32 0.0, %v512
      %v514 = vpop.f32.mrb[0].mxu0
      %515 = vmatprep.mubr.bf16.mxu0 0
      %516 = vmatmul.mubr.bf16.gmra.mrb[0].mxu0 %v340
      %v517 = vpop.f32.mrb[0].mxu0
      %v518 = vadd.f32 0.0, %v517
      %v519 = vpop.f32.mrb[0].mxu0
      %v520 = vpop.f32.mrb[0].mxu0
      %v521 = vadd.f32 0.0, %v520
      %v522 = vpop.f32.mrb[0].mxu0
      %523 = vmatprep.mubr.bf16.mxu0 0
      %524 = vmatmul.mubr.bf16.gmra.mrb[0].mxu0 %v341
      %v525 = vpop.f32.mrb[0].mxu0
      %v526 = vadd.f32 0.0, %v525
      %v527 = vpop.f32.mrb[0].mxu0
      %v528 = vpop.f32.mrb[0].mxu0
      %v529 = vadd.f32 0.0, %v528
      %v530 = vpop.f32.mrb[0].mxu0
      %531 = vmatprep.mubr.bf16.mxu0 0
      %532 = vmatmul.mubr.bf16.gmra.mrb[0].mxu0 %v342
      %v533 = vpop.f32.mrb[0].mxu0
      %v534 = vadd.f32 0.0, %v533
      %v535 = vpop.f32.mrb[0].mxu0
      %v536 = vpop.f32.mrb[0].mxu0
      %v537 = vadd.f32 0.0, %v536
      %v538 = vpop.f32.mrb[0].mxu0
      %539 = vmatprep.mubr.bf16.mxu0 0
      %540 = vmatmul.mubr.bf16.gmra.mrb[0].mxu0 %v343
      %v541 = vpop.f32.mrb[0].mxu0
      %v542 = vadd.f32 0.0, %v541
      %v543 = vpop.f32.mrb[0].mxu0
      %v544 = vpop.f32.mrb[0].mxu0
      %v545 = vadd.f32 0.0, %v544
      %v546 = vpop.f32.mrb[0].mxu0
      %547 = vmatprep.mubr.bf16.mxu0 0
      %548 = vmatmul.mubr.bf16.gmra.mrb[0].mxu0 %v344
      %v549 = vpop.f32.mrb[0].mxu0
      %v550 = vadd.f32 0.0, %v549
      %v551 = vpop.f32.mrb[0].mxu0
      %v552 = vpop.f32.mrb[0].mxu0
      %v553 = vadd.f32 0.0, %v552
      %v554 = vpop.f32.mrb[0].mxu0
      %555 = vmatprep.mubr.bf16.mxu0 0
      %556 = vmatmul.mubr.bf16.gmra.mrb[0].mxu0 %v345
      %v557 = vpop.f32.mrb[0].mxu0
      %v558 = vadd.f32 0.0, %v557
      %v559 = vpop.f32.mrb[0].mxu0
      %v560 = vpop.f32.mrb[0].mxu0
      %v561 = vadd.f32 0.0, %v560
      %v562 = vpop.f32.mrb[0].mxu0
      %563 = vmatprep.mubr.bf16.mxu0 0
      %564 = vmatmul.mubr.bf16.gmra.mrb[0].mxu0 %v346
      %v565 = vpop.f32.mrb[0].mxu0
      %v566 = vadd.f32 0.0, %v565
      %v567 = vpop.f32.mrb[0].mxu0
      %v568 = vpop.f32.mrb[0].mxu0
      %v569 = vadd.f32 0.0, %v568
      %v570 = vpop.f32.mrb[0].mxu0
      %571 = vdwg.mxu0
      %v572 = vpack.c.bf16 %v449, %v446
      %v573 = vpack.c.bf16 %v457, %v454
      %v574 = vpack.c.bf16 %v465, %v462
      %v575 = vpack.c.bf16 %v473, %v470
      %v576 = vpack.c.bf16 %v481, %v478
      %v577 = vpack.c.bf16 %v489, %v486
      %v578 = vpack.c.bf16 %v497, %v494
      %v579 = vpack.c.bf16 %v505, %v502
      %v580 = vpack.c.bf16 %v513, %v510
      %v581 = vpack.c.bf16 %v521, %v518
      %v582 = vpack.c.bf16 %v529, %v526
      %v583 = vpack.c.bf16 %v537, %v534
      %v584 = vpack.c.bf16 %v545, %v542
      %v585 = vpack.c.bf16 %v553, %v550
      %v586 = vpack.c.bf16 %v561, %v558
      %v587 = vpack.c.bf16 %v569, %v566
      %v604 = vunpack.c.l.b16 %v572
      %v605 = vunpack.c.h.b16 %v572
      %v606 = vunpack.c.l.b16 %v573
      %v607 = vunpack.c.h.b16 %v573
      %v608 = vunpack.c.l.b16 %v574
      %v609 = vunpack.c.h.b16 %v574
      %v610 = vunpack.c.l.b16 %v575
      %v611 = vunpack.c.h.b16 %v575
      %v612 = vunpack.c.l.b16 %v576
      %v613 = vunpack.c.h.b16 %v576
      %v614 = vunpack.c.l.b16 %v577
      %v615 = vunpack.c.h.b16 %v577
      %v616 = vunpack.c.l.b16 %v578
      %v617 = vunpack.c.h.b16 %v578
      %v618 = vunpack.c.l.b16 %v579
      %v619 = vunpack.c.h.b16 %v579
      %v620 = vunpack.c.l.b16 %v580
      %v621 = vunpack.c.h.b16 %v580
      %v622 = vunpack.c.l.b16 %v581
      %v623 = vunpack.c.h.b16 %v581
      %v624 = vunpack.c.l.b16 %v582
      %v625 = vunpack.c.h.b16 %v582
      %v626 = vunpack.c.l.b16 %v583
      %v627 = vunpack.c.h.b16 %v583
      %v628 = vunpack.c.l.b16 %v584
      %v629 = vunpack.c.h.b16 %v584
      %v630 = vunpack.c.l.b16 %v585
      %v631 = vunpack.c.h.b16 %v585
      %v632 = vunpack.c.l.b16 %v586
      %v633 = vunpack.c.h.b16 %v586
      %v634 = vunpack.c.l.b16 %v587
      %v635 = vunpack.c.h.b16 %v587
      %v636 = vpack.c.b16 %v604, %v604
      %v637 = vpack.c.b16 %v605, %v605
      %v638 = vpack.c.b16 %v606, %v606
      %v639 = vpack.c.b16 %v607, %v607
      %v640 = vpack.c.b16 %v608, %v608
      %v641 = vpack.c.b16 %v609, %v609
      %v642 = vpack.c.b16 %v610, %v610
      %v643 = vpack.c.b16 %v611, %v611
      %v644 = vpack.c.b16 %v612, %v612
      %v645 = vpack.c.b16 %v613, %v613
      %v646 = vpack.c.b16 %v614, %v614
      %v647 = vpack.c.b16 %v615, %v615
      %v648 = vpack.c.b16 %v616, %v616
      %v649 = vpack.c.b16 %v617, %v617
      %v650 = vpack.c.b16 %v618, %v618
      %v651 = vpack.c.b16 %v619, %v619
      %v652 = vpack.c.b16 %v620, %v620
      %v653 = vpack.c.b16 %v621, %v621
      %v654 = vpack.c.b16 %v622, %v622
      %v655 = vpack.c.b16 %v623, %v623
      %v656 = vpack.c.b16 %v624, %v624
      %v657 = vpack.c.b16 %v625, %v625
      %v658 = vpack.c.b16 %v626, %v626
      %v659 = vpack.c.b16 %v627, %v627
      %v660 = vpack.c.b16 %v628, %v628
      %v661 = vpack.c.b16 %v629, %v629
      %v662 = vpack.c.b16 %v630, %v630
      %v663 = vpack.c.b16 %v631, %v631
      %v664 = vpack.c.b16 %v632, %v632
      %v665 = vpack.c.b16 %v633, %v633
      %v666 = vpack.c.b16 %v634, %v634
      %v667 = vpack.c.b16 %v635, %v635
      %700 = vst [vmem:[%s210] sm:$0xf] %v636
      %701 = vst [vmem:[%s210 + $0x4] sm:$0xf] %v637
      %702 = vst [vmem:[%s210 + $0x8] sm:$0xf] %v638
      %703 = vst [vmem:[%s210 + $0xc] sm:$0xf] %v639
      %704 = vst [vmem:[%s210 + $0x10] sm:$0xf] %v640
      %705 = vst [vmem:[%s210 + $0x14] sm:$0xf] %v641
      %706 = vst [vmem:[%s210 + $0x18] sm:$0xf] %v642
      %707 = vst [vmem:[%s210 + $0x1c] sm:$0xf] %v643
      %708 = vst [vmem:[%s210 + $0x20] sm:$0xf] %v644
      %709 = vst [vmem:[%s210 + $0x24] sm:$0xf] %v645
      %710 = vst [vmem:[%s210 + $0x28] sm:$0xf] %v646
      %711 = vst [vmem:[%s210 + $0x2c] sm:$0xf] %v647
      %712 = vst [vmem:[%s210 + $0x30] sm:$0xf] %v648
      %713 = vst [vmem:[%s210 + $0x34] sm:$0xf] %v649
      %714 = vst [vmem:[%s210 + $0x38] sm:$0xf] %v650
      %715 = vst [vmem:[%s210 + $0x3c] sm:$0xf] %v651
      %716 = vst [vmem:[%s210 + $0x40] sm:$0xf] %v652
      %717 = vst [vmem:[%s210 + $0x44] sm:$0xf] %v653
      %718 = vst [vmem:[%s210 + $0x48] sm:$0xf] %v654
      %719 = vst [vmem:[%s210 + $0x4c] sm:$0xf] %v655
      %720 = vst [vmem:[%s210 + $0x50] sm:$0xf] %v656
      %721 = vst [vmem:[%s210 + $0x54] sm:$0xf] %v657
      %722 = vst [vmem:[%s210 + $0x58] sm:$0xf] %v658
      %723 = vst [vmem:[%s210 + $0x5c] sm:$0xf] %v659
      %724 = vst [vmem:[%s210 + $0x60] sm:$0xf] %v660
      %725 = vst [vmem:[%s210 + $0x64] sm:$0xf] %v661
      %726 = vst [vmem:[%s210 + $0x68] sm:$0xf] %v662
      %727 = vst [vmem:[%s210 + $0x6c] sm:$0xf] %v663
      %728 = vst [vmem:[%s210 + $0x70] sm:$0xf] %v664
      %729 = vst [vmem:[%s210 + $0x74] sm:$0xf] %v665
      %730 = vst [vmem:[%s210 + $0x78] sm:$0xf] %v666
      %731 = vst [vmem:[%s210 + $0x7c] sm:$0xf] %v667
      %v732 = vadd.f32 %v446, %v449
      %v733 = vadd.f32 %v732, %v454
      %v734 = vadd.f32 %v733, %v457
      %v735 = vadd.f32 %v734, %v462
      %v736 = vadd.f32 %v735, %v465
      %v737 = vadd.f32 %v736, %v470
      %v738 = vadd.f32 %v737, %v473
      %v739 = vadd.f32 %v738, %v478
      %v740 = vadd.f32 %v739, %v481
      %v741 = vadd.f32 %v740, %v486
      %v742 = vadd.f32 %v741, %v489
      %v743 = vadd.f32 %v742, %v494
      %v744 = vadd.f32 %v743, %v497
      %v745 = vadd.f32 %v744, %v502
      %v746 = vadd.f32 %v745, %v505
      %v747 = vadd.f32 %v746, %v510
      %v748 = vadd.f32 %v747, %v513
      %v749 = vadd.f32 %v748, %v518
      %v750 = vadd.f32 %v749, %v521
      %v751 = vadd.f32 %v750, %v526
      %v752 = vadd.f32 %v751, %v529
      %v753 = vadd.f32 %v752, %v534
      %v754 = vadd.f32 %v753, %v537
      %v755 = vadd.f32 %v754, %v542
      %v756 = vadd.f32 %v755, %v545
      %v757 = vadd.f32 %v756, %v550
      %v758 = vadd.f32 %v757, %v553
      %v759 = vadd.f32 %v758, %v558
      %v760 = vadd.f32 %v759, %v561
      %v761 = vadd.f32 %v760, %v566
      %v762 = vadd.f32 %v761, %v569
      %v763 = vrot.slane %v762, 4
      %v764 = vadd.f32 %v762, %v763
      %v765 = vrot.slane %v764, 2
      %v766 = vadd.f32 %v764, %v765
      %v767 = vrot.slane %v766, 1
      %v768 = vadd.f32 %v766, %v767
      %769 = vst [vmem:[%s214] sm:$0x1] %v768
      %v770 = vmul.f32 %v446, %v446
      %v771 = vmul.f32 %v449, %v449
      %v772 = vmul.f32 %v454, %v454
      %v773 = vmul.f32 %v457, %v457
      %v774 = vmul.f32 %v462, %v462
      %v775 = vmul.f32 %v465, %v465
      %v776 = vmul.f32 %v470, %v470
      %v777 = vmul.f32 %v473, %v473
      %v778 = vmul.f32 %v478, %v478
      %v779 = vmul.f32 %v481, %v481
      %v780 = vmul.f32 %v486, %v486
      %v781 = vmul.f32 %v489, %v489
      %v782 = vmul.f32 %v494, %v494
      %v783 = vmul.f32 %v497, %v497
      %v784 = vmul.f32 %v502, %v502
      %v785 = vmul.f32 %v505, %v505
      %v786 = vmul.f32 %v510, %v510
      %v787 = vmul.f32 %v513, %v513
      %v788 = vmul.f32 %v518, %v518
      %v789 = vmul.f32 %v521, %v521
      %v790 = vmul.f32 %v526, %v526
      %v791 = vmul.f32 %v529, %v529
      %v792 = vmul.f32 %v534, %v534
      %v793 = vmul.f32 %v537, %v537
      %v794 = vmul.f32 %v542, %v542
      %v795 = vmul.f32 %v545, %v545
      %v796 = vmul.f32 %v550, %v550
      %v797 = vmul.f32 %v553, %v553
      %v798 = vmul.f32 %v558, %v558
      %v799 = vmul.f32 %v561, %v561
      %v800 = vmul.f32 %v566, %v566
      %v801 = vmul.f32 %v569, %v569
      %v802 = vadd.f32 %v770, %v771
      %v803 = vadd.f32 %v802, %v772
      %v804 = vadd.f32 %v803, %v773
      %v805 = vadd.f32 %v804, %v774
      %v806 = vadd.f32 %v805, %v775
      %v807 = vadd.f32 %v806, %v776
      %v808 = vadd.f32 %v807, %v777
      %v809 = vadd.f32 %v808, %v778
      %v810 = vadd.f32 %v809, %v779
      %v811 = vadd.f32 %v810, %v780
      %v812 = vadd.f32 %v811, %v781
      %v813 = vadd.f32 %v812, %v782
      %v814 = vadd.f32 %v813, %v783
      %v815 = vadd.f32 %v814, %v784
      %v816 = vadd.f32 %v815, %v785
      %v817 = vadd.f32 %v816, %v786
      %v818 = vadd.f32 %v817, %v787
      %v819 = vadd.f32 %v818, %v788
      %v820 = vadd.f32 %v819, %v789
      %v821 = vadd.f32 %v820, %v790
      %v822 = vadd.f32 %v821, %v791
      %v823 = vadd.f32 %v822, %v792
      %v824 = vadd.f32 %v823, %v793
      %v825 = vadd.f32 %v824, %v794
      %v826 = vadd.f32 %v825, %v795
      %v827 = vadd.f32 %v826, %v796
      %v828 = vadd.f32 %v827, %v797
      %v829 = vadd.f32 %v828, %v798
      %v830 = vadd.f32 %v829, %v799
      %v831 = vadd.f32 %v830, %v800
      %v832 = vadd.f32 %v831, %v801
      %v833 = vrot.slane %v832, 4
      %v834 = vadd.f32 %v832, %v833
      %v835 = vrot.slane %v834, 2
      %v836 = vadd.f32 %v834, %v835
      %v837 = vrot.slane %v836, 1
      %v838 = vadd.f32 %v836, %v837
      %839 = vst [vmem:[%s217] sm:$0x1] %v838
      %s840 = smul.u32 32, %s16
      %p841 = scmp.lt.s32.totalorder %s840, 63
      %s842 = scalar_select %p841, %s840, 63
      %s843 = smul.addr %s842, 4
      %s844 = scalar_lea.vmem %s2, %s843
      %p845 = scmp.lt.s32.totalorder %s16, 1
      %s846 = scalar_select %p845, %s16, 1
      %s847 = scalar_lea.vmem %s3, %s846
      %p848 = scmp.lt.s32.totalorder %s16, 1
      %s849 = scalar_select %p848, %s16, 1
      %s850 = scalar_lea.vmem %s4, %s849
      // Predicated region
      $region29: #{bottleneck_forward.4} parent=27 // pred_check
        %p851 = pneg %p81
      $region30: #{bottleneck_forward.4} parent=27 // pred_check_branch
        %853 = sbr.rel (%p851) target = $region32
      $region31: #{bottleneck_forward.4} parent=27 // pred_region
        %s854 = smul.u32 32, %s16
      $region32: #{bottleneck_forward.4} parent=27 // pred_fallthru
        _
      // Predicated region
      $region33: #{bottleneck_forward.4} parent=27 // pred_check
        %p855 = pneg %p107
      $region34: #{bottleneck_forward.4} parent=27 // pred_check_branch
        %857 = sbr.rel (%p855) target = $region36
      $region35: #{bottleneck_forward.4} parent=27 // pred_region
        _
      $region36: #{bottleneck_forward.4} parent=27 // pred_fallthru
        _
      // Predicated region
      $region37: #{bottleneck_forward.4} parent=27 // pred_check
        %p858 = pneg %p133
      $region38: #{bottleneck_forward.4} parent=27 // pred_check_branch
        %860 = sbr.rel (%p858) target = $region40
      $region39: #{bottleneck_forward.4} parent=27 // pred_region
        _
      $region40: #{bottleneck_forward.4} parent=27 // pred_fallthru
        _
    $region28: #{bottleneck_forward.4} parent=5 // pred_fallthru
      _
    %p861 = scmp.le.s32.totalorder 2, %s11
    // Predicated region
    $region41: #{bottleneck_forward.4} parent=5 // pred_check
      %p862 = pneg %p861
    $region42: #{bottleneck_forward.4} parent=5 // pred_check_branch
      %864 = sbr.rel (%p862) target = $region44
    $region43: #{bottleneck_forward.4} parent=5 // pred_region
      %s865 = ssub.s32 %s11, 2
      // Predicated region
      $region45: #{bottleneck_forward.4} parent=43 // pred_check
        %p866 = pneg %p87
      $region46: #{bottleneck_forward.4} parent=43 // pred_check_branch
        %868 = sbr.rel (%p866) target = $region48
      $region47: #{bottleneck_forward.4} parent=43 // pred_region
        %s869 = smul.u32 32, %s17
        %p870 = scmp.lt.s32.totalorder %s869, 63
        %s871 = scalar_select %p870, %s869, 63
        %s872 = smul.addr %s871, 4
        %s873 = scalar_lea.vmem %s2, %s872
      $region48: #{bottleneck_forward.4} parent=43 // pred_fallthru
        _
      // Predicated region
      $region49: #{bottleneck_forward.4} parent=43 // pred_check
        %p874 = pneg %p113
      $region50: #{bottleneck_forward.4} parent=43 // pred_check_branch
        %876 = sbr.rel (%p874) target = $region52
      $region51: #{bottleneck_forward.4} parent=43 // pred_region
        %p877 = scmp.lt.s32.totalorder %s17, 1
        %s878 = scalar_select %p877, %s17, 1
        %s879 = scalar_lea.vmem %s3, %s878
      $region52: #{bottleneck_forward.4} parent=43 // pred_fallthru
        _
      // Predicated region
      $region53: #{bottleneck_forward.4} parent=43 // pred_check
        %p880 = pneg %p139
      $region54: #{bottleneck_forward.4} parent=43 // pred_check_branch
        %882 = sbr.rel (%p880) target = $region56
      $region55: #{bottleneck_forward.4} parent=43 // pred_region
        %p883 = scmp.lt.s32.totalorder %s17, 1
        %s884 = scalar_select %p883, %s17, 1
        %s885 = scalar_lea.vmem %s4, %s884
      $region56: #{bottleneck_forward.4} parent=43 // pred_fallthru
        _
    $region44: #{bottleneck_forward.4} parent=5 // pred_fallthru
      _
  $region6: #{bottleneck_forward.4} parent=0 // loop_footer
    %s15 = sadd.s32 1, %s11
  $region7: #{bottleneck_forward.4} parent=0 // loop_footer_branch
    %10 = sbr.rel target = $region3
  $region8: #{bottleneck_forward.4} parent=0 // loop_exit
    _

// kernel: bottleneck_forward.6
$region0: #{bottleneck_forward.6}
  #allocation0 [shape = 'u32[]', space=smem, size = 0x4, offset = 0x4, fixed_abs, tag = 'smem constant byte address 0x4 - core index']
  #allocation1 [shape = 'u32[144,128]{1,0:T(1,128)}', space=vmem, size = 0x12000, scoped, tag = 'internal scratch']
  %s0 = inlined_call_operand.vmem [shape: bf16[512,128], index: 0, kind: input, shape index: {}]
  %s1 = inlined_call_operand.vmem [shape: f32[1,128], index: 1, kind: input, shape index: {}]
  %s2 = inlined_call_operand.vmem [shape: f32[1,128], index: 2, kind: input, shape index: {}]
  %s3 = inlined_call_operand.vmem [shape: bf16[128,128], index: 3, kind: input, shape index: {}]
  %s4 = inlined_call_operand.vmem [shape: bf16[512,128], index: 4, kind: input, shape index: {}]
  %s5 = inlined_call_operand.vmem [shape: bf16[128,128], index: 5, kind: input, shape index: {}]
  %s6 = inlined_call_operand.vmem [shape: bf16[512,128], index: 6, kind: output, shape index: {0}]
  %s7 = inlined_call_operand.vmem [shape: f32[2,1,128], index: 7, kind: output, shape index: {1}]
  %s8 = inlined_call_operand.vmem [shape: f32[2,1,128], index: 8, kind: output, shape index: {2}]
  %s9 = inlined_call_operand.vmem [shape: bf16[512,128], index: 9, kind: output, shape index: {3}]
  %s10 = inlined_call_operand.vmem [shape: f32[2,1,128], index: 10, kind: output, shape index: {4}]
  %s11 = inlined_call_operand.vmem [shape: f32[2,1,128], index: 11, kind: output, shape index: {5}]
  %12 = xla_tuple %s6, %s7, %s8, %s9, %s10, %s11
  %s13 = sld [smem:[#allocation0]]
  $region97: #{bottleneck_forward.6} parent=0
    _
  %s15 = ssub.s32 1, %s13
  %s16 = scalar_select 0, %s15, %s13
  loop: start=0, step=1, limit=4
  $region2: #{bottleneck_forward.6} parent=0 // loop_pre_header
    _
  $region3: #{bottleneck_forward.6} parent=0 // loop_header
    %s18 = sphi 0, %s22
    %p19 = scmp.ge.s32.totalorder %s18, 4
    %s28 = sphi 0, %s30
    %s31 = sphi 0, %s28
    %s32 = sphi 0, %s31
    %s48 = sphi 0, %s32
    %s52 = sphi 0, %s52
    %s54 = sphi 0, %s52
    %s55 = sphi 0, %s54
    %s69 = sphi 0, %s55
    %s73 = sphi 0, %s73
    %s75 = sphi 0, %s73
    %s76 = sphi 0, %s75
    %s90 = sphi 0, %s76
    %s94 = sphi 0, %s94
    %s96 = sphi 0, %s94
    %s97 = sphi 0, %s96
    %s111 = sphi 0, %s97
    %s117 = sphi 0, %s119
    %s120 = sphi 0, %s117
    %s121 = sphi 0, %s120
    %s137 = sphi 0, %s121
    %s141 = sphi 0, %s141
    %s143 = sphi 0, %s141
    %s144 = sphi 0, %s143
    %s158 = sphi 0, %s144
    %s164 = sphi 0, %s166
    %s167 = sphi 0, %s164
    %s168 = sphi 0, %s167
    %s184 = sphi 0, %s168
    %s190 = sphi 0, %s192
    %s193 = sphi 0, %s190
    %s194 = sphi 0, %s193
    %s210 = sphi 0, %s194
    %s216 = sphi 0, %s218
    %s219 = sphi 0, %s216
    %s220 = sphi 0, %s219
    %s236 = sphi 0, %s220
    %s242 = sphi 0, %s244
    %s245 = sphi 0, %s242
    %s246 = sphi 0, %s245
    %s262 = sphi 0, %s246
    %s268 = sphi 0, %s270
    %s271 = sphi 0, %s268
    %s272 = sphi 0, %s271
    %s288 = sphi 0, %s272
    %s294 = sphi 0, %s296
    %s297 = sphi 0, %s294
    %s298 = sphi 0, %s297
    %s314 = sphi 0, %s298
  $region4: #{bottleneck_forward.6} parent=0 // loop_header_branch
    %21 = sbr.rel (%p19) target = $region8
  $region5: #{bottleneck_forward.6} parent=0 // loop_body
    %s23 = ssub.s32 %s18, 1
    %s24 = ssub.s32 %s18, 2
    %s25 = sadd.s32 %s18, 1
    %s26 = ssub.s32 %s18, %s25
    %p27 = scmp.eq.s32.totalorder %s26, 0
    %s29 = sadd.s32 %s28, 1
    %s30 = scalar_select %p27, %s28, %s29
    %p33 = pneg %p27
    %p34 = scmp.eq.s32.totalorder %s18, 1
    %p35 = por %p33, %p34
    %p36 = scmp.ne.s32.totalorder %s28, %s31
    %p37 = scmp.eq.s32.totalorder %s18, 0
    %p38 = por %p36, %p37
    %p39 = scmp.ne.s32.totalorder %s28, %s31
    %p40 = scmp.eq.s32.totalorder %s23, 1
    %p41 = por %p39, %p40
    %p42 = scmp.ne.s32.totalorder %s31, %s32
    %p43 = scmp.eq.s32.totalorder %s23, 0
    %p44 = por %p42, %p43
    %p45 = scmp.ne.s32.totalorder %s31, %s32
    %p46 = scmp.eq.s32.totalorder %s24, 1
    %p47 = por %p45, %p46
    %p49 = scmp.ne.s32.totalorder %s32, %s48
    %p50 = scmp.eq.s32.totalorder %s24, 0
    %p51 = por %p49, %p50
    %s53 = sadd.s32 %s52, 1
    %p56 = scmp.eq.s32.totalorder %s18, 1
    %p57 = scmp.ne.s32.totalorder %s52, %s54
    %p58 = scmp.eq.s32.totalorder %s18, 0
    %p59 = por %p57, %p58
    %p60 = scmp.ne.s32.totalorder %s52, %s54
    %p61 = scmp.eq.s32.totalorder %s23, 1
    %p62 = por %p60, %p61
    %p63 = scmp.ne.s32.totalorder %s54, %s55
    %p64 = scmp.eq.s32.totalorder %s23, 0
    %p65 = por %p63, %p64
    %p66 = scmp.ne.s32.totalorder %s54, %s55
    %p67 = scmp.eq.s32.totalorder %s24, 1
    %p68 = por %p66, %p67
    %p70 = scmp.ne.s32.totalorder %s55, %s69
    %p71 = scmp.eq.s32.totalorder %s24, 0
    %p72 = por %p70, %p71
    %s74 = sadd.s32 %s73, 1
    %p77 = scmp.eq.s32.totalorder %s18, 1
    %p78 = scmp.ne.s32.totalorder %s73, %s75
    %p79 = scmp.eq.s32.totalorder %s18, 0
    %p80 = por %p78, %p79
    %p81 = scmp.ne.s32.totalorder %s73, %s75
    %p82 = scmp.eq.s32.totalorder %s23, 1
    %p83 = por %p81, %p82
    %p84 = scmp.ne.s32.totalorder %s75, %s76
    %p85 = scmp.eq.s32.totalorder %s23, 0
    %p86 = por %p84, %p85
    %p87 = scmp.ne.s32.totalorder %s75, %s76
    %p88 = scmp.eq.s32.totalorder %s24, 1
    %p89 = por %p87, %p88
    %p91 = scmp.ne.s32.totalorder %s76, %s90
    %p92 = scmp.eq.s32.totalorder %s24, 0
    %p93 = por %p91, %p92
    %s95 = sadd.s32 %s94, 1
    %p98 = scmp.eq.s32.totalorder %s18, 1
    %p99 = scmp.ne.s32.totalorder %s94, %s96
    %p100 = scmp.eq.s32.totalorder %s18, 0
    %p101 = por %p99, %p100
    %p102 = scmp.ne.s32.totalorder %s94, %s96
    %p103 = scmp.eq.s32.totalorder %s23, 1
    %p104 = por %p102, %p103
    %p105 = scmp.ne.s32.totalorder %s96, %s97
    %p106 = scmp.eq.s32.totalorder %s23, 0
    %p107 = por %p105, %p106
    %p108 = scmp.ne.s32.totalorder %s96, %s97
    %p109 = scmp.eq.s32.totalorder %s24, 1
    %p110 = por %p108, %p109
    %p112 = scmp.ne.s32.totalorder %s97, %s111
    %p113 = scmp.eq.s32.totalorder %s24, 0
    %p114 = por %p112, %p113
    %s115 = ssub.s32 %s18, %s25
    %p116 = scmp.eq.s32.totalorder %s115, 0
    %s118 = sadd.s32 %s117, 1
    %s119 = scalar_select %p116, %s117, %s118
    %p122 = pneg %p116
    %p123 = scmp.eq.s32.totalorder %s18, 1
    %p124 = por %p122, %p123
    %p125 = scmp.ne.s32.totalorder %s117, %s120
    %p126 = scmp.eq.s32.totalorder %s18, 0
    %p127 = por %p125, %p126
    %p128 = scmp.ne.s32.totalorder %s117, %s120
    %p129 = scmp.eq.s32.totalorder %s23, 1
    %p130 = por %p128, %p129
    %p131 = scmp.ne.s32.totalorder %s120, %s121
    %p132 = scmp.eq.s32.totalorder %s23, 0
    %p133 = por %p131, %p132
    %p134 = scmp.ne.s32.totalorder %s120, %s121
    %p135 = scmp.eq.s32.totalorder %s24, 1
    %p136 = por %p134, %p135
    %p138 = scmp.ne.s32.totalorder %s121, %s137
    %p139 = scmp.eq.s32.totalorder %s24, 0
    %p140 = por %p138, %p139
    %s142 = sadd.s32 %s141, 1
    %p145 = scmp.eq.s32.totalorder %s18, 1
    %p146 = scmp.ne.s32.totalorder %s141, %s143
    %p147 = scmp.eq.s32.totalorder %s18, 0
    %p148 = por %p146, %p147
    %p149 = scmp.ne.s32.totalorder %s141, %s143
    %p150 = scmp.eq.s32.totalorder %s23, 1
    %p151 = por %p149, %p150
    %p152 = scmp.ne.s32.totalorder %s143, %s144
    %p153 = scmp.eq.s32.totalorder %s23, 0
    %p154 = por %p152, %p153
    %p155 = scmp.ne.s32.totalorder %s143, %s144
    %p156 = scmp.eq.s32.totalorder %s24, 1
    %p157 = por %p155, %p156
    %p159 = scmp.ne.s32.totalorder %s144, %s158
    %p160 = scmp.eq.s32.totalorder %s24, 0
    %p161 = por %p159, %p160
    %s162 = ssub.s32 %s18, %s25
    %p163 = scmp.eq.s32.totalorder %s162, 0
    %s165 = sadd.s32 %s164, 1
    %s166 = scalar_select %p163, %s164, %s165
    %p169 = pneg %p163
    %p170 = scmp.eq.s32.totalorder %s18, 1
    %p171 = por %p169, %p170
    %p172 = scmp.ne.s32.totalorder %s164, %s167
    %p173 = scmp.eq.s32.totalorder %s18, 0
    %p174 = por %p172, %p173
    %p175 = scmp.ne.s32.totalorder %s164, %s167
    %p176 = scmp.eq.s32.totalorder %s23, 1
    %p177 = por %p175, %p176
    %p178 = scmp.ne.s32.totalorder %s167, %s168
    %p179 = scmp.eq.s32.totalorder %s23, 0
    %p180 = por %p178, %p179
    %p181 = scmp.ne.s32.totalorder %s167, %s168
    %p182 = scmp.eq.s32.totalorder %s24, 1
    %p183 = por %p181, %p182
    %p185 = scmp.ne.s32.totalorder %s168, %s184
    %p186 = scmp.eq.s32.totalorder %s24, 0
    %p187 = por %p185, %p186
    %s188 = ssub.s32 %s18, %s25
    %p189 = scmp.eq.s32.totalorder %s188, 0
    %s191 = sadd.s32 %s190, 1
    %s192 = scalar_select %p189, %s190, %s191
    %p195 = pneg %p189
    %p196 = scmp.eq.s32.totalorder %s18, 1
    %p197 = por %p195, %p196
    %p198 = scmp.ne.s32.totalorder %s190, %s193
    %p199 = scmp.eq.s32.totalorder %s18, 0
    %p200 = por %p198, %p199
    %p201 = scmp.ne.s32.totalorder %s190, %s193
    %p202 = scmp.eq.s32.totalorder %s23, 1
    %p203 = por %p201, %p202
    %p204 = scmp.ne.s32.totalorder %s193, %s194
    %p205 = scmp.eq.s32.totalorder %s23, 0
    %p206 = por %p204, %p205
    %p207 = scmp.ne.s32.totalorder %s193, %s194
    %p208 = scmp.eq.s32.totalorder %s24, 1
    %p209 = por %p207, %p208
    %p211 = scmp.ne.s32.totalorder %s194, %s210
    %p212 = scmp.eq.s32.totalorder %s24, 0
    %p213 = por %p211, %p212
    %s214 = ssub.s32 %s18, %s25
    %p215 = scmp.eq.s32.totalorder %s214, 0
    %s217 = sadd.s32 %s216, 1
    %s218 = scalar_select %p215, %s216, %s217
    %p221 = pneg %p215
    %p222 = scmp.eq.s32.totalorder %s18, 1
    %p223 = por %p221, %p222
    %p224 = scmp.ne.s32.totalorder %s216, %s219
    %p225 = scmp.eq.s32.totalorder %s18, 0
    %p226 = por %p224, %p225
    %p227 = scmp.ne.s32.totalorder %s216, %s219
    %p228 = scmp.eq.s32.totalorder %s23, 1
    %p229 = por %p227, %p228
    %p230 = scmp.ne.s32.totalorder %s219, %s220
    %p231 = scmp.eq.s32.totalorder %s23, 0
    %p232 = por %p230, %p231
    %p233 = scmp.ne.s32.totalorder %s219, %s220
    %p234 = scmp.eq.s32.totalorder %s24, 1
    %p235 = por %p233, %p234
    %p237 = scmp.ne.s32.totalorder %s220, %s236
    %p238 = scmp.eq.s32.totalorder %s24, 0
    %p239 = por %p237, %p238
    %s240 = ssub.s32 %s18, %s25
    %p241 = scmp.eq.s32.totalorder %s240, 0
    %s243 = sadd.s32 %s242, 1
    %s244 = scalar_select %p241, %s242, %s243
    %p247 = pneg %p241
    %p248 = scmp.eq.s32.totalorder %s18, 1
    %p249 = por %p247, %p248
    %p250 = scmp.ne.s32.totalorder %s242, %s245
    %p251 = scmp.eq.s32.totalorder %s18, 0
    %p252 = por %p250, %p251
    %p253 = scmp.ne.s32.totalorder %s242, %s245
    %p254 = scmp.eq.s32.totalorder %s23, 1
    %p255 = por %p253, %p254
    %p256 = scmp.ne.s32.totalorder %s245, %s246
    %p257 = scmp.eq.s32.totalorder %s23, 0
    %p258 = por %p256, %p257
    %p259 = scmp.ne.s32.totalorder %s245, %s246
    %p260 = scmp.eq.s32.totalorder %s24, 1
    %p261 = por %p259, %p260
    %p263 = scmp.ne.s32.totalorder %s246, %s262
    %p264 = scmp.eq.s32.totalorder %s24, 0
    %p265 = por %p263, %p264
    %s266 = ssub.s32 %s18, %s25
    %p267 = scmp.eq.s32.totalorder %s266, 0
    %s269 = sadd.s32 %s268, 1
    %s270 = scalar_select %p267, %s268, %s269
    %p273 = pneg %p267
    %p274 = scmp.eq.s32.totalorder %s18, 1
    %p275 = por %p273, %p274
    %p276 = scmp.ne.s32.totalorder %s268, %s271
    %p277 = scmp.eq.s32.totalorder %s18, 0
    %p278 = por %p276, %p277
    %p279 = scmp.ne.s32.totalorder %s268, %s271
    %p280 = scmp.eq.s32.totalorder %s23, 1
    %p281 = por %p279, %p280
    %p282 = scmp.ne.s32.totalorder %s271, %s272
    %p283 = scmp.eq.s32.totalorder %s23, 0
    %p284 = por %p282, %p283
    %p285 = scmp.ne.s32.totalorder %s271, %s272
    %p286 = scmp.eq.s32.totalorder %s24, 1
    %p287 = por %p285, %p286
    %p289 = scmp.ne.s32.totalorder %s272, %s288
    %p290 = scmp.eq.s32.totalorder %s24, 0
    %p291 = por %p289, %p290
    %s292 = ssub.s32 %s18, %s25
    %p293 = scmp.eq.s32.totalorder %s292, 0
    %s295 = sadd.s32 %s294, 1
    %s296 = scalar_select %p293, %s294, %s295
    %p299 = pneg %p293
    %p300 = scmp.eq.s32.totalorder %s18, 1
    %p301 = por %p299, %p300
    %p302 = scmp.ne.s32.totalorder %s294, %s297
    %p303 = scmp.eq.s32.totalorder %s18, 0
    %p304 = por %p302, %p303
    %p305 = scmp.ne.s32.totalorder %s294, %s297
    %p306 = scmp.eq.s32.totalorder %s23, 1
    %p307 = por %p305, %p306
    %p308 = scmp.ne.s32.totalorder %s297, %s298
    %p309 = scmp.eq.s32.totalorder %s23, 0
    %p310 = por %p308, %p309
    %p311 = scmp.ne.s32.totalorder %s297, %s298
    %p312 = scmp.eq.s32.totalorder %s24, 1
    %p313 = por %p311, %p312
    %p315 = scmp.ne.s32.totalorder %s298, %s314
    %p316 = scmp.eq.s32.totalorder %s24, 0
    %p317 = por %p315, %p316
    %p318 = scmp.le.s32.totalorder 1, %s18
    %p319 = scmp.lt.s32.totalorder %s18, 3
    %p320 = pnand %p318, %p319
    %p321 = pneg %p320
    // Predicated region
    $region9: #{bottleneck_forward.6} parent=5 // pred_check
      _
    $region10: #{bottleneck_forward.6} parent=5 // pred_check_branch
      %323 = sbr.rel (%p320) target = $region12
    $region11: #{bottleneck_forward.6} parent=5 // pred_region
      %s324 = ssub.s32 %s18, 1
      // Predicated region
      $region13: #{bottleneck_forward.6} parent=11 // pred_check
        %p325 = pneg %p65
      $region14: #{bottleneck_forward.6} parent=11 // pred_check_branch
        %327 = sbr.rel (%p325) target = $region16
      $region15: #{bottleneck_forward.6} parent=11 // pred_region
        _
      $region16: #{bottleneck_forward.6} parent=11 // pred_fallthru
        _
      // Predicated region
      $region17: #{bottleneck_forward.6} parent=11 // pred_check
        %p328 = pneg %p86
      $region18: #{bottleneck_forward.6} parent=11 // pred_check_branch
        %330 = sbr.rel (%p328) target = $region20
      $region19: #{bottleneck_forward.6} parent=11 // pred_region
        _
      $region20: #{bottleneck_forward.6} parent=11 // pred_fallthru
        _
      // Predicated region
      $region21: #{bottleneck_forward.6} parent=11 // pred_check
        %p331 = pneg %p107
      $region22: #{bottleneck_forward.6} parent=11 // pred_check_branch
        %333 = sbr.rel (%p331) target = $region24
      $region23: #{bottleneck_forward.6} parent=11 // pred_region
        _
      $region24: #{bottleneck_forward.6} parent=11 // pred_fallthru
        _
      // Predicated region
      $region25: #{bottleneck_forward.6} parent=11 // pred_check
        %p334 = pneg %p154
      $region26: #{bottleneck_forward.6} parent=11 // pred_check_branch
        %336 = sbr.rel (%p334) target = $region28
      $region27: #{bottleneck_forward.6} parent=11 // pred_region
        _
      $region28: #{bottleneck_forward.6} parent=11 // pred_fallthru
        _
    $region12: #{bottleneck_forward.6} parent=5 // pred_fallthru
      _
    %p337 = scmp.lt.s32.totalorder %s18, 2
    // Predicated region
    $region29: #{bottleneck_forward.6} parent=5 // pred_check
      %p338 = pneg %p337
    $region30: #{bottleneck_forward.6} parent=5 // pred_check_branch
      %340 = sbr.rel (%p338) target = $region32
    $region31: #{bottleneck_forward.6} parent=5 // pred_region
      // Predicated region
      $region33: #{bottleneck_forward.6} parent=31 // pred_check
        %p341 = pneg %p38
      $region34: #{bottleneck_forward.6} parent=31 // pred_check_branch
        %343 = sbr.rel (%p341) target = $region36
      $region35: #{bottleneck_forward.6} parent=31 // pred_region
        %s344 = smul.u32 32, %s18
        %p345 = scmp.lt.s32.totalorder %s344, 63
        %s346 = scalar_select %p345, %s344, 63
        %s347 = smul.addr %s346, 4
        %s348 = scalar_lea.vmem %s0, %s347
        %s349 = smul.u32 32, %s18
      $region36: #{bottleneck_forward.6} parent=31 // pred_fallthru
        _
      // Predicated region
      $region37: #{bottleneck_forward.6} parent=31 // pred_check
        %p350 = pneg %p127
      $region38: #{bottleneck_forward.6} parent=31 // pred_check_branch
        %352 = sbr.rel (%p350) target = $region40
      $region39: #{bottleneck_forward.6} parent=31 // pred_region
        %s353 = smul.u32 32, %s18
        %p354 = scmp.lt.s32.totalorder %s353, 63
        %s355 = scalar_select %p354, %s353, 63
        %s356 = smul.addr %s355, 4
        %s357 = scalar_lea.vmem %s4, %s356
        %s358 = smul.u32 32, %s18
      $region40: #{bottleneck_forward.6} parent=31 // pred_fallthru
        _
    $region32: #{bottleneck_forward.6} parent=5 // pred_fallthru
      _
    %p359 = scmp.le.s32.totalorder 1, %s18
    %p360 = scmp.lt.s32.totalorder %s18, 3
    %p361 = pnand %p359, %p360
    %p362 = pneg %p361
    // Predicated region
    $region41: #{bottleneck_forward.6} parent=5 // pred_check
      _
    $region42: #{bottleneck_forward.6} parent=5 // pred_check_branch
      %364 = sbr.rel (%p361) target = $region44
    $region43: #{bottleneck_forward.6} parent=5 // pred_region
      %s365 = ssub.s32 %s18, 1
      %s366 = smul.u32 32, %s23
      %p367 = scmp.lt.s32.totalorder %s366, 63
      %s368 = scalar_select %p367, %s366, 63
      %s369 = smul.addr %s368, 4
      %s370 = scalar_lea.vmem %s0, %s369
      %p371 = pneg %p44
      %p372 = pneg %p41
      %p373 = pneg %p65
      %p374 = pneg %p62
      %p375 = pneg %p86
      %p376 = pneg %p83
      %p377 = pneg %p107
      %p378 = pneg %p104
      %s379 = smul.u32 32, %s23
      %p380 = scmp.lt.s32.totalorder %s379, 63
      %s381 = scalar_select %p380, %s379, 63
      %s382 = smul.addr %s381, 4
      %s383 = scalar_lea.vmem %s4, %s382
      %p384 = pneg %p133
      %p385 = pneg %p130
      %p386 = pneg %p154
      %p387 = pneg %p151
      %p388 = pneg %p180
      %p389 = pneg %p177
      %s390 = smul.u32 32, %s23
      %p391 = scmp.lt.s32.totalorder %s390, 63
      %s392 = scalar_select %p391, %s390, 63
      %s393 = smul.addr %s392, 4
      %s394 = scalar_lea.vmem %s6, %s393
      %p395 = pneg %p206
      %p396 = pneg %p203
      %p397 = scmp.lt.s32.totalorder %s23, 1
      %s398 = scalar_select %p397, %s23, 1
      %s399 = scalar_lea.vmem %s7, %s398
      %p400 = pneg %p232
      %p401 = pneg %p229
      %p402 = scmp.lt.s32.totalorder %s23, 1
      %s403 = scalar_select %p402, %s23, 1
      %s404 = scalar_lea.vmem %s8, %s403
      %p405 = pneg %p258
      %p406 = pneg %p255
      %s407 = smul.u32 32, %s23
      %p408 = scmp.lt.s32.totalorder %s407, 63
      %s409 = scalar_select %p408, %s407, 63
      %s410 = smul.addr %s409, 4
      %s411 = scalar_lea.vmem %s9, %s410
      %p412 = pneg %p284
      %p413 = pneg %p281
      %p414 = scmp.lt.s32.totalorder %s23, 1
      %s415 = scalar_select %p414, %s23, 1
      %s416 = scalar_lea.vmem %s10, %s415
      %p417 = pneg %p310
      %p418 = pneg %p307
      %p419 = scmp.lt.s32.totalorder %s23, 1
      %s420 = scalar_select %p419, %s23, 1
      %s421 = scalar_lea.vmem %s11, %s420
      %s422 = smul.u32 32, %s23
      %p423 = scmp.lt.s32.totalorder %s422, 63
      %s424 = scalar_select %p423, %s422, 63
      %s425 = smul.addr %s424, 4
      %s426 = scalar_lea.vmem %s0, %s425
      %s427 = smul.u32 32, %s23
      %s428 = smul.u32 32, %s23
      %p429 = scmp.lt.s32.totalorder %s428, 63
      %s430 = scalar_select %p429, %s428, 63
      %s431 = smul.addr %s430, 4
      %s432 = scalar_lea.vmem %s4, %s431
      %s433 = smul.u32 32, %s23
      %s434 = smul.u32 32, %s23
      %p435 = scmp.lt.s32.totalorder %s434, 63
      %s436 = scalar_select %p435, %s434, 63
      %s437 = smul.addr %s436, 4
      %s438 = scalar_lea.vmem %s6, %s437
      %s439 = smul.u32 32, %s23
      %p440 = scmp.lt.s32.totalorder %s23, 1
      %s441 = scalar_select %p440, %s23, 1
      %s442 = scalar_lea.vmem %s7, %s441
      %p443 = scmp.lt.s32.totalorder %s23, 1
      %s444 = scalar_select %p443, %s23, 1
      %s445 = scalar_lea.vmem %s8, %s444
      %s446 = smul.u32 32, %s23
      %p447 = scmp.lt.s32.totalorder %s446, 63
      %s448 = scalar_select %p447, %s446, 63
      %s449 = smul.addr %s448, 4
      %s450 = scalar_lea.vmem %s9, %s449
      %s451 = smul.u32 32, %s23
      %p452 = scmp.lt.s32.totalorder %s23, 1
      %s453 = scalar_select %p452, %s23, 1
      %s454 = scalar_lea.vmem %s10, %s453
      %p455 = scmp.lt.s32.totalorder %s23, 1
      %s456 = scalar_select %p455, %s23, 1
      %s457 = scalar_lea.vmem %s11, %s456
      %v459 = vld [vmem:[%s426] sm:$0xf]
      %v460 = vld [vmem:[%s426 + $0x4] sm:$0xf]
      %v461 = vld [vmem:[%s426 + $0x8] sm:$0xf]
      %v462 = vld [vmem:[%s426 + $0xc] sm:$0xf]
      %v463 = vld [vmem:[%s426 + $0x10] sm:$0xf]
      %v464 = vld [vmem:[%s426 + $0x14] sm:$0xf]
      %v465 = vld [vmem:[%s426 + $0x18] sm:$0xf]
      %v466 = vld [vmem:[%s426 + $0x1c] sm:$0xf]
      %v467 = vld [vmem:[%s426 + $0x20] sm:$0xf]
      %v468 = vld [vmem:[%s426 + $0x24] sm:$0xf]
      %v469 = vld [vmem:[%s426 + $0x28] sm:$0xf]
      %v470 = vld [vmem:[%s426 + $0x2c] sm:$0xf]
      %v471 = vld [vmem:[%s426 + $0x30] sm:$0xf]
      %v472 = vld [vmem:[%s426 + $0x34] sm:$0xf]
      %v473 = vld [vmem:[%s426 + $0x38] sm:$0xf]
      %v474 = vld [vmem:[%s426 + $0x3c] sm:$0xf]
      %v475 = vld [vmem:[%s426 + $0x40] sm:$0xf]
      %v476 = vld [vmem:[%s426 + $0x44] sm:$0xf]
      %v477 = vld [vmem:[%s426 + $0x48] sm:$0xf]
      %v478 = vld [vmem:[%s426 + $0x4c] sm:$0xf]
      %v479 = vld [vmem:[%s426 + $0x50] sm:$0xf]
      %v480 = vld [vmem:[%s426 + $0x54] sm:$0xf]
      %v481 = vld [vmem:[%s426 + $0x58] sm:$0xf]
      %v482 = vld [vmem:[%s426 + $0x5c] sm:$0xf]
      %v483 = vld [vmem:[%s426 + $0x60] sm:$0xf]
      %v484 = vld [vmem:[%s426 + $0x64] sm:$0xf]
      %v485 = vld [vmem:[%s426 + $0x68] sm:$0xf]
      %v486 = vld [vmem:[%s426 + $0x6c] sm:$0xf]
      %v487 = vld [vmem:[%s426 + $0x70] sm:$0xf]
      %v488 = vld [vmem:[%s426 + $0x74] sm:$0xf]
      %v489 = vld [vmem:[%s426 + $0x78] sm:$0xf]
      %v490 = vld [vmem:[%s426 + $0x7c] sm:$0xf]
      %v491 = vunpack.c.l.bf16 %v459
      %v492 = vunpack.c.l.bf16 %v460
      %v493 = vunpack.c.l.bf16 %v461
      %v494 = vunpack.c.l.bf16 %v462
      %v495 = vunpack.c.l.bf16 %v463
      %v496 = vunpack.c.l.bf16 %v464
      %v497 = vunpack.c.l.bf16 %v465
      %v498 = vunpack.c.l.bf16 %v466
      %v499 = vunpack.c.l.bf16 %v467
      %v500 = vunpack.c.l.bf16 %v468
      %v501 = vunpack.c.l.bf16 %v469
      %v502 = vunpack.c.l.bf16 %v470
      %v503 = vunpack.c.l.bf16 %v471
      %v504 = vunpack.c.l.bf16 %v472
      %v505 = vunpack.c.l.bf16 %v473
      %v506 = vunpack.c.l.bf16 %v474
      %v507 = vunpack.c.l.bf16 %v475
      %v508 = vunpack.c.l.bf16 %v476
      %v509 = vunpack.c.l.bf16 %v477
      %v510 = vunpack.c.l.bf16 %v478
      %v511 = vunpack.c.l.bf16 %v479
      %v512 = vunpack.c.l.bf16 %v480
      %v513 = vunpack.c.l.bf16 %v481
      %v514 = vunpack.c.l.bf16 %v482
      %v515 = vunpack.c.l.bf16 %v483
      %v516 = vunpack.c.l.bf16 %v484
      %v517 = vunpack.c.l.bf16 %v485
      %v518 = vunpack.c.l.bf16 %v486
      %v519 = vunpack.c.l.bf16 %v487
      %v520 = vunpack.c.l.bf16 %v488
      %v521 = vunpack.c.l.bf16 %v489
      %v522 = vunpack.c.l.bf16 %v490
      %v523 = vld [vmem:[%s1] sm:$0x1]
      %v525 = vlaneseq
      %v526 = vshrl.u32 %v525, 7
      %v527 = vsub.s32 0, %v526
      %v528 = vrot.slane %v523, %v527
      %v530 = vmul.f32 %v491, %v528
      %v531 = vmul.f32 %v492, %v528
      %v532 = vmul.f32 %v493, %v528
      %v533 = vmul.f32 %v494, %v528
      %v534 = vmul.f32 %v495, %v528
      %v535 = vmul.f32 %v496, %v528
      %v536 = vmul.f32 %v497, %v528
      %v537 = vmul.f32 %v498, %v528
      %v538 = vmul.f32 %v499, %v528
      %v539 = vmul.f32 %v500, %v528
      %v540 = vmul.f32 %v501, %v528
      %v541 = vmul.f32 %v502, %v528
      %v542 = vmul.f32 %v503, %v528
      %v543 = vmul.f32 %v504, %v528
      %v544 = vmul.f32 %v505, %v528
      %v545 = vmul.f32 %v506, %v528
      %v546 = vmul.f32 %v507, %v528
      %v547 = vmul.f32 %v508, %v528
      %v548 = vmul.f32 %v509, %v528
      %v549 = vmul.f32 %v510, %v528
      %v550 = vmul.f32 %v511, %v528
      %v551 = vmul.f32 %v512, %v528
      %v552 = vmul.f32 %v513, %v528
      %v553 = vmul.f32 %v514, %v528
      %v554 = vmul.f32 %v515, %v528
      %v555 = vmul.f32 %v516, %v528
      %v556 = vmul.f32 %v517, %v528
      %v557 = vmul.f32 %v518, %v528
      %v558 = vmul.f32 %v519, %v528
      %v559 = vmul.f32 %v520, %v528
      %v560 = vmul.f32 %v521, %v528
      %v561 = vmul.f32 %v522, %v528
      %v562 = vld [vmem:[%s2] sm:$0x1]
      %v564 = vlaneseq
      %v565 = vshrl.u32 %v564, 7
      %v566 = vsub.s32 0, %v565
      %v567 = vrot.slane %v562, %v566
      %v569 = vadd.f32 %v530, %v567
      %v570 = vadd.f32 %v531, %v567
      %v571 = vadd.f32 %v532, %v567
      %v572 = vadd.f32 %v533, %v567
      %v573 = vadd.f32 %v534, %v567
      %v574 = vadd.f32 %v535, %v567
      %v575 = vadd.f32 %v536, %v567
      %v576 = vadd.f32 %v537, %v567
      %v577 = vadd.f32 %v538, %v567
      %v578 = vadd.f32 %v539, %v567
      %v579 = vadd.f32 %v540, %v567
      %v580 = vadd.f32 %v541, %v567
      %v581 = vadd.f32 %v542, %v567
      %v582 = vadd.f32 %v543, %v567
      %v583 = vadd.f32 %v544, %v567
      %v584 = vadd.f32 %v545, %v567
      %v585 = vadd.f32 %v546, %v567
      %v586 = vadd.f32 %v547, %v567
      %v587 = vadd.f32 %v548, %v567
      %v588 = vadd.f32 %v549, %v567
      %v589 = vadd.f32 %v550, %v567
      %v590 = vadd.f32 %v551, %v567
      %v591 = vadd.f32 %v552, %v567
      %v592 = vadd.f32 %v553, %v567
      %v593 = vadd.f32 %v554, %v567
      %v594 = vadd.f32 %v555, %v567
      %v595 = vadd.f32 %v556, %v567
      %v596 = vadd.f32 %v557, %v567
      %v597 = vadd.f32 %v558, %v567
      %v598 = vadd.f32 %v559, %v567
      %v599 = vadd.f32 %v560, %v567
      %v600 = vadd.f32 %v561, %v567
      %v601 = vmax.f32 %v569, 0.0
      %v602 = vmax.f32 %v570, 0.0
      %v603 = vmax.f32 %v571, 0.0
      %v604 = vmax.f32 %v572, 0.0
      %v605 = vmax.f32 %v573, 0.0
      %v606 = vmax.f32 %v574, 0.0
      %v607 = vmax.f32 %v575, 0.0
      %v608 = vmax.f32 %v576, 0.0
      %v609 = vmax.f32 %v577, 0.0
      %v610 = vmax.f32 %v578, 0.0
      %v611 = vmax.f32 %v579, 0.0
      %v612 = vmax.f32 %v580, 0.0
      %v613 = vmax.f32 %v581, 0.0
      %v614 = vmax.f32 %v582, 0.0
      %v615 = vmax.f32 %v583, 0.0
      %v616 = vmax.f32 %v584, 0.0
      %v617 = vmax.f32 %v585, 0.0
      %v618 = vmax.f32 %v586, 0.0
      %v619 = vmax.f32 %v587, 0.0
      %v620 = vmax.f32 %v588, 0.0
      %v621 = vmax.f32 %v589, 0.0
      %v622 = vmax.f32 %v590, 0.0
      %v623 = vmax.f32 %v591, 0.0
      %v624 = vmax.f32 %v592, 0.0
      %v625 = vmax.f32 %v593, 0.0
      %v626 = vmax.f32 %v594, 0.0
      %v627 = vmax.f32 %v595, 0.0
      %v628 = vmax.f32 %v596, 0.0
      %v629 = vmax.f32 %v597, 0.0
      %v630 = vmax.f32 %v598, 0.0
      %v631 = vmax.f32 %v599, 0.0
      %v632 = vmax.f32 %v600, 0.0
      %v633 = vpack.c.bf16 %v602, %v601
      %v634 = vpack.c.bf16 %v604, %v603
      %v635 = vpack.c.bf16 %v606, %v605
      %v636 = vpack.c.bf16 %v608, %v607
      %v637 = vpack.c.bf16 %v610, %v609
      %v638 = vpack.c.bf16 %v612, %v611
      %v639 = vpack.c.bf16 %v614, %v613
      %v640 = vpack.c.bf16 %v616, %v615
      %v641 = vpack.c.bf16 %v618, %v617
      %v642 = vpack.c.bf16 %v620, %v619
      %v643 = vpack.c.bf16 %v622, %v621
      %v644 = vpack.c.bf16 %v624, %v623
      %v645 = vpack.c.bf16 %v626, %v625
      %v646 = vpack.c.bf16 %v628, %v627
      %v647 = vpack.c.bf16 %v630, %v629
      %v648 = vpack.c.bf16 %v632, %v631
      %v649 = vld [vmem:[%s3] sm:$0xf]
      %v650 = vld [vmem:[%s3 + $0x4] sm:$0xf]
      %v651 = vld [vmem:[%s3 + $0x8] sm:$0xf]
      %v652 = vld [vmem:[%s3 + $0xc] sm:$0xf]
      %v653 = vld [vmem:[%s3 + $0x10] sm:$0xf]
      %v654 = vld [vmem:[%s3 + $0x14] sm:$0xf]
      %v655 = vld [vmem:[%s3 + $0x18] sm:$0xf]
      %v656 = vld [vmem:[%s3 + $0x1c] sm:$0xf]
      %v657 = vld [vmem:[%s3 + $0x20] sm:$0xf]
      %v658 = vld [vmem:[%s3 + $0x24] sm:$0xf]
      %v659 = vld [vmem:[%s3 + $0x28] sm:$0xf]
      %v660 = vld [vmem:[%s3 + $0x2c] sm:$0xf]
      %v661 = vld [vmem:[%s3 + $0x30] sm:$0xf]
      %v662 = vld [vmem:[%s3 + $0x34] sm:$0xf]
      %v663 = vld [vmem:[%s3 + $0x38] sm:$0xf]
      %v664 = vld [vmem:[%s3 + $0x3c] sm:$0xf]
      %v681 = vunpack.c.l.b16 %v649
      %v682 = vunpack.c.l.b16 %v650
      %v683 = vunpack.c.l.b16 %v651
      %v684 = vunpack.c.l.b16 %v652
      %v685 = vunpack.c.l.b16 %v653
      %v686 = vunpack.c.l.b16 %v654
      %v687 = vunpack.c.l.b16 %v655
      %v688 = vunpack.c.l.b16 %v656
      %v689 = vunpack.c.l.b16 %v657
      %v690 = vunpack.c.l.b16 %v658
      %v691 = vunpack.c.l.b16 %v659
      %v692 = vunpack.c.l.b16 %v660
      %v693 = vunpack.c.l.b16 %v661
      %v694 = vunpack.c.l.b16 %v662
      %v695 = vunpack.c.l.b16 %v663
      %v696 = vunpack.c.l.b16 %v664
      %v697 = vpack.c.b16 %v682, %v681
      %v698 = vpack.c.b16 %v684, %v683
      %v699 = vpack.c.b16 %v686, %v685
      %v700 = vpack.c.b16 %v688, %v687
      %v701 = vpack.c.b16 %v690, %v689
      %v702 = vpack.c.b16 %v692, %v691
      %v703 = vpack.c.b16 %v694, %v693
      %v704 = vpack.c.b16 %v696, %v695
      %713 = vmatprep.subr.bf16.mxu0 0
      %714 = vmatpush1.bf16.msra.mxu0 %v697
      %715 = vmatprep.subr.bf16.mxu0 0
      %716 = vmatpush1.bf16.msra.mxu0 %v698
      %717 = vmatprep.subr.bf16.mxu0 0
      %718 = vmatpush1.bf16.msra.mxu0 %v699
      %719 = vmatprep.subr.bf16.mxu0 0
      %720 = vmatpush1.bf16.msra.mxu0 %v700
      %721 = vmatprep.subr.bf16.mxu0 0
      %722 = vmatpush1.bf16.msra.mxu0 %v701
      %723 = vmatprep.subr.bf16.mxu0 0
      %724 = vmatpush1.bf16.msra.mxu0 %v702
      %725 = vmatprep.subr.bf16.mxu0 0
      %726 = vmatpush1.bf16.msra.mxu0 %v703
      %727 = vmatprep.subr.bf16.mxu0 0
      %728 = vmatpush1.bf16.msra.mxu0 %v704
      %729 = vmatprep.subr.bf16.mxu0 0
      %730 = vmatpush1.bf16.msra.mxu0 0
      %731 = vmatprep.subr.bf16.mxu0 0
      %732 = vmatpush1.bf16.msra.mxu0 0
      %733 = vmatprep.subr.bf16.mxu0 0
      %734 = vmatpush1.bf16.msra.mxu0 0
      %735 = vmatprep.subr.bf16.mxu0 0
      %736 = vmatpush1.bf16.msra.mxu0 0
      %737 = vmatprep.subr.bf16.mxu0 0
      %738 = vmatpush1.bf16.msra.mxu0 0
      %739 = vmatprep.subr.bf16.mxu0 0
      %740 = vmatpush1.bf16.msra.mxu0 0
      %741 = vmatprep.subr.bf16.mxu0 0
      %742 = vmatpush1.bf16.msra.mxu0 0
      %743 = vmatprep.subr.bf16.mxu0 0
      %744 = vmatpush1.bf16.msra.mxu0 0
      %745 = vmatprep.mubr.bf16.mxu0 0
      %746 = vmatmul.mubr.bf16.gmra.mrb[0].mxu0 %v633
      %v747 = vpop.f32.mrb[0].mxu0
      %v748 = vadd.f32 0.0, %v747
      %v749 = vpop.f32.mrb[0].mxu0
      %v750 = vpop.f32.mrb[0].mxu0
      %v751 = vadd.f32 0.0, %v750
      %v752 = vpop.f32.mrb[0].mxu0
      %753 = vmatprep.mubr.bf16.mxu0 0
      %754 = vmatmul.mubr.bf16.gmra.mrb[0].mxu0 %v634
      %v755 = vpop.f32.mrb[0].mxu0
      %v756 = vadd.f32 0.0, %v755
      %v757 = vpop.f32.mrb[0].mxu0
      %v758 = vpop.f32.mrb[0].mxu0
      %v759 = vadd.f32 0.0, %v758
      %v760 = vpop.f32.mrb[0].mxu0
      %761 = vmatprep.mubr.bf16.mxu0 0
      %762 = vmatmul.mubr.bf16.gmra.mrb[0].mxu0 %v635
      %v763 = vpop.f32.mrb[0].mxu0
      %v764 = vadd.f32 0.0, %v763
      %v765 = vpop.f32.mrb[0].mxu0
      %v766 = vpop.f32.mrb[0].mxu0
      %v767 = vadd.f32 0.0, %v766
      %v768 = vpop.f32.mrb[0].mxu0
      %769 = vmatprep.mubr.bf16.mxu0 0
      %770 = vmatmul.mubr.bf16.gmra.mrb[0].mxu0 %v636
      %v771 = vpop.f32.mrb[0].mxu0
      %v772 = vadd.f32 0.0, %v771
      %v773 = vpop.f32.mrb[0].mxu0
      %v774 = vpop.f32.mrb[0].mxu0
      %v775 = vadd.f32 0.0, %v774
      %v776 = vpop.f32.mrb[0].mxu0
      %777 = vmatprep.mubr.bf16.mxu0 0
      %778 = vmatmul.mubr.bf16.gmra.mrb[0].mxu0 %v637
      %v779 = vpop.f32.mrb[0].mxu0
      %v780 = vadd.f32 0.0, %v779
      %v781 = vpop.f32.mrb[0].mxu0
      %v782 = vpop.f32.mrb[0].mxu0
      %v783 = vadd.f32 0.0, %v782
      %v784 = vpop.f32.mrb[0].mxu0
      %785 = vmatprep.mubr.bf16.mxu0 0
      %786 = vmatmul.mubr.bf16.gmra.mrb[0].mxu0 %v638
      %v787 = vpop.f32.mrb[0].mxu0
      %v788 = vadd.f32 0.0, %v787
      %v789 = vpop.f32.mrb[0].mxu0
      %v790 = vpop.f32.mrb[0].mxu0
      %v791 = vadd.f32 0.0, %v790
      %v792 = vpop.f32.mrb[0].mxu0
      %793 = vmatprep.mubr.bf16.mxu0 0
      %794 = vmatmul.mubr.bf16.gmra.mrb[0].mxu0 %v639
      %v795 = vpop.f32.mrb[0].mxu0
      %v796 = vadd.f32 0.0, %v795
      %v797 = vpop.f32.mrb[0].mxu0
      %v798 = vpop.f32.mrb[0].mxu0
      %v799 = vadd.f32 0.0, %v798
      %v800 = vpop.f32.mrb[0].mxu0
      %801 = vmatprep.mubr.bf16.mxu0 0
      %802 = vmatmul.mubr.bf16.gmra.mrb[0].mxu0 %v640
      %v803 = vpop.f32.mrb[0].mxu0
      %v804 = vadd.f32 0.0, %v803
      %v805 = vpop.f32.mrb[0].mxu0
      %v806 = vpop.f32.mrb[0].mxu0
      %v807 = vadd.f32 0.0, %v806
      %v808 = vpop.f32.mrb[0].mxu0
      %809 = vmatprep.mubr.bf16.mxu0 0
      %810 = vmatmul.mubr.bf16.gmra.mrb[0].mxu0 %v641
      %v811 = vpop.f32.mrb[0].mxu0
      %v812 = vadd.f32 0.0, %v811
      %v813 = vpop.f32.mrb[0].mxu0
      %v814 = vpop.f32.mrb[0].mxu0
      %v815 = vadd.f32 0.0, %v814
      %v816 = vpop.f32.mrb[0].mxu0
      %817 = vmatprep.mubr.bf16.mxu0 0
      %818 = vmatmul.mubr.bf16.gmra.mrb[0].mxu0 %v642
      %v819 = vpop.f32.mrb[0].mxu0
      %v820 = vadd.f32 0.0, %v819
      %v821 = vpop.f32.mrb[0].mxu0
      %v822 = vpop.f32.mrb[0].mxu0
      %v823 = vadd.f32 0.0, %v822
      %v824 = vpop.f32.mrb[0].mxu0
      %825 = vmatprep.mubr.bf16.mxu0 0
      %826 = vmatmul.mubr.bf16.gmra.mrb[0].mxu0 %v643
      %v827 = vpop.f32.mrb[0].mxu0
      %v828 = vadd.f32 0.0, %v827
      %v829 = vpop.f32.mrb[0].mxu0
      %v830 = vpop.f32.mrb[0].mxu0
      %v831 = vadd.f32 0.0, %v830
      %v832 = vpop.f32.mrb[0].mxu0
      %833 = vmatprep.mubr.bf16.mxu0 0
      %834 = vmatmul.mubr.bf16.gmra.mrb[0].mxu0 %v644
      %v835 = vpop.f32.mrb[0].mxu0
      %v836 = vadd.f32 0.0, %v835
      %v837 = vpop.f32.mrb[0].mxu0
      %v838 = vpop.f32.mrb[0].mxu0
      %v839 = vadd.f32 0.0, %v838
      %v840 = vpop.f32.mrb[0].mxu0
      %841 = vmatprep.mubr.bf16.mxu0 0
      %842 = vmatmul.mubr.bf16.gmra.mrb[0].mxu0 %v645
      %v843 = vpop.f32.mrb[0].mxu0
      %v844 = vadd.f32 0.0, %v843
      %v845 = vpop.f32.mrb[0].mxu0
      %v846 = vpop.f32.mrb[0].mxu0
      %v847 = vadd.f32 0.0, %v846
      %v848 = vpop.f32.mrb[0].mxu0
      %849 = vmatprep.mubr.bf16.mxu0 0
      %850 = vmatmul.mubr.bf16.gmra.mrb[0].mxu0 %v646
      %v851 = vpop.f32.mrb[0].mxu0
      %v852 = vadd.f32 0.0, %v851
      %v853 = vpop.f32.mrb[0].mxu0
      %v854 = vpop.f32.mrb[0].mxu0
      %v855 = vadd.f32 0.0, %v854
      %v856 = vpop.f32.mrb[0].mxu0
      %857 = vmatprep.mubr.bf16.mxu0 0
      %858 = vmatmul.mubr.bf16.gmra.mrb[0].mxu0 %v647
      %v859 = vpop.f32.mrb[0].mxu0
      %v860 = vadd.f32 0.0, %v859
      %v861 = vpop.f32.mrb[0].mxu0
      %v862 = vpop.f32.mrb[0].mxu0
      %v863 = vadd.f32 0.0, %v862
      %v864 = vpop.f32.mrb[0].mxu0
      %865 = vmatprep.mubr.bf16.mxu0 0
      %866 = vmatmul.mubr.bf16.gmra.mrb[0].mxu0 %v648
      %v867 = vpop.f32.mrb[0].mxu0
      %v868 = vadd.f32 0.0, %v867
      %v869 = vpop.f32.mrb[0].mxu0
      %v870 = vpop.f32.mrb[0].mxu0
      %v871 = vadd.f32 0.0, %v870
      %v872 = vpop.f32.mrb[0].mxu0
      %873 = vdwg.mxu0
      %v874 = vpack.c.bf16 %v751, %v748
      %v875 = vpack.c.bf16 %v759, %v756
      %v876 = vpack.c.bf16 %v767, %v764
      %v877 = vpack.c.bf16 %v775, %v772
      %v878 = vpack.c.bf16 %v783, %v780
      %v879 = vpack.c.bf16 %v791, %v788
      %v880 = vpack.c.bf16 %v799, %v796
      %v881 = vpack.c.bf16 %v807, %v804
      %v882 = vpack.c.bf16 %v815, %v812
      %v883 = vpack.c.bf16 %v823, %v820
      %v884 = vpack.c.bf16 %v831, %v828
      %v885 = vpack.c.bf16 %v839, %v836
      %v886 = vpack.c.bf16 %v847, %v844
      %v887 = vpack.c.bf16 %v855, %v852
      %v888 = vpack.c.bf16 %v863, %v860
      %v889 = vpack.c.bf16 %v871, %v868
      %v906 = vunpack.c.l.b16 %v874
      %v907 = vunpack.c.h.b16 %v874
      %v908 = vunpack.c.l.b16 %v875
      %v909 = vunpack.c.h.b16 %v875
      %v910 = vunpack.c.l.b16 %v876
      %v911 = vunpack.c.h.b16 %v876
      %v912 = vunpack.c.l.b16 %v877
      %v913 = vunpack.c.h.b16 %v877
      %v914 = vunpack.c.l.b16 %v878
      %v915 = vunpack.c.h.b16 %v878
      %v916 = vunpack.c.l.b16 %v879
      %v917 = vunpack.c.h.b16 %v879
      %v918 = vunpack.c.l.b16 %v880
      %v919 = vunpack.c.h.b16 %v880
      %v920 = vunpack.c.l.b16 %v881
      %v921 = vunpack.c.h.b16 %v881
      %v922 = vunpack.c.l.b16 %v882
      %v923 = vunpack.c.h.b16 %v882
      %v924 = vunpack.c.l.b16 %v883
      %v925 = vunpack.c.h.b16 %v883
      %v926 = vunpack.c.l.b16 %v884
      %v927 = vunpack.c.h.b16 %v884
      %v928 = vunpack.c.l.b16 %v885
      %v929 = vunpack.c.h.b16 %v885
      %v930 = vunpack.c.l.b16 %v886
      %v931 = vunpack.c.h.b16 %v886
      %v932 = vunpack.c.l.b16 %v887
      %v933 = vunpack.c.h.b16 %v887
      %v934 = vunpack.c.l.b16 %v888
      %v935 = vunpack.c.h.b16 %v888
      %v936 = vunpack.c.l.b16 %v889
      %v937 = vunpack.c.h.b16 %v889
      %v938 = vpack.c.b16 %v906, %v906
      %v939 = vpack.c.b16 %v907, %v907
      %v940 = vpack.c.b16 %v908, %v908
      %v941 = vpack.c.b16 %v909, %v909
      %v942 = vpack.c.b16 %v910, %v910
      %v943 = vpack.c.b16 %v911, %v911
      %v944 = vpack.c.b16 %v912, %v912
      %v945 = vpack.c.b16 %v913, %v913
      %v946 = vpack.c.b16 %v914, %v914
      %v947 = vpack.c.b16 %v915, %v915
      %v948 = vpack.c.b16 %v916, %v916
      %v949 = vpack.c.b16 %v917, %v917
      %v950 = vpack.c.b16 %v918, %v918
      %v951 = vpack.c.b16 %v919, %v919
      %v952 = vpack.c.b16 %v920, %v920
      %v953 = vpack.c.b16 %v921, %v921
      %v954 = vpack.c.b16 %v922, %v922
      %v955 = vpack.c.b16 %v923, %v923
      %v956 = vpack.c.b16 %v924, %v924
      %v957 = vpack.c.b16 %v925, %v925
      %v958 = vpack.c.b16 %v926, %v926
      %v959 = vpack.c.b16 %v927, %v927
      %v960 = vpack.c.b16 %v928, %v928
      %v961 = vpack.c.b16 %v929, %v929
      %v962 = vpack.c.b16 %v930, %v930
      %v963 = vpack.c.b16 %v931, %v931
      %v964 = vpack.c.b16 %v932, %v932
      %v965 = vpack.c.b16 %v933, %v933
      %v966 = vpack.c.b16 %v934, %v934
      %v967 = vpack.c.b16 %v935, %v935
      %v968 = vpack.c.b16 %v936, %v936
      %v969 = vpack.c.b16 %v937, %v937
      %1002 = vst [vmem:[%s438] sm:$0xf] %v938
      %1003 = vst [vmem:[%s438 + $0x4] sm:$0xf] %v939
      %1004 = vst [vmem:[%s438 + $0x8] sm:$0xf] %v940
      %1005 = vst [vmem:[%s438 + $0xc] sm:$0xf] %v941
      %1006 = vst [vmem:[%s438 + $0x10] sm:$0xf] %v942
      %1007 = vst [vmem:[%s438 + $0x14] sm:$0xf] %v943
      %1008 = vst [vmem:[%s438 + $0x18] sm:$0xf] %v944
      %1009 = vst [vmem:[%s438 + $0x1c] sm:$0xf] %v945
      %1010 = vst [vmem:[%s438 + $0x20] sm:$0xf] %v946
      %1011 = vst [vmem:[%s438 + $0x24] sm:$0xf] %v947
      %1012 = vst [vmem:[%s438 + $0x28] sm:$0xf] %v948
      %1013 = vst [vmem:[%s438 + $0x2c] sm:$0xf] %v949
      %1014 = vst [vmem:[%s438 + $0x30] sm:$0xf] %v950
      %1015 = vst [vmem:[%s438 + $0x34] sm:$0xf] %v951
      %1016 = vst [vmem:[%s438 + $0x38] sm:$0xf] %v952
      %1017 = vst [vmem:[%s438 + $0x3c] sm:$0xf] %v953
      %1018 = vst [vmem:[%s438 + $0x40] sm:$0xf] %v954
      %1019 = vst [vmem:[%s438 + $0x44] sm:$0xf] %v955
      %1020 = vst [vmem:[%s438 + $0x48] sm:$0xf] %v956
      %1021 = vst [vmem:[%s438 + $0x4c] sm:$0xf] %v957
      %1022 = vst [vmem:[%s438 + $0x50] sm:$0xf] %v958
      %1023 = vst [vmem:[%s438 + $0x54] sm:$0xf] %v959
      %1024 = vst [vmem:[%s438 + $0x58] sm:$0xf] %v960
      %1025 = vst [vmem:[%s438 + $0x5c] sm:$0xf] %v961
      %1026 = vst [vmem:[%s438 + $0x60] sm:$0xf] %v962
      %1027 = vst [vmem:[%s438 + $0x64] sm:$0xf] %v963
      %1028 = vst [vmem:[%s438 + $0x68] sm:$0xf] %v964
      %1029 = vst [vmem:[%s438 + $0x6c] sm:$0xf] %v965
      %1030 = vst [vmem:[%s438 + $0x70] sm:$0xf] %v966
      %1031 = vst [vmem:[%s438 + $0x74] sm:$0xf] %v967
      %1032 = vst [vmem:[%s438 + $0x78] sm:$0xf] %v968
      %1033 = vst [vmem:[%s438 + $0x7c] sm:$0xf] %v969
      %v1034 = vadd.f32 %v748, %v751
      %v1035 = vadd.f32 %v1034, %v756
      %v1036 = vadd.f32 %v1035, %v759
      %v1037 = vadd.f32 %v1036, %v764
      %v1038 = vadd.f32 %v1037, %v767
      %v1039 = vadd.f32 %v1038, %v772
      %v1040 = vadd.f32 %v1039, %v775
      %v1041 = vadd.f32 %v1040, %v780
      %v1042 = vadd.f32 %v1041, %v783
      %v1043 = vadd.f32 %v1042, %v788
      %v1044 = vadd.f32 %v1043, %v791
      %v1045 = vadd.f32 %v1044, %v796
      %v1046 = vadd.f32 %v1045, %v799
      %v1047 = vadd.f32 %v1046, %v804
      %v1048 = vadd.f32 %v1047, %v807
      %v1049 = vadd.f32 %v1048, %v812
      %v1050 = vadd.f32 %v1049, %v815
      %v1051 = vadd.f32 %v1050, %v820
      %v1052 = vadd.f32 %v1051, %v823
      %v1053 = vadd.f32 %v1052, %v828
      %v1054 = vadd.f32 %v1053, %v831
      %v1055 = vadd.f32 %v1054, %v836
      %v1056 = vadd.f32 %v1055, %v839
      %v1057 = vadd.f32 %v1056, %v844
      %v1058 = vadd.f32 %v1057, %v847
      %v1059 = vadd.f32 %v1058, %v852
      %v1060 = vadd.f32 %v1059, %v855
      %v1061 = vadd.f32 %v1060, %v860
      %v1062 = vadd.f32 %v1061, %v863
      %v1063 = vadd.f32 %v1062, %v868
      %v1064 = vadd.f32 %v1063, %v871
      %v1065 = vrot.slane %v1064, 4
      %v1066 = vadd.f32 %v1064, %v1065
      %v1067 = vrot.slane %v1066, 2
      %v1068 = vadd.f32 %v1066, %v1067
      %v1069 = vrot.slane %v1068, 1
      %v1070 = vadd.f32 %v1068, %v1069
      %1071 = vst [vmem:[%s442] sm:$0x1] %v1070
      %v1072 = vmul.f32 %v748, %v748
      %v1073 = vmul.f32 %v751, %v751
      %v1074 = vmul.f32 %v756, %v756
      %v1075 = vmul.f32 %v759, %v759
      %v1076 = vmul.f32 %v764, %v764
      %v1077 = vmul.f32 %v767, %v767
      %v1078 = vmul.f32 %v772, %v772
      %v1079 = vmul.f32 %v775, %v775
      %v1080 = vmul.f32 %v780, %v780
      %v1081 = vmul.f32 %v783, %v783
      %v1082 = vmul.f32 %v788, %v788
      %v1083 = vmul.f32 %v791, %v791
      %v1084 = vmul.f32 %v796, %v796
      %v1085 = vmul.f32 %v799, %v799
      %v1086 = vmul.f32 %v804, %v804
      %v1087 = vmul.f32 %v807, %v807
      %v1088 = vmul.f32 %v812, %v812
      %v1089 = vmul.f32 %v815, %v815
      %v1090 = vmul.f32 %v820, %v820
      %v1091 = vmul.f32 %v823, %v823
      %v1092 = vmul.f32 %v828, %v828
      %v1093 = vmul.f32 %v831, %v831
      %v1094 = vmul.f32 %v836, %v836
      %v1095 = vmul.f32 %v839, %v839
      %v1096 = vmul.f32 %v844, %v844
      %v1097 = vmul.f32 %v847, %v847
      %v1098 = vmul.f32 %v852, %v852
      %v1099 = vmul.f32 %v855, %v855
      %v1100 = vmul.f32 %v860, %v860
      %v1101 = vmul.f32 %v863, %v863
      %v1102 = vmul.f32 %v868, %v868
      %v1103 = vmul.f32 %v871, %v871
      %v1104 = vadd.f32 %v1072, %v1073
      %v1105 = vadd.f32 %v1104, %v1074
      %v1106 = vadd.f32 %v1105, %v1075
      %v1107 = vadd.f32 %v1106, %v1076
      %v1108 = vadd.f32 %v1107, %v1077
      %v1109 = vadd.f32 %v1108, %v1078
      %v1110 = vadd.f32 %v1109, %v1079
      %v1111 = vadd.f32 %v1110, %v1080
      %v1112 = vadd.f32 %v1111, %v1081
      %v1113 = vadd.f32 %v1112, %v1082
      %v1114 = vadd.f32 %v1113, %v1083
      %v1115 = vadd.f32 %v1114, %v1084
      %v1116 = vadd.f32 %v1115, %v1085
      %v1117 = vadd.f32 %v1116, %v1086
      %v1118 = vadd.f32 %v1117, %v1087
      %v1119 = vadd.f32 %v1118, %v1088
      %v1120 = vadd.f32 %v1119, %v1089
      %v1121 = vadd.f32 %v1120, %v1090
      %v1122 = vadd.f32 %v1121, %v1091
      %v1123 = vadd.f32 %v1122, %v1092
      %v1124 = vadd.f32 %v1123, %v1093
      %v1125 = vadd.f32 %v1124, %v1094
      %v1126 = vadd.f32 %v1125, %v1095
      %v1127 = vadd.f32 %v1126, %v1096
      %v1128 = vadd.f32 %v1127, %v1097
      %v1129 = vadd.f32 %v1128, %v1098
      %v1130 = vadd.f32 %v1129, %v1099
      %v1131 = vadd.f32 %v1130, %v1100
      %v1132 = vadd.f32 %v1131, %v1101
      %v1133 = vadd.f32 %v1132, %v1102
      %v1134 = vadd.f32 %v1133, %v1103
      %v1135 = vrot.slane %v1134, 4
      %v1136 = vadd.f32 %v1134, %v1135
      %v1137 = vrot.slane %v1136, 2
      %v1138 = vadd.f32 %v1136, %v1137
      %v1139 = vrot.slane %v1138, 1
      %v1140 = vadd.f32 %v1138, %v1139
      %1141 = vst [vmem:[%s445] sm:$0x1] %v1140
      %v1142 = vld [vmem:[%s432] sm:$0xf]
      %v1143 = vld [vmem:[%s432 + $0x4] sm:$0xf]
      %v1144 = vld [vmem:[%s432 + $0x8] sm:$0xf]
      %v1145 = vld [vmem:[%s432 + $0xc] sm:$0xf]
      %v1146 = vld [vmem:[%s432 + $0x10] sm:$0xf]
      %v1147 = vld [vmem:[%s432 + $0x14] sm:$0xf]
      %v1148 = vld [vmem:[%s432 + $0x18] sm:$0xf]
      %v1149 = vld [vmem:[%s432 + $0x1c] sm:$0xf]
      %v1150 = vld [vmem:[%s432 + $0x20] sm:$0xf]
      %v1151 = vld [vmem:[%s432 + $0x24] sm:$0xf]
      %v1152 = vld [vmem:[%s432 + $0x28] sm:$0xf]
      %v1153 = vld [vmem:[%s432 + $0x2c] sm:$0xf]
      %v1154 = vld [vmem:[%s432 + $0x30] sm:$0xf]
      %v1155 = vld [vmem:[%s432 + $0x34] sm:$0xf]
      %v1156 = vld [vmem:[%s432 + $0x38] sm:$0xf]
      %v1157 = vld [vmem:[%s432 + $0x3c] sm:$0xf]
      %v1158 = vld [vmem:[%s432 + $0x40] sm:$0xf]
      %v1159 = vld [vmem:[%s432 + $0x44] sm:$0xf]
      %v1160 = vld [vmem:[%s432 + $0x48] sm:$0xf]
      %v1161 = vld [vmem:[%s432 + $0x4c] sm:$0xf]
      %v1162 = vld [vmem:[%s432 + $0x50] sm:$0xf]
      %v1163 = vld [vmem:[%s432 + $0x54] sm:$0xf]
      %v1164 = vld [vmem:[%s432 + $0x58] sm:$0xf]
      %v1165 = vld [vmem:[%s432 + $0x5c] sm:$0xf]
      %v1166 = vld [vmem:[%s432 + $0x60] sm:$0xf]
      %v1167 = vld [vmem:[%s432 + $0x64] sm:$0xf]
      %v1168 = vld [vmem:[%s432 + $0x68] sm:$0xf]
      %v1169 = vld [vmem:[%s432 + $0x6c] sm:$0xf]
      %v1170 = vld [vmem:[%s432 + $0x70] sm:$0xf]
      %v1171 = vld [vmem:[%s432 + $0x74] sm:$0xf]
      %v1172 = vld [vmem:[%s432 + $0x78] sm:$0xf]
      %v1173 = vld [vmem:[%s432 + $0x7c] sm:$0xf]
      %v1174 = vld [vmem:[%s5] sm:$0xf]
      %v1175 = vld [vmem:[%s5 + $0x4] sm:$0xf]
      %v1176 = vld [vmem:[%s5 + $0x8] sm:$0xf]
      %v1177 = vld [vmem:[%s5 + $0xc] sm:$0xf]
      %v1178 = vld [vmem:[%s5 + $0x10] sm:$0xf]
      %v1179 = vld [vmem:[%s5 + $0x14] sm:$0xf]
      %v1180 = vld [vmem:[%s5 + $0x18] sm:$0xf]
      %v1181 = vld [vmem:[%s5 + $0x1c] sm:$0xf]
      %v1182 = vld [vmem:[%s5 + $0x20] sm:$0xf]
      %v1183 = vld [vmem:[%s5 + $0x24] sm:$0xf]
      %v1184 = vld [vmem:[%s5 + $0x28] sm:$0xf]
      %v1185 = vld [vmem:[%s5 + $0x2c] sm:$0xf]
      %v1186 = vld [vmem:[%s5 + $0x30] sm:$0xf]
      %v1187 = vld [vmem:[%s5 + $0x34] sm:$0xf]
      %v1188 = vld [vmem:[%s5 + $0x38] sm:$0xf]
      %v1189 = vld [vmem:[%s5 + $0x3c] sm:$0xf]
      %v1222 = vunpack.c.l.b16 %v1142
      %v1223 = vunpack.c.l.b16 %v1143
      %v1224 = vunpack.c.l.b16 %v1144
      %v1225 = vunpack.c.l.b16 %v1145
      %v1226 = vunpack.c.l.b16 %v1146
      %v1227 = vunpack.c.l.b16 %v1147
      %v1228 = vunpack.c.l.b16 %v1148
      %v1229 = vunpack.c.l.b16 %v1149
      %v1230 = vunpack.c.l.b16 %v1150
      %v1231 = vunpack.c.l.b16 %v1151
      %v1232 = vunpack.c.l.b16 %v1152
      %v1233 = vunpack.c.l.b16 %v1153
      %v1234 = vunpack.c.l.b16 %v1154
      %v1235 = vunpack.c.l.b16 %v1155
      %v1236 = vunpack.c.l.b16 %v1156
      %v1237 = vunpack.c.l.b16 %v1157
      %v1238 = vunpack.c.l.b16 %v1158
      %v1239 = vunpack.c.l.b16 %v1159
      %v1240 = vunpack.c.l.b16 %v1160
      %v1241 = vunpack.c.l.b16 %v1161
      %v1242 = vunpack.c.l.b16 %v1162
      %v1243 = vunpack.c.l.b16 %v1163
      %v1244 = vunpack.c.l.b16 %v1164
      %v1245 = vunpack.c.l.b16 %v1165
      %v1246 = vunpack.c.l.b16 %v1166
      %v1247 = vunpack.c.l.b16 %v1167
      %v1248 = vunpack.c.l.b16 %v1168
      %v1249 = vunpack.c.l.b16 %v1169
      %v1250 = vunpack.c.l.b16 %v1170
      %v1251 = vunpack.c.l.b16 %v1171
      %v1252 = vunpack.c.l.b16 %v1172
      %v1253 = vunpack.c.l.b16 %v1173
      %v1254 = vpack.c.b16 %v1223, %v1222
      %v1255 = vpack.c.b16 %v1225, %v1224
      %v1256 = vpack.c.b16 %v1227, %v1226
      %v1257 = vpack.c.b16 %v1229, %v1228
      %v1258 = vpack.c.b16 %v1231, %v1230
      %v1259 = vpack.c.b16 %v1233, %v1232
      %v1260 = vpack.c.b16 %v1235, %v1234
      %v1261 = vpack.c.b16 %v1237, %v1236
      %v1262 = vpack.c.b16 %v1239, %v1238
      %v1263 = vpack.c.b16 %v1241, %v1240
      %v1264 = vpack.c.b16 %v1243, %v1242
      %v1265 = vpack.c.b16 %v1245, %v1244
      %v1266 = vpack.c.b16 %v1247, %v1246
      %v1267 = vpack.c.b16 %v1249, %v1248
      %v1268 = vpack.c.b16 %v1251, %v1250
      %v1269 = vpack.c.b16 %v1253, %v1252
      %v1302 = vunpack.c.l.b16 %v1174
      %v1303 = vunpack.c.l.b16 %v1175
      %v1304 = vunpack.c.l.b16 %v1176
      %v1305 = vunpack.c.l.b16 %v1177
      %v1306 = vunpack.c.l.b16 %v1178
      %v1307 = vunpack.c.l.b16 %v1179
      %v1308 = vunpack.c.l.b16 %v1180
      %v1309 = vunpack.c.l.b16 %v1181
      %v1310 = vunpack.c.l.b16 %v1182
      %v1311 = vunpack.c.l.b16 %v1183
      %v1312 = vunpack.c.l.b16 %v1184
      %v1313 = vunpack.c.l.b16 %v1185
      %v1314 = vunpack.c.l.b16 %v1186
      %v1315 = vunpack.c.l.b16 %v1187
      %v1316 = vunpack.c.l.b16 %v1188
      %v1317 = vunpack.c.l.b16 %v1189
      %v1318 = vpack.c.b16 %v1303, %v1302
      %v1319 = vpack.c.b16 %v1305, %v1304
      %v1320 = vpack.c.b16 %v1307, %v1306
      %v1321 = vpack.c.b16 %v1309, %v1308
      %v1322 = vpack.c.b16 %v1311, %v1310
      %v1323 = vpack.c.b16 %v1313, %v1312
      %v1324 = vpack.c.b16 %v1315, %v1314
      %v1325 = vpack.c.b16 %v1317, %v1316
      %1334 = vmatprep.subr.bf16.mxu0 0
      %1335 = vmatpush1.bf16.msra.mxu0 %v1318
      %1336 = vmatprep.subr.bf16.mxu0 0
      %1337 = vmatpush1.bf16.msra.mxu0 %v1319
      %1338 = vmatprep.subr.bf16.mxu0 0
      %1339 = vmatpush1.bf16.msra.mxu0 %v1320
      %1340 = vmatprep.subr.bf16.mxu0 0
      %1341 = vmatpush1.bf16.msra.mxu0 %v1321
      %1342 = vmatprep.subr.bf16.mxu0 0
      %1343 = vmatpush1.bf16.msra.mxu0 %v1322
      %1344 = vmatprep.subr.bf16.mxu0 0
      %1345 = vmatpush1.bf16.msra.mxu0 %v1323
      %1346 = vmatprep.subr.bf16.mxu0 0
      %1347 = vmatpush1.bf16.msra.mxu0 %v1324
      %1348 = vmatprep.subr.bf16.mxu0 0
      %1349 = vmatpush1.bf16.msra.mxu0 %v1325
      %1350 = vmatprep.subr.bf16.mxu0 0
      %1351 = vmatpush1.bf16.msra.mxu0 0
      %1352 = vmatprep.subr.bf16.mxu0 0
      %1353 = vmatpush1.bf16.msra.mxu0 0
      %1354 = vmatprep.subr.bf16.mxu0 0
      %1355 = vmatpush1.bf16.msra.mxu0 0
      %1356 = vmatprep.subr.bf16.mxu0 0
      %1357 = vmatpush1.bf16.msra.mxu0 0
      %1358 = vmatprep.subr.bf16.mxu0 0
      %1359 = vmatpush1.bf16.msra.mxu0 0
      %1360 = vmatprep.subr.bf16.mxu0 0
      %1361 = vmatpush1.bf16.msra.mxu0 0
      %1362 = vmatprep.subr.bf16.mxu0 0
      %1363 = vmatpush1.bf16.msra.mxu0 0
      %1364 = vmatprep.subr.bf16.mxu0 0
      %1365 = vmatpush1.bf16.msra.mxu0 0
      %1366 = vmatprep.mubr.bf16.mxu0 0
      %1367 = vmatmul.mubr.bf16.gmra.mrb[0].mxu0 %v1254
      %v1368 = vpop.f32.mrb[0].mxu0
      %v1369 = vadd.f32 0.0, %v1368
      %v1370 = vpop.f32.mrb[0].mxu0
      %v1371 = vpop.f32.mrb[0].mxu0
      %v1372 = vadd.f32 0.0, %v1371
      %v1373 = vpop.f32.mrb[0].mxu0
      %1374 = vmatprep.mubr.bf16.mxu0 0
      %1375 = vmatmul.mubr.bf16.gmra.mrb[0].mxu0 %v1255
      %v1376 = vpop.f32.mrb[0].mxu0
      %v1377 = vadd.f32 0.0, %v1376
      %v1378 = vpop.f32.mrb[0].mxu0
      %v1379 = vpop.f32.mrb[0].mxu0
      %v1380 = vadd.f32 0.0, %v1379
      %v1381 = vpop.f32.mrb[0].mxu0
      %1382 = vmatprep.mubr.bf16.mxu0 0
      %1383 = vmatmul.mubr.bf16.gmra.mrb[0].mxu0 %v1256
      %v1384 = vpop.f32.mrb[0].mxu0
      %v1385 = vadd.f32 0.0, %v1384
      %v1386 = vpop.f32.mrb[0].mxu0
      %v1387 = vpop.f32.mrb[0].mxu0
      %v1388 = vadd.f32 0.0, %v1387
      %v1389 = vpop.f32.mrb[0].mxu0
      %1390 = vmatprep.mubr.bf16.mxu0 0
      %1391 = vmatmul.mubr.bf16.gmra.mrb[0].mxu0 %v1257
      %v1392 = vpop.f32.mrb[0].mxu0
      %v1393 = vadd.f32 0.0, %v1392
      %v1394 = vpop.f32.mrb[0].mxu0
      %v1395 = vpop.f32.mrb[0].mxu0
      %v1396 = vadd.f32 0.0, %v1395
      %v1397 = vpop.f32.mrb[0].mxu0
      %1398 = vmatprep.mubr.bf16.mxu0 0
      %1399 = vmatmul.mubr.bf16.gmra.mrb[0].mxu0 %v1258
      %v1400 = vpop.f32.mrb[0].mxu0
      %v1401 = vadd.f32 0.0, %v1400
      %v1402 = vpop.f32.mrb[0].mxu0
      %v1403 = vpop.f32.mrb[0].mxu0
      %v1404 = vadd.f32 0.0, %v1403
      %v1405 = vpop.f32.mrb[0].mxu0
      %1406 = vmatprep.mubr.bf16.mxu0 0
      %1407 = vmatmul.mubr.bf16.gmra.mrb[0].mxu0 %v1259
      %v1408 = vpop.f32.mrb[0].mxu0
      %v1409 = vadd.f32 0.0, %v1408
      %v1410 = vpop.f32.mrb[0].mxu0
      %v1411 = vpop.f32.mrb[0].mxu0
      %v1412 = vadd.f32 0.0, %v1411
      %v1413 = vpop.f32.mrb[0].mxu0
      %1414 = vmatprep.mubr.bf16.mxu0 0
      %1415 = vmatmul.mubr.bf16.gmra.mrb[0].mxu0 %v1260
      %v1416 = vpop.f32.mrb[0].mxu0
      %v1417 = vadd.f32 0.0, %v1416
      %v1418 = vpop.f32.mrb[0].mxu0
      %v1419 = vpop.f32.mrb[0].mxu0
      %v1420 = vadd.f32 0.0, %v1419
      %v1421 = vpop.f32.mrb[0].mxu0
      %1422 = vmatprep.mubr.bf16.mxu0 0
      %1423 = vmatmul.mubr.bf16.gmra.mrb[0].mxu0 %v1261
      %v1424 = vpop.f32.mrb[0].mxu0
      %v1425 = vadd.f32 0.0, %v1424
      %v1426 = vpop.f32.mrb[0].mxu0
      %v1427 = vpop.f32.mrb[0].mxu0
      %v1428 = vadd.f32 0.0, %v1427
      %v1429 = vpop.f32.mrb[0].mxu0
      %1430 = vmatprep.mubr.bf16.mxu0 0
      %1431 = vmatmul.mubr.bf16.gmra.mrb[0].mxu0 %v1262
      %v1432 = vpop.f32.mrb[0].mxu0
      %v1433 = vadd.f32 0.0, %v1432
      %v1434 = vpop.f32.mrb[0].mxu0
      %v1435 = vpop.f32.mrb[0].mxu0
      %v1436 = vadd.f32 0.0, %v1435
      %v1437 = vpop.f32.mrb[0].mxu0
      %1438 = vmatprep.mubr.bf16.mxu0 0
      %1439 = vmatmul.mubr.bf16.gmra.mrb[0].mxu0 %v1263
      %v1440 = vpop.f32.mrb[0].mxu0
      %v1441 = vadd.f32 0.0, %v1440
      %v1442 = vpop.f32.mrb[0].mxu0
      %v1443 = vpop.f32.mrb[0].mxu0
      %v1444 = vadd.f32 0.0, %v1443
      %v1445 = vpop.f32.mrb[0].mxu0
      %1446 = vmatprep.mubr.bf16.mxu0 0
      %1447 = vmatmul.mubr.bf16.gmra.mrb[0].mxu0 %v1264
      %v1448 = vpop.f32.mrb[0].mxu0
      %v1449 = vadd.f32 0.0, %v1448
      %v1450 = vpop.f32.mrb[0].mxu0
      %v1451 = vpop.f32.mrb[0].mxu0
      %v1452 = vadd.f32 0.0, %v1451
      %v1453 = vpop.f32.mrb[0].mxu0
      %1454 = vmatprep.mubr.bf16.mxu0 0
      %1455 = vmatmul.mubr.bf16.gmra.mrb[0].mxu0 %v1265
      %v1456 = vpop.f32.mrb[0].mxu0
      %v1457 = vadd.f32 0.0, %v1456
      %v1458 = vpop.f32.mrb[0].mxu0
      %v1459 = vpop.f32.mrb[0].mxu0
      %v1460 = vadd.f32 0.0, %v1459
      %v1461 = vpop.f32.mrb[0].mxu0
      %1462 = vmatprep.mubr.bf16.mxu0 0
      %1463 = vmatmul.mubr.bf16.gmra.mrb[0].mxu0 %v1266
      %v1464 = vpop.f32.mrb[0].mxu0
      %v1465 = vadd.f32 0.0, %v1464
      %v1466 = vpop.f32.mrb[0].mxu0
      %v1467 = vpop.f32.mrb[0].mxu0
      %v1468 = vadd.f32 0.0, %v1467
      %v1469 = vpop.f32.mrb[0].mxu0
      %1470 = vmatprep.mubr.bf16.mxu0 0
      %1471 = vmatmul.mubr.bf16.gmra.mrb[0].mxu0 %v1267
      %v1472 = vpop.f32.mrb[0].mxu0
      %v1473 = vadd.f32 0.0, %v1472
      %v1474 = vpop.f32.mrb[0].mxu0
      %v1475 = vpop.f32.mrb[0].mxu0
      %v1476 = vadd.f32 0.0, %v1475
      %v1477 = vpop.f32.mrb[0].mxu0
      %1478 = vmatprep.mubr.bf16.mxu0 0
      %1479 = vmatmul.mubr.bf16.gmra.mrb[0].mxu0 %v1268
      %v1480 = vpop.f32.mrb[0].mxu0
      %v1481 = vadd.f32 0.0, %v1480
      %v1482 = vpop.f32.mrb[0].mxu0
      %v1483 = vpop.f32.mrb[0].mxu0
      %v1484 = vadd.f32 0.0, %v1483
      %v1485 = vpop.f32.mrb[0].mxu0
      %1486 = vmatprep.mubr.bf16.mxu0 0
      %1487 = vmatmul.mubr.bf16.gmra.mrb[0].mxu0 %v1269
      %v1488 = vpop.f32.mrb[0].mxu0
      %v1489 = vadd.f32 0.0, %v1488
      %v1490 = vpop.f32.mrb[0].mxu0
      %v1491 = vpop.f32.mrb[0].mxu0
      %v1492 = vadd.f32 0.0, %v1491
      %v1493 = vpop.f32.mrb[0].mxu0
      %1494 = vdwg.mxu0
      %v1495 = vpack.c.bf16 %v1372, %v1369
      %v1496 = vpack.c.bf16 %v1380, %v1377
      %v1497 = vpack.c.bf16 %v1388, %v1385
      %v1498 = vpack.c.bf16 %v1396, %v1393
      %v1499 = vpack.c.bf16 %v1404, %v1401
      %v1500 = vpack.c.bf16 %v1412, %v1409
      %v1501 = vpack.c.bf16 %v1420, %v1417
      %v1502 = vpack.c.bf16 %v1428, %v1425
      %v1503 = vpack.c.bf16 %v1436, %v1433
      %v1504 = vpack.c.bf16 %v1444, %v1441
      %v1505 = vpack.c.bf16 %v1452, %v1449
      %v1506 = vpack.c.bf16 %v1460, %v1457
      %v1507 = vpack.c.bf16 %v1468, %v1465
      %v1508 = vpack.c.bf16 %v1476, %v1473
      %v1509 = vpack.c.bf16 %v1484, %v1481
      %v1510 = vpack.c.bf16 %v1492, %v1489
      %v1527 = vunpack.c.l.b16 %v1495
      %v1528 = vunpack.c.h.b16 %v1495
      %v1529 = vunpack.c.l.b16 %v1496
      %v1530 = vunpack.c.h.b16 %v1496
      %v1531 = vunpack.c.l.b16 %v1497
      %v1532 = vunpack.c.h.b16 %v1497
      %v1533 = vunpack.c.l.b16 %v1498
      %v1534 = vunpack.c.h.b16 %v1498
      %v1535 = vunpack.c.l.b16 %v1499
      %v1536 = vunpack.c.h.b16 %v1499
      %v1537 = vunpack.c.l.b16 %v1500
      %v1538 = vunpack.c.h.b16 %v1500
      %v1539 = vunpack.c.l.b16 %v1501
      %v1540 = vunpack.c.h.b16 %v1501
      %v1541 = vunpack.c.l.b16 %v1502
      %v1542 = vunpack.c.h.b16 %v1502
      %v1543 = vunpack.c.l.b16 %v1503
      %v1544 = vunpack.c.h.b16 %v1503
      %v1545 = vunpack.c.l.b16 %v1504
      %v1546 = vunpack.c.h.b16 %v1504
      %v1547 = vunpack.c.l.b16 %v1505
      %v1548 = vunpack.c.h.b16 %v1505
      %v1549 = vunpack.c.l.b16 %v1506
      %v1550 = vunpack.c.h.b16 %v1506
      %v1551 = vunpack.c.l.b16 %v1507
      %v1552 = vunpack.c.h.b16 %v1507
      %v1553 = vunpack.c.l.b16 %v1508
      %v1554 = vunpack.c.h.b16 %v1508
      %v1555 = vunpack.c.l.b16 %v1509
      %v1556 = vunpack.c.h.b16 %v1509
      %v1557 = vunpack.c.l.b16 %v1510
      %v1558 = vunpack.c.h.b16 %v1510
      %v1559 = vpack.c.b16 %v1527, %v1527
      %v1560 = vpack.c.b16 %v1528, %v1528
      %v1561 = vpack.c.b16 %v1529, %v1529
      %v1562 = vpack.c.b16 %v1530, %v1530
      %v1563 = vpack.c.b16 %v1531, %v1531
      %v1564 = vpack.c.b16 %v1532, %v1532
      %v1565 = vpack.c.b16 %v1533, %v1533
      %v1566 = vpack.c.b16 %v1534, %v1534
      %v1567 = vpack.c.b16 %v1535, %v1535
      %v1568 = vpack.c.b16 %v1536, %v1536
      %v1569 = vpack.c.b16 %v1537, %v1537
      %v1570 = vpack.c.b16 %v1538, %v1538
      %v1571 = vpack.c.b16 %v1539, %v1539
      %v1572 = vpack.c.b16 %v1540, %v1540
      %v1573 = vpack.c.b16 %v1541, %v1541
      %v1574 = vpack.c.b16 %v1542, %v1542
      %v1575 = vpack.c.b16 %v1543, %v1543
      %v1576 = vpack.c.b16 %v1544, %v1544
      %v1577 = vpack.c.b16 %v1545, %v1545
      %v1578 = vpack.c.b16 %v1546, %v1546
      %v1579 = vpack.c.b16 %v1547, %v1547
      %v1580 = vpack.c.b16 %v1548, %v1548
      %v1581 = vpack.c.b16 %v1549, %v1549
      %v1582 = vpack.c.b16 %v1550, %v1550
      %v1583 = vpack.c.b16 %v1551, %v1551
      %v1584 = vpack.c.b16 %v1552, %v1552
      %v1585 = vpack.c.b16 %v1553, %v1553
      %v1586 = vpack.c.b16 %v1554, %v1554
      %v1587 = vpack.c.b16 %v1555, %v1555
      %v1588 = vpack.c.b16 %v1556, %v1556
      %v1589 = vpack.c.b16 %v1557, %v1557
      %v1590 = vpack.c.b16 %v1558, %v1558
      %1623 = vst [vmem:[%s450] sm:$0xf] %v1559
      %1624 = vst [vmem:[%s450 + $0x4] sm:$0xf] %v1560
      %1625 = vst [vmem:[%s450 + $0x8] sm:$0xf] %v1561
      %1626 = vst [vmem:[%s450 + $0xc] sm:$0xf] %v1562
      %1627 = vst [vmem:[%s450 + $0x10] sm:$0xf] %v1563
      %1628 = vst [vmem:[%s450 + $0x14] sm:$0xf] %v1564
      %1629 = vst [vmem:[%s450 + $0x18] sm:$0xf] %v1565
      %1630 = vst [vmem:[%s450 + $0x1c] sm:$0xf] %v1566
      %1631 = vst [vmem:[%s450 + $0x20] sm:$0xf] %v1567
      %1632 = vst [vmem:[%s450 + $0x24] sm:$0xf] %v1568
      %1633 = vst [vmem:[%s450 + $0x28] sm:$0xf] %v1569
      %1634 = vst [vmem:[%s450 + $0x2c] sm:$0xf] %v1570
      %1635 = vst [vmem:[%s450 + $0x30] sm:$0xf] %v1571
      %1636 = vst [vmem:[%s450 + $0x34] sm:$0xf] %v1572
      %1637 = vst [vmem:[%s450 + $0x38] sm:$0xf] %v1573
      %1638 = vst [vmem:[%s450 + $0x3c] sm:$0xf] %v1574
      %1639 = vst [vmem:[%s450 + $0x40] sm:$0xf] %v1575
      %1640 = vst [vmem:[%s450 + $0x44] sm:$0xf] %v1576
      %1641 = vst [vmem:[%s450 + $0x48] sm:$0xf] %v1577
      %1642 = vst [vmem:[%s450 + $0x4c] sm:$0xf] %v1578
      %1643 = vst [vmem:[%s450 + $0x50] sm:$0xf] %v1579
      %1644 = vst [vmem:[%s450 + $0x54] sm:$0xf] %v1580
      %1645 = vst [vmem:[%s450 + $0x58] sm:$0xf] %v1581
      %1646 = vst [vmem:[%s450 + $0x5c] sm:$0xf] %v1582
      %1647 = vst [vmem:[%s450 + $0x60] sm:$0xf] %v1583
      %1648 = vst [vmem:[%s450 + $0x64] sm:$0xf] %v1584
      %1649 = vst [vmem:[%s450 + $0x68] sm:$0xf] %v1585
      %1650 = vst [vmem:[%s450 + $0x6c] sm:$0xf] %v1586
      %1651 = vst [vmem:[%s450 + $0x70] sm:$0xf] %v1587
      %1652 = vst [vmem:[%s450 + $0x74] sm:$0xf] %v1588
      %1653 = vst [vmem:[%s450 + $0x78] sm:$0xf] %v1589
      %1654 = vst [vmem:[%s450 + $0x7c] sm:$0xf] %v1590
      %v1655 = vadd.f32 %v1369, %v1372
      %v1656 = vadd.f32 %v1655, %v1377
      %v1657 = vadd.f32 %v1656, %v1380
      %v1658 = vadd.f32 %v1657, %v1385
      %v1659 = vadd.f32 %v1658, %v1388
      %v1660 = vadd.f32 %v1659, %v1393
      %v1661 = vadd.f32 %v1660, %v1396
      %v1662 = vadd.f32 %v1661, %v1401
      %v1663 = vadd.f32 %v1662, %v1404
      %v1664 = vadd.f32 %v1663, %v1409
      %v1665 = vadd.f32 %v1664, %v1412
      %v1666 = vadd.f32 %v1665, %v1417
      %v1667 = vadd.f32 %v1666, %v1420
      %v1668 = vadd.f32 %v1667, %v1425
      %v1669 = vadd.f32 %v1668, %v1428
      %v1670 = vadd.f32 %v1669, %v1433
      %v1671 = vadd.f32 %v1670, %v1436
      %v1672 = vadd.f32 %v1671, %v1441
      %v1673 = vadd.f32 %v1672, %v1444
      %v1674 = vadd.f32 %v1673, %v1449
      %v1675 = vadd.f32 %v1674, %v1452
      %v1676 = vadd.f32 %v1675, %v1457
      %v1677 = vadd.f32 %v1676, %v1460
      %v1678 = vadd.f32 %v1677, %v1465
      %v1679 = vadd.f32 %v1678, %v1468
      %v1680 = vadd.f32 %v1679, %v1473
      %v1681 = vadd.f32 %v1680, %v1476
      %v1682 = vadd.f32 %v1681, %v1481
      %v1683 = vadd.f32 %v1682, %v1484
      %v1684 = vadd.f32 %v1683, %v1489
      %v1685 = vadd.f32 %v1684, %v1492
      %v1686 = vrot.slane %v1685, 4
      %v1687 = vadd.f32 %v1685, %v1686
      %v1688 = vrot.slane %v1687, 2
      %v1689 = vadd.f32 %v1687, %v1688
      %v1690 = vrot.slane %v1689, 1
      %v1691 = vadd.f32 %v1689, %v1690
      %1692 = vst [vmem:[%s454] sm:$0x1] %v1691
      %v1693 = vmul.f32 %v1369, %v1369
      %v1694 = vmul.f32 %v1372, %v1372
      %v1695 = vmul.f32 %v1377, %v1377
      %v1696 = vmul.f32 %v1380, %v1380
      %v1697 = vmul.f32 %v1385, %v1385
      %v1698 = vmul.f32 %v1388, %v1388
      %v1699 = vmul.f32 %v1393, %v1393
      %v1700 = vmul.f32 %v1396, %v1396
      %v1701 = vmul.f32 %v1401, %v1401
      %v1702 = vmul.f32 %v1404, %v1404
      %v1703 = vmul.f32 %v1409, %v1409
      %v1704 = vmul.f32 %v1412, %v1412
      %v1705 = vmul.f32 %v1417, %v1417
      %v1706 = vmul.f32 %v1420, %v1420
      %v1707 = vmul.f32 %v1425, %v1425
      %v1708 = vmul.f32 %v1428, %v1428
      %v1709 = vmul.f32 %v1433, %v1433
      %v1710 = vmul.f32 %v1436, %v1436
      %v1711 = vmul.f32 %v1441, %v1441
      %v1712 = vmul.f32 %v1444, %v1444
      %v1713 = vmul.f32 %v1449, %v1449
      %v1714 = vmul.f32 %v1452, %v1452
      %v1715 = vmul.f32 %v1457, %v1457
      %v1716 = vmul.f32 %v1460, %v1460
      %v1717 = vmul.f32 %v1465, %v1465
      %v1718 = vmul.f32 %v1468, %v1468
      %v1719 = vmul.f32 %v1473, %v1473
      %v1720 = vmul.f32 %v1476, %v1476
      %v1721 = vmul.f32 %v1481, %v1481
      %v1722 = vmul.f32 %v1484, %v1484
      %v1723 = vmul.f32 %v1489, %v1489
      %v1724 = vmul.f32 %v1492, %v1492
      %v1725 = vadd.f32 %v1693, %v1694
      %v1726 = vadd.f32 %v1725, %v1695
      %v1727 = vadd.f32 %v1726, %v1696
      %v1728 = vadd.f32 %v1727, %v1697
      %v1729 = vadd.f32 %v1728, %v1698
      %v1730 = vadd.f32 %v1729, %v1699
      %v1731 = vadd.f32 %v1730, %v1700
      %v1732 = vadd.f32 %v1731, %v1701
      %v1733 = vadd.f32 %v1732, %v1702
      %v1734 = vadd.f32 %v1733, %v1703
      %v1735 = vadd.f32 %v1734, %v1704
      %v1736 = vadd.f32 %v1735, %v1705
      %v1737 = vadd.f32 %v1736, %v1706
      %v1738 = vadd.f32 %v1737, %v1707
      %v1739 = vadd.f32 %v1738, %v1708
      %v1740 = vadd.f32 %v1739, %v1709
      %v1741 = vadd.f32 %v1740, %v1710
      %v1742 = vadd.f32 %v1741, %v1711
      %v1743 = vadd.f32 %v1742, %v1712
      %v1744 = vadd.f32 %v1743, %v1713
      %v1745 = vadd.f32 %v1744, %v1714
      %v1746 = vadd.f32 %v1745, %v1715
      %v1747 = vadd.f32 %v1746, %v1716
      %v1748 = vadd.f32 %v1747, %v1717
      %v1749 = vadd.f32 %v1748, %v1718
      %v1750 = vadd.f32 %v1749, %v1719
      %v1751 = vadd.f32 %v1750, %v1720
      %v1752 = vadd.f32 %v1751, %v1721
      %v1753 = vadd.f32 %v1752, %v1722
      %v1754 = vadd.f32 %v1753, %v1723
      %v1755 = vadd.f32 %v1754, %v1724
      %v1756 = vrot.slane %v1755, 4
      %v1757 = vadd.f32 %v1755, %v1756
      %v1758 = vrot.slane %v1757, 2
      %v1759 = vadd.f32 %v1757, %v1758
      %v1760 = vrot.slane %v1759, 1
      %v1761 = vadd.f32 %v1759, %v1760
      %1762 = vst [vmem:[%s457] sm:$0x1] %v1761
      %s1763 = smul.u32 32, %s23
      %p1764 = scmp.lt.s32.totalorder %s1763, 63
      %s1765 = scalar_select %p1764, %s1763, 63
      %s1766 = smul.addr %s1765, 4
      %s1767 = scalar_lea.vmem %s6, %s1766
      %p1768 = scmp.lt.s32.totalorder %s23, 1
      %s1769 = scalar_select %p1768, %s23, 1
      %s1770 = scalar_lea.vmem %s7, %s1769
      %p1771 = scmp.lt.s32.totalorder %s23, 1
      %s1772 = scalar_select %p1771, %s23, 1
      %s1773 = scalar_lea.vmem %s8, %s1772
      %s1774 = smul.u32 32, %s23
      %p1775 = scmp.lt.s32.totalorder %s1774, 63
      %s1776 = scalar_select %p1775, %s1774, 63
      %s1777 = smul.addr %s1776, 4
      %s1778 = scalar_lea.vmem %s9, %s1777
      %p1779 = scmp.lt.s32.totalorder %s23, 1
      %s1780 = scalar_select %p1779, %s23, 1
      %s1781 = scalar_lea.vmem %s10, %s1780
      %p1782 = scmp.lt.s32.totalorder %s23, 1
      %s1783 = scalar_select %p1782, %s23, 1
      %s1784 = scalar_lea.vmem %s11, %s1783
      // Predicated region
      $region45: #{bottleneck_forward.6} parent=43 // pred_check
        %p1785 = pneg %p177
      $region46: #{bottleneck_forward.6} parent=43 // pred_check_branch
        %1787 = sbr.rel (%p1785) target = $region48
      $region47: #{bottleneck_forward.6} parent=43 // pred_region
        %s1788 = smul.u32 32, %s23
      $region48: #{bottleneck_forward.6} parent=43 // pred_fallthru
        _
      // Predicated region
      $region49: #{bottleneck_forward.6} parent=43 // pred_check
        %p1789 = pneg %p203
      $region50: #{bottleneck_forward.6} parent=43 // pred_check_branch
        %1791 = sbr.rel (%p1789) target = $region52
      $region51: #{bottleneck_forward.6} parent=43 // pred_region
        _
      $region52: #{bottleneck_forward.6} parent=43 // pred_fallthru
        _
      // Predicated region
      $region53: #{bottleneck_forward.6} parent=43 // pred_check
        %p1792 = pneg %p229
      $region54: #{bottleneck_forward.6} parent=43 // pred_check_branch
        %1794 = sbr.rel (%p1792) target = $region56
      $region55: #{bottleneck_forward.6} parent=43 // pred_region
        _
      $region56: #{bottleneck_forward.6} parent=43 // pred_fallthru
        _
      // Predicated region
      $region57: #{bottleneck_forward.6} parent=43 // pred_check
        %p1795 = pneg %p255
      $region58: #{bottleneck_forward.6} parent=43 // pred_check_branch
        %1797 = sbr.rel (%p1795) target = $region60
      $region59: #{bottleneck_forward.6} parent=43 // pred_region
        %s1798 = smul.u32 32, %s23
      $region60: #{bottleneck_forward.6} parent=43 // pred_fallthru
        _
      // Predicated region
      $region61: #{bottleneck_forward.6} parent=43 // pred_check
        %p1799 = pneg %p281
      $region62: #{bottleneck_forward.6} parent=43 // pred_check_branch
        %1801 = sbr.rel (%p1799) target = $region64
      $region63: #{bottleneck_forward.6} parent=43 // pred_region
        _
      $region64: #{bottleneck_forward.6} parent=43 // pred_fallthru
        _
      // Predicated region
      $region65: #{bottleneck_forward.6} parent=43 // pred_check
        %p1802 = pneg %p307
      $region66: #{bottleneck_forward.6} parent=43 // pred_check_branch
        %1804 = sbr.rel (%p1802) target = $region68
      $region67: #{bottleneck_forward.6} parent=43 // pred_region
        _
      $region68: #{bottleneck_forward.6} parent=43 // pred_fallthru
        _
    $region44: #{bottleneck_forward.6} parent=5 // pred_fallthru
      _
    %p1805 = scmp.le.s32.totalorder 2, %s18
    // Predicated region
    $region69: #{bottleneck_forward.6} parent=5 // pred_check
      %p1806 = pneg %p1805
    $region70: #{bottleneck_forward.6} parent=5 // pred_check_branch
      %1808 = sbr.rel (%p1806) target = $region72
    $region71: #{bottleneck_forward.6} parent=5 // pred_region
      %s1809 = ssub.s32 %s18, 2
      // Predicated region
      $region73: #{bottleneck_forward.6} parent=71 // pred_check
        %p1810 = pneg %p183
      $region74: #{bottleneck_forward.6} parent=71 // pred_check_branch
        %1812 = sbr.rel (%p1810) target = $region76
      $region75: #{bottleneck_forward.6} parent=71 // pred_region
        %s1813 = smul.u32 32, %s24
        %p1814 = scmp.lt.s32.totalorder %s1813, 63
        %s1815 = scalar_select %p1814, %s1813, 63
        %s1816 = smul.addr %s1815, 4
        %s1817 = scalar_lea.vmem %s6, %s1816
      $region76: #{bottleneck_forward.6} parent=71 // pred_fallthru
        _
      // Predicated region
      $region77: #{bottleneck_forward.6} parent=71 // pred_check
        %p1818 = pneg %p209
      $region78: #{bottleneck_forward.6} parent=71 // pred_check_branch
        %1820 = sbr.rel (%p1818) target = $region80
      $region79: #{bottleneck_forward.6} parent=71 // pred_region
        %p1821 = scmp.lt.s32.totalorder %s24, 1
        %s1822 = scalar_select %p1821, %s24, 1
        %s1823 = scalar_lea.vmem %s7, %s1822
      $region80: #{bottleneck_forward.6} parent=71 // pred_fallthru
        _
      // Predicated region
      $region81: #{bottleneck_forward.6} parent=71 // pred_check
        %p1824 = pneg %p235
      $region82: #{bottleneck_forward.6} parent=71 // pred_check_branch
        %1826 = sbr.rel (%p1824) target = $region84
      $region83: #{bottleneck_forward.6} parent=71 // pred_region
        %p1827 = scmp.lt.s32.totalorder %s24, 1
        %s1828 = scalar_select %p1827, %s24, 1
        %s1829 = scalar_lea.vmem %s8, %s1828
      $region84: #{bottleneck_forward.6} parent=71 // pred_fallthru
        _
      // Predicated region
      $region85: #{bottleneck_forward.6} parent=71 // pred_check
        %p1830 = pneg %p261
      $region86: #{bottleneck_forward.6} parent=71 // pred_check_branch
        %1832 = sbr.rel (%p1830) target = $region88
      $region87: #{bottleneck_forward.6} parent=71 // pred_region
        %s1833 = smul.u32 32, %s24
        %p1834 = scmp.lt.s32.totalorder %s1833, 63
        %s1835 = scalar_select %p1834, %s1833, 63
        %s1836 = smul.addr %s1835, 4
        %s1837 = scalar_lea.vmem %s9, %s1836
      $region88: #{bottleneck_forward.6} parent=71 // pred_fallthru
        _
      // Predicated region
      $region89: #{bottleneck_forward.6} parent=71 // pred_check
        %p1838 = pneg %p287
      $region90: #{bottleneck_forward.6} parent=71 // pred_check_branch
        %1840 = sbr.rel (%p1838) target = $region92
      $region91: #{bottleneck_forward.6} parent=71 // pred_region
        %p1841 = scmp.lt.s32.totalorder %s24, 1
        %s1842 = scalar_select %p1841, %s24, 1
        %s1843 = scalar_lea.vmem %s10, %s1842
      $region92: #{bottleneck_forward.6} parent=71 // pred_fallthru
        _
      // Predicated region
      $region93: #{bottleneck_forward.6} parent=71 // pred_check
        %p1844 = pneg %p313
      $region94: #{bottleneck_forward.6} parent=71 // pred_check_branch
        %1846 = sbr.rel (%p1844) target = $region96
      $region95: #{bottleneck_forward.6} parent=71 // pred_region
        %p1847 = scmp.lt.s32.totalorder %s24, 1
        %s1848 = scalar_select %p1847, %s24, 1
        %s1849 = scalar_lea.vmem %s11, %s1848
      $region96: #{bottleneck_forward.6} parent=71 // pred_fallthru
        _
    $region72: #{bottleneck_forward.6} parent=5 // pred_fallthru
      _
  $region6: #{bottleneck_forward.6} parent=0 // loop_footer
    %s22 = sadd.s32 1, %s18
  $region7: #{bottleneck_forward.6} parent=0 // loop_footer_branch
    %17 = sbr.rel target = $region3
  $region8: #{bottleneck_forward.6} parent=0 // loop_exit
    _

// kernel: bottleneck_forward.5
$region0: #{bottleneck_forward.5}
  #allocation0 [shape = 'u32[]', space=smem, size = 0x4, offset = 0x4, fixed_abs, tag = 'smem constant byte address 0x4 - core index']
  #allocation1 [shape = 'u32[144,128]{1,0:T(1,128)}', space=vmem, size = 0x12000, scoped, tag = 'internal scratch']
  #allocation2 [shape = 'bf16[18,18,128]{2,1,0:T(8,128)(2,1)}', space=vmem, size = 0x1b000, scoped, tag = 'scratch operand']
  #allocation3 [shape = 'f32[256,128]{1,0:T(8,128)}', space=vmem, size = 0x20000, scoped, tag = 'scratch operand']
  %s0 = inlined_call_operand.vmem [shape: bf16[2,16,16,128], index: 0, kind: input, shape index: {}]
  %s1 = inlined_call_operand.vmem [shape: f32[1,128], index: 1, kind: input, shape index: {}]
  %s2 = inlined_call_operand.vmem [shape: f32[1,128], index: 2, kind: input, shape index: {}]
  %s3 = inlined_call_operand.vmem [shape: bf16[9,128,128], index: 3, kind: input, shape index: {}]
  %s4 = inlined_call_operand.vmem [shape: bf16[512,128], index: 4, kind: output, shape index: {0}]
  %s5 = inlined_call_operand.vmem [shape: f32[2,1,128], index: 5, kind: output, shape index: {1}]
  %s6 = inlined_call_operand.vmem [shape: f32[2,1,128], index: 6, kind: output, shape index: {2}]
  %7 = xla_tuple %s4, %s5, %s6
  %s8 = sld [smem:[#allocation0]]
  $region65: #{bottleneck_forward.5} parent=0
    _
  %s10 = ssub.s32 1, %s8
  %s11 = scalar_select 0, %s10, %s8
  loop: start=0, step=1, limit=4
  $region2: #{bottleneck_forward.5} parent=0 // loop_pre_header
    _
  $region3: #{bottleneck_forward.5} parent=0 // loop_header
    %s13 = sphi 0, %s17
    %p14 = scmp.ge.s32.totalorder %s13, 4
    %s23 = sphi 0, %s25
    %s26 = sphi 0, %s23
    %s27 = sphi 0, %s26
    %s43 = sphi 0, %s27
    %s47 = sphi 0, %s47
    %s49 = sphi 0, %s47
    %s50 = sphi 0, %s49
    %s64 = sphi 0, %s50
    %s68 = sphi 0, %s68
    %s70 = sphi 0, %s68
    %s71 = sphi 0, %s70
    %s85 = sphi 0, %s71
    %s89 = sphi 0, %s89
    %s91 = sphi 0, %s89
    %s92 = sphi 0, %s91
    %s106 = sphi 0, %s92
    %s112 = sphi 0, %s114
    %s115 = sphi 0, %s112
    %s116 = sphi 0, %s115
    %s132 = sphi 0, %s116
    %s138 = sphi 0, %s140
    %s141 = sphi 0, %s138
    %s142 = sphi 0, %s141
    %s158 = sphi 0, %s142
    %s164 = sphi 0, %s166
    %s167 = sphi 0, %s164
    %s168 = sphi 0, %s167
    %s184 = sphi 0, %s168
  $region4: #{bottleneck_forward.5} parent=0 // loop_header_branch
    %16 = sbr.rel (%p14) target = $region8
  $region5: #{bottleneck_forward.5} parent=0 // loop_body
    %s18 = ssub.s32 %s13, 1
    %s19 = ssub.s32 %s13, 2
    %s20 = sadd.s32 %s13, 1
    %s21 = ssub.s32 %s13, %s20
    %p22 = scmp.eq.s32.totalorder %s21, 0
    %s24 = sadd.s32 %s23, 1
    %s25 = scalar_select %p22, %s23, %s24
    %p28 = pneg %p22
    %p29 = scmp.eq.s32.totalorder %s13, 1
    %p30 = por %p28, %p29
    %p31 = scmp.ne.s32.totalorder %s23, %s26
    %p32 = scmp.eq.s32.totalorder %s13, 0
    %p33 = por %p31, %p32
    %p34 = scmp.ne.s32.totalorder %s23, %s26
    %p35 = scmp.eq.s32.totalorder %s18, 1
    %p36 = por %p34, %p35
    %p37 = scmp.ne.s32.totalorder %s26, %s27
    %p38 = scmp.eq.s32.totalorder %s18, 0
    %p39 = por %p37, %p38
    %p40 = scmp.ne.s32.totalorder %s26, %s27
    %p41 = scmp.eq.s32.totalorder %s19, 1
    %p42 = por %p40, %p41
    %p44 = scmp.ne.s32.totalorder %s27, %s43
    %p45 = scmp.eq.s32.totalorder %s19, 0
    %p46 = por %p44, %p45
    %s48 = sadd.s32 %s47, 1
    %p51 = scmp.eq.s32.totalorder %s13, 1
    %p52 = scmp.ne.s32.totalorder %s47, %s49
    %p53 = scmp.eq.s32.totalorder %s13, 0
    %p54 = por %p52, %p53
    %p55 = scmp.ne.s32.totalorder %s47, %s49
    %p56 = scmp.eq.s32.totalorder %s18, 1
    %p57 = por %p55, %p56
    %p58 = scmp.ne.s32.totalorder %s49, %s50
    %p59 = scmp.eq.s32.totalorder %s18, 0
    %p60 = por %p58, %p59
    %p61 = scmp.ne.s32.totalorder %s49, %s50
    %p62 = scmp.eq.s32.totalorder %s19, 1
    %p63 = por %p61, %p62
    %p65 = scmp.ne.s32.totalorder %s50, %s64
    %p66 = scmp.eq.s32.totalorder %s19, 0
    %p67 = por %p65, %p66
    %s69 = sadd.s32 %s68, 1
    %p72 = scmp.eq.s32.totalorder %s13, 1
    %p73 = scmp.ne.s32.totalorder %s68, %s70
    %p74 = scmp.eq.s32.totalorder %s13, 0
    %p75 = por %p73, %p74
    %p76 = scmp.ne.s32.totalorder %s68, %s70
    %p77 = scmp.eq.s32.totalorder %s18, 1
    %p78 = por %p76, %p77
    %p79 = scmp.ne.s32.totalorder %s70, %s71
    %p80 = scmp.eq.s32.totalorder %s18, 0
    %p81 = por %p79, %p80
    %p82 = scmp.ne.s32.totalorder %s70, %s71
    %p83 = scmp.eq.s32.totalorder %s19, 1
    %p84 = por %p82, %p83
    %p86 = scmp.ne.s32.totalorder %s71, %s85
    %p87 = scmp.eq.s32.totalorder %s19, 0
    %p88 = por %p86, %p87
    %s90 = sadd.s32 %s89, 1
    %p93 = scmp.eq.s32.totalorder %s13, 1
    %p94 = scmp.ne.s32.totalorder %s89, %s91
    %p95 = scmp.eq.s32.totalorder %s13, 0
    %p96 = por %p94, %p95
    %p97 = scmp.ne.s32.totalorder %s89, %s91
    %p98 = scmp.eq.s32.totalorder %s18, 1
    %p99 = por %p97, %p98
    %p100 = scmp.ne.s32.totalorder %s91, %s92
    %p101 = scmp.eq.s32.totalorder %s18, 0
    %p102 = por %p100, %p101
    %p103 = scmp.ne.s32.totalorder %s91, %s92
    %p104 = scmp.eq.s32.totalorder %s19, 1
    %p105 = por %p103, %p104
    %p107 = scmp.ne.s32.totalorder %s92, %s106
    %p108 = scmp.eq.s32.totalorder %s19, 0
    %p109 = por %p107, %p108
    %s110 = ssub.s32 %s13, %s20
    %p111 = scmp.eq.s32.totalorder %s110, 0
    %s113 = sadd.s32 %s112, 1
    %s114 = scalar_select %p111, %s112, %s113
    %p117 = pneg %p111
    %p118 = scmp.eq.s32.totalorder %s13, 1
    %p119 = por %p117, %p118
    %p120 = scmp.ne.s32.totalorder %s112, %s115
    %p121 = scmp.eq.s32.totalorder %s13, 0
    %p122 = por %p120, %p121
    %p123 = scmp.ne.s32.totalorder %s112, %s115
    %p124 = scmp.eq.s32.totalorder %s18, 1
    %p125 = por %p123, %p124
    %p126 = scmp.ne.s32.totalorder %s115, %s116
    %p127 = scmp.eq.s32.totalorder %s18, 0
    %p128 = por %p126, %p127
    %p129 = scmp.ne.s32.totalorder %s115, %s116
    %p130 = scmp.eq.s32.totalorder %s19, 1
    %p131 = por %p129, %p130
    %p133 = scmp.ne.s32.totalorder %s116, %s132
    %p134 = scmp.eq.s32.totalorder %s19, 0
    %p135 = por %p133, %p134
    %s136 = ssub.s32 %s13, %s20
    %p137 = scmp.eq.s32.totalorder %s136, 0
    %s139 = sadd.s32 %s138, 1
    %s140 = scalar_select %p137, %s138, %s139
    %p143 = pneg %p137
    %p144 = scmp.eq.s32.totalorder %s13, 1
    %p145 = por %p143, %p144
    %p146 = scmp.ne.s32.totalorder %s138, %s141
    %p147 = scmp.eq.s32.totalorder %s13, 0
    %p148 = por %p146, %p147
    %p149 = scmp.ne.s32.totalorder %s138, %s141
    %p150 = scmp.eq.s32.totalorder %s18, 1
    %p151 = por %p149, %p150
    %p152 = scmp.ne.s32.totalorder %s141, %s142
    %p153 = scmp.eq.s32.totalorder %s18, 0
    %p154 = por %p152, %p153
    %p155 = scmp.ne.s32.totalorder %s141, %s142
    %p156 = scmp.eq.s32.totalorder %s19, 1
    %p157 = por %p155, %p156
    %p159 = scmp.ne.s32.totalorder %s142, %s158
    %p160 = scmp.eq.s32.totalorder %s19, 0
    %p161 = por %p159, %p160
    %s162 = ssub.s32 %s13, %s20
    %p163 = scmp.eq.s32.totalorder %s162, 0
    %s165 = sadd.s32 %s164, 1
    %s166 = scalar_select %p163, %s164, %s165
    %p169 = pneg %p163
    %p170 = scmp.eq.s32.totalorder %s13, 1
    %p171 = por %p169, %p170
    %p172 = scmp.ne.s32.totalorder %s164, %s167
    %p173 = scmp.eq.s32.totalorder %s13, 0
    %p174 = por %p172, %p173
    %p175 = scmp.ne.s32.totalorder %s164, %s167
    %p176 = scmp.eq.s32.totalorder %s18, 1
    %p177 = por %p175, %p176
    %p178 = scmp.ne.s32.totalorder %s167, %s168
    %p179 = scmp.eq.s32.totalorder %s18, 0
    %p180 = por %p178, %p179
    %p181 = scmp.ne.s32.totalorder %s167, %s168
    %p182 = scmp.eq.s32.totalorder %s19, 1
    %p183 = por %p181, %p182
    %p185 = scmp.ne.s32.totalorder %s168, %s184
    %p186 = scmp.eq.s32.totalorder %s19, 0
    %p187 = por %p185, %p186
    %p188 = scmp.le.s32.totalorder 1, %s13
    %p189 = scmp.lt.s32.totalorder %s13, 3
    %p190 = pnand %p188, %p189
    %p191 = pneg %p190
    // Predicated region
    $region9: #{bottleneck_forward.5} parent=5 // pred_check
      _
    $region10: #{bottleneck_forward.5} parent=5 // pred_check_branch
      %193 = sbr.rel (%p190) target = $region12
    $region11: #{bottleneck_forward.5} parent=5 // pred_region
      %s194 = ssub.s32 %s13, 1
      // Predicated region
      $region13: #{bottleneck_forward.5} parent=11 // pred_check
        %p195 = pneg %p60
      $region14: #{bottleneck_forward.5} parent=11 // pred_check_branch
        %197 = sbr.rel (%p195) target = $region16
      $region15: #{bottleneck_forward.5} parent=11 // pred_region
        _
      $region16: #{bottleneck_forward.5} parent=11 // pred_fallthru
        _
      // Predicated region
      $region17: #{bottleneck_forward.5} parent=11 // pred_check
        %p198 = pneg %p81
      $region18: #{bottleneck_forward.5} parent=11 // pred_check_branch
        %200 = sbr.rel (%p198) target = $region20
      $region19: #{bottleneck_forward.5} parent=11 // pred_region
        _
      $region20: #{bottleneck_forward.5} parent=11 // pred_fallthru
        _
      // Predicated region
      $region21: #{bottleneck_forward.5} parent=11 // pred_check
        %p201 = pneg %p102
      $region22: #{bottleneck_forward.5} parent=11 // pred_check_branch
        %203 = sbr.rel (%p201) target = $region24
      $region23: #{bottleneck_forward.5} parent=11 // pred_region
        _
      $region24: #{bottleneck_forward.5} parent=11 // pred_fallthru
        _
    $region12: #{bottleneck_forward.5} parent=5 // pred_fallthru
      _
    %p204 = scmp.lt.s32.totalorder %s13, 2
    // Predicated region
    $region25: #{bottleneck_forward.5} parent=5 // pred_check
      %p205 = pneg %p204
    $region26: #{bottleneck_forward.5} parent=5 // pred_check_branch
      %207 = sbr.rel (%p205) target = $region28
    $region27: #{bottleneck_forward.5} parent=5 // pred_region
      // Predicated region
      $region29: #{bottleneck_forward.5} parent=27 // pred_check
        %p208 = pneg %p33
      $region30: #{bottleneck_forward.5} parent=27 // pred_check_branch
        %210 = sbr.rel (%p208) target = $region32
      $region31: #{bottleneck_forward.5} parent=27 // pred_region
        %p211 = scmp.lt.s32.totalorder %s13, 1
        %s212 = scalar_select %p211, %s13, 1
        %s213 = smul.addr %s212, 32
        %s214 = smul.addr %s213, 4
        %s215 = scalar_lea.vmem %s0, %s214
      $region32: #{bottleneck_forward.5} parent=27 // pred_fallthru
        _
    $region28: #{bottleneck_forward.5} parent=5 // pred_fallthru
      _
    %p216 = scmp.le.s32.totalorder 1, %s13
    %p217 = scmp.lt.s32.totalorder %s13, 3
    %p218 = pnand %p216, %p217
    %p219 = pneg %p218
    // Predicated region
    $region33: #{bottleneck_forward.5} parent=5 // pred_check
      _
    $region34: #{bottleneck_forward.5} parent=5 // pred_check_branch
      %221 = sbr.rel (%p218) target = $region36
    $region35: #{bottleneck_forward.5} parent=5 // pred_region
      %s222 = ssub.s32 %s13, 1
      %p223 = scmp.lt.s32.totalorder %s18, 1
      %s224 = scalar_select %p223, %s18, 1
      %s225 = smul.addr %s224, 32
      %s226 = smul.addr %s225, 4
      %s227 = scalar_lea.vmem %s0, %s226
      %p228 = pneg %p39
      %p229 = pneg %p36
      %p230 = pneg %p60
      %p231 = pneg %p57
      %p232 = pneg %p81
      %p233 = pneg %p78
      %p234 = pneg %p102
      %p235 = pneg %p99
      %p236 = pneg %p128
      %p237 = pneg %p125
      %s238 = smul.u32 32, %s18
      %p239 = scmp.lt.s32.totalorder %s238, 63
      %s240 = scalar_select %p239, %s238, 63
      %s241 = smul.addr %s240, 4
      %s242 = scalar_lea.vmem %s4, %s241
      %p243 = pneg %p154
      %p244 = pneg %p151
      %p245 = scmp.lt.s32.totalorder %s18, 1
      %s246 = scalar_select %p245, %s18, 1
      %s247 = scalar_lea.vmem %s5, %s246
      %p248 = pneg %p180
      %p249 = pneg %p177
      %p250 = scmp.lt.s32.totalorder %s18, 1
      %s251 = scalar_select %p250, %s18, 1
      %s252 = scalar_lea.vmem %s6, %s251
      %p253 = scmp.lt.s32.totalorder %s18, 1
      %s254 = scalar_select %p253, %s18, 1
      %s255 = smul.addr %s254, 32
      %s256 = smul.addr %s255, 4
      %s257 = scalar_lea.vmem %s0, %s256
      %s258 = smul.u32 32, %s18
      %p259 = scmp.lt.s32.totalorder %s258, 63
      %s260 = scalar_select %p259, %s258, 63
      %s261 = smul.addr %s260, 4
      %s262 = scalar_lea.vmem %s4, %s261
      %s263 = smul.u32 32, %s18
      %p264 = scmp.lt.s32.totalorder %s18, 1
      %s265 = scalar_select %p264, %s18, 1
      %s266 = scalar_lea.vmem %s5, %s265
      %p267 = scmp.lt.s32.totalorder %s18, 1
      %s268 = scalar_select %p267, %s18, 1
      %s269 = scalar_lea.vmem %s6, %s268
      %271 = vst [vmem:[#allocation2] sm:$0xf] 0
      %272 = vst [vmem:[#allocation2 + $0x4] sm:$0xf] 0
      %273 = vst [vmem:[#allocation2 + $0x8] sm:$0x1] 0
      %274 = vst [vmem:[#allocation2 + $0xc] sm:$0xf] 0
      %275 = vst [vmem:[#allocation2 + $0x10] sm:$0xf] 0
      %276 = vst [vmem:[#allocation2 + $0x14] sm:$0x1] 0
      %277 = vst [vmem:[#allocation2 + $0x18] sm:$0xf] 0
      %278 = vst [vmem:[#allocation2 + $0x1c] sm:$0xf] 0
      %279 = vst [vmem:[#allocation2 + $0x20] sm:$0x1] 0
      %280 = vst [vmem:[#allocation2 + $0x24] sm:$0xf] 0
      %281 = vst [vmem:[#allocation2 + $0x28] sm:$0xf] 0
      %282 = vst [vmem:[#allocation2 + $0x2c] sm:$0x1] 0
      %283 = vst [vmem:[#allocation2 + $0x30] sm:$0xf] 0
      %284 = vst [vmem:[#allocation2 + $0x34] sm:$0xf] 0
      %285 = vst [vmem:[#allocation2 + $0x38] sm:$0x1] 0
      %286 = vst [vmem:[#allocation2 + $0x3c] sm:$0xf] 0
      %287 = vst [vmem:[#allocation2 + $0x40] sm:$0xf] 0
      %288 = vst [vmem:[#allocation2 + $0x44] sm:$0x1] 0
      %289 = vst [vmem:[#allocation2 + $0x48] sm:$0xf] 0
      %290 = vst [vmem:[#allocation2 + $0x4c] sm:$0xf] 0
      %291 = vst [vmem:[#allocation2 + $0x50] sm:$0x1] 0
      %292 = vst [vmem:[#allocation2 + $0x54] sm:$0xf] 0
      %293 = vst [vmem:[#allocation2 + $0x58] sm:$0xf] 0
      %294 = vst [vmem:[#allocation2 + $0x5c] sm:$0x1] 0
      %295 = vst [vmem:[#allocation2 + $0x60] sm:$0xf] 0
      %296 = vst [vmem:[#allocation2 + $0x64] sm:$0xf] 0
      %297 = vst [vmem:[#allocation2 + $0x68] sm:$0x1] 0
      %298 = vst [vmem:[#allocation2 + $0x6c] sm:$0xf] 0
      %299 = vst [vmem:[#allocation2 + $0x70] sm:$0xf] 0
      %300 = vst [vmem:[#allocation2 + $0x74] sm:$0x1] 0
      %301 = vst [vmem:[#allocation2 + $0x78] sm:$0xf] 0
      %302 = vst [vmem:[#allocation2 + $0x7c] sm:$0xf] 0
      %303 = vst [vmem:[#allocation2 + $0x80] sm:$0x1] 0
      %304 = vst [vmem:[#allocation2 + $0x84] sm:$0xf] 0
      %305 = vst [vmem:[#allocation2 + $0x88] sm:$0xf] 0
      %306 = vst [vmem:[#allocation2 + $0x8c] sm:$0x1] 0
      %307 = vst [vmem:[#allocation2 + $0x90] sm:$0xf] 0
      %308 = vst [vmem:[#allocation2 + $0x94] sm:$0xf] 0
      %309 = vst [vmem:[#allocation2 + $0x98] sm:$0x1] 0
      %310 = vst [vmem:[#allocation2 + $0x9c] sm:$0xf] 0
      %311 = vst [vmem:[#allocation2 + $0xa0] sm:$0xf] 0
      %312 = vst [vmem:[#allocation2 + $0xa4] sm:$0x1] 0
      %313 = vst [vmem:[#allocation2 + $0xa8] sm:$0xf] 0
      %314 = vst [vmem:[#allocation2 + $0xac] sm:$0xf] 0
      %315 = vst [vmem:[#allocation2 + $0xb0] sm:$0x1] 0
      %316 = vst [vmem:[#allocation2 + $0xb4] sm:$0xf] 0
      %317 = vst [vmem:[#allocation2 + $0xb8] sm:$0xf] 0
      %318 = vst [vmem:[#allocation2 + $0xbc] sm:$0x1] 0
      %319 = vst [vmem:[#allocation2 + $0xc0] sm:$0xf] 0
      %320 = vst [vmem:[#allocation2 + $0xc4] sm:$0xf] 0
      %321 = vst [vmem:[#allocation2 + $0xc8] sm:$0x1] 0
      %322 = vst [vmem:[#allocation2 + $0xcc] sm:$0xf] 0
      %323 = vst [vmem:[#allocation2 + $0xd0] sm:$0xf] 0
      %324 = vst [vmem:[#allocation2 + $0xd4] sm:$0x1] 0
      %v325 = vld [vmem:[%s257] sm:$0xf]
      %v326 = vld [vmem:[%s257 + $0x4] sm:$0xf]
      %v327 = vld [vmem:[%s257 + $0x8] sm:$0xf]
      %v328 = vld [vmem:[%s257 + $0xc] sm:$0xf]
      %v329 = vld [vmem:[%s257 + $0x10] sm:$0xf]
      %v330 = vld [vmem:[%s257 + $0x14] sm:$0xf]
      %v331 = vld [vmem:[%s257 + $0x18] sm:$0xf]
      %v332 = vld [vmem:[%s257 + $0x1c] sm:$0xf]
      %v333 = vld [vmem:[%s257 + $0x20] sm:$0xf]
      %v334 = vld [vmem:[%s257 + $0x24] sm:$0xf]
      %v335 = vld [vmem:[%s257 + $0x28] sm:$0xf]
      %v336 = vld [vmem:[%s257 + $0x2c] sm:$0xf]
      %v337 = vld [vmem:[%s257 + $0x30] sm:$0xf]
      %v338 = vld [vmem:[%s257 + $0x34] sm:$0xf]
      %v339 = vld [vmem:[%s257 + $0x38] sm:$0xf]
      %v340 = vld [vmem:[%s257 + $0x3c] sm:$0xf]
      %v341 = vld [vmem:[%s257 + $0x40] sm:$0xf]
      %v342 = vld [vmem:[%s257 + $0x44] sm:$0xf]
      %v343 = vld [vmem:[%s257 + $0x48] sm:$0xf]
      %v344 = vld [vmem:[%s257 + $0x4c] sm:$0xf]
      %v345 = vld [vmem:[%s257 + $0x50] sm:$0xf]
      %v346 = vld [vmem:[%s257 + $0x54] sm:$0xf]
      %v347 = vld [vmem:[%s257 + $0x58] sm:$0xf]
      %v348 = vld [vmem:[%s257 + $0x5c] sm:$0xf]
      %v349 = vld [vmem:[%s257 + $0x60] sm:$0xf]
      %v350 = vld [vmem:[%s257 + $0x64] sm:$0xf]
      %v351 = vld [vmem:[%s257 + $0x68] sm:$0xf]
      %v352 = vld [vmem:[%s257 + $0x6c] sm:$0xf]
      %v353 = vld [vmem:[%s257 + $0x70] sm:$0xf]
      %v354 = vld [vmem:[%s257 + $0x74] sm:$0xf]
      %v355 = vld [vmem:[%s257 + $0x78] sm:$0xf]
      %v356 = vld [vmem:[%s257 + $0x7c] sm:$0xf]
      %v357 = vunpack.c.l.bf16 %v325
      %v358 = vunpack.c.l.bf16 %v326
      %v359 = vunpack.c.l.bf16 %v327
      %v360 = vunpack.c.l.bf16 %v328
      %v361 = vunpack.c.l.bf16 %v329
      %v362 = vunpack.c.l.bf16 %v330
      %v363 = vunpack.c.l.bf16 %v331
      %v364 = vunpack.c.l.bf16 %v332
      %v365 = vunpack.c.l.bf16 %v333
      %v366 = vunpack.c.l.bf16 %v334
      %v367 = vunpack.c.l.bf16 %v335
      %v368 = vunpack.c.l.bf16 %v336
      %v369 = vunpack.c.l.bf16 %v337
      %v370 = vunpack.c.l.bf16 %v338
      %v371 = vunpack.c.l.bf16 %v339
      %v372 = vunpack.c.l.bf16 %v340
      %v373 = vunpack.c.l.bf16 %v341
      %v374 = vunpack.c.l.bf16 %v342
      %v375 = vunpack.c.l.bf16 %v343
      %v376 = vunpack.c.l.bf16 %v344
      %v377 = vunpack.c.l.bf16 %v345
      %v378 = vunpack.c.l.bf16 %v346
      %v379 = vunpack.c.l.bf16 %v347
      %v380 = vunpack.c.l.bf16 %v348
      %v381 = vunpack.c.l.bf16 %v349
      %v382 = vunpack.c.l.bf16 %v350
      %v383 = vunpack.c.l.bf16 %v351
      %v384 = vunpack.c.l.bf16 %v352
      %v385 = vunpack.c.l.bf16 %v353
      %v386 = vunpack.c.l.bf16 %v354
      %v387 = vunpack.c.l.bf16 %v355
      %v388 = vunpack.c.l.bf16 %v356
      %v389 = vld [vmem:[%s1] sm:$0x1]
      %v391 = vlaneseq
      %v392 = vshrl.u32 %v391, 7
      %v393 = vsub.s32 0, %v392
      %v394 = vrot.slane %v389, %v393
      %v396 = vmul.f32 %v357, %v394
      %v397 = vmul.f32 %v358, %v394
      %v398 = vmul.f32 %v359, %v394
      %v399 = vmul.f32 %v360, %v394
      %v400 = vmul.f32 %v361, %v394
      %v401 = vmul.f32 %v362, %v394
      %v402 = vmul.f32 %v363, %v394
      %v403 = vmul.f32 %v364, %v394
      %v404 = vmul.f32 %v365, %v394
      %v405 = vmul.f32 %v366, %v394
      %v406 = vmul.f32 %v367, %v394
      %v407 = vmul.f32 %v368, %v394
      %v408 = vmul.f32 %v369, %v394
      %v409 = vmul.f32 %v370, %v394
      %v410 = vmul.f32 %v371, %v394
      %v411 = vmul.f32 %v372, %v394
      %v412 = vmul.f32 %v373, %v394
      %v413 = vmul.f32 %v374, %v394
      %v414 = vmul.f32 %v375, %v394
      %v415 = vmul.f32 %v376, %v394
      %v416 = vmul.f32 %v377, %v394
      %v417 = vmul.f32 %v378, %v394
      %v418 = vmul.f32 %v379, %v394
      %v419 = vmul.f32 %v380, %v394
      %v420 = vmul.f32 %v381, %v394
      %v421 = vmul.f32 %v382, %v394
      %v422 = vmul.f32 %v383, %v394
      %v423 = vmul.f32 %v384, %v394
      %v424 = vmul.f32 %v385, %v394
      %v425 = vmul.f32 %v386, %v394
      %v426 = vmul.f32 %v387, %v394
      %v427 = vmul.f32 %v388, %v394
      %v428 = vld [vmem:[%s2] sm:$0x1]
      %v430 = vlaneseq
      %v431 = vshrl.u32 %v430, 7
      %v432 = vsub.s32 0, %v431
      %v433 = vrot.slane %v428, %v432
      %v435 = vadd.f32 %v396, %v433
      %v436 = vadd.f32 %v397, %v433
      %v437 = vadd.f32 %v398, %v433
      %v438 = vadd.f32 %v399, %v433
      %v439 = vadd.f32 %v400, %v433
      %v440 = vadd.f32 %v401, %v433
      %v441 = vadd.f32 %v402, %v433
      %v442 = vadd.f32 %v403, %v433
      %v443 = vadd.f32 %v404, %v433
      %v444 = vadd.f32 %v405, %v433
      %v445 = vadd.f32 %v406, %v433
      %v446 = vadd.f32 %v407, %v433
      %v447 = vadd.f32 %v408, %v433
      %v448 = vadd.f32 %v409, %v433
      %v449 = vadd.f32 %v410, %v433
      %v450 = vadd.f32 %v411, %v433
      %v451 = vadd.f32 %v412, %v433
      %v452 = vadd.f32 %v413, %v433
      %v453 = vadd.f32 %v414, %v433
      %v454 = vadd.f32 %v415, %v433
      %v455 = vadd.f32 %v416, %v433
      %v456 = vadd.f32 %v417, %v433
      %v457 = vadd.f32 %v418, %v433
      %v458 = vadd.f32 %v419, %v433
      %v459 = vadd.f32 %v420, %v433
      %v460 = vadd.f32 %v421, %v433
      %v461 = vadd.f32 %v422, %v433
      %v462 = vadd.f32 %v423, %v433
      %v463 = vadd.f32 %v424, %v433
      %v464 = vadd.f32 %v425, %v433
      %v465 = vadd.f32 %v426, %v433
      %v466 = vadd.f32 %v427, %v433
      %v467 = vmax.f32 %v435, 0.0
      %v468 = vmax.f32 %v436, 0.0
      %v469 = vmax.f32 %v437, 0.0
      %v470 = vmax.f32 %v438, 0.0
      %v471 = vmax.f32 %v439, 0.0
      %v472 = vmax.f32 %v440, 0.0
      %v473 = vmax.f32 %v441, 0.0
      %v474 = vmax.f32 %v442, 0.0
      %v475 = vmax.f32 %v443, 0.0
      %v476 = vmax.f32 %v444, 0.0
      %v477 = vmax.f32 %v445, 0.0
      %v478 = vmax.f32 %v446, 0.0
      %v479 = vmax.f32 %v447, 0.0
      %v480 = vmax.f32 %v448, 0.0
      %v481 = vmax.f32 %v449, 0.0
      %v482 = vmax.f32 %v450, 0.0
      %v483 = vmax.f32 %v451, 0.0
      %v484 = vmax.f32 %v452, 0.0
      %v485 = vmax.f32 %v453, 0.0
      %v486 = vmax.f32 %v454, 0.0
      %v487 = vmax.f32 %v455, 0.0
      %v488 = vmax.f32 %v456, 0.0
      %v489 = vmax.f32 %v457, 0.0
      %v490 = vmax.f32 %v458, 0.0
      %v491 = vmax.f32 %v459, 0.0
      %v492 = vmax.f32 %v460, 0.0
      %v493 = vmax.f32 %v461, 0.0
      %v494 = vmax.f32 %v462, 0.0
      %v495 = vmax.f32 %v463, 0.0
      %v496 = vmax.f32 %v464, 0.0
      %v497 = vmax.f32 %v465, 0.0
      %v498 = vmax.f32 %v466, 0.0
      %v499 = vpack.c.bf16 %v468, %v467
      %v500 = vpack.c.bf16 %v470, %v469
      %v501 = vpack.c.bf16 %v472, %v471
      %v502 = vpack.c.bf16 %v474, %v473
      %v503 = vpack.c.bf16 %v476, %v475
      %v504 = vpack.c.bf16 %v478, %v477
      %v505 = vpack.c.bf16 %v480, %v479
      %v506 = vpack.c.bf16 %v482, %v481
      %v507 = vpack.c.bf16 %v484, %v483
      %v508 = vpack.c.bf16 %v486, %v485
      %v509 = vpack.c.bf16 %v488, %v487
      %v510 = vpack.c.bf16 %v490, %v489
      %v511 = vpack.c.bf16 %v492, %v491
      %v512 = vpack.c.bf16 %v494, %v493
      %v513 = vpack.c.bf16 %v496, %v495
      %v514 = vpack.c.bf16 %v498, %v497
      %v531 = vunpack.c.l.b16 %v499
      %v532 = vunpack.c.h.b16 %v499
      %v533 = vunpack.c.l.b16 %v500
      %v534 = vunpack.c.h.b16 %v500
      %v535 = vunpack.c.l.b16 %v501
      %v536 = vunpack.c.h.b16 %v501
      %v537 = vunpack.c.l.b16 %v502
      %v538 = vunpack.c.h.b16 %v502
      %v539 = vunpack.c.l.b16 %v503
      %v540 = vunpack.c.h.b16 %v503
      %v541 = vunpack.c.l.b16 %v504
      %v542 = vunpack.c.h.b16 %v504
      %v543 = vunpack.c.l.b16 %v505
      %v544 = vunpack.c.h.b16 %v505
      %v545 = vunpack.c.l.b16 %v506
      %v546 = vunpack.c.h.b16 %v506
      %v547 = vunpack.c.l.b16 %v507
      %v548 = vunpack.c.h.b16 %v507
      %v549 = vunpack.c.l.b16 %v508
      %v550 = vunpack.c.h.b16 %v508
      %v551 = vunpack.c.l.b16 %v509
      %v552 = vunpack.c.h.b16 %v509
      %v553 = vunpack.c.l.b16 %v510
      %v554 = vunpack.c.h.b16 %v510
      %v555 = vunpack.c.l.b16 %v511
      %v556 = vunpack.c.h.b16 %v511
      %v557 = vunpack.c.l.b16 %v512
      %v558 = vunpack.c.h.b16 %v512
      %v559 = vunpack.c.l.b16 %v513
      %v560 = vunpack.c.h.b16 %v513
      %v561 = vunpack.c.l.b16 %v514
      %v562 = vunpack.c.h.b16 %v514
      %v563 = vpack.c.b16 %v531, %v531
      %v564 = vpack.c.b16 %v532, %v532
      %v565 = vpack.c.b16 %v533, %v533
      %v566 = vpack.c.b16 %v534, %v534
      %v567 = vpack.c.b16 %v535, %v535
      %v568 = vpack.c.b16 %v536, %v536
      %v569 = vpack.c.b16 %v537, %v537
      %v570 = vpack.c.b16 %v538, %v538
      %v571 = vpack.c.b16 %v539, %v539
      %v572 = vpack.c.b16 %v540, %v540
      %v573 = vpack.c.b16 %v541, %v541
      %v574 = vpack.c.b16 %v542, %v542
      %v575 = vpack.c.b16 %v543, %v543
      %v576 = vpack.c.b16 %v544, %v544
      %v577 = vpack.c.b16 %v545, %v545
      %v578 = vpack.c.b16 %v546, %v546
      %v579 = vpack.c.b16 %v547, %v547
      %v580 = vpack.c.b16 %v548, %v548
      %v581 = vpack.c.b16 %v549, %v549
      %v582 = vpack.c.b16 %v550, %v550
      %v583 = vpack.c.b16 %v551, %v551
      %v584 = vpack.c.b16 %v552, %v552
      %v585 = vpack.c.b16 %v553, %v553
      %v586 = vpack.c.b16 %v554, %v554
      %v587 = vpack.c.b16 %v555, %v555
      %v588 = vpack.c.b16 %v556, %v556
      %v589 = vpack.c.b16 %v557, %v557
      %v590 = vpack.c.b16 %v558, %v558
      %v591 = vpack.c.b16 %v559, %v559
      %v592 = vpack.c.b16 %v560, %v560
      %v593 = vpack.c.b16 %v561, %v561
      %v594 = vpack.c.b16 %v562, %v562
      %vm595 = vsmask.f32 256
      %vm596 = vsmask.f32 4368
      %vm597 = vmor %vm595, %vm596
      %v599 = vshrl.u32 %v563, 16
      %v601 = vrot.slane %v599, 7
      %v602 = vshll.u32 %v563, 16
      %v604 = vor.u32 %v601, %v602
      %v605 = vrot.slane %v601, 4
      %v607 = vshrl.u32 %v564, 16
      %v609 = vrot.slane %v607, 7
      %v610 = vshll.u32 %v564, 16
      %v612 = vor.u32 %v609, %v610
      %v613 = vsel %vm597, %v605, %v612
      %v614 = vrot.slane %v609, 4
      %v616 = vshrl.u32 %v565, 16
      %v618 = vrot.slane %v616, 7
      %v619 = vshll.u32 %v565, 16
      %v621 = vor.u32 %v618, %v619
      %v622 = vrot.slane %v618, 4
      %v624 = vshrl.u32 %v566, 16
      %v626 = vrot.slane %v624, 7
      %v627 = vshll.u32 %v566, 16
      %v629 = vor.u32 %v626, %v627
      %v630 = vsel %vm597, %v622, %v629
      %v631 = vrot.slane %v626, 4
      %v633 = vshrl.u32 %v567, 16
      %v635 = vrot.slane %v633, 7
      %v636 = vshll.u32 %v567, 16
      %v638 = vor.u32 %v635, %v636
      %v639 = vrot.slane %v635, 4
      %v641 = vshrl.u32 %v568, 16
      %v643 = vrot.slane %v641, 7
      %v644 = vshll.u32 %v568, 16
      %v646 = vor.u32 %v643, %v644
      %v647 = vsel %vm597, %v639, %v646
      %v648 = vrot.slane %v643, 4
      %v650 = vshrl.u32 %v569, 16
      %v652 = vrot.slane %v650, 7
      %v653 = vshll.u32 %v569, 16
      %v655 = vor.u32 %v652, %v653
      %v656 = vrot.slane %v652, 4
      %v658 = vshrl.u32 %v570, 16
      %v660 = vrot.slane %v658, 7
      %v661 = vshll.u32 %v570, 16
      %v663 = vor.u32 %v660, %v661
      %v664 = vsel %vm597, %v656, %v663
      %v665 = vrot.slane %v660, 4
      %v667 = vshrl.u32 %v571, 16
      %v669 = vrot.slane %v667, 7
      %v670 = vshll.u32 %v571, 16
      %v672 = vor.u32 %v669, %v670
      %v673 = vrot.slane %v669, 4
      %v675 = vshrl.u32 %v572, 16
      %v677 = vrot.slane %v675, 7
      %v678 = vshll.u32 %v572, 16
      %v680 = vor.u32 %v677, %v678
      %v681 = vsel %vm597, %v673, %v680
      %v682 = vrot.slane %v677, 4
      %v684 = vshrl.u32 %v573, 16
      %v686 = vrot.slane %v684, 7
      %v687 = vshll.u32 %v573, 16
      %v689 = vor.u32 %v686, %v687
      %v690 = vrot.slane %v686, 4
      %v692 = vshrl.u32 %v574, 16
      %v694 = vrot.slane %v692, 7
      %v695 = vshll.u32 %v574, 16
      %v697 = vor.u32 %v694, %v695
      %v698 = vsel %vm597, %v690, %v697
      %v699 = vrot.slane %v694, 4
      %v701 = vshrl.u32 %v575, 16
      %v703 = vrot.slane %v701, 7
      %v704 = vshll.u32 %v575, 16
      %v706 = vor.u32 %v703, %v704
      %v707 = vrot.slane %v703, 4
      %v709 = vshrl.u32 %v576, 16
      %v711 = vrot.slane %v709, 7
      %v712 = vshll.u32 %v576, 16
      %v714 = vor.u32 %v711, %v712
      %v715 = vsel %vm597, %v707, %v714
      %v716 = vrot.slane %v711, 4
      %v718 = vshrl.u32 %v577, 16
      %v720 = vrot.slane %v718, 7
      %v721 = vshll.u32 %v577, 16
      %v723 = vor.u32 %v720, %v721
      %v724 = vrot.slane %v720, 4
      %v726 = vshrl.u32 %v578, 16
      %v728 = vrot.slane %v726, 7
      %v729 = vshll.u32 %v578, 16
      %v731 = vor.u32 %v728, %v729
      %v732 = vsel %vm597, %v724, %v731
      %v733 = vrot.slane %v728, 4
      %v735 = vshrl.u32 %v579, 16
      %v737 = vrot.slane %v735, 7
      %v738 = vshll.u32 %v579, 16
      %v740 = vor.u32 %v737, %v738
      %v741 = vrot.slane %v737, 4
      %v743 = vshrl.u32 %v580, 16
      %v745 = vrot.slane %v743, 7
      %v746 = vshll.u32 %v580, 16
      %v748 = vor.u32 %v745, %v746
      %v749 = vsel %vm597, %v741, %v748
      %v750 = vrot.slane %v745, 4
      %v752 = vshrl.u32 %v581, 16
      %v754 = vrot.slane %v752, 7
      %v755 = vshll.u32 %v581, 16
      %v757 = vor.u32 %v754, %v755
      %v758 = vrot.slane %v754, 4
      %v760 = vshrl.u32 %v582, 16
      %v762 = vrot.slane %v760, 7
      %v763 = vshll.u32 %v582, 16
      %v765 = vor.u32 %v762, %v763
      %v766 = vsel %vm597, %v758, %v765
      %v767 = vrot.slane %v762, 4
      %v769 = vshrl.u32 %v583, 16
      %v771 = vrot.slane %v769, 7
      %v772 = vshll.u32 %v583, 16
      %v774 = vor.u32 %v771, %v772
      %v775 = vrot.slane %v771, 4
      %v777 = vshrl.u32 %v584, 16
      %v779 = vrot.slane %v777, 7
      %v780 = vshll.u32 %v584, 16
      %v782 = vor.u32 %v779, %v780
      %v783 = vsel %vm597, %v775, %v782
      %v784 = vrot.slane %v779, 4
      %v786 = vshrl.u32 %v585, 16
      %v788 = vrot.slane %v786, 7
      %v789 = vshll.u32 %v585, 16
      %v791 = vor.u32 %v788, %v789
      %v792 = vrot.slane %v788, 4
      %v794 = vshrl.u32 %v586, 16
      %v796 = vrot.slane %v794, 7
      %v797 = vshll.u32 %v586, 16
      %v799 = vor.u32 %v796, %v797
      %v800 = vsel %vm597, %v792, %v799
      %v801 = vrot.slane %v796, 4
      %v803 = vshrl.u32 %v587, 16
      %v805 = vrot.slane %v803, 7
      %v806 = vshll.u32 %v587, 16
      %v808 = vor.u32 %v805, %v806
      %v809 = vrot.slane %v805, 4
      %v811 = vshrl.u32 %v588, 16
      %v813 = vrot.slane %v811, 7
      %v814 = vshll.u32 %v588, 16
      %v816 = vor.u32 %v813, %v814
      %v817 = vsel %vm597, %v809, %v816
      %v818 = vrot.slane %v813, 4
      %v820 = vshrl.u32 %v589, 16
      %v822 = vrot.slane %v820, 7
      %v823 = vshll.u32 %v589, 16
      %v825 = vor.u32 %v822, %v823
      %v826 = vrot.slane %v822, 4
      %v828 = vshrl.u32 %v590, 16
      %v830 = vrot.slane %v828, 7
      %v831 = vshll.u32 %v590, 16
      %v833 = vor.u32 %v830, %v831
      %v834 = vsel %vm597, %v826, %v833
      %v835 = vrot.slane %v830, 4
      %v837 = vshrl.u32 %v591, 16
      %v839 = vrot.slane %v837, 7
      %v840 = vshll.u32 %v591, 16
      %v842 = vor.u32 %v839, %v840
      %v843 = vrot.slane %v839, 4
      %v845 = vshrl.u32 %v592, 16
      %v847 = vrot.slane %v845, 7
      %v848 = vshll.u32 %v592, 16
      %v850 = vor.u32 %v847, %v848
      %v851 = vsel %vm597, %v843, %v850
      %v852 = vrot.slane %v847, 4
      %v854 = vshrl.u32 %v593, 16
      %v856 = vrot.slane %v854, 7
      %v857 = vshll.u32 %v593, 16
      %v859 = vor.u32 %v856, %v857
      %v860 = vrot.slane %v856, 4
      %v862 = vshrl.u32 %v594, 16
      %v864 = vrot.slane %v862, 7
      %v865 = vshll.u32 %v594, 16
      %v867 = vor.u32 %v864, %v865
      %v868 = vsel %vm597, %v860, %v867
      %v869 = vrot.slane %v864, 4
      %s918 = scalar_lea.vmem [#allocation2], 12
      %vm919 = vcmask 1043456
      %vm920 = vsmask.f32 7938
      %vm921 = vmand %vm919, %vm920
      %v922 = vld [vmem:[%s918] sm:$0xf]
      %v923 = vsel %vm921, %v604, %v922
      %924 = vst [vmem:[%s918] sm:$0xf] %v923
      %925 = vst [vmem:[%s918 + $0x4] sm:$0xf] %v613
      %vm926 = vcmask 1040384
      %vm927 = vmand %vm926, %vm595
      %v928 = vld [vmem:[%s918 + $0x8] sm:$0x1]
      %v929 = vsel %vm927, %v614, %v928
      %930 = vst [vmem:[%s918 + $0x8] sm:$0x1] %v929
      %v931 = vld [vmem:[%s918 + $0xc] sm:$0xf]
      %v932 = vsel %vm921, %v621, %v931
      %933 = vst [vmem:[%s918 + $0xc] sm:$0xf] %v932
      %934 = vst [vmem:[%s918 + $0x10] sm:$0xf] %v630
      %v935 = vld [vmem:[%s918 + $0x14] sm:$0x1]
      %v936 = vsel %vm927, %v631, %v935
      %937 = vst [vmem:[%s918 + $0x14] sm:$0x1] %v936
      %v938 = vld [vmem:[%s918 + $0x18] sm:$0xf]
      %v939 = vsel %vm921, %v638, %v938
      %940 = vst [vmem:[%s918 + $0x18] sm:$0xf] %v939
      %941 = vst [vmem:[%s918 + $0x1c] sm:$0xf] %v647
      %v942 = vld [vmem:[%s918 + $0x20] sm:$0x1]
      %v943 = vsel %vm927, %v648, %v942
      %944 = vst [vmem:[%s918 + $0x20] sm:$0x1] %v943
      %v945 = vld [vmem:[%s918 + $0x24] sm:$0xf]
      %v946 = vsel %vm921, %v655, %v945
      %947 = vst [vmem:[%s918 + $0x24] sm:$0xf] %v946
      %948 = vst [vmem:[%s918 + $0x28] sm:$0xf] %v664
      %v949 = vld [vmem:[%s918 + $0x2c] sm:$0x1]
      %v950 = vsel %vm927, %v665, %v949
      %951 = vst [vmem:[%s918 + $0x2c] sm:$0x1] %v950
      %v952 = vld [vmem:[%s918 + $0x30] sm:$0xf]
      %v953 = vsel %vm921, %v672, %v952
      %954 = vst [vmem:[%s918 + $0x30] sm:$0xf] %v953
      %955 = vst [vmem:[%s918 + $0x34] sm:$0xf] %v681
      %v956 = vld [vmem:[%s918 + $0x38] sm:$0x1]
      %v957 = vsel %vm927, %v682, %v956
      %958 = vst [vmem:[%s918 + $0x38] sm:$0x1] %v957
      %v959 = vld [vmem:[%s918 + $0x3c] sm:$0xf]
      %v960 = vsel %vm921, %v689, %v959
      %961 = vst [vmem:[%s918 + $0x3c] sm:$0xf] %v960
      %962 = vst [vmem:[%s918 + $0x40] sm:$0xf] %v698
      %v963 = vld [vmem:[%s918 + $0x44] sm:$0x1]
      %v964 = vsel %vm927, %v699, %v963
      %965 = vst [vmem:[%s918 + $0x44] sm:$0x1] %v964
      %v966 = vld [vmem:[%s918 + $0x48] sm:$0xf]
      %v967 = vsel %vm921, %v706, %v966
      %968 = vst [vmem:[%s918 + $0x48] sm:$0xf] %v967
      %969 = vst [vmem:[%s918 + $0x4c] sm:$0xf] %v715
      %v970 = vld [vmem:[%s918 + $0x50] sm:$0x1]
      %v971 = vsel %vm927, %v716, %v970
      %972 = vst [vmem:[%s918 + $0x50] sm:$0x1] %v971
      %v973 = vld [vmem:[%s918 + $0x54] sm:$0xf]
      %v974 = vsel %vm921, %v723, %v973
      %975 = vst [vmem:[%s918 + $0x54] sm:$0xf] %v974
      %976 = vst [vmem:[%s918 + $0x58] sm:$0xf] %v732
      %v977 = vld [vmem:[%s918 + $0x5c] sm:$0x1]
      %v978 = vsel %vm927, %v733, %v977
      %979 = vst [vmem:[%s918 + $0x5c] sm:$0x1] %v978
      %v980 = vld [vmem:[%s918 + $0x60] sm:$0xf]
      %v981 = vsel %vm921, %v740, %v980
      %982 = vst [vmem:[%s918 + $0x60] sm:$0xf] %v981
      %983 = vst [vmem:[%s918 + $0x64] sm:$0xf] %v749
      %v984 = vld [vmem:[%s918 + $0x68] sm:$0x1]
      %v985 = vsel %vm927, %v750, %v984
      %986 = vst [vmem:[%s918 + $0x68] sm:$0x1] %v985
      %v987 = vld [vmem:[%s918 + $0x6c] sm:$0xf]
      %v988 = vsel %vm921, %v757, %v987
      %989 = vst [vmem:[%s918 + $0x6c] sm:$0xf] %v988
      %990 = vst [vmem:[%s918 + $0x70] sm:$0xf] %v766
      %v991 = vld [vmem:[%s918 + $0x74] sm:$0x1]
      %v992 = vsel %vm927, %v767, %v991
      %993 = vst [vmem:[%s918 + $0x74] sm:$0x1] %v992
      %v994 = vld [vmem:[%s918 + $0x78] sm:$0xf]
      %v995 = vsel %vm921, %v774, %v994
      %996 = vst [vmem:[%s918 + $0x78] sm:$0xf] %v995
      %997 = vst [vmem:[%s918 + $0x7c] sm:$0xf] %v783
      %v998 = vld [vmem:[%s918 + $0x80] sm:$0x1]
      %v999 = vsel %vm927, %v784, %v998
      %1000 = vst [vmem:[%s918 + $0x80] sm:$0x1] %v999
      %v1001 = vld [vmem:[%s918 + $0x84] sm:$0xf]
      %v1002 = vsel %vm921, %v791, %v1001
      %1003 = vst [vmem:[%s918 + $0x84] sm:$0xf] %v1002
      %1004 = vst [vmem:[%s918 + $0x88] sm:$0xf] %v800
      %v1005 = vld [vmem:[%s918 + $0x8c] sm:$0x1]
      %v1006 = vsel %vm927, %v801, %v1005
      %1007 = vst [vmem:[%s918 + $0x8c] sm:$0x1] %v1006
      %v1008 = vld [vmem:[%s918 + $0x90] sm:$0xf]
      %v1009 = vsel %vm921, %v808, %v1008
      %1010 = vst [vmem:[%s918 + $0x90] sm:$0xf] %v1009
      %1011 = vst [vmem:[%s918 + $0x94] sm:$0xf] %v817
      %v1012 = vld [vmem:[%s918 + $0x98] sm:$0x1]
      %v1013 = vsel %vm927, %v818, %v1012
      %1014 = vst [vmem:[%s918 + $0x98] sm:$0x1] %v1013
      %v1015 = vld [vmem:[%s918 + $0x9c] sm:$0xf]
      %v1016 = vsel %vm921, %v825, %v1015
      %1017 = vst [vmem:[%s918 + $0x9c] sm:$0xf] %v1016
      %1018 = vst [vmem:[%s918 + $0xa0] sm:$0xf] %v834
      %v1019 = vld [vmem:[%s918 + $0xa4] sm:$0x1]
      %v1020 = vsel %vm927, %v835, %v1019
      %1021 = vst [vmem:[%s918 + $0xa4] sm:$0x1] %v1020
      %v1022 = vld [vmem:[%s918 + $0xa8] sm:$0xf]
      %v1023 = vsel %vm921, %v842, %v1022
      %1024 = vst [vmem:[%s918 + $0xa8] sm:$0xf] %v1023
      %1025 = vst [vmem:[%s918 + $0xac] sm:$0xf] %v851
      %v1026 = vld [vmem:[%s918 + $0xb0] sm:$0x1]
      %v1027 = vsel %vm927, %v852, %v1026
      %1028 = vst [vmem:[%s918 + $0xb0] sm:$0x1] %v1027
      %v1029 = vld [vmem:[%s918 + $0xb4] sm:$0xf]
      %v1030 = vsel %vm921, %v859, %v1029
      %1031 = vst [vmem:[%s918 + $0xb4] sm:$0xf] %v1030
      %1032 = vst [vmem:[%s918 + $0xb8] sm:$0xf] %v868
      %v1033 = vld [vmem:[%s918 + $0xbc] sm:$0x1]
      %v1034 = vsel %vm927, %v869, %v1033
      %1035 = vst [vmem:[%s918 + $0xbc] sm:$0x1] %v1034
      %1036 = vst [vmem:[#allocation3] sm:$0xff] 0.0
      %1037 = vst [vmem:[#allocation3 + $0x8] sm:$0xff] 0.0
      %1038 = vst [vmem:[#allocation3 + $0x10] sm:$0xff] 0.0
      %1039 = vst [vmem:[#allocation3 + $0x18] sm:$0xff] 0.0
      %1040 = vst [vmem:[#allocation3 + $0x20] sm:$0xff] 0.0
      %1041 = vst [vmem:[#allocation3 + $0x28] sm:$0xff] 0.0
      %1042 = vst [vmem:[#allocation3 + $0x30] sm:$0xff] 0.0
      %1043 = vst [vmem:[#allocation3 + $0x38] sm:$0xff] 0.0
      %1044 = vst [vmem:[#allocation3 + $0x40] sm:$0xff] 0.0
      %1045 = vst [vmem:[#allocation3 + $0x48] sm:$0xff] 0.0
      %1046 = vst [vmem:[#allocation3 + $0x50] sm:$0xff] 0.0
      %1047 = vst [vmem:[#allocation3 + $0x58] sm:$0xff] 0.0
      %1048 = vst [vmem:[#allocation3 + $0x60] sm:$0xff] 0.0
      %1049 = vst [vmem:[#allocation3 + $0x68] sm:$0xff] 0.0
      %1050 = vst [vmem:[#allocation3 + $0x70] sm:$0xff] 0.0
      %1051 = vst [vmem:[#allocation3 + $0x78] sm:$0xff] 0.0
      %1052 = vst [vmem:[#allocation3 + $0x80] sm:$0xff] 0.0
      %1053 = vst [vmem:[#allocation3 + $0x88] sm:$0xff] 0.0
      %1054 = vst [vmem:[#allocation3 + $0x90] sm:$0xff] 0.0
      %1055 = vst [vmem:[#allocation3 + $0x98] sm:$0xff] 0.0
      %1056 = vst [vmem:[#allocation3 + $0xa0] sm:$0xff] 0.0
      %1057 = vst [vmem:[#allocation3 + $0xa8] sm:$0xff] 0.0
      %1058 = vst [vmem:[#allocation3 + $0xb0] sm:$0xff] 0.0
      %1059 = vst [vmem:[#allocation3 + $0xb8] sm:$0xff] 0.0
      %1060 = vst [vmem:[#allocation3 + $0xc0] sm:$0xff] 0.0
      %1061 = vst [vmem:[#allocation3 + $0xc8] sm:$0xff] 0.0
      %1062 = vst [vmem:[#allocation3 + $0xd0] sm:$0xff] 0.0
      %1063 = vst [vmem:[#allocation3 + $0xd8] sm:$0xff] 0.0
      %1064 = vst [vmem:[#allocation3 + $0xe0] sm:$0xff] 0.0
      %1065 = vst [vmem:[#allocation3 + $0xe8] sm:$0xff] 0.0
      %1066 = vst [vmem:[#allocation3 + $0xf0] sm:$0xff] 0.0
      %1067 = vst [vmem:[#allocation3 + $0xf8] sm:$0xff] 0.0
      %v1068 = vld [vmem:[#allocation2] sm:$0xf]
      %v1069 = vld [vmem:[#allocation2 + $0x4] sm:$0xf]
      %v1070 = vld [vmem:[#allocation2 + $0xc] sm:$0xf]
      %v1071 = vld [vmem:[#allocation2 + $0x10] sm:$0xf]
      %v1072 = vld [vmem:[#allocation2 + $0x18] sm:$0xf]
      %v1073 = vld [vmem:[#allocation2 + $0x1c] sm:$0xf]
      %v1074 = vld [vmem:[#allocation2 + $0x24] sm:$0xf]
      %v1075 = vld [vmem:[#allocation2 + $0x28] sm:$0xf]
      %v1076 = vld [vmem:[#allocation2 + $0x30] sm:$0xf]
      %v1077 = vld [vmem:[#allocation2 + $0x34] sm:$0xf]
      %v1078 = vld [vmem:[#allocation2 + $0x3c] sm:$0xf]
      %v1079 = vld [vmem:[#allocation2 + $0x40] sm:$0xf]
      %v1080 = vld [vmem:[#allocation2 + $0x48] sm:$0xf]
      %v1081 = vld [vmem:[#allocation2 + $0x4c] sm:$0xf]
      %v1082 = vld [vmem:[#allocation2 + $0x54] sm:$0xf]
      %v1083 = vld [vmem:[#allocation2 + $0x58] sm:$0xf]
      %v1084 = vld [vmem:[#allocation2 + $0x60] sm:$0xf]
      %v1085 = vld [vmem:[#allocation2 + $0x64] sm:$0xf]
      %v1086 = vld [vmem:[#allocation2 + $0x6c] sm:$0xf]
      %v1087 = vld [vmem:[#allocation2 + $0x70] sm:$0xf]
      %v1088 = vld [vmem:[#allocation2 + $0x78] sm:$0xf]
      %v1089 = vld [vmem:[#allocation2 + $0x7c] sm:$0xf]
      %v1090 = vld [vmem:[#allocation2 + $0x84] sm:$0xf]
      %v1091 = vld [vmem:[#allocation2 + $0x88] sm:$0xf]
      %v1092 = vld [vmem:[#allocation2 + $0x90] sm:$0xf]
      %v1093 = vld [vmem:[#allocation2 + $0x94] sm:$0xf]
      %v1094 = vld [vmem:[#allocation2 + $0x9c] sm:$0xf]
      %v1095 = vld [vmem:[#allocation2 + $0xa0] sm:$0xf]
      %v1096 = vld [vmem:[#allocation2 + $0xa8] sm:$0xf]
      %v1097 = vld [vmem:[#allocation2 + $0xac] sm:$0xf]
      %v1098 = vld [vmem:[#allocation2 + $0xb4] sm:$0xf]
      %v1099 = vld [vmem:[#allocation2 + $0xb8] sm:$0xf]
      %v1100 = vld [vmem:[#allocation3] sm:$0xff]
      %v1101 = vld [vmem:[#allocation3 + $0x8] sm:$0xff]
      %v1102 = vld [vmem:[#allocation3 + $0x10] sm:$0xff]
      %v1103 = vld [vmem:[#allocation3 + $0x18] sm:$0xff]
      %v1104 = vld [vmem:[#allocation3 + $0x20] sm:$0xff]
      %v1105 = vld [vmem:[#allocation3 + $0x28] sm:$0xff]
      %v1106 = vld [vmem:[#allocation3 + $0x30] sm:$0xff]
      %v1107 = vld [vmem:[#allocation3 + $0x38] sm:$0xff]
      %v1108 = vld [vmem:[#allocation3 + $0x40] sm:$0xff]
      %v1109 = vld [vmem:[#allocation3 + $0x48] sm:$0xff]
      %v1110 = vld [vmem:[#allocation3 + $0x50] sm:$0xff]
      %v1111 = vld [vmem:[#allocation3 + $0x58] sm:$0xff]
      %v1112 = vld [vmem:[#allocation3 + $0x60] sm:$0xff]
      %v1113 = vld [vmem:[#allocation3 + $0x68] sm:$0xff]
      %v1114 = vld [vmem:[#allocation3 + $0x70] sm:$0xff]
      %v1115 = vld [vmem:[#allocation3 + $0x78] sm:$0xff]
      %v1116 = vld [vmem:[#allocation3 + $0x80] sm:$0xff]
      %v1117 = vld [vmem:[#allocation3 + $0x88] sm:$0xff]
      %v1118 = vld [vmem:[#allocation3 + $0x90] sm:$0xff]
      %v1119 = vld [vmem:[#allocation3 + $0x98] sm:$0xff]
      %v1120 = vld [vmem:[#allocation3 + $0xa0] sm:$0xff]
      %v1121 = vld [vmem:[#allocation3 + $0xa8] sm:$0xff]
      %v1122 = vld [vmem:[#allocation3 + $0xb0] sm:$0xff]
      %v1123 = vld [vmem:[#allocation3 + $0xb8] sm:$0xff]
      %v1124 = vld [vmem:[#allocation3 + $0xc0] sm:$0xff]
      %v1125 = vld [vmem:[#allocation3 + $0xc8] sm:$0xff]
      %v1126 = vld [vmem:[#allocation3 + $0xd0] sm:$0xff]
      %v1127 = vld [vmem:[#allocation3 + $0xd8] sm:$0xff]
      %v1128 = vld [vmem:[#allocation3 + $0xe0] sm:$0xff]
      %v1129 = vld [vmem:[#allocation3 + $0xe8] sm:$0xff]
      %v1130 = vld [vmem:[#allocation3 + $0xf0] sm:$0xff]
      %v1131 = vld [vmem:[#allocation3 + $0xf8] sm:$0xff]
      %v1132 = vld [vmem:[%s3] sm:$0xf]
      %v1133 = vld [vmem:[%s3 + $0x4] sm:$0xf]
      %v1134 = vld [vmem:[%s3 + $0x8] sm:$0xf]
      %v1135 = vld [vmem:[%s3 + $0xc] sm:$0xf]
      %v1136 = vld [vmem:[%s3 + $0x10] sm:$0xf]
      %v1137 = vld [vmem:[%s3 + $0x14] sm:$0xf]
      %v1138 = vld [vmem:[%s3 + $0x18] sm:$0xf]
      %v1139 = vld [vmem:[%s3 + $0x1c] sm:$0xf]
      %v1140 = vld [vmem:[%s3 + $0x20] sm:$0xf]
      %v1141 = vld [vmem:[%s3 + $0x24] sm:$0xf]
      %v1142 = vld [vmem:[%s3 + $0x28] sm:$0xf]
      %v1143 = vld [vmem:[%s3 + $0x2c] sm:$0xf]
      %v1144 = vld [vmem:[%s3 + $0x30] sm:$0xf]
      %v1145 = vld [vmem:[%s3 + $0x34] sm:$0xf]
      %v1146 = vld [vmem:[%s3 + $0x38] sm:$0xf]
      %v1147 = vld [vmem:[%s3 + $0x3c] sm:$0xf]
      %v1180 = vunpack.c.l.b16 %v1068
      %v1181 = vunpack.c.l.b16 %v1069
      %v1182 = vunpack.c.l.b16 %v1070
      %v1183 = vunpack.c.l.b16 %v1071
      %v1184 = vunpack.c.l.b16 %v1072
      %v1185 = vunpack.c.l.b16 %v1073
      %v1186 = vunpack.c.l.b16 %v1074
      %v1187 = vunpack.c.l.b16 %v1075
      %v1188 = vunpack.c.l.b16 %v1076
      %v1189 = vunpack.c.l.b16 %v1077
      %v1190 = vunpack.c.l.b16 %v1078
      %v1191 = vunpack.c.l.b16 %v1079
      %v1192 = vunpack.c.l.b16 %v1080
      %v1193 = vunpack.c.l.b16 %v1081
      %v1194 = vunpack.c.l.b16 %v1082
      %v1195 = vunpack.c.l.b16 %v1083
      %v1196 = vunpack.c.l.b16 %v1084
      %v1197 = vunpack.c.l.b16 %v1085
      %v1198 = vunpack.c.l.b16 %v1086
      %v1199 = vunpack.c.l.b16 %v1087
      %v1200 = vunpack.c.l.b16 %v1088
      %v1201 = vunpack.c.l.b16 %v1089
      %v1202 = vunpack.c.l.b16 %v1090
      %v1203 = vunpack.c.l.b16 %v1091
      %v1204 = vunpack.c.l.b16 %v1092
      %v1205 = vunpack.c.l.b16 %v1093
      %v1206 = vunpack.c.l.b16 %v1094
      %v1207 = vunpack.c.l.b16 %v1095
      %v1208 = vunpack.c.l.b16 %v1096
      %v1209 = vunpack.c.l.b16 %v1097
      %v1210 = vunpack.c.l.b16 %v1098
      %v1211 = vunpack.c.l.b16 %v1099
      %v1212 = vpack.c.b16 %v1181, %v1180
      %v1213 = vpack.c.b16 %v1183, %v1182
      %v1214 = vpack.c.b16 %v1185, %v1184
      %v1215 = vpack.c.b16 %v1187, %v1186
      %v1216 = vpack.c.b16 %v1189, %v1188
      %v1217 = vpack.c.b16 %v1191, %v1190
      %v1218 = vpack.c.b16 %v1193, %v1192
      %v1219 = vpack.c.b16 %v1195, %v1194
      %v1220 = vpack.c.b16 %v1197, %v1196
      %v1221 = vpack.c.b16 %v1199, %v1198
      %v1222 = vpack.c.b16 %v1201, %v1200
      %v1223 = vpack.c.b16 %v1203, %v1202
      %v1224 = vpack.c.b16 %v1205, %v1204
      %v1225 = vpack.c.b16 %v1207, %v1206
      %v1226 = vpack.c.b16 %v1209, %v1208
      %v1227 = vpack.c.b16 %v1211, %v1210
      %v1260 = vunpack.c.l.b16 %v1132
      %v1261 = vunpack.c.l.b16 %v1133
      %v1262 = vunpack.c.l.b16 %v1134
      %v1263 = vunpack.c.l.b16 %v1135
      %v1264 = vunpack.c.l.b16 %v1136
      %v1265 = vunpack.c.l.b16 %v1137
      %v1266 = vunpack.c.l.b16 %v1138
      %v1267 = vunpack.c.l.b16 %v1139
      %v1268 = vunpack.c.l.b16 %v1140
      %v1269 = vunpack.c.l.b16 %v1141
      %v1270 = vunpack.c.l.b16 %v1142
      %v1271 = vunpack.c.l.b16 %v1143
      %v1272 = vunpack.c.l.b16 %v1144
      %v1273 = vunpack.c.l.b16 %v1145
      %v1274 = vunpack.c.l.b16 %v1146
      %v1275 = vunpack.c.l.b16 %v1147
      %v1276 = vpack.c.b16 %v1261, %v1260
      %v1277 = vpack.c.b16 %v1263, %v1262
      %v1278 = vpack.c.b16 %v1265, %v1264
      %v1279 = vpack.c.b16 %v1267, %v1266
      %v1280 = vpack.c.b16 %v1269, %v1268
      %v1281 = vpack.c.b16 %v1271, %v1270
      %v1282 = vpack.c.b16 %v1273, %v1272
      %v1283 = vpack.c.b16 %v1275, %v1274
      %1292 = vmatprep.subr.bf16.mxu0 0
      %1293 = vmatpush1.bf16.msra.mxu0 %v1276
      %1294 = vmatprep.subr.bf16.mxu0 0
      %1295 = vmatpush1.bf16.msra.mxu0 %v1277
      %1296 = vmatprep.subr.bf16.mxu0 0
      %1297 = vmatpush1.bf16.msra.mxu0 %v1278
      %1298 = vmatprep.subr.bf16.mxu0 0
      %1299 = vmatpush1.bf16.msra.mxu0 %v1279
      %1300 = vmatprep.subr.bf16.mxu0 0
      %1301 = vmatpush1.bf16.msra.mxu0 %v1280
      %1302 = vmatprep.subr.bf16.mxu0 0
      %1303 = vmatpush1.bf16.msra.mxu0 %v1281
      %1304 = vmatprep.subr.bf16.mxu0 0
      %1305 = vmatpush1.bf16.msra.mxu0 %v1282
      %1306 = vmatprep.subr.bf16.mxu0 0
      %1307 = vmatpush1.bf16.msra.mxu0 %v1283
      %1308 = vmatprep.subr.bf16.mxu0 0
      %1309 = vmatpush1.bf16.msra.mxu0 0
      %1310 = vmatprep.subr.bf16.mxu0 0
      %1311 = vmatpush1.bf16.msra.mxu0 0
      %1312 = vmatprep.subr.bf16.mxu0 0
      %1313 = vmatpush1.bf16.msra.mxu0 0
      %1314 = vmatprep.subr.bf16.mxu0 0
      %1315 = vmatpush1.bf16.msra.mxu0 0
      %1316 = vmatprep.subr.bf16.mxu0 0
      %1317 = vmatpush1.bf16.msra.mxu0 0
      %1318 = vmatprep.subr.bf16.mxu0 0
      %1319 = vmatpush1.bf16.msra.mxu0 0
      %1320 = vmatprep.subr.bf16.mxu0 0
      %1321 = vmatpush1.bf16.msra.mxu0 0
      %1322 = vmatprep.subr.bf16.mxu0 0
      %1323 = vmatpush1.bf16.msra.mxu0 0
      %1324 = vmatprep.mubr.bf16.mxu0 0
      %1325 = vmatmul.mubr.bf16.gmra.mrb[0].mxu0 %v1212
      %v1326 = vpop.f32.mrb[0].mxu0
      %v1327 = vadd.f32 0.0, %v1326
      %v1328 = vpop.f32.mrb[0].mxu0
      %v1329 = vpop.f32.mrb[0].mxu0
      %v1330 = vadd.f32 0.0, %v1329
      %v1331 = vpop.f32.mrb[0].mxu0
      %1332 = vmatprep.mubr.bf16.mxu0 0
      %1333 = vmatmul.mubr.bf16.gmra.mrb[0].mxu0 %v1213
      %v1334 = vpop.f32.mrb[0].mxu0
      %v1335 = vadd.f32 0.0, %v1334
      %v1336 = vpop.f32.mrb[0].mxu0
      %v1337 = vpop.f32.mrb[0].mxu0
      %v1338 = vadd.f32 0.0, %v1337
      %v1339 = vpop.f32.mrb[0].mxu0
      %1340 = vmatprep.mubr.bf16.mxu0 0
      %1341 = vmatmul.mubr.bf16.gmra.mrb[0].mxu0 %v1214
      %v1342 = vpop.f32.mrb[0].mxu0
      %v1343 = vadd.f32 0.0, %v1342
      %v1344 = vpop.f32.mrb[0].mxu0
      %v1345 = vpop.f32.mrb[0].mxu0
      %v1346 = vadd.f32 0.0, %v1345
      %v1347 = vpop.f32.mrb[0].mxu0
      %1348 = vmatprep.mubr.bf16.mxu0 0
      %1349 = vmatmul.mubr.bf16.gmra.mrb[0].mxu0 %v1215
      %v1350 = vpop.f32.mrb[0].mxu0
      %v1351 = vadd.f32 0.0, %v1350
      %v1352 = vpop.f32.mrb[0].mxu0
      %v1353 = vpop.f32.mrb[0].mxu0
      %v1354 = vadd.f32 0.0, %v1353
      %v1355 = vpop.f32.mrb[0].mxu0
      %1356 = vmatprep.mubr.bf16.mxu0 0
      %1357 = vmatmul.mubr.bf16.gmra.mrb[0].mxu0 %v1216
      %v1358 = vpop.f32.mrb[0].mxu0
      %v1359 = vadd.f32 0.0, %v1358
      %v1360 = vpop.f32.mrb[0].mxu0
      %v1361 = vpop.f32.mrb[0].mxu0
      %v1362 = vadd.f32 0.0, %v1361
      %v1363 = vpop.f32.mrb[0].mxu0
      %1364 = vmatprep.mubr.bf16.mxu0 0
      %1365 = vmatmul.mubr.bf16.gmra.mrb[0].mxu0 %v1217
      %v1366 = vpop.f32.mrb[0].mxu0
      %v1367 = vadd.f32 0.0, %v1366
      %v1368 = vpop.f32.mrb[0].mxu0
      %v1369 = vpop.f32.mrb[0].mxu0
      %v1370 = vadd.f32 0.0, %v1369
      %v1371 = vpop.f32.mrb[0].mxu0
      %1372 = vmatprep.mubr.bf16.mxu0 0
      %1373 = vmatmul.mubr.bf16.gmra.mrb[0].mxu0 %v1218
      %v1374 = vpop.f32.mrb[0].mxu0
      %v1375 = vadd.f32 0.0, %v1374
      %v1376 = vpop.f32.mrb[0].mxu0
      %v1377 = vpop.f32.mrb[0].mxu0
      %v1378 = vadd.f32 0.0, %v1377
      %v1379 = vpop.f32.mrb[0].mxu0
      %1380 = vmatprep.mubr.bf16.mxu0 0
      %1381 = vmatmul.mubr.bf16.gmra.mrb[0].mxu0 %v1219
      %v1382 = vpop.f32.mrb[0].mxu0
      %v1383 = vadd.f32 0.0, %v1382
      %v1384 = vpop.f32.mrb[0].mxu0
      %v1385 = vpop.f32.mrb[0].mxu0
      %v1386 = vadd.f32 0.0, %v1385
      %v1387 = vpop.f32.mrb[0].mxu0
      %1388 = vmatprep.mubr.bf16.mxu0 0
      %1389 = vmatmul.mubr.bf16.gmra.mrb[0].mxu0 %v1220
      %v1390 = vpop.f32.mrb[0].mxu0
      %v1391 = vadd.f32 0.0, %v1390
      %v1392 = vpop.f32.mrb[0].mxu0
      %v1393 = vpop.f32.mrb[0].mxu0
      %v1394 = vadd.f32 0.0, %v1393
      %v1395 = vpop.f32.mrb[0].mxu0
      %1396 = vmatprep.mubr.bf16.mxu0 0
      %1397 = vmatmul.mubr.bf16.gmra.mrb[0].mxu0 %v1221
      %v1398 = vpop.f32.mrb[0].mxu0
      %v1399 = vadd.f32 0.0, %v1398
      %v1400 = vpop.f32.mrb[0].mxu0
      %v1401 = vpop.f32.mrb[0].mxu0
      %v1402 = vadd.f32 0.0, %v1401
      %v1403 = vpop.f32.mrb[0].mxu0
      %1404 = vmatprep.mubr.bf16.mxu0 0
      %1405 = vmatmul.mubr.bf16.gmra.mrb[0].mxu0 %v1222
      %v1406 = vpop.f32.mrb[0].mxu0
      %v1407 = vadd.f32 0.0, %v1406
      %v1408 = vpop.f32.mrb[0].mxu0
      %v1409 = vpop.f32.mrb[0].mxu0
      %v1410 = vadd.f32 0.0, %v1409
      %v1411 = vpop.f32.mrb[0].mxu0
      %1412 = vmatprep.mubr.bf16.mxu0 0
      %1413 = vmatmul.mubr.bf16.gmra.mrb[0].mxu0 %v1223
      %v1414 = vpop.f32.mrb[0].mxu0
      %v1415 = vadd.f32 0.0, %v1414
      %v1416 = vpop.f32.mrb[0].mxu0
      %v1417 = vpop.f32.mrb[0].mxu0
      %v1418 = vadd.f32 0.0, %v1417
      %v1419 = vpop.f32.mrb[0].mxu0
      %1420 = vmatprep.mubr.bf16.mxu0 0
      %1421 = vmatmul.mubr.bf16.gmra.mrb[0].mxu0 %v1224
      %v1422 = vpop.f32.mrb[0].mxu0
      %v1423 = vadd.f32 0.0, %v1422
      %v1424 = vpop.f32.mrb[0].mxu0
      %v1425 = vpop.f32.mrb[0].mxu0
      %v1426 = vadd.f32 0.0, %v1425
      %v1427 = vpop.f32.mrb[0].mxu0
      %1428 = vmatprep.mubr.bf16.mxu0 0
      %1429 = vmatmul.mubr.bf16.gmra.mrb[0].mxu0 %v1225
      %v1430 = vpop.f32.mrb[0].mxu0
      %v1431 = vadd.f32 0.0, %v1430
      %v1432 = vpop.f32.mrb[0].mxu0
      %v1433 = vpop.f32.mrb[0].mxu0
      %v1434 = vadd.f32 0.0, %v1433
      %v1435 = vpop.f32.mrb[0].mxu0
      %1436 = vmatprep.mubr.bf16.mxu0 0
      %1437 = vmatmul.mubr.bf16.gmra.mrb[0].mxu0 %v1226
      %v1438 = vpop.f32.mrb[0].mxu0
      %v1439 = vadd.f32 0.0, %v1438
      %v1440 = vpop.f32.mrb[0].mxu0
      %v1441 = vpop.f32.mrb[0].mxu0
      %v1442 = vadd.f32 0.0, %v1441
      %v1443 = vpop.f32.mrb[0].mxu0
      %1444 = vmatprep.mubr.bf16.mxu0 0
      %1445 = vmatmul.mubr.bf16.gmra.mrb[0].mxu0 %v1227
      %v1446 = vpop.f32.mrb[0].mxu0
      %v1447 = vadd.f32 0.0, %v1446
      %v1448 = vpop.f32.mrb[0].mxu0
      %v1449 = vpop.f32.mrb[0].mxu0
      %v1450 = vadd.f32 0.0, %v1449
      %v1451 = vpop.f32.mrb[0].mxu0
      %1452 = vdwg.mxu0
      %v1453 = vadd.f32 %v1100, %v1327
      %v1454 = vadd.f32 %v1101, %v1330
      %v1455 = vadd.f32 %v1102, %v1335
      %v1456 = vadd.f32 %v1103, %v1338
      %v1457 = vadd.f32 %v1104, %v1343
      %v1458 = vadd.f32 %v1105, %v1346
      %v1459 = vadd.f32 %v1106, %v1351
      %v1460 = vadd.f32 %v1107, %v1354
      %v1461 = vadd.f32 %v1108, %v1359
      %v1462 = vadd.f32 %v1109, %v1362
      %v1463 = vadd.f32 %v1110, %v1367
      %v1464 = vadd.f32 %v1111, %v1370
      %v1465 = vadd.f32 %v1112, %v1375
      %v1466 = vadd.f32 %v1113, %v1378
      %v1467 = vadd.f32 %v1114, %v1383
      %v1468 = vadd.f32 %v1115, %v1386
      %v1469 = vadd.f32 %v1116, %v1391
      %v1470 = vadd.f32 %v1117, %v1394
      %v1471 = vadd.f32 %v1118, %v1399
      %v1472 = vadd.f32 %v1119, %v1402
      %v1473 = vadd.f32 %v1120, %v1407
      %v1474 = vadd.f32 %v1121, %v1410
      %v1475 = vadd.f32 %v1122, %v1415
      %v1476 = vadd.f32 %v1123, %v1418
      %v1477 = vadd.f32 %v1124, %v1423
      %v1478 = vadd.f32 %v1125, %v1426
      %v1479 = vadd.f32 %v1126, %v1431
      %v1480 = vadd.f32 %v1127, %v1434
      %v1481 = vadd.f32 %v1128, %v1439
      %v1482 = vadd.f32 %v1129, %v1442
      %v1483 = vadd.f32 %v1130, %v1447
      %v1484 = vadd.f32 %v1131, %v1450
      %1485 = vst [vmem:[#allocation3] sm:$0xff] %v1453
      %1486 = vst [vmem:[#allocation3 + $0x8] sm:$0xff] %v1454
      %1487 = vst [vmem:[#allocation3 + $0x10] sm:$0xff] %v1455
      %1488 = vst [vmem:[#allocation3 + $0x18] sm:$0xff] %v1456
      %1489 = vst [vmem:[#allocation3 + $0x20] sm:$0xff] %v1457
      %1490 = vst [vmem:[#allocation3 + $0x28] sm:$0xff] %v1458
      %1491 = vst [vmem:[#allocation3 + $0x30] sm:$0xff] %v1459
      %1492 = vst [vmem:[#allocation3 + $0x38] sm:$0xff] %v1460
      %1493 = vst [vmem:[#allocation3 + $0x40] sm:$0xff] %v1461
      %1494 = vst [vmem:[#allocation3 + $0x48] sm:$0xff] %v1462
      %1495 = vst [vmem:[#allocation3 + $0x50] sm:$0xff] %v1463
      %1496 = vst [vmem:[#allocation3 + $0x58] sm:$0xff] %v1464
      %1497 = vst [vmem:[#allocation3 + $0x60] sm:$0xff] %v1465
      %1498 = vst [vmem:[#allocation3 + $0x68] sm:$0xff] %v1466
      %1499 = vst [vmem:[#allocation3 + $0x70] sm:$0xff] %v1467
      %1500 = vst [vmem:[#allocation3 + $0x78] sm:$0xff] %v1468
      %1501 = vst [vmem:[#allocation3 + $0x80] sm:$0xff] %v1469
      %1502 = vst [vmem:[#allocation3 + $0x88] sm:$0xff] %v1470
      %1503 = vst [vmem:[#allocation3 + $0x90] sm:$0xff] %v1471
      %1504 = vst [vmem:[#allocation3 + $0x98] sm:$0xff] %v1472
      %1505 = vst [vmem:[#allocation3 + $0xa0] sm:$0xff] %v1473
      %1506 = vst [vmem:[#allocation3 + $0xa8] sm:$0xff] %v1474
      %1507 = vst [vmem:[#allocation3 + $0xb0] sm:$0xff] %v1475
      %1508 = vst [vmem:[#allocation3 + $0xb8] sm:$0xff] %v1476
      %1509 = vst [vmem:[#allocation3 + $0xc0] sm:$0xff] %v1477
      %1510 = vst [vmem:[#allocation3 + $0xc8] sm:$0xff] %v1478
      %1511 = vst [vmem:[#allocation3 + $0xd0] sm:$0xff] %v1479
      %1512 = vst [vmem:[#allocation3 + $0xd8] sm:$0xff] %v1480
      %1513 = vst [vmem:[#allocation3 + $0xe0] sm:$0xff] %v1481
      %1514 = vst [vmem:[#allocation3 + $0xe8] sm:$0xff] %v1482
      %1515 = vst [vmem:[#allocation3 + $0xf0] sm:$0xff] %v1483
      %1516 = vst [vmem:[#allocation3 + $0xf8] sm:$0xff] %v1484
      %v1517 = vld [vmem:[#allocation2] sm:$0xf]
      %v1518 = vld [vmem:[#allocation2 + $0x4] sm:$0xf]
      %v1519 = vld [vmem:[#allocation2 + $0x8] sm:$0x1]
      %v1520 = vld [vmem:[#allocation2 + $0xc] sm:$0xf]
      %v1521 = vld [vmem:[#allocation2 + $0x10] sm:$0xf]
      %v1522 = vld [vmem:[#allocation2 + $0x14] sm:$0x1]
      %v1523 = vld [vmem:[#allocation2 + $0x18] sm:$0xf]
      %v1524 = vld [vmem:[#allocation2 + $0x1c] sm:$0xf]
      %v1525 = vld [vmem:[#allocation2 + $0x20] sm:$0x1]
      %v1526 = vld [vmem:[#allocation2 + $0x24] sm:$0xf]
      %v1527 = vld [vmem:[#allocation2 + $0x28] sm:$0xf]
      %v1528 = vld [vmem:[#allocation2 + $0x2c] sm:$0x1]
      %v1529 = vld [vmem:[#allocation2 + $0x30] sm:$0xf]
      %v1530 = vld [vmem:[#allocation2 + $0x34] sm:$0xf]
      %v1531 = vld [vmem:[#allocation2 + $0x38] sm:$0x1]
      %v1532 = vld [vmem:[#allocation2 + $0x3c] sm:$0xf]
      %v1533 = vld [vmem:[#allocation2 + $0x40] sm:$0xf]
      %v1534 = vld [vmem:[#allocation2 + $0x44] sm:$0x1]
      %v1535 = vld [vmem:[#allocation2 + $0x48] sm:$0xf]
      %v1536 = vld [vmem:[#allocation2 + $0x4c] sm:$0xf]
      %v1537 = vld [vmem:[#allocation2 + $0x50] sm:$0x1]
      %v1538 = vld [vmem:[#allocation2 + $0x54] sm:$0xf]
      %v1539 = vld [vmem:[#allocation2 + $0x58] sm:$0xf]
      %v1540 = vld [vmem:[#allocation2 + $0x5c] sm:$0x1]
      %v1541 = vld [vmem:[#allocation2 + $0x60] sm:$0xf]
      %v1542 = vld [vmem:[#allocation2 + $0x64] sm:$0xf]
      %v1543 = vld [vmem:[#allocation2 + $0x68] sm:$0x1]
      %v1544 = vld [vmem:[#allocation2 + $0x6c] sm:$0xf]
      %v1545 = vld [vmem:[#allocation2 + $0x70] sm:$0xf]
      %v1546 = vld [vmem:[#allocation2 + $0x74] sm:$0x1]
      %v1547 = vld [vmem:[#allocation2 + $0x78] sm:$0xf]
      %v1548 = vld [vmem:[#allocation2 + $0x7c] sm:$0xf]
      %v1549 = vld [vmem:[#allocation2 + $0x80] sm:$0x1]
      %v1550 = vld [vmem:[#allocation2 + $0x84] sm:$0xf]
      %v1551 = vld [vmem:[#allocation2 + $0x88] sm:$0xf]
      %v1552 = vld [vmem:[#allocation2 + $0x8c] sm:$0x1]
      %v1553 = vld [vmem:[#allocation2 + $0x90] sm:$0xf]
      %v1554 = vld [vmem:[#allocation2 + $0x94] sm:$0xf]
      %v1555 = vld [vmem:[#allocation2 + $0x98] sm:$0x1]
      %v1556 = vld [vmem:[#allocation2 + $0x9c] sm:$0xf]
      %v1557 = vld [vmem:[#allocation2 + $0xa0] sm:$0xf]
      %v1558 = vld [vmem:[#allocation2 + $0xa4] sm:$0x1]
      %v1559 = vld [vmem:[#allocation2 + $0xa8] sm:$0xf]
      %v1560 = vld [vmem:[#allocation2 + $0xac] sm:$0xf]
      %v1561 = vld [vmem:[#allocation2 + $0xb0] sm:$0x1]
      %v1562 = vld [vmem:[#allocation2 + $0xb4] sm:$0xf]
      %v1563 = vld [vmem:[#allocation2 + $0xb8] sm:$0xf]
      %v1564 = vld [vmem:[#allocation2 + $0xbc] sm:$0x1]
      %v1565 = vld [vmem:[#allocation3] sm:$0xff]
      %v1566 = vld [vmem:[#allocation3 + $0x8] sm:$0xff]
      %v1567 = vld [vmem:[#allocation3 + $0x10] sm:$0xff]
      %v1568 = vld [vmem:[#allocation3 + $0x18] sm:$0xff]
      %v1569 = vld [vmem:[#allocation3 + $0x20] sm:$0xff]
      %v1570 = vld [vmem:[#allocation3 + $0x28] sm:$0xff]
      %v1571 = vld [vmem:[#allocation3 + $0x30] sm:$0xff]
      %v1572 = vld [vmem:[#allocation3 + $0x38] sm:$0xff]
      %v1573 = vld [vmem:[#allocation3 + $0x40] sm:$0xff]
      %v1574 = vld [vmem:[#allocation3 + $0x48] sm:$0xff]
      %v1575 = vld [vmem:[#allocation3 + $0x50] sm:$0xff]
      %v1576 = vld [vmem:[#allocation3 + $0x58] sm:$0xff]
      %v1577 = vld [vmem:[#allocation3 + $0x60] sm:$0xff]
      %v1578 = vld [vmem:[#allocation3 + $0x68] sm:$0xff]
      %v1579 = vld [vmem:[#allocation3 + $0x70] sm:$0xff]
      %v1580 = vld [vmem:[#allocation3 + $0x78] sm:$0xff]
      %v1581 = vld [vmem:[#allocation3 + $0x80] sm:$0xff]
      %v1582 = vld [vmem:[#allocation3 + $0x88] sm:$0xff]
      %v1583 = vld [vmem:[#allocation3 + $0x90] sm:$0xff]
      %v1584 = vld [vmem:[#allocation3 + $0x98] sm:$0xff]
      %v1585 = vld [vmem:[#allocation3 + $0xa0] sm:$0xff]
      %v1586 = vld [vmem:[#allocation3 + $0xa8] sm:$0xff]
      %v1587 = vld [vmem:[#allocation3 + $0xb0] sm:$0xff]
      %v1588 = vld [vmem:[#allocation3 + $0xb8] sm:$0xff]
      %v1589 = vld [vmem:[#allocation3 + $0xc0] sm:$0xff]
      %v1590 = vld [vmem:[#allocation3 + $0xc8] sm:$0xff]
      %v1591 = vld [vmem:[#allocation3 + $0xd0] sm:$0xff]
      %v1592 = vld [vmem:[#allocation3 + $0xd8] sm:$0xff]
      %v1593 = vld [vmem:[#allocation3 + $0xe0] sm:$0xff]
      %v1594 = vld [vmem:[#allocation3 + $0xe8] sm:$0xff]
      %v1595 = vld [vmem:[#allocation3 + $0xf0] sm:$0xff]
      %v1596 = vld [vmem:[#allocation3 + $0xf8] sm:$0xff]
      %vm1597 = vsmask.f32 3328
      %vm1598 = vsmask.f32 7440
      %vm1599 = vmor %vm1597, %vm1598
      %v1601 = vshrl.u32 %v1517, 16
      %v1603 = vrot.slane %v1601, 4
      %v1604 = vshll.u32 %v1517, 16
      %v1606 = vrot.slane %v1604, 5
      %v1607 = vor.u32 %v1603, %v1606
      %v1608 = vrot.slane %v1607, 4
      %v1610 = vshll.u32 %v1518, 16
      %v1612 = vrot.slane %v1610, 5
      %v1613 = vsel %vm1599, %v1608, %v1612
      %v1614 = vshrl.u32 %v1518, 16
      %v1616 = vrot.slane %v1614, 4
      %v1617 = vor.u32 %v1616, %v1612
      %v1618 = vrot.slane %v1617, 4
      %v1620 = vshll.u32 %v1519, 16
      %v1622 = vrot.slane %v1620, 5
      %v1623 = vsel %vm1599, %v1618, %v1622
      %v1625 = vshrl.u32 %v1520, 16
      %v1627 = vrot.slane %v1625, 4
      %v1628 = vshll.u32 %v1520, 16
      %v1630 = vrot.slane %v1628, 5
      %v1631 = vor.u32 %v1627, %v1630
      %v1632 = vrot.slane %v1631, 4
      %v1634 = vshll.u32 %v1521, 16
      %v1636 = vrot.slane %v1634, 5
      %v1637 = vsel %vm1599, %v1632, %v1636
      %v1638 = vshrl.u32 %v1521, 16
      %v1640 = vrot.slane %v1638, 4
      %v1641 = vor.u32 %v1640, %v1636
      %v1642 = vrot.slane %v1641, 4
      %v1644 = vshll.u32 %v1522, 16
      %v1646 = vrot.slane %v1644, 5
      %v1647 = vsel %vm1599, %v1642, %v1646
      %v1649 = vshrl.u32 %v1523, 16
      %v1651 = vrot.slane %v1649, 4
      %v1652 = vshll.u32 %v1523, 16
      %v1654 = vrot.slane %v1652, 5
      %v1655 = vor.u32 %v1651, %v1654
      %v1656 = vrot.slane %v1655, 4
      %v1658 = vshll.u32 %v1524, 16
      %v1660 = vrot.slane %v1658, 5
      %v1661 = vsel %vm1599, %v1656, %v1660
      %v1662 = vshrl.u32 %v1524, 16
      %v1664 = vrot.slane %v1662, 4
      %v1665 = vor.u32 %v1664, %v1660
      %v1666 = vrot.slane %v1665, 4
      %v1668 = vshll.u32 %v1525, 16
      %v1670 = vrot.slane %v1668, 5
      %v1671 = vsel %vm1599, %v1666, %v1670
      %v1673 = vshrl.u32 %v1526, 16
      %v1675 = vrot.slane %v1673, 4
      %v1676 = vshll.u32 %v1526, 16
      %v1678 = vrot.slane %v1676, 5
      %v1679 = vor.u32 %v1675, %v1678
      %v1680 = vrot.slane %v1679, 4
      %v1682 = vshll.u32 %v1527, 16
      %v1684 = vrot.slane %v1682, 5
      %v1685 = vsel %vm1599, %v1680, %v1684
      %v1686 = vshrl.u32 %v1527, 16
      %v1688 = vrot.slane %v1686, 4
      %v1689 = vor.u32 %v1688, %v1684
      %v1690 = vrot.slane %v1689, 4
      %v1692 = vshll.u32 %v1528, 16
      %v1694 = vrot.slane %v1692, 5
      %v1695 = vsel %vm1599, %v1690, %v1694
      %v1697 = vshrl.u32 %v1529, 16
      %v1699 = vrot.slane %v1697, 4
      %v1700 = vshll.u32 %v1529, 16
      %v1702 = vrot.slane %v1700, 5
      %v1703 = vor.u32 %v1699, %v1702
      %v1704 = vrot.slane %v1703, 4
      %v1706 = vshll.u32 %v1530, 16
      %v1708 = vrot.slane %v1706, 5
      %v1709 = vsel %vm1599, %v1704, %v1708
      %v1710 = vshrl.u32 %v1530, 16
      %v1712 = vrot.slane %v1710, 4
      %v1713 = vor.u32 %v1712, %v1708
      %v1714 = vrot.slane %v1713, 4
      %v1716 = vshll.u32 %v1531, 16
      %v1718 = vrot.slane %v1716, 5
      %v1719 = vsel %vm1599, %v1714, %v1718
      %v1721 = vshrl.u32 %v1532, 16
      %v1723 = vrot.slane %v1721, 4
      %v1724 = vshll.u32 %v1532, 16
      %v1726 = vrot.slane %v1724, 5
      %v1727 = vor.u32 %v1723, %v1726
      %v1728 = vrot.slane %v1727, 4
      %v1730 = vshll.u32 %v1533, 16
      %v1732 = vrot.slane %v1730, 5
      %v1733 = vsel %vm1599, %v1728, %v1732
      %v1734 = vshrl.u32 %v1533, 16
      %v1736 = vrot.slane %v1734, 4
      %v1737 = vor.u32 %v1736, %v1732
      %v1738 = vrot.slane %v1737, 4
      %v1740 = vshll.u32 %v1534, 16
      %v1742 = vrot.slane %v1740, 5
      %v1743 = vsel %vm1599, %v1738, %v1742
      %v1745 = vshrl.u32 %v1535, 16
      %v1747 = vrot.slane %v1745, 4
      %v1748 = vshll.u32 %v1535, 16
      %v1750 = vrot.slane %v1748, 5
      %v1751 = vor.u32 %v1747, %v1750
      %v1752 = vrot.slane %v1751, 4
      %v1754 = vshll.u32 %v1536, 16
      %v1756 = vrot.slane %v1754, 5
      %v1757 = vsel %vm1599, %v1752, %v1756
      %v1758 = vshrl.u32 %v1536, 16
      %v1760 = vrot.slane %v1758, 4
      %v1761 = vor.u32 %v1760, %v1756
      %v1762 = vrot.slane %v1761, 4
      %v1764 = vshll.u32 %v1537, 16
      %v1766 = vrot.slane %v1764, 5
      %v1767 = vsel %vm1599, %v1762, %v1766
      %v1769 = vshrl.u32 %v1538, 16
      %v1771 = vrot.slane %v1769, 4
      %v1772 = vshll.u32 %v1538, 16
      %v1774 = vrot.slane %v1772, 5
      %v1775 = vor.u32 %v1771, %v1774
      %v1776 = vrot.slane %v1775, 4
      %v1778 = vshll.u32 %v1539, 16
      %v1780 = vrot.slane %v1778, 5
      %v1781 = vsel %vm1599, %v1776, %v1780
      %v1782 = vshrl.u32 %v1539, 16
      %v1784 = vrot.slane %v1782, 4
      %v1785 = vor.u32 %v1784, %v1780
      %v1786 = vrot.slane %v1785, 4
      %v1788 = vshll.u32 %v1540, 16
      %v1790 = vrot.slane %v1788, 5
      %v1791 = vsel %vm1599, %v1786, %v1790
      %v1793 = vshrl.u32 %v1541, 16
      %v1795 = vrot.slane %v1793, 4
      %v1796 = vshll.u32 %v1541, 16
      %v1798 = vrot.slane %v1796, 5
      %v1799 = vor.u32 %v1795, %v1798
      %v1800 = vrot.slane %v1799, 4
      %v1802 = vshll.u32 %v1542, 16
      %v1804 = vrot.slane %v1802, 5
      %v1805 = vsel %vm1599, %v1800, %v1804
      %v1806 = vshrl.u32 %v1542, 16
      %v1808 = vrot.slane %v1806, 4
      %v1809 = vor.u32 %v1808, %v1804
      %v1810 = vrot.slane %v1809, 4
      %v1812 = vshll.u32 %v1543, 16
      %v1814 = vrot.slane %v1812, 5
      %v1815 = vsel %vm1599, %v1810, %v1814
      %v1817 = vshrl.u32 %v1544, 16
      %v1819 = vrot.slane %v1817, 4
      %v1820 = vshll.u32 %v1544, 16
      %v1822 = vrot.slane %v1820, 5
      %v1823 = vor.u32 %v1819, %v1822
      %v1824 = vrot.slane %v1823, 4
      %v1826 = vshll.u32 %v1545, 16
      %v1828 = vrot.slane %v1826, 5
      %v1829 = vsel %vm1599, %v1824, %v1828
      %v1830 = vshrl.u32 %v1545, 16
      %v1832 = vrot.slane %v1830, 4
      %v1833 = vor.u32 %v1832, %v1828
      %v1834 = vrot.slane %v1833, 4
      %v1836 = vshll.u32 %v1546, 16
      %v1838 = vrot.slane %v1836, 5
      %v1839 = vsel %vm1599, %v1834, %v1838
      %v1841 = vshrl.u32 %v1547, 16
      %v1843 = vrot.slane %v1841, 4
      %v1844 = vshll.u32 %v1547, 16
      %v1846 = vrot.slane %v1844, 5
      %v1847 = vor.u32 %v1843, %v1846
      %v1848 = vrot.slane %v1847, 4
      %v1850 = vshll.u32 %v1548, 16
      %v1852 = vrot.slane %v1850, 5
      %v1853 = vsel %vm1599, %v1848, %v1852
      %v1854 = vshrl.u32 %v1548, 16
      %v1856 = vrot.slane %v1854, 4
      %v1857 = vor.u32 %v1856, %v1852
      %v1858 = vrot.slane %v1857, 4
      %v1860 = vshll.u32 %v1549, 16
      %v1862 = vrot.slane %v1860, 5
      %v1863 = vsel %vm1599, %v1858, %v1862
      %v1865 = vshrl.u32 %v1550, 16
      %v1867 = vrot.slane %v1865, 4
      %v1868 = vshll.u32 %v1550, 16
      %v1870 = vrot.slane %v1868, 5
      %v1871 = vor.u32 %v1867, %v1870
      %v1872 = vrot.slane %v1871, 4
      %v1874 = vshll.u32 %v1551, 16
      %v1876 = vrot.slane %v1874, 5
      %v1877 = vsel %vm1599, %v1872, %v1876
      %v1878 = vshrl.u32 %v1551, 16
      %v1880 = vrot.slane %v1878, 4
      %v1881 = vor.u32 %v1880, %v1876
      %v1882 = vrot.slane %v1881, 4
      %v1884 = vshll.u32 %v1552, 16
      %v1886 = vrot.slane %v1884, 5
      %v1887 = vsel %vm1599, %v1882, %v1886
      %v1889 = vshrl.u32 %v1553, 16
      %v1891 = vrot.slane %v1889, 4
      %v1892 = vshll.u32 %v1553, 16
      %v1894 = vrot.slane %v1892, 5
      %v1895 = vor.u32 %v1891, %v1894
      %v1896 = vrot.slane %v1895, 4
      %v1898 = vshll.u32 %v1554, 16
      %v1900 = vrot.slane %v1898, 5
      %v1901 = vsel %vm1599, %v1896, %v1900
      %v1902 = vshrl.u32 %v1554, 16
      %v1904 = vrot.slane %v1902, 4
      %v1905 = vor.u32 %v1904, %v1900
      %v1906 = vrot.slane %v1905, 4
      %v1908 = vshll.u32 %v1555, 16
      %v1910 = vrot.slane %v1908, 5
      %v1911 = vsel %vm1599, %v1906, %v1910
      %v1913 = vshrl.u32 %v1556, 16
      %v1915 = vrot.slane %v1913, 4
      %v1916 = vshll.u32 %v1556, 16
      %v1918 = vrot.slane %v1916, 5
      %v1919 = vor.u32 %v1915, %v1918
      %v1920 = vrot.slane %v1919, 4
      %v1922 = vshll.u32 %v1557, 16
      %v1924 = vrot.slane %v1922, 5
      %v1925 = vsel %vm1599, %v1920, %v1924
      %v1926 = vshrl.u32 %v1557, 16
      %v1928 = vrot.slane %v1926, 4
      %v1929 = vor.u32 %v1928, %v1924
      %v1930 = vrot.slane %v1929, 4
      %v1932 = vshll.u32 %v1558, 16
      %v1934 = vrot.slane %v1932, 5
      %v1935 = vsel %vm1599, %v1930, %v1934
      %v1937 = vshrl.u32 %v1559, 16
      %v1939 = vrot.slane %v1937, 4
      %v1940 = vshll.u32 %v1559, 16
      %v1942 = vrot.slane %v1940, 5
      %v1943 = vor.u32 %v1939, %v1942
      %v1944 = vrot.slane %v1943, 4
      %v1946 = vshll.u32 %v1560, 16
      %v1948 = vrot.slane %v1946, 5
      %v1949 = vsel %vm1599, %v1944, %v1948
      %v1950 = vshrl.u32 %v1560, 16
      %v1952 = vrot.slane %v1950, 4
      %v1953 = vor.u32 %v1952, %v1948
      %v1954 = vrot.slane %v1953, 4
      %v1956 = vshll.u32 %v1561, 16
      %v1958 = vrot.slane %v1956, 5
      %v1959 = vsel %vm1599, %v1954, %v1958
      %v1961 = vshrl.u32 %v1562, 16
      %v1963 = vrot.slane %v1961, 4
      %v1964 = vshll.u32 %v1562, 16
      %v1966 = vrot.slane %v1964, 5
      %v1967 = vor.u32 %v1963, %v1966
      %v1968 = vrot.slane %v1967, 4
      %v1970 = vshll.u32 %v1563, 16
      %v1972 = vrot.slane %v1970, 5
      %v1973 = vsel %vm1599, %v1968, %v1972
      %v1974 = vshrl.u32 %v1563, 16
      %v1976 = vrot.slane %v1974, 4
      %v1977 = vor.u32 %v1976, %v1972
      %v1978 = vrot.slane %v1977, 4
      %v1980 = vshll.u32 %v1564, 16
      %v1982 = vrot.slane %v1980, 5
      %v1983 = vsel %vm1599, %v1978, %v1982
      %s1984 = scalar_lea.vmem %s3, 64
      %v1985 = vld [vmem:[%s1984] sm:$0xf]
      %v1986 = vld [vmem:[%s1984 + $0x4] sm:$0xf]
      %v1987 = vld [vmem:[%s1984 + $0x8] sm:$0xf]
      %v1988 = vld [vmem:[%s1984 + $0xc] sm:$0xf]
      %v1989 = vld [vmem:[%s1984 + $0x10] sm:$0xf]
      %v1990 = vld [vmem:[%s1984 + $0x14] sm:$0xf]
      %v1991 = vld [vmem:[%s1984 + $0x18] sm:$0xf]
      %v1992 = vld [vmem:[%s1984 + $0x1c] sm:$0xf]
      %v1993 = vld [vmem:[%s1984 + $0x20] sm:$0xf]
      %v1994 = vld [vmem:[%s1984 + $0x24] sm:$0xf]
      %v1995 = vld [vmem:[%s1984 + $0x28] sm:$0xf]
      %v1996 = vld [vmem:[%s1984 + $0x2c] sm:$0xf]
      %v1997 = vld [vmem:[%s1984 + $0x30] sm:$0xf]
      %v1998 = vld [vmem:[%s1984 + $0x34] sm:$0xf]
      %v1999 = vld [vmem:[%s1984 + $0x38] sm:$0xf]
      %v2000 = vld [vmem:[%s1984 + $0x3c] sm:$0xf]
      %v2001 = vunpack.c.l.b16 %v1613
      %v2002 = vunpack.c.l.b16 %v1623
      %v2003 = vunpack.c.l.b16 %v1637
      %v2004 = vunpack.c.l.b16 %v1647
      %v2005 = vunpack.c.l.b16 %v1661
      %v2006 = vunpack.c.l.b16 %v1671
      %v2007 = vunpack.c.l.b16 %v1685
      %v2008 = vunpack.c.l.b16 %v1695
      %v2009 = vunpack.c.l.b16 %v1709
      %v2010 = vunpack.c.l.b16 %v1719
      %v2011 = vunpack.c.l.b16 %v1733
      %v2012 = vunpack.c.l.b16 %v1743
      %v2013 = vunpack.c.l.b16 %v1757
      %v2014 = vunpack.c.l.b16 %v1767
      %v2015 = vunpack.c.l.b16 %v1781
      %v2016 = vunpack.c.l.b16 %v1791
      %v2017 = vunpack.c.l.b16 %v1805
      %v2018 = vunpack.c.l.b16 %v1815
      %v2019 = vunpack.c.l.b16 %v1829
      %v2020 = vunpack.c.l.b16 %v1839
      %v2021 = vunpack.c.l.b16 %v1853
      %v2022 = vunpack.c.l.b16 %v1863
      %v2023 = vunpack.c.l.b16 %v1877
      %v2024 = vunpack.c.l.b16 %v1887
      %v2025 = vunpack.c.l.b16 %v1901
      %v2026 = vunpack.c.l.b16 %v1911
      %v2027 = vunpack.c.l.b16 %v1925
      %v2028 = vunpack.c.l.b16 %v1935
      %v2029 = vunpack.c.l.b16 %v1949
      %v2030 = vunpack.c.l.b16 %v1959
      %v2031 = vunpack.c.l.b16 %v1973
      %v2032 = vunpack.c.l.b16 %v1983
      %v2033 = vpack.c.b16 %v2002, %v2001
      %v2034 = vpack.c.b16 %v2004, %v2003
      %v2035 = vpack.c.b16 %v2006, %v2005
      %v2036 = vpack.c.b16 %v2008, %v2007
      %v2037 = vpack.c.b16 %v2010, %v2009
      %v2038 = vpack.c.b16 %v2012, %v2011
      %v2039 = vpack.c.b16 %v2014, %v2013
      %v2040 = vpack.c.b16 %v2016, %v2015
      %v2041 = vpack.c.b16 %v2018, %v2017
      %v2042 = vpack.c.b16 %v2020, %v2019
      %v2043 = vpack.c.b16 %v2022, %v2021
      %v2044 = vpack.c.b16 %v2024, %v2023
      %v2045 = vpack.c.b16 %v2026, %v2025
      %v2046 = vpack.c.b16 %v2028, %v2027
      %v2047 = vpack.c.b16 %v2030, %v2029
      %v2048 = vpack.c.b16 %v2032, %v2031
      %v2081 = vunpack.c.l.b16 %v1985
      %v2082 = vunpack.c.l.b16 %v1986
      %v2083 = vunpack.c.l.b16 %v1987
      %v2084 = vunpack.c.l.b16 %v1988
      %v2085 = vunpack.c.l.b16 %v1989
      %v2086 = vunpack.c.l.b16 %v1990
      %v2087 = vunpack.c.l.b16 %v1991
      %v2088 = vunpack.c.l.b16 %v1992
      %v2089 = vunpack.c.l.b16 %v1993
      %v2090 = vunpack.c.l.b16 %v1994
      %v2091 = vunpack.c.l.b16 %v1995
      %v2092 = vunpack.c.l.b16 %v1996
      %v2093 = vunpack.c.l.b16 %v1997
      %v2094 = vunpack.c.l.b16 %v1998
      %v2095 = vunpack.c.l.b16 %v1999
      %v2096 = vunpack.c.l.b16 %v2000
      %v2097 = vpack.c.b16 %v2082, %v2081
      %v2098 = vpack.c.b16 %v2084, %v2083
      %v2099 = vpack.c.b16 %v2086, %v2085
      %v2100 = vpack.c.b16 %v2088, %v2087
      %v2101 = vpack.c.b16 %v2090, %v2089
      %v2102 = vpack.c.b16 %v2092, %v2091
      %v2103 = vpack.c.b16 %v2094, %v2093
      %v2104 = vpack.c.b16 %v2096, %v2095
      %2113 = vmatprep.subr.bf16.mxu0 0
      %2114 = vmatpush1.bf16.msra.mxu0 %v2097
      %2115 = vmatprep.subr.bf16.mxu0 0
      %2116 = vmatpush1.bf16.msra.mxu0 %v2098
      %2117 = vmatprep.subr.bf16.mxu0 0
      %2118 = vmatpush1.bf16.msra.mxu0 %v2099
      %2119 = vmatprep.subr.bf16.mxu0 0
      %2120 = vmatpush1.bf16.msra.mxu0 %v2100
      %2121 = vmatprep.subr.bf16.mxu0 0
      %2122 = vmatpush1.bf16.msra.mxu0 %v2101
      %2123 = vmatprep.subr.bf16.mxu0 0
      %2124 = vmatpush1.bf16.msra.mxu0 %v2102
      %2125 = vmatprep.subr.bf16.mxu0 0
      %2126 = vmatpush1.bf16.msra.mxu0 %v2103
      %2127 = vmatprep.subr.bf16.mxu0 0
      %2128 = vmatpush1.bf16.msra.mxu0 %v2104
      %2129 = vmatprep.subr.bf16.mxu0 0
      %2130 = vmatpush1.bf16.msra.mxu0 0
      %2131 = vmatprep.subr.bf16.mxu0 0
      %2132 = vmatpush1.bf16.msra.mxu0 0
      %2133 = vmatprep.subr.bf16.mxu0 0
      %2134 = vmatpush1.bf16.msra.mxu0 0
      %2135 = vmatprep.subr.bf16.mxu0 0
      %2136 = vmatpush1.bf16.msra.mxu0 0
      %2137 = vmatprep.subr.bf16.mxu0 0
      %2138 = vmatpush1.bf16.msra.mxu0 0
      %2139 = vmatprep.subr.bf16.mxu0 0
      %2140 = vmatpush1.bf16.msra.mxu0 0
      %2141 = vmatprep.subr.bf16.mxu0 0
      %2142 = vmatpush1.bf16.msra.mxu0 0
      %2143 = vmatprep.subr.bf16.mxu0 0
      %2144 = vmatpush1.bf16.msra.mxu0 0
      %2145 = vmatprep.mubr.bf16.mxu0 0
      %2146 = vmatmul.mubr.bf16.gmra.mrb[0].mxu0 %v2033
      %v2147 = vpop.f32.mrb[0].mxu0
      %v2148 = vadd.f32 0.0, %v2147
      %v2149 = vpop.f32.mrb[0].mxu0
      %v2150 = vpop.f32.mrb[0].mxu0
      %v2151 = vadd.f32 0.0, %v2150
      %v2152 = vpop.f32.mrb[0].mxu0
      %2153 = vmatprep.mubr.bf16.mxu0 0
      %2154 = vmatmul.mubr.bf16.gmra.mrb[0].mxu0 %v2034
      %v2155 = vpop.f32.mrb[0].mxu0
      %v2156 = vadd.f32 0.0, %v2155
      %v2157 = vpop.f32.mrb[0].mxu0
      %v2158 = vpop.f32.mrb[0].mxu0
      %v2159 = vadd.f32 0.0, %v2158
      %v2160 = vpop.f32.mrb[0].mxu0
      %2161 = vmatprep.mubr.bf16.mxu0 0
      %2162 = vmatmul.mubr.bf16.gmra.mrb[0].mxu0 %v2035
      %v2163 = vpop.f32.mrb[0].mxu0
      %v2164 = vadd.f32 0.0, %v2163
      %v2165 = vpop.f32.mrb[0].mxu0
      %v2166 = vpop.f32.mrb[0].mxu0
      %v2167 = vadd.f32 0.0, %v2166
      %v2168 = vpop.f32.mrb[0].mxu0
      %2169 = vmatprep.mubr.bf16.mxu0 0
      %2170 = vmatmul.mubr.bf16.gmra.mrb[0].mxu0 %v2036
      %v2171 = vpop.f32.mrb[0].mxu0
      %v2172 = vadd.f32 0.0, %v2171
      %v2173 = vpop.f32.mrb[0].mxu0
      %v2174 = vpop.f32.mrb[0].mxu0
      %v2175 = vadd.f32 0.0, %v2174
      %v2176 = vpop.f32.mrb[0].mxu0
      %2177 = vmatprep.mubr.bf16.mxu0 0
      %2178 = vmatmul.mubr.bf16.gmra.mrb[0].mxu0 %v2037
      %v2179 = vpop.f32.mrb[0].mxu0
      %v2180 = vadd.f32 0.0, %v2179
      %v2181 = vpop.f32.mrb[0].mxu0
      %v2182 = vpop.f32.mrb[0].mxu0
      %v2183 = vadd.f32 0.0, %v2182
      %v2184 = vpop.f32.mrb[0].mxu0
      %2185 = vmatprep.mubr.bf16.mxu0 0
      %2186 = vmatmul.mubr.bf16.gmra.mrb[0].mxu0 %v2038
      %v2187 = vpop.f32.mrb[0].mxu0
      %v2188 = vadd.f32 0.0, %v2187
      %v2189 = vpop.f32.mrb[0].mxu0
      %v2190 = vpop.f32.mrb[0].mxu0
      %v2191 = vadd.f32 0.0, %v2190
      %v2192 = vpop.f32.mrb[0].mxu0
      %2193 = vmatprep.mubr.bf16.mxu0 0
      %2194 = vmatmul.mubr.bf16.gmra.mrb[0].mxu0 %v2039
      %v2195 = vpop.f32.mrb[0].mxu0
      %v2196 = vadd.f32 0.0, %v2195
      %v2197 = vpop.f32.mrb[0].mxu0
      %v2198 = vpop.f32.mrb[0].mxu0
      %v2199 = vadd.f32 0.0, %v2198
      %v2200 = vpop.f32.mrb[0].mxu0
      %2201 = vmatprep.mubr.bf16.mxu0 0
      %2202 = vmatmul.mubr.bf16.gmra.mrb[0].mxu0 %v2040
      %v2203 = vpop.f32.mrb[0].mxu0
      %v2204 = vadd.f32 0.0, %v2203
      %v2205 = vpop.f32.mrb[0].mxu0
      %v2206 = vpop.f32.mrb[0].mxu0
      %v2207 = vadd.f32 0.0, %v2206
      %v2208 = vpop.f32.mrb[0].mxu0
      %2209 = vmatprep.mubr.bf16.mxu0 0
      %2210 = vmatmul.mubr.bf16.gmra.mrb[0].mxu0 %v2041
      %v2211 = vpop.f32.mrb[0].mxu0
      %v2212 = vadd.f32 0.0, %v2211
      %v2213 = vpop.f32.mrb[0].mxu0
      %v2214 = vpop.f32.mrb[0].mxu0
      %v2215 = vadd.f32 0.0, %v2214
      %v2216 = vpop.f32.mrb[0].mxu0
      %2217 = vmatprep.mubr.bf16.mxu0 0
      %2218 = vmatmul.mubr.bf16.gmra.mrb[0].mxu0 %v2042
      %v2219 = vpop.f32.mrb[0].mxu0
      %v2220 = vadd.f32 0.0, %v2219
      %v2221 = vpop.f32.mrb[0].mxu0
      %v2222 = vpop.f32.mrb[0].mxu0
      %v2223 = vadd.f32 0.0, %v2222
      %v2224 = vpop.f32.mrb[0].mxu0
      %2225 = vmatprep.mubr.bf16.mxu0 0
      %2226 = vmatmul.mubr.bf16.gmra.mrb[0].mxu0 %v2043
      %v2227 = vpop.f32.mrb[0].mxu0
      %v2228 = vadd.f32 0.0, %v2227
      %v2229 = vpop.f32.mrb[0].mxu0
      %v2230 = vpop.f32.mrb[0].mxu0
      %v2231 = vadd.f32 0.0, %v2230
      %v2232 = vpop.f32.mrb[0].mxu0
      %2233 = vmatprep.mubr.bf16.mxu0 0
      %2234 = vmatmul.mubr.bf16.gmra.mrb[0].mxu0 %v2044
      %v2235 = vpop.f32.mrb[0].mxu0
      %v2236 = vadd.f32 0.0, %v2235
      %v2237 = vpop.f32.mrb[0].mxu0
      %v2238 = vpop.f32.mrb[0].mxu0
      %v2239 = vadd.f32 0.0, %v2238
      %v2240 = vpop.f32.mrb[0].mxu0
      %2241 = vmatprep.mubr.bf16.mxu0 0
      %2242 = vmatmul.mubr.bf16.gmra.mrb[0].mxu0 %v2045
      %v2243 = vpop.f32.mrb[0].mxu0
      %v2244 = vadd.f32 0.0, %v2243
      %v2245 = vpop.f32.mrb[0].mxu0
      %v2246 = vpop.f32.mrb[0].mxu0
      %v2247 = vadd.f32 0.0, %v2246
      %v2248 = vpop.f32.mrb[0].mxu0
      %2249 = vmatprep.mubr.bf16.mxu0 0
      %2250 = vmatmul.mubr.bf16.gmra.mrb[0].mxu0 %v2046
      %v2251 = vpop.f32.mrb[0].mxu0
      %v2252 = vadd.f32 0.0, %v2251
      %v2253 = vpop.f32.mrb[0].mxu0
      %v2254 = vpop.f32.mrb[0].mxu0
      %v2255 = vadd.f32 0.0, %v2254
      %v2256 = vpop.f32.mrb[0].mxu0
      %2257 = vmatprep.mubr.bf16.mxu0 0
      %2258 = vmatmul.mubr.bf16.gmra.mrb[0].mxu0 %v2047
      %v2259 = vpop.f32.mrb[0].mxu0
      %v2260 = vadd.f32 0.0, %v2259
      %v2261 = vpop.f32.mrb[0].mxu0
      %v2262 = vpop.f32.mrb[0].mxu0
      %v2263 = vadd.f32 0.0, %v2262
      %v2264 = vpop.f32.mrb[0].mxu0
      %2265 = vmatprep.mubr.bf16.mxu0 0
      %2266 = vmatmul.mubr.bf16.gmra.mrb[0].mxu0 %v2048
      %v2267 = vpop.f32.mrb[0].mxu0
      %v2268 = vadd.f32 0.0, %v2267
      %v2269 = vpop.f32.mrb[0].mxu0
      %v2270 = vpop.f32.mrb[0].mxu0
      %v2271 = vadd.f32 0.0, %v2270
      %v2272 = vpop.f32.mrb[0].mxu0
      %2273 = vdwg.mxu0
      %v2274 = vadd.f32 %v1565, %v2148
      %v2275 = vadd.f32 %v1566, %v2151
      %v2276 = vadd.f32 %v1567, %v2156
      %v2277 = vadd.f32 %v1568, %v2159
      %v2278 = vadd.f32 %v1569, %v2164
      %v2279 = vadd.f32 %v1570, %v2167
      %v2280 = vadd.f32 %v1571, %v2172
      %v2281 = vadd.f32 %v1572, %v2175
      %v2282 = vadd.f32 %v1573, %v2180
      %v2283 = vadd.f32 %v1574, %v2183
      %v2284 = vadd.f32 %v1575, %v2188
      %v2285 = vadd.f32 %v1576, %v2191
      %v2286 = vadd.f32 %v1577, %v2196
      %v2287 = vadd.f32 %v1578, %v2199
      %v2288 = vadd.f32 %v1579, %v2204
      %v2289 = vadd.f32 %v1580, %v2207
      %v2290 = vadd.f32 %v1581, %v2212
      %v2291 = vadd.f32 %v1582, %v2215
      %v2292 = vadd.f32 %v1583, %v2220
      %v2293 = vadd.f32 %v1584, %v2223
      %v2294 = vadd.f32 %v1585, %v2228
      %v2295 = vadd.f32 %v1586, %v2231
      %v2296 = vadd.f32 %v1587, %v2236
      %v2297 = vadd.f32 %v1588, %v2239
      %v2298 = vadd.f32 %v1589, %v2244
      %v2299 = vadd.f32 %v1590, %v2247
      %v2300 = vadd.f32 %v1591, %v2252
      %v2301 = vadd.f32 %v1592, %v2255
      %v2302 = vadd.f32 %v1593, %v2260
      %v2303 = vadd.f32 %v1594, %v2263
      %v2304 = vadd.f32 %v1595, %v2268
      %v2305 = vadd.f32 %v1596, %v2271
      %2306 = vst [vmem:[#allocation3] sm:$0xff] %v2274
      %2307 = vst [vmem:[#allocation3 + $0x8] sm:$0xff] %v2275
      %2308 = vst [vmem:[#allocation3 + $0x10] sm:$0xff] %v2276
      %2309 = vst [vmem:[#allocation3 + $0x18] sm:$0xff] %v2277
      %2310 = vst [vmem:[#allocation3 + $0x20] sm:$0xff] %v2278
      %2311 = vst [vmem:[#allocation3 + $0x28] sm:$0xff] %v2279
      %2312 = vst [vmem:[#allocation3 + $0x30] sm:$0xff] %v2280
      %2313 = vst [vmem:[#allocation3 + $0x38] sm:$0xff] %v2281
      %2314 = vst [vmem:[#allocation3 + $0x40] sm:$0xff] %v2282
      %2315 = vst [vmem:[#allocation3 + $0x48] sm:$0xff] %v2283
      %2316 = vst [vmem:[#allocation3 + $0x50] sm:$0xff] %v2284
      %2317 = vst [vmem:[#allocation3 + $0x58] sm:$0xff] %v2285
      %2318 = vst [vmem:[#allocation3 + $0x60] sm:$0xff] %v2286
      %2319 = vst [vmem:[#allocation3 + $0x68] sm:$0xff] %v2287
      %2320 = vst [vmem:[#allocation3 + $0x70] sm:$0xff] %v2288
      %2321 = vst [vmem:[#allocation3 + $0x78] sm:$0xff] %v2289
      %2322 = vst [vmem:[#allocation3 + $0x80] sm:$0xff] %v2290
      %2323 = vst [vmem:[#allocation3 + $0x88] sm:$0xff] %v2291
      %2324 = vst [vmem:[#allocation3 + $0x90] sm:$0xff] %v2292
      %2325 = vst [vmem:[#allocation3 + $0x98] sm:$0xff] %v2293
      %2326 = vst [vmem:[#allocation3 + $0xa0] sm:$0xff] %v2294
      %2327 = vst [vmem:[#allocation3 + $0xa8] sm:$0xff] %v2295
      %2328 = vst [vmem:[#allocation3 + $0xb0] sm:$0xff] %v2296
      %2329 = vst [vmem:[#allocation3 + $0xb8] sm:$0xff] %v2297
      %2330 = vst [vmem:[#allocation3 + $0xc0] sm:$0xff] %v2298
      %2331 = vst [vmem:[#allocation3 + $0xc8] sm:$0xff] %v2299
      %2332 = vst [vmem:[#allocation3 + $0xd0] sm:$0xff] %v2300
      %2333 = vst [vmem:[#allocation3 + $0xd8] sm:$0xff] %v2301
      %2334 = vst [vmem:[#allocation3 + $0xe0] sm:$0xff] %v2302
      %2335 = vst [vmem:[#allocation3 + $0xe8] sm:$0xff] %v2303
      %2336 = vst [vmem:[#allocation3 + $0xf0] sm:$0xff] %v2304
      %2337 = vst [vmem:[#allocation3 + $0xf8] sm:$0xff] %v2305
      %v2338 = vld [vmem:[#allocation2] sm:$0xe]
      %v2339 = vld [vmem:[#allocation2 + $0x4] sm:$0xf]
      %v2340 = vld [vmem:[#allocation2 + $0x8] sm:$0x1]
      %v2341 = vld [vmem:[#allocation2 + $0xc] sm:$0xe]
      %v2342 = vld [vmem:[#allocation2 + $0x10] sm:$0xf]
      %v2343 = vld [vmem:[#allocation2 + $0x14] sm:$0x1]
      %v2344 = vld [vmem:[#allocation2 + $0x18] sm:$0xe]
      %v2345 = vld [vmem:[#allocation2 + $0x1c] sm:$0xf]
      %v2346 = vld [vmem:[#allocation2 + $0x20] sm:$0x1]
      %v2347 = vld [vmem:[#allocation2 + $0x24] sm:$0xe]
      %v2348 = vld [vmem:[#allocation2 + $0x28] sm:$0xf]
      %v2349 = vld [vmem:[#allocation2 + $0x2c] sm:$0x1]
      %v2350 = vld [vmem:[#allocation2 + $0x30] sm:$0xe]
      %v2351 = vld [vmem:[#allocation2 + $0x34] sm:$0xf]
      %v2352 = vld [vmem:[#allocation2 + $0x38] sm:$0x1]
      %v2353 = vld [vmem:[#allocation2 + $0x3c] sm:$0xe]
      %v2354 = vld [vmem:[#allocation2 + $0x40] sm:$0xf]
      %v2355 = vld [vmem:[#allocation2 + $0x44] sm:$0x1]
      %v2356 = vld [vmem:[#allocation2 + $0x48] sm:$0xe]
      %v2357 = vld [vmem:[#allocation2 + $0x4c] sm:$0xf]
      %v2358 = vld [vmem:[#allocation2 + $0x50] sm:$0x1]
      %v2359 = vld [vmem:[#allocation2 + $0x54] sm:$0xe]
      %v2360 = vld [vmem:[#allocation2 + $0x58] sm:$0xf]
      %v2361 = vld [vmem:[#allocation2 + $0x5c] sm:$0x1]
      %v2362 = vld [vmem:[#allocation2 + $0x60] sm:$0xe]
      %v2363 = vld [vmem:[#allocation2 + $0x64] sm:$0xf]
      %v2364 = vld [vmem:[#allocation2 + $0x68] sm:$0x1]
      %v2365 = vld [vmem:[#allocation2 + $0x6c] sm:$0xe]
      %v2366 = vld [vmem:[#allocation2 + $0x70] sm:$0xf]
      %v2367 = vld [vmem:[#allocation2 + $0x74] sm:$0x1]
      %v2368 = vld [vmem:[#allocation2 + $0x78] sm:$0xe]
      %v2369 = vld [vmem:[#allocation2 + $0x7c] sm:$0xf]
      %v2370 = vld [vmem:[#allocation2 + $0x80] sm:$0x1]
      %v2371 = vld [vmem:[#allocation2 + $0x84] sm:$0xe]
      %v2372 = vld [vmem:[#allocation2 + $0x88] sm:$0xf]
      %v2373 = vld [vmem:[#allocation2 + $0x8c] sm:$0x1]
      %v2374 = vld [vmem:[#allocation2 + $0x90] sm:$0xe]
      %v2375 = vld [vmem:[#allocation2 + $0x94] sm:$0xf]
      %v2376 = vld [vmem:[#allocation2 + $0x98] sm:$0x1]
      %v2377 = vld [vmem:[#allocation2 + $0x9c] sm:$0xe]
      %v2378 = vld [vmem:[#allocation2 + $0xa0] sm:$0xf]
      %v2379 = vld [vmem:[#allocation2 + $0xa4] sm:$0x1]
      %v2380 = vld [vmem:[#allocation2 + $0xa8] sm:$0xe]
      %v2381 = vld [vmem:[#allocation2 + $0xac] sm:$0xf]
      %v2382 = vld [vmem:[#allocation2 + $0xb0] sm:$0x1]
      %v2383 = vld [vmem:[#allocation2 + $0xb4] sm:$0xe]
      %v2384 = vld [vmem:[#allocation2 + $0xb8] sm:$0xf]
      %v2385 = vld [vmem:[#allocation2 + $0xbc] sm:$0x1]
      %v2386 = vld [vmem:[#allocation3] sm:$0xff]
      %v2387 = vld [vmem:[#allocation3 + $0x8] sm:$0xff]
      %v2388 = vld [vmem:[#allocation3 + $0x10] sm:$0xff]
      %v2389 = vld [vmem:[#allocation3 + $0x18] sm:$0xff]
      %v2390 = vld [vmem:[#allocation3 + $0x20] sm:$0xff]
      %v2391 = vld [vmem:[#allocation3 + $0x28] sm:$0xff]
      %v2392 = vld [vmem:[#allocation3 + $0x30] sm:$0xff]
      %v2393 = vld [vmem:[#allocation3 + $0x38] sm:$0xff]
      %v2394 = vld [vmem:[#allocation3 + $0x40] sm:$0xff]
      %v2395 = vld [vmem:[#allocation3 + $0x48] sm:$0xff]
      %v2396 = vld [vmem:[#allocation3 + $0x50] sm:$0xff]
      %v2397 = vld [vmem:[#allocation3 + $0x58] sm:$0xff]
      %v2398 = vld [vmem:[#allocation3 + $0x60] sm:$0xff]
      %v2399 = vld [vmem:[#allocation3 + $0x68] sm:$0xff]
      %v2400 = vld [vmem:[#allocation3 + $0x70] sm:$0xff]
      %v2401 = vld [vmem:[#allocation3 + $0x78] sm:$0xff]
      %v2402 = vld [vmem:[#allocation3 + $0x80] sm:$0xff]
      %v2403 = vld [vmem:[#allocation3 + $0x88] sm:$0xff]
      %v2404 = vld [vmem:[#allocation3 + $0x90] sm:$0xff]
      %v2405 = vld [vmem:[#allocation3 + $0x98] sm:$0xff]
      %v2406 = vld [vmem:[#allocation3 + $0xa0] sm:$0xff]
      %v2407 = vld [vmem:[#allocation3 + $0xa8] sm:$0xff]
      %v2408 = vld [vmem:[#allocation3 + $0xb0] sm:$0xff]
      %v2409 = vld [vmem:[#allocation3 + $0xb8] sm:$0xff]
      %v2410 = vld [vmem:[#allocation3 + $0xc0] sm:$0xff]
      %v2411 = vld [vmem:[#allocation3 + $0xc8] sm:$0xff]
      %v2412 = vld [vmem:[#allocation3 + $0xd0] sm:$0xff]
      %v2413 = vld [vmem:[#allocation3 + $0xd8] sm:$0xff]
      %v2414 = vld [vmem:[#allocation3 + $0xe0] sm:$0xff]
      %v2415 = vld [vmem:[#allocation3 + $0xe8] sm:$0xff]
      %v2416 = vld [vmem:[#allocation3 + $0xf0] sm:$0xff]
      %v2417 = vld [vmem:[#allocation3 + $0xf8] sm:$0xff]
      %vm2466 = vcmask 1042432
      %vm2467 = vcmask 1046532
      %vm2468 = vmor %vm2466, %vm2467
      %v2469 = vrot.slane %v2338, 5
      %v2470 = vrot.slane %v2469, 4
      %v2471 = vrot.slane %v2339, 5
      %v2472 = vsel %vm2468, %v2470, %v2471
      %v2473 = vrot.slane %v2471, 4
      %v2474 = vrot.slane %v2340, 5
      %v2475 = vsel %vm2468, %v2473, %v2474
      %v2476 = vrot.slane %v2341, 5
      %v2477 = vrot.slane %v2476, 4
      %v2478 = vrot.slane %v2342, 5
      %v2479 = vsel %vm2468, %v2477, %v2478
      %v2480 = vrot.slane %v2478, 4
      %v2481 = vrot.slane %v2343, 5
      %v2482 = vsel %vm2468, %v2480, %v2481
      %v2483 = vrot.slane %v2344, 5
      %v2484 = vrot.slane %v2483, 4
      %v2485 = vrot.slane %v2345, 5
      %v2486 = vsel %vm2468, %v2484, %v2485
      %v2487 = vrot.slane %v2485, 4
      %v2488 = vrot.slane %v2346, 5
      %v2489 = vsel %vm2468, %v2487, %v2488
      %v2490 = vrot.slane %v2347, 5
      %v2491 = vrot.slane %v2490, 4
      %v2492 = vrot.slane %v2348, 5
      %v2493 = vsel %vm2468, %v2491, %v2492
      %v2494 = vrot.slane %v2492, 4
      %v2495 = vrot.slane %v2349, 5
      %v2496 = vsel %vm2468, %v2494, %v2495
      %v2497 = vrot.slane %v2350, 5
      %v2498 = vrot.slane %v2497, 4
      %v2499 = vrot.slane %v2351, 5
      %v2500 = vsel %vm2468, %v2498, %v2499
      %v2501 = vrot.slane %v2499, 4
      %v2502 = vrot.slane %v2352, 5
      %v2503 = vsel %vm2468, %v2501, %v2502
      %v2504 = vrot.slane %v2353, 5
      %v2505 = vrot.slane %v2504, 4
      %v2506 = vrot.slane %v2354, 5
      %v2507 = vsel %vm2468, %v2505, %v2506
      %v2508 = vrot.slane %v2506, 4
      %v2509 = vrot.slane %v2355, 5
      %v2510 = vsel %vm2468, %v2508, %v2509
      %v2511 = vrot.slane %v2356, 5
      %v2512 = vrot.slane %v2511, 4
      %v2513 = vrot.slane %v2357, 5
      %v2514 = vsel %vm2468, %v2512, %v2513
      %v2515 = vrot.slane %v2513, 4
      %v2516 = vrot.slane %v2358, 5
      %v2517 = vsel %vm2468, %v2515, %v2516
      %v2518 = vrot.slane %v2359, 5
      %v2519 = vrot.slane %v2518, 4
      %v2520 = vrot.slane %v2360, 5
      %v2521 = vsel %vm2468, %v2519, %v2520
      %v2522 = vrot.slane %v2520, 4
      %v2523 = vrot.slane %v2361, 5
      %v2524 = vsel %vm2468, %v2522, %v2523
      %v2525 = vrot.slane %v2362, 5
      %v2526 = vrot.slane %v2525, 4
      %v2527 = vrot.slane %v2363, 5
      %v2528 = vsel %vm2468, %v2526, %v2527
      %v2529 = vrot.slane %v2527, 4
      %v2530 = vrot.slane %v2364, 5
      %v2531 = vsel %vm2468, %v2529, %v2530
      %v2532 = vrot.slane %v2365, 5
      %v2533 = vrot.slane %v2532, 4
      %v2534 = vrot.slane %v2366, 5
      %v2535 = vsel %vm2468, %v2533, %v2534
      %v2536 = vrot.slane %v2534, 4
      %v2537 = vrot.slane %v2367, 5
      %v2538 = vsel %vm2468, %v2536, %v2537
      %v2539 = vrot.slane %v2368, 5
      %v2540 = vrot.slane %v2539, 4
      %v2541 = vrot.slane %v2369, 5
      %v2542 = vsel %vm2468, %v2540, %v2541
      %v2543 = vrot.slane %v2541, 4
      %v2544 = vrot.slane %v2370, 5
      %v2545 = vsel %vm2468, %v2543, %v2544
      %v2546 = vrot.slane %v2371, 5
      %v2547 = vrot.slane %v2546, 4
      %v2548 = vrot.slane %v2372, 5
      %v2549 = vsel %vm2468, %v2547, %v2548
      %v2550 = vrot.slane %v2548, 4
      %v2551 = vrot.slane %v2373, 5
      %v2552 = vsel %vm2468, %v2550, %v2551
      %v2553 = vrot.slane %v2374, 5
      %v2554 = vrot.slane %v2553, 4
      %v2555 = vrot.slane %v2375, 5
      %v2556 = vsel %vm2468, %v2554, %v2555
      %v2557 = vrot.slane %v2555, 4
      %v2558 = vrot.slane %v2376, 5
      %v2559 = vsel %vm2468, %v2557, %v2558
      %v2560 = vrot.slane %v2377, 5
      %v2561 = vrot.slane %v2560, 4
      %v2562 = vrot.slane %v2378, 5
      %v2563 = vsel %vm2468, %v2561, %v2562
      %v2564 = vrot.slane %v2562, 4
      %v2565 = vrot.slane %v2379, 5
      %v2566 = vsel %vm2468, %v2564, %v2565
      %v2567 = vrot.slane %v2380, 5
      %v2568 = vrot.slane %v2567, 4
      %v2569 = vrot.slane %v2381, 5
      %v2570 = vsel %vm2468, %v2568, %v2569
      %v2571 = vrot.slane %v2569, 4
      %v2572 = vrot.slane %v2382, 5
      %v2573 = vsel %vm2468, %v2571, %v2572
      %v2574 = vrot.slane %v2383, 5
      %v2575 = vrot.slane %v2574, 4
      %v2576 = vrot.slane %v2384, 5
      %v2577 = vsel %vm2468, %v2575, %v2576
      %v2578 = vrot.slane %v2576, 4
      %v2579 = vrot.slane %v2385, 5
      %v2580 = vsel %vm2468, %v2578, %v2579
      %s2581 = scalar_lea.vmem %s3, 128
      %v2582 = vld [vmem:[%s2581] sm:$0xf]
      %v2583 = vld [vmem:[%s2581 + $0x4] sm:$0xf]
      %v2584 = vld [vmem:[%s2581 + $0x8] sm:$0xf]
      %v2585 = vld [vmem:[%s2581 + $0xc] sm:$0xf]
      %v2586 = vld [vmem:[%s2581 + $0x10] sm:$0xf]
      %v2587 = vld [vmem:[%s2581 + $0x14] sm:$0xf]
      %v2588 = vld [vmem:[%s2581 + $0x18] sm:$0xf]
      %v2589 = vld [vmem:[%s2581 + $0x1c] sm:$0xf]
      %v2590 = vld [vmem:[%s2581 + $0x20] sm:$0xf]
      %v2591 = vld [vmem:[%s2581 + $0x24] sm:$0xf]
      %v2592 = vld [vmem:[%s2581 + $0x28] sm:$0xf]
      %v2593 = vld [vmem:[%s2581 + $0x2c] sm:$0xf]
      %v2594 = vld [vmem:[%s2581 + $0x30] sm:$0xf]
      %v2595 = vld [vmem:[%s2581 + $0x34] sm:$0xf]
      %v2596 = vld [vmem:[%s2581 + $0x38] sm:$0xf]
      %v2597 = vld [vmem:[%s2581 + $0x3c] sm:$0xf]
      %v2598 = vunpack.c.l.b16 %v2472
      %v2599 = vunpack.c.l.b16 %v2475
      %v2600 = vunpack.c.l.b16 %v2479
      %v2601 = vunpack.c.l.b16 %v2482
      %v2602 = vunpack.c.l.b16 %v2486
      %v2603 = vunpack.c.l.b16 %v2489
      %v2604 = vunpack.c.l.b16 %v2493
      %v2605 = vunpack.c.l.b16 %v2496
      %v2606 = vunpack.c.l.b16 %v2500
      %v2607 = vunpack.c.l.b16 %v2503
      %v2608 = vunpack.c.l.b16 %v2507
      %v2609 = vunpack.c.l.b16 %v2510
      %v2610 = vunpack.c.l.b16 %v2514
      %v2611 = vunpack.c.l.b16 %v2517
      %v2612 = vunpack.c.l.b16 %v2521
      %v2613 = vunpack.c.l.b16 %v2524
      %v2614 = vunpack.c.l.b16 %v2528
      %v2615 = vunpack.c.l.b16 %v2531
      %v2616 = vunpack.c.l.b16 %v2535
      %v2617 = vunpack.c.l.b16 %v2538
      %v2618 = vunpack.c.l.b16 %v2542
      %v2619 = vunpack.c.l.b16 %v2545
      %v2620 = vunpack.c.l.b16 %v2549
      %v2621 = vunpack.c.l.b16 %v2552
      %v2622 = vunpack.c.l.b16 %v2556
      %v2623 = vunpack.c.l.b16 %v2559
      %v2624 = vunpack.c.l.b16 %v2563
      %v2625 = vunpack.c.l.b16 %v2566
      %v2626 = vunpack.c.l.b16 %v2570
      %v2627 = vunpack.c.l.b16 %v2573
      %v2628 = vunpack.c.l.b16 %v2577
      %v2629 = vunpack.c.l.b16 %v2580
      %v2630 = vpack.c.b16 %v2599, %v2598
      %v2631 = vpack.c.b16 %v2601, %v2600
      %v2632 = vpack.c.b16 %v2603, %v2602
      %v2633 = vpack.c.b16 %v2605, %v2604
      %v2634 = vpack.c.b16 %v2607, %v2606
      %v2635 = vpack.c.b16 %v2609, %v2608
      %v2636 = vpack.c.b16 %v2611, %v2610
      %v2637 = vpack.c.b16 %v2613, %v2612
      %v2638 = vpack.c.b16 %v2615, %v2614
      %v2639 = vpack.c.b16 %v2617, %v2616
      %v2640 = vpack.c.b16 %v2619, %v2618
      %v2641 = vpack.c.b16 %v2621, %v2620
      %v2642 = vpack.c.b16 %v2623, %v2622
      %v2643 = vpack.c.b16 %v2625, %v2624
      %v2644 = vpack.c.b16 %v2627, %v2626
      %v2645 = vpack.c.b16 %v2629, %v2628
      %v2678 = vunpack.c.l.b16 %v2582
      %v2679 = vunpack.c.l.b16 %v2583
      %v2680 = vunpack.c.l.b16 %v2584
      %v2681 = vunpack.c.l.b16 %v2585
      %v2682 = vunpack.c.l.b16 %v2586
      %v2683 = vunpack.c.l.b16 %v2587
      %v2684 = vunpack.c.l.b16 %v2588
      %v2685 = vunpack.c.l.b16 %v2589
      %v2686 = vunpack.c.l.b16 %v2590
      %v2687 = vunpack.c.l.b16 %v2591
      %v2688 = vunpack.c.l.b16 %v2592
      %v2689 = vunpack.c.l.b16 %v2593
      %v2690 = vunpack.c.l.b16 %v2594
      %v2691 = vunpack.c.l.b16 %v2595
      %v2692 = vunpack.c.l.b16 %v2596
      %v2693 = vunpack.c.l.b16 %v2597
      %v2694 = vpack.c.b16 %v2679, %v2678
      %v2695 = vpack.c.b16 %v2681, %v2680
      %v2696 = vpack.c.b16 %v2683, %v2682
      %v2697 = vpack.c.b16 %v2685, %v2684
      %v2698 = vpack.c.b16 %v2687, %v2686
      %v2699 = vpack.c.b16 %v2689, %v2688
      %v2700 = vpack.c.b16 %v2691, %v2690
      %v2701 = vpack.c.b16 %v2693, %v2692
      %2710 = vmatprep.subr.bf16.mxu0 0
      %2711 = vmatpush1.bf16.msra.mxu0 %v2694
      %2712 = vmatprep.subr.bf16.mxu0 0
      %2713 = vmatpush1.bf16.msra.mxu0 %v2695
      %2714 = vmatprep.subr.bf16.mxu0 0
      %2715 = vmatpush1.bf16.msra.mxu0 %v2696
      %2716 = vmatprep.subr.bf16.mxu0 0
      %2717 = vmatpush1.bf16.msra.mxu0 %v2697
      %2718 = vmatprep.subr.bf16.mxu0 0
      %2719 = vmatpush1.bf16.msra.mxu0 %v2698
      %2720 = vmatprep.subr.bf16.mxu0 0
      %2721 = vmatpush1.bf16.msra.mxu0 %v2699
      %2722 = vmatprep.subr.bf16.mxu0 0
      %2723 = vmatpush1.bf16.msra.mxu0 %v2700
      %2724 = vmatprep.subr.bf16.mxu0 0
      %2725 = vmatpush1.bf16.msra.mxu0 %v2701
      %2726 = vmatprep.subr.bf16.mxu0 0
      %2727 = vmatpush1.bf16.msra.mxu0 0
      %2728 = vmatprep.subr.bf16.mxu0 0
      %2729 = vmatpush1.bf16.msra.mxu0 0
      %2730 = vmatprep.subr.bf16.mxu0 0
      %2731 = vmatpush1.bf16.msra.mxu0 0
      %2732 = vmatprep.subr.bf16.mxu0 0
      %2733 = vmatpush1.bf16.msra.mxu0 0
      %2734 = vmatprep.subr.bf16.mxu0 0
      %2735 = vmatpush1.bf16.msra.mxu0 0
      %2736 = vmatprep.subr.bf16.mxu0 0
      %2737 = vmatpush1.bf16.msra.mxu0 0
      %2738 = vmatprep.subr.bf16.mxu0 0
      %2739 = vmatpush1.bf16.msra.mxu0 0
      %2740 = vmatprep.subr.bf16.mxu0 0
      %2741 = vmatpush1.bf16.msra.mxu0 0
      %2742 = vmatprep.mubr.bf16.mxu0 0
      %2743 = vmatmul.mubr.bf16.gmra.mrb[0].mxu0 %v2630
      %v2744 = vpop.f32.mrb[0].mxu0
      %v2745 = vadd.f32 0.0, %v2744
      %v2746 = vpop.f32.mrb[0].mxu0
      %v2747 = vpop.f32.mrb[0].mxu0
      %v2748 = vadd.f32 0.0, %v2747
      %v2749 = vpop.f32.mrb[0].mxu0
      %2750 = vmatprep.mubr.bf16.mxu0 0
      %2751 = vmatmul.mubr.bf16.gmra.mrb[0].mxu0 %v2631
      %v2752 = vpop.f32.mrb[0].mxu0
      %v2753 = vadd.f32 0.0, %v2752
      %v2754 = vpop.f32.mrb[0].mxu0
      %v2755 = vpop.f32.mrb[0].mxu0
      %v2756 = vadd.f32 0.0, %v2755
      %v2757 = vpop.f32.mrb[0].mxu0
      %2758 = vmatprep.mubr.bf16.mxu0 0
      %2759 = vmatmul.mubr.bf16.gmra.mrb[0].mxu0 %v2632
      %v2760 = vpop.f32.mrb[0].mxu0
      %v2761 = vadd.f32 0.0, %v2760
      %v2762 = vpop.f32.mrb[0].mxu0
      %v2763 = vpop.f32.mrb[0].mxu0
      %v2764 = vadd.f32 0.0, %v2763
      %v2765 = vpop.f32.mrb[0].mxu0
      %2766 = vmatprep.mubr.bf16.mxu0 0
      %2767 = vmatmul.mubr.bf16.gmra.mrb[0].mxu0 %v2633
      %v2768 = vpop.f32.mrb[0].mxu0
      %v2769 = vadd.f32 0.0, %v2768
      %v2770 = vpop.f32.mrb[0].mxu0
      %v2771 = vpop.f32.mrb[0].mxu0
      %v2772 = vadd.f32 0.0, %v2771
      %v2773 = vpop.f32.mrb[0].mxu0
      %2774 = vmatprep.mubr.bf16.mxu0 0
      %2775 = vmatmul.mubr.bf16.gmra.mrb[0].mxu0 %v2634
      %v2776 = vpop.f32.mrb[0].mxu0
      %v2777 = vadd.f32 0.0, %v2776
      %v2778 = vpop.f32.mrb[0].mxu0
      %v2779 = vpop.f32.mrb[0].mxu0
      %v2780 = vadd.f32 0.0, %v2779
      %v2781 = vpop.f32.mrb[0].mxu0
      %2782 = vmatprep.mubr.bf16.mxu0 0
      %2783 = vmatmul.mubr.bf16.gmra.mrb[0].mxu0 %v2635
      %v2784 = vpop.f32.mrb[0].mxu0
      %v2785 = vadd.f32 0.0, %v2784
      %v2786 = vpop.f32.mrb[0].mxu0
      %v2787 = vpop.f32.mrb[0].mxu0
      %v2788 = vadd.f32 0.0, %v2787
      %v2789 = vpop.f32.mrb[0].mxu0
      %2790 = vmatprep.mubr.bf16.mxu0 0
      %2791 = vmatmul.mubr.bf16.gmra.mrb[0].mxu0 %v2636
      %v2792 = vpop.f32.mrb[0].mxu0
      %v2793 = vadd.f32 0.0, %v2792
      %v2794 = vpop.f32.mrb[0].mxu0
      %v2795 = vpop.f32.mrb[0].mxu0
      %v2796 = vadd.f32 0.0, %v2795
      %v2797 = vpop.f32.mrb[0].mxu0
      %2798 = vmatprep.mubr.bf16.mxu0 0
      %2799 = vmatmul.mubr.bf16.gmra.mrb[0].mxu0 %v2637
      %v2800 = vpop.f32.mrb[0].mxu0
      %v2801 = vadd.f32 0.0, %v2800
      %v2802 = vpop.f32.mrb[0].mxu0
      %v2803 = vpop.f32.mrb[0].mxu0
      %v2804 = vadd.f32 0.0, %v2803
      %v2805 = vpop.f32.mrb[0].mxu0
      %2806 = vmatprep.mubr.bf16.mxu0 0
      %2807 = vmatmul.mubr.bf16.gmra.mrb[0].mxu0 %v2638
      %v2808 = vpop.f32.mrb[0].mxu0
      %v2809 = vadd.f32 0.0, %v2808
      %v2810 = vpop.f32.mrb[0].mxu0
      %v2811 = vpop.f32.mrb[0].mxu0
      %v2812 = vadd.f32 0.0, %v2811
      %v2813 = vpop.f32.mrb[0].mxu0
      %2814 = vmatprep.mubr.bf16.mxu0 0
      %2815 = vmatmul.mubr.bf16.gmra.mrb[0].mxu0 %v2639
      %v2816 = vpop.f32.mrb[0].mxu0
      %v2817 = vadd.f32 0.0, %v2816
      %v2818 = vpop.f32.mrb[0].mxu0
      %v2819 = vpop.f32.mrb[0].mxu0
      %v2820 = vadd.f32 0.0, %v2819
      %v2821 = vpop.f32.mrb[0].mxu0
      %2822 = vmatprep.mubr.bf16.mxu0 0
      %2823 = vmatmul.mubr.bf16.gmra.mrb[0].mxu0 %v2640
      %v2824 = vpop.f32.mrb[0].mxu0
      %v2825 = vadd.f32 0.0, %v2824
      %v2826 = vpop.f32.mrb[0].mxu0
      %v2827 = vpop.f32.mrb[0].mxu0
      %v2828 = vadd.f32 0.0, %v2827
      %v2829 = vpop.f32.mrb[0].mxu0
      %2830 = vmatprep.mubr.bf16.mxu0 0
      %2831 = vmatmul.mubr.bf16.gmra.mrb[0].mxu0 %v2641
      %v2832 = vpop.f32.mrb[0].mxu0
      %v2833 = vadd.f32 0.0, %v2832
      %v2834 = vpop.f32.mrb[0].mxu0
      %v2835 = vpop.f32.mrb[0].mxu0
      %v2836 = vadd.f32 0.0, %v2835
      %v2837 = vpop.f32.mrb[0].mxu0
      %2838 = vmatprep.mubr.bf16.mxu0 0
      %2839 = vmatmul.mubr.bf16.gmra.mrb[0].mxu0 %v2642
      %v2840 = vpop.f32.mrb[0].mxu0
      %v2841 = vadd.f32 0.0, %v2840
      %v2842 = vpop.f32.mrb[0].mxu0
      %v2843 = vpop.f32.mrb[0].mxu0
      %v2844 = vadd.f32 0.0, %v2843
      %v2845 = vpop.f32.mrb[0].mxu0
      %2846 = vmatprep.mubr.bf16.mxu0 0
      %2847 = vmatmul.mubr.bf16.gmra.mrb[0].mxu0 %v2643
      %v2848 = vpop.f32.mrb[0].mxu0
      %v2849 = vadd.f32 0.0, %v2848
      %v2850 = vpop.f32.mrb[0].mxu0
      %v2851 = vpop.f32.mrb[0].mxu0
      %v2852 = vadd.f32 0.0, %v2851
      %v2853 = vpop.f32.mrb[0].mxu0
      %2854 = vmatprep.mubr.bf16.mxu0 0
      %2855 = vmatmul.mubr.bf16.gmra.mrb[0].mxu0 %v2644
      %v2856 = vpop.f32.mrb[0].mxu0
      %v2857 = vadd.f32 0.0, %v2856
      %v2858 = vpop.f32.mrb[0].mxu0
      %v2859 = vpop.f32.mrb[0].mxu0
      %v2860 = vadd.f32 0.0, %v2859
      %v2861 = vpop.f32.mrb[0].mxu0
      %2862 = vmatprep.mubr.bf16.mxu0 0
      %2863 = vmatmul.mubr.bf16.gmra.mrb[0].mxu0 %v2645
      %v2864 = vpop.f32.mrb[0].mxu0
      %v2865 = vadd.f32 0.0, %v2864
      %v2866 = vpop.f32.mrb[0].mxu0
      %v2867 = vpop.f32.mrb[0].mxu0
      %v2868 = vadd.f32 0.0, %v2867
      %v2869 = vpop.f32.mrb[0].mxu0
      %2870 = vdwg.mxu0
      %v2871 = vadd.f32 %v2386, %v2745
      %v2872 = vadd.f32 %v2387, %v2748
      %v2873 = vadd.f32 %v2388, %v2753
      %v2874 = vadd.f32 %v2389, %v2756
      %v2875 = vadd.f32 %v2390, %v2761
      %v2876 = vadd.f32 %v2391, %v2764
      %v2877 = vadd.f32 %v2392, %v2769
      %v2878 = vadd.f32 %v2393, %v2772
      %v2879 = vadd.f32 %v2394, %v2777
      %v2880 = vadd.f32 %v2395, %v2780
      %v2881 = vadd.f32 %v2396, %v2785
      %v2882 = vadd.f32 %v2397, %v2788
      %v2883 = vadd.f32 %v2398, %v2793
      %v2884 = vadd.f32 %v2399, %v2796
      %v2885 = vadd.f32 %v2400, %v2801
      %v2886 = vadd.f32 %v2401, %v2804
      %v2887 = vadd.f32 %v2402, %v2809
      %v2888 = vadd.f32 %v2403, %v2812
      %v2889 = vadd.f32 %v2404, %v2817
      %v2890 = vadd.f32 %v2405, %v2820
      %v2891 = vadd.f32 %v2406, %v2825
      %v2892 = vadd.f32 %v2407, %v2828
      %v2893 = vadd.f32 %v2408, %v2833
      %v2894 = vadd.f32 %v2409, %v2836
      %v2895 = vadd.f32 %v2410, %v2841
      %v2896 = vadd.f32 %v2411, %v2844
      %v2897 = vadd.f32 %v2412, %v2849
      %v2898 = vadd.f32 %v2413, %v2852
      %v2899 = vadd.f32 %v2414, %v2857
      %v2900 = vadd.f32 %v2415, %v2860
      %v2901 = vadd.f32 %v2416, %v2865
      %v2902 = vadd.f32 %v2417, %v2868
      %2903 = vst [vmem:[#allocation3] sm:$0xff] %v2871
      %2904 = vst [vmem:[#allocation3 + $0x8] sm:$0xff] %v2872
      %2905 = vst [vmem:[#allocation3 + $0x10] sm:$0xff] %v2873
      %2906 = vst [vmem:[#allocation3 + $0x18] sm:$0xff] %v2874
      %2907 = vst [vmem:[#allocation3 + $0x20] sm:$0xff] %v2875
      %2908 = vst [vmem:[#allocation3 + $0x28] sm:$0xff] %v2876
      %2909 = vst [vmem:[#allocation3 + $0x30] sm:$0xff] %v2877
      %2910 = vst [vmem:[#allocation3 + $0x38] sm:$0xff] %v2878
      %2911 = vst [vmem:[#allocation3 + $0x40] sm:$0xff] %v2879
      %2912 = vst [vmem:[#allocation3 + $0x48] sm:$0xff] %v2880
      %2913 = vst [vmem:[#allocation3 + $0x50] sm:$0xff] %v2881
      %2914 = vst [vmem:[#allocation3 + $0x58] sm:$0xff] %v2882
      %2915 = vst [vmem:[#allocation3 + $0x60] sm:$0xff] %v2883
      %2916 = vst [vmem:[#allocation3 + $0x68] sm:$0xff] %v2884
      %2917 = vst [vmem:[#allocation3 + $0x70] sm:$0xff] %v2885
      %2918 = vst [vmem:[#allocation3 + $0x78] sm:$0xff] %v2886
      %2919 = vst [vmem:[#allocation3 + $0x80] sm:$0xff] %v2887
      %2920 = vst [vmem:[#allocation3 + $0x88] sm:$0xff] %v2888
      %2921 = vst [vmem:[#allocation3 + $0x90] sm:$0xff] %v2889
      %2922 = vst [vmem:[#allocation3 + $0x98] sm:$0xff] %v2890
      %2923 = vst [vmem:[#allocation3 + $0xa0] sm:$0xff] %v2891
      %2924 = vst [vmem:[#allocation3 + $0xa8] sm:$0xff] %v2892
      %2925 = vst [vmem:[#allocation3 + $0xb0] sm:$0xff] %v2893
      %2926 = vst [vmem:[#allocation3 + $0xb8] sm:$0xff] %v2894
      %2927 = vst [vmem:[#allocation3 + $0xc0] sm:$0xff] %v2895
      %2928 = vst [vmem:[#allocation3 + $0xc8] sm:$0xff] %v2896
      %2929 = vst [vmem:[#allocation3 + $0xd0] sm:$0xff] %v2897
      %2930 = vst [vmem:[#allocation3 + $0xd8] sm:$0xff] %v2898
      %2931 = vst [vmem:[#allocation3 + $0xe0] sm:$0xff] %v2899
      %2932 = vst [vmem:[#allocation3 + $0xe8] sm:$0xff] %v2900
      %2933 = vst [vmem:[#allocation3 + $0xf0] sm:$0xff] %v2901
      %2934 = vst [vmem:[#allocation3 + $0xf8] sm:$0xff] %v2902
      %v2935 = vld [vmem:[%s918] sm:$0xf]
      %v2936 = vld [vmem:[%s918 + $0x4] sm:$0xf]
      %v2937 = vld [vmem:[%s918 + $0xc] sm:$0xf]
      %v2938 = vld [vmem:[%s918 + $0x10] sm:$0xf]
      %v2939 = vld [vmem:[%s918 + $0x18] sm:$0xf]
      %v2940 = vld [vmem:[%s918 + $0x1c] sm:$0xf]
      %v2941 = vld [vmem:[%s918 + $0x24] sm:$0xf]
      %v2942 = vld [vmem:[%s918 + $0x28] sm:$0xf]
      %v2943 = vld [vmem:[%s918 + $0x30] sm:$0xf]
      %v2944 = vld [vmem:[%s918 + $0x34] sm:$0xf]
      %v2945 = vld [vmem:[%s918 + $0x3c] sm:$0xf]
      %v2946 = vld [vmem:[%s918 + $0x40] sm:$0xf]
      %v2947 = vld [vmem:[%s918 + $0x48] sm:$0xf]
      %v2948 = vld [vmem:[%s918 + $0x4c] sm:$0xf]
      %v2949 = vld [vmem:[%s918 + $0x54] sm:$0xf]
      %v2950 = vld [vmem:[%s918 + $0x58] sm:$0xf]
      %v2951 = vld [vmem:[%s918 + $0x60] sm:$0xf]
      %v2952 = vld [vmem:[%s918 + $0x64] sm:$0xf]
      %v2953 = vld [vmem:[%s918 + $0x6c] sm:$0xf]
      %v2954 = vld [vmem:[%s918 + $0x70] sm:$0xf]
      %v2955 = vld [vmem:[%s918 + $0x78] sm:$0xf]
      %v2956 = vld [vmem:[%s918 + $0x7c] sm:$0xf]
      %v2957 = vld [vmem:[%s918 + $0x84] sm:$0xf]
      %v2958 = vld [vmem:[%s918 + $0x88] sm:$0xf]
      %v2959 = vld [vmem:[%s918 + $0x90] sm:$0xf]
      %v2960 = vld [vmem:[%s918 + $0x94] sm:$0xf]
      %v2961 = vld [vmem:[%s918 + $0x9c] sm:$0xf]
      %v2962 = vld [vmem:[%s918 + $0xa0] sm:$0xf]
      %v2963 = vld [vmem:[%s918 + $0xa8] sm:$0xf]
      %v2964 = vld [vmem:[%s918 + $0xac] sm:$0xf]
      %v2965 = vld [vmem:[%s918 + $0xb4] sm:$0xf]
      %v2966 = vld [vmem:[%s918 + $0xb8] sm:$0xf]
      %v2967 = vld [vmem:[#allocation3] sm:$0xff]
      %v2968 = vld [vmem:[#allocation3 + $0x8] sm:$0xff]
      %v2969 = vld [vmem:[#allocation3 + $0x10] sm:$0xff]
      %v2970 = vld [vmem:[#allocation3 + $0x18] sm:$0xff]
      %v2971 = vld [vmem:[#allocation3 + $0x20] sm:$0xff]
      %v2972 = vld [vmem:[#allocation3 + $0x28] sm:$0xff]
      %v2973 = vld [vmem:[#allocation3 + $0x30] sm:$0xff]
      %v2974 = vld [vmem:[#allocation3 + $0x38] sm:$0xff]
      %v2975 = vld [vmem:[#allocation3 + $0x40] sm:$0xff]
      %v2976 = vld [vmem:[#allocation3 + $0x48] sm:$0xff]
      %v2977 = vld [vmem:[#allocation3 + $0x50] sm:$0xff]
      %v2978 = vld [vmem:[#allocation3 + $0x58] sm:$0xff]
      %v2979 = vld [vmem:[#allocation3 + $0x60] sm:$0xff]
      %v2980 = vld [vmem:[#allocation3 + $0x68] sm:$0xff]
      %v2981 = vld [vmem:[#allocation3 + $0x70] sm:$0xff]
      %v2982 = vld [vmem:[#allocation3 + $0x78] sm:$0xff]
      %v2983 = vld [vmem:[#allocation3 + $0x80] sm:$0xff]
      %v2984 = vld [vmem:[#allocation3 + $0x88] sm:$0xff]
      %v2985 = vld [vmem:[#allocation3 + $0x90] sm:$0xff]
      %v2986 = vld [vmem:[#allocation3 + $0x98] sm:$0xff]
      %v2987 = vld [vmem:[#allocation3 + $0xa0] sm:$0xff]
      %v2988 = vld [vmem:[#allocation3 + $0xa8] sm:$0xff]
      %v2989 = vld [vmem:[#allocation3 + $0xb0] sm:$0xff]
      %v2990 = vld [vmem:[#allocation3 + $0xb8] sm:$0xff]
      %v2991 = vld [vmem:[#allocation3 + $0xc0] sm:$0xff]
      %v2992 = vld [vmem:[#allocation3 + $0xc8] sm:$0xff]
      %v2993 = vld [vmem:[#allocation3 + $0xd0] sm:$0xff]
      %v2994 = vld [vmem:[#allocation3 + $0xd8] sm:$0xff]
      %v2995 = vld [vmem:[#allocation3 + $0xe0] sm:$0xff]
      %v2996 = vld [vmem:[#allocation3 + $0xe8] sm:$0xff]
      %v2997 = vld [vmem:[#allocation3 + $0xf0] sm:$0xff]
      %v2998 = vld [vmem:[#allocation3 + $0xf8] sm:$0xff]
      %s2999 = scalar_lea.vmem %s3, 192
      %v3000 = vld [vmem:[%s2999] sm:$0xf]
      %v3001 = vld [vmem:[%s2999 + $0x4] sm:$0xf]
      %v3002 = vld [vmem:[%s2999 + $0x8] sm:$0xf]
      %v3003 = vld [vmem:[%s2999 + $0xc] sm:$0xf]
      %v3004 = vld [vmem:[%s2999 + $0x10] sm:$0xf]
      %v3005 = vld [vmem:[%s2999 + $0x14] sm:$0xf]
      %v3006 = vld [vmem:[%s2999 + $0x18] sm:$0xf]
      %v3007 = vld [vmem:[%s2999 + $0x1c] sm:$0xf]
      %v3008 = vld [vmem:[%s2999 + $0x20] sm:$0xf]
      %v3009 = vld [vmem:[%s2999 + $0x24] sm:$0xf]
      %v3010 = vld [vmem:[%s2999 + $0x28] sm:$0xf]
      %v3011 = vld [vmem:[%s2999 + $0x2c] sm:$0xf]
      %v3012 = vld [vmem:[%s2999 + $0x30] sm:$0xf]
      %v3013 = vld [vmem:[%s2999 + $0x34] sm:$0xf]
      %v3014 = vld [vmem:[%s2999 + $0x38] sm:$0xf]
      %v3015 = vld [vmem:[%s2999 + $0x3c] sm:$0xf]
      %v3048 = vunpack.c.l.b16 %v2935
      %v3049 = vunpack.c.l.b16 %v2936
      %v3050 = vunpack.c.l.b16 %v2937
      %v3051 = vunpack.c.l.b16 %v2938
      %v3052 = vunpack.c.l.b16 %v2939
      %v3053 = vunpack.c.l.b16 %v2940
      %v3054 = vunpack.c.l.b16 %v2941
      %v3055 = vunpack.c.l.b16 %v2942
      %v3056 = vunpack.c.l.b16 %v2943
      %v3057 = vunpack.c.l.b16 %v2944
      %v3058 = vunpack.c.l.b16 %v2945
      %v3059 = vunpack.c.l.b16 %v2946
      %v3060 = vunpack.c.l.b16 %v2947
      %v3061 = vunpack.c.l.b16 %v2948
      %v3062 = vunpack.c.l.b16 %v2949
      %v3063 = vunpack.c.l.b16 %v2950
      %v3064 = vunpack.c.l.b16 %v2951
      %v3065 = vunpack.c.l.b16 %v2952
      %v3066 = vunpack.c.l.b16 %v2953
      %v3067 = vunpack.c.l.b16 %v2954
      %v3068 = vunpack.c.l.b16 %v2955
      %v3069 = vunpack.c.l.b16 %v2956
      %v3070 = vunpack.c.l.b16 %v2957
      %v3071 = vunpack.c.l.b16 %v2958
      %v3072 = vunpack.c.l.b16 %v2959
      %v3073 = vunpack.c.l.b16 %v2960
      %v3074 = vunpack.c.l.b16 %v2961
      %v3075 = vunpack.c.l.b16 %v2962
      %v3076 = vunpack.c.l.b16 %v2963
      %v3077 = vunpack.c.l.b16 %v2964
      %v3078 = vunpack.c.l.b16 %v2965
      %v3079 = vunpack.c.l.b16 %v2966
      %v3080 = vpack.c.b16 %v3049, %v3048
      %v3081 = vpack.c.b16 %v3051, %v3050
      %v3082 = vpack.c.b16 %v3053, %v3052
      %v3083 = vpack.c.b16 %v3055, %v3054
      %v3084 = vpack.c.b16 %v3057, %v3056
      %v3085 = vpack.c.b16 %v3059, %v3058
      %v3086 = vpack.c.b16 %v3061, %v3060
      %v3087 = vpack.c.b16 %v3063, %v3062
      %v3088 = vpack.c.b16 %v3065, %v3064
      %v3089 = vpack.c.b16 %v3067, %v3066
      %v3090 = vpack.c.b16 %v3069, %v3068
      %v3091 = vpack.c.b16 %v3071, %v3070
      %v3092 = vpack.c.b16 %v3073, %v3072
      %v3093 = vpack.c.b16 %v3075, %v3074
      %v3094 = vpack.c.b16 %v3077, %v3076
      %v3095 = vpack.c.b16 %v3079, %v3078
      %v3128 = vunpack.c.l.b16 %v3000
      %v3129 = vunpack.c.l.b16 %v3001
      %v3130 = vunpack.c.l.b16 %v3002
      %v3131 = vunpack.c.l.b16 %v3003
      %v3132 = vunpack.c.l.b16 %v3004
      %v3133 = vunpack.c.l.b16 %v3005
      %v3134 = vunpack.c.l.b16 %v3006
      %v3135 = vunpack.c.l.b16 %v3007
      %v3136 = vunpack.c.l.b16 %v3008
      %v3137 = vunpack.c.l.b16 %v3009
      %v3138 = vunpack.c.l.b16 %v3010
      %v3139 = vunpack.c.l.b16 %v3011
      %v3140 = vunpack.c.l.b16 %v3012
      %v3141 = vunpack.c.l.b16 %v3013
      %v3142 = vunpack.c.l.b16 %v3014
      %v3143 = vunpack.c.l.b16 %v3015
      %v3144 = vpack.c.b16 %v3129, %v3128
      %v3145 = vpack.c.b16 %v3131, %v3130
      %v3146 = vpack.c.b16 %v3133, %v3132
      %v3147 = vpack.c.b16 %v3135, %v3134
      %v3148 = vpack.c.b16 %v3137, %v3136
      %v3149 = vpack.c.b16 %v3139, %v3138
      %v3150 = vpack.c.b16 %v3141, %v3140
      %v3151 = vpack.c.b16 %v3143, %v3142
      %3160 = vmatprep.subr.bf16.mxu0 0
      %3161 = vmatpush1.bf16.msra.mxu0 %v3144
      %3162 = vmatprep.subr.bf16.mxu0 0
      %3163 = vmatpush1.bf16.msra.mxu0 %v3145
      %3164 = vmatprep.subr.bf16.mxu0 0
      %3165 = vmatpush1.bf16.msra.mxu0 %v3146
      %3166 = vmatprep.subr.bf16.mxu0 0
      %3167 = vmatpush1.bf16.msra.mxu0 %v3147
      %3168 = vmatprep.subr.bf16.mxu0 0
      %3169 = vmatpush1.bf16.msra.mxu0 %v3148
      %3170 = vmatprep.subr.bf16.mxu0 0
      %3171 = vmatpush1.bf16.msra.mxu0 %v3149
      %3172 = vmatprep.subr.bf16.mxu0 0
      %3173 = vmatpush1.bf16.msra.mxu0 %v3150
      %3174 = vmatprep.subr.bf16.mxu0 0
      %3175 = vmatpush1.bf16.msra.mxu0 %v3151
      %3176 = vmatprep.subr.bf16.mxu0 0
      %3177 = vmatpush1.bf16.msra.mxu0 0
      %3178 = vmatprep.subr.bf16.mxu0 0
      %3179 = vmatpush1.bf16.msra.mxu0 0
      %3180 = vmatprep.subr.bf16.mxu0 0
      %3181 = vmatpush1.bf16.msra.mxu0 0
      %3182 = vmatprep.subr.bf16.mxu0 0
      %3183 = vmatpush1.bf16.msra.mxu0 0
      %3184 = vmatprep.subr.bf16.mxu0 0
      %3185 = vmatpush1.bf16.msra.mxu0 0
      %3186 = vmatprep.subr.bf16.mxu0 0
      %3187 = vmatpush1.bf16.msra.mxu0 0
      %3188 = vmatprep.subr.bf16.mxu0 0
      %3189 = vmatpush1.bf16.msra.mxu0 0
      %3190 = vmatprep.subr.bf16.mxu0 0
      %3191 = vmatpush1.bf16.msra.mxu0 0
      %3192 = vmatprep.mubr.bf16.mxu0 0
      %3193 = vmatmul.mubr.bf16.gmra.mrb[0].mxu0 %v3080
      %v3194 = vpop.f32.mrb[0].mxu0
      %v3195 = vadd.f32 0.0, %v3194
      %v3196 = vpop.f32.mrb[0].mxu0
      %v3197 = vpop.f32.mrb[0].mxu0
      %v3198 = vadd.f32 0.0, %v3197
      %v3199 = vpop.f32.mrb[0].mxu0
      %3200 = vmatprep.mubr.bf16.mxu0 0
      %3201 = vmatmul.mubr.bf16.gmra.mrb[0].mxu0 %v3081
      %v3202 = vpop.f32.mrb[0].mxu0
      %v3203 = vadd.f32 0.0, %v3202
      %v3204 = vpop.f32.mrb[0].mxu0
      %v3205 = vpop.f32.mrb[0].mxu0
      %v3206 = vadd.f32 0.0, %v3205
      %v3207 = vpop.f32.mrb[0].mxu0
      %3208 = vmatprep.mubr.bf16.mxu0 0
      %3209 = vmatmul.mubr.bf16.gmra.mrb[0].mxu0 %v3082
      %v3210 = vpop.f32.mrb[0].mxu0
      %v3211 = vadd.f32 0.0, %v3210
      %v3212 = vpop.f32.mrb[0].mxu0
      %v3213 = vpop.f32.mrb[0].mxu0
      %v3214 = vadd.f32 0.0, %v3213
      %v3215 = vpop.f32.mrb[0].mxu0
      %3216 = vmatprep.mubr.bf16.mxu0 0
      %3217 = vmatmul.mubr.bf16.gmra.mrb[0].mxu0 %v3083
      %v3218 = vpop.f32.mrb[0].mxu0
      %v3219 = vadd.f32 0.0, %v3218
      %v3220 = vpop.f32.mrb[0].mxu0
      %v3221 = vpop.f32.mrb[0].mxu0
      %v3222 = vadd.f32 0.0, %v3221
      %v3223 = vpop.f32.mrb[0].mxu0
      %3224 = vmatprep.mubr.bf16.mxu0 0
      %3225 = vmatmul.mubr.bf16.gmra.mrb[0].mxu0 %v3084
      %v3226 = vpop.f32.mrb[0].mxu0
      %v3227 = vadd.f32 0.0, %v3226
      %v3228 = vpop.f32.mrb[0].mxu0
      %v3229 = vpop.f32.mrb[0].mxu0
      %v3230 = vadd.f32 0.0, %v3229
      %v3231 = vpop.f32.mrb[0].mxu0
      %3232 = vmatprep.mubr.bf16.mxu0 0
      %3233 = vmatmul.mubr.bf16.gmra.mrb[0].mxu0 %v3085
      %v3234 = vpop.f32.mrb[0].mxu0
      %v3235 = vadd.f32 0.0, %v3234
      %v3236 = vpop.f32.mrb[0].mxu0
      %v3237 = vpop.f32.mrb[0].mxu0
      %v3238 = vadd.f32 0.0, %v3237
      %v3239 = vpop.f32.mrb[0].mxu0
      %3240 = vmatprep.mubr.bf16.mxu0 0
      %3241 = vmatmul.mubr.bf16.gmra.mrb[0].mxu0 %v3086
      %v3242 = vpop.f32.mrb[0].mxu0
      %v3243 = vadd.f32 0.0, %v3242
      %v3244 = vpop.f32.mrb[0].mxu0
      %v3245 = vpop.f32.mrb[0].mxu0
      %v3246 = vadd.f32 0.0, %v3245
      %v3247 = vpop.f32.mrb[0].mxu0
      %3248 = vmatprep.mubr.bf16.mxu0 0
      %3249 = vmatmul.mubr.bf16.gmra.mrb[0].mxu0 %v3087
      %v3250 = vpop.f32.mrb[0].mxu0
      %v3251 = vadd.f32 0.0, %v3250
      %v3252 = vpop.f32.mrb[0].mxu0
      %v3253 = vpop.f32.mrb[0].mxu0
      %v3254 = vadd.f32 0.0, %v3253
      %v3255 = vpop.f32.mrb[0].mxu0
      %3256 = vmatprep.mubr.bf16.mxu0 0
      %3257 = vmatmul.mubr.bf16.gmra.mrb[0].mxu0 %v3088
      %v3258 = vpop.f32.mrb[0].mxu0
      %v3259 = vadd.f32 0.0, %v3258
      %v3260 = vpop.f32.mrb[0].mxu0
      %v3261 = vpop.f32.mrb[0].mxu0
      %v3262 = vadd.f32 0.0, %v3261
      %v3263 = vpop.f32.mrb[0].mxu0
      %3264 = vmatprep.mubr.bf16.mxu0 0
      %3265 = vmatmul.mubr.bf16.gmra.mrb[0].mxu0 %v3089
      %v3266 = vpop.f32.mrb[0].mxu0
      %v3267 = vadd.f32 0.0, %v3266
      %v3268 = vpop.f32.mrb[0].mxu0
      %v3269 = vpop.f32.mrb[0].mxu0
      %v3270 = vadd.f32 0.0, %v3269
      %v3271 = vpop.f32.mrb[0].mxu0
      %3272 = vmatprep.mubr.bf16.mxu0 0
      %3273 = vmatmul.mubr.bf16.gmra.mrb[0].mxu0 %v3090
      %v3274 = vpop.f32.mrb[0].mxu0
      %v3275 = vadd.f32 0.0, %v3274
      %v3276 = vpop.f32.mrb[0].mxu0
      %v3277 = vpop.f32.mrb[0].mxu0
      %v3278 = vadd.f32 0.0, %v3277
      %v3279 = vpop.f32.mrb[0].mxu0
      %3280 = vmatprep.mubr.bf16.mxu0 0
      %3281 = vmatmul.mubr.bf16.gmra.mrb[0].mxu0 %v3091
      %v3282 = vpop.f32.mrb[0].mxu0
      %v3283 = vadd.f32 0.0, %v3282
      %v3284 = vpop.f32.mrb[0].mxu0
      %v3285 = vpop.f32.mrb[0].mxu0
      %v3286 = vadd.f32 0.0, %v3285
      %v3287 = vpop.f32.mrb[0].mxu0
      %3288 = vmatprep.mubr.bf16.mxu0 0
      %3289 = vmatmul.mubr.bf16.gmra.mrb[0].mxu0 %v3092
      %v3290 = vpop.f32.mrb[0].mxu0
      %v3291 = vadd.f32 0.0, %v3290
      %v3292 = vpop.f32.mrb[0].mxu0
      %v3293 = vpop.f32.mrb[0].mxu0
      %v3294 = vadd.f32 0.0, %v3293
      %v3295 = vpop.f32.mrb[0].mxu0
      %3296 = vmatprep.mubr.bf16.mxu0 0
      %3297 = vmatmul.mubr.bf16.gmra.mrb[0].mxu0 %v3093
      %v3298 = vpop.f32.mrb[0].mxu0
      %v3299 = vadd.f32 0.0, %v3298
      %v3300 = vpop.f32.mrb[0].mxu0
      %v3301 = vpop.f32.mrb[0].mxu0
      %v3302 = vadd.f32 0.0, %v3301
      %v3303 = vpop.f32.mrb[0].mxu0
      %3304 = vmatprep.mubr.bf16.mxu0 0
      %3305 = vmatmul.mubr.bf16.gmra.mrb[0].mxu0 %v3094
      %v3306 = vpop.f32.mrb[0].mxu0
      %v3307 = vadd.f32 0.0, %v3306
      %v3308 = vpop.f32.mrb[0].mxu0
      %v3309 = vpop.f32.mrb[0].mxu0
      %v3310 = vadd.f32 0.0, %v3309
      %v3311 = vpop.f32.mrb[0].mxu0
      %3312 = vmatprep.mubr.bf16.mxu0 0
      %3313 = vmatmul.mubr.bf16.gmra.mrb[0].mxu0 %v3095
      %v3314 = vpop.f32.mrb[0].mxu0
      %v3315 = vadd.f32 0.0, %v3314
      %v3316 = vpop.f32.mrb[0].mxu0
      %v3317 = vpop.f32.mrb[0].mxu0
      %v3318 = vadd.f32 0.0, %v3317
      %v3319 = vpop.f32.mrb[0].mxu0
      %3320 = vdwg.mxu0
      %v3321 = vadd.f32 %v2967, %v3195
      %v3322 = vadd.f32 %v2968, %v3198
      %v3323 = vadd.f32 %v2969, %v3203
      %v3324 = vadd.f32 %v2970, %v3206
      %v3325 = vadd.f32 %v2971, %v3211
      %v3326 = vadd.f32 %v2972, %v3214
      %v3327 = vadd.f32 %v2973, %v3219
      %v3328 = vadd.f32 %v2974, %v3222
      %v3329 = vadd.f32 %v2975, %v3227
      %v3330 = vadd.f32 %v2976, %v3230
      %v3331 = vadd.f32 %v2977, %v3235
      %v3332 = vadd.f32 %v2978, %v3238
      %v3333 = vadd.f32 %v2979, %v3243
      %v3334 = vadd.f32 %v2980, %v3246
      %v3335 = vadd.f32 %v2981, %v3251
      %v3336 = vadd.f32 %v2982, %v3254
      %v3337 = vadd.f32 %v2983, %v3259
      %v3338 = vadd.f32 %v2984, %v3262
      %v3339 = vadd.f32 %v2985, %v3267
      %v3340 = vadd.f32 %v2986, %v3270
      %v3341 = vadd.f32 %v2987, %v3275
      %v3342 = vadd.f32 %v2988, %v3278
      %v3343 = vadd.f32 %v2989, %v3283
      %v3344 = vadd.f32 %v2990, %v3286
      %v3345 = vadd.f32 %v2991, %v3291
      %v3346 = vadd.f32 %v2992, %v3294
      %v3347 = vadd.f32 %v2993, %v3299
      %v3348 = vadd.f32 %v2994, %v3302
      %v3349 = vadd.f32 %v2995, %v3307
      %v3350 = vadd.f32 %v2996, %v3310
      %v3351 = vadd.f32 %v2997, %v3315
      %v3352 = vadd.f32 %v2998, %v3318
      %3353 = vst [vmem:[#allocation3] sm:$0xff] %v3321
      %3354 = vst [vmem:[#allocation3 + $0x8] sm:$0xff] %v3322
      %3355 = vst [vmem:[#allocation3 + $0x10] sm:$0xff] %v3323
      %3356 = vst [vmem:[#allocation3 + $0x18] sm:$0xff] %v3324
      %3357 = vst [vmem:[#allocation3 + $0x20] sm:$0xff] %v3325
      %3358 = vst [vmem:[#allocation3 + $0x28] sm:$0xff] %v3326
      %3359 = vst [vmem:[#allocation3 + $0x30] sm:$0xff] %v3327
      %3360 = vst [vmem:[#allocation3 + $0x38] sm:$0xff] %v3328
      %3361 = vst [vmem:[#allocation3 + $0x40] sm:$0xff] %v3329
      %3362 = vst [vmem:[#allocation3 + $0x48] sm:$0xff] %v3330
      %3363 = vst [vmem:[#allocation3 + $0x50] sm:$0xff] %v3331
      %3364 = vst [vmem:[#allocation3 + $0x58] sm:$0xff] %v3332
      %3365 = vst [vmem:[#allocation3 + $0x60] sm:$0xff] %v3333
      %3366 = vst [vmem:[#allocation3 + $0x68] sm:$0xff] %v3334
      %3367 = vst [vmem:[#allocation3 + $0x70] sm:$0xff] %v3335
      %3368 = vst [vmem:[#allocation3 + $0x78] sm:$0xff] %v3336
      %3369 = vst [vmem:[#allocation3 + $0x80] sm:$0xff] %v3337
      %3370 = vst [vmem:[#allocation3 + $0x88] sm:$0xff] %v3338
      %3371 = vst [vmem:[#allocation3 + $0x90] sm:$0xff] %v3339
      %3372 = vst [vmem:[#allocation3 + $0x98] sm:$0xff] %v3340
      %3373 = vst [vmem:[#allocation3 + $0xa0] sm:$0xff] %v3341
      %3374 = vst [vmem:[#allocation3 + $0xa8] sm:$0xff] %v3342
      %3375 = vst [vmem:[#allocation3 + $0xb0] sm:$0xff] %v3343
      %3376 = vst [vmem:[#allocation3 + $0xb8] sm:$0xff] %v3344
      %3377 = vst [vmem:[#allocation3 + $0xc0] sm:$0xff] %v3345
      %3378 = vst [vmem:[#allocation3 + $0xc8] sm:$0xff] %v3346
      %3379 = vst [vmem:[#allocation3 + $0xd0] sm:$0xff] %v3347
      %3380 = vst [vmem:[#allocation3 + $0xd8] sm:$0xff] %v3348
      %3381 = vst [vmem:[#allocation3 + $0xe0] sm:$0xff] %v3349
      %3382 = vst [vmem:[#allocation3 + $0xe8] sm:$0xff] %v3350
      %3383 = vst [vmem:[#allocation3 + $0xf0] sm:$0xff] %v3351
      %3384 = vst [vmem:[#allocation3 + $0xf8] sm:$0xff] %v3352
      %v3385 = vld [vmem:[%s918] sm:$0xf]
      %v3386 = vld [vmem:[%s918 + $0x4] sm:$0xf]
      %v3387 = vld [vmem:[%s918 + $0x8] sm:$0x1]
      %v3388 = vld [vmem:[%s918 + $0xc] sm:$0xf]
      %v3389 = vld [vmem:[%s918 + $0x10] sm:$0xf]
      %v3390 = vld [vmem:[%s918 + $0x14] sm:$0x1]
      %v3391 = vld [vmem:[%s918 + $0x18] sm:$0xf]
      %v3392 = vld [vmem:[%s918 + $0x1c] sm:$0xf]
      %v3393 = vld [vmem:[%s918 + $0x20] sm:$0x1]
      %v3394 = vld [vmem:[%s918 + $0x24] sm:$0xf]
      %v3395 = vld [vmem:[%s918 + $0x28] sm:$0xf]
      %v3396 = vld [vmem:[%s918 + $0x2c] sm:$0x1]
      %v3397 = vld [vmem:[%s918 + $0x30] sm:$0xf]
      %v3398 = vld [vmem:[%s918 + $0x34] sm:$0xf]
      %v3399 = vld [vmem:[%s918 + $0x38] sm:$0x1]
      %v3400 = vld [vmem:[%s918 + $0x3c] sm:$0xf]
      %v3401 = vld [vmem:[%s918 + $0x40] sm:$0xf]
      %v3402 = vld [vmem:[%s918 + $0x44] sm:$0x1]
      %v3403 = vld [vmem:[%s918 + $0x48] sm:$0xf]
      %v3404 = vld [vmem:[%s918 + $0x4c] sm:$0xf]
      %v3405 = vld [vmem:[%s918 + $0x50] sm:$0x1]
      %v3406 = vld [vmem:[%s918 + $0x54] sm:$0xf]
      %v3407 = vld [vmem:[%s918 + $0x58] sm:$0xf]
      %v3408 = vld [vmem:[%s918 + $0x5c] sm:$0x1]
      %v3409 = vld [vmem:[%s918 + $0x60] sm:$0xf]
      %v3410 = vld [vmem:[%s918 + $0x64] sm:$0xf]
      %v3411 = vld [vmem:[%s918 + $0x68] sm:$0x1]
      %v3412 = vld [vmem:[%s918 + $0x6c] sm:$0xf]
      %v3413 = vld [vmem:[%s918 + $0x70] sm:$0xf]
      %v3414 = vld [vmem:[%s918 + $0x74] sm:$0x1]
      %v3415 = vld [vmem:[%s918 + $0x78] sm:$0xf]
      %v3416 = vld [vmem:[%s918 + $0x7c] sm:$0xf]
      %v3417 = vld [vmem:[%s918 + $0x80] sm:$0x1]
      %v3418 = vld [vmem:[%s918 + $0x84] sm:$0xf]
      %v3419 = vld [vmem:[%s918 + $0x88] sm:$0xf]
      %v3420 = vld [vmem:[%s918 + $0x8c] sm:$0x1]
      %v3421 = vld [vmem:[%s918 + $0x90] sm:$0xf]
      %v3422 = vld [vmem:[%s918 + $0x94] sm:$0xf]
      %v3423 = vld [vmem:[%s918 + $0x98] sm:$0x1]
      %v3424 = vld [vmem:[%s918 + $0x9c] sm:$0xf]
      %v3425 = vld [vmem:[%s918 + $0xa0] sm:$0xf]
      %v3426 = vld [vmem:[%s918 + $0xa4] sm:$0x1]
      %v3427 = vld [vmem:[%s918 + $0xa8] sm:$0xf]
      %v3428 = vld [vmem:[%s918 + $0xac] sm:$0xf]
      %v3429 = vld [vmem:[%s918 + $0xb0] sm:$0x1]
      %v3430 = vld [vmem:[%s918 + $0xb4] sm:$0xf]
      %v3431 = vld [vmem:[%s918 + $0xb8] sm:$0xf]
      %v3432 = vld [vmem:[%s918 + $0xbc] sm:$0x1]
      %v3433 = vld [vmem:[#allocation3] sm:$0xff]
      %v3434 = vld [vmem:[#allocation3 + $0x8] sm:$0xff]
      %v3435 = vld [vmem:[#allocation3 + $0x10] sm:$0xff]
      %v3436 = vld [vmem:[#allocation3 + $0x18] sm:$0xff]
      %v3437 = vld [vmem:[#allocation3 + $0x20] sm:$0xff]
      %v3438 = vld [vmem:[#allocation3 + $0x28] sm:$0xff]
      %v3439 = vld [vmem:[#allocation3 + $0x30] sm:$0xff]
      %v3440 = vld [vmem:[#allocation3 + $0x38] sm:$0xff]
      %v3441 = vld [vmem:[#allocation3 + $0x40] sm:$0xff]
      %v3442 = vld [vmem:[#allocation3 + $0x48] sm:$0xff]
      %v3443 = vld [vmem:[#allocation3 + $0x50] sm:$0xff]
      %v3444 = vld [vmem:[#allocation3 + $0x58] sm:$0xff]
      %v3445 = vld [vmem:[#allocation3 + $0x60] sm:$0xff]
      %v3446 = vld [vmem:[#allocation3 + $0x68] sm:$0xff]
      %v3447 = vld [vmem:[#allocation3 + $0x70] sm:$0xff]
      %v3448 = vld [vmem:[#allocation3 + $0x78] sm:$0xff]
      %v3449 = vld [vmem:[#allocation3 + $0x80] sm:$0xff]
      %v3450 = vld [vmem:[#allocation3 + $0x88] sm:$0xff]
      %v3451 = vld [vmem:[#allocation3 + $0x90] sm:$0xff]
      %v3452 = vld [vmem:[#allocation3 + $0x98] sm:$0xff]
      %v3453 = vld [vmem:[#allocation3 + $0xa0] sm:$0xff]
      %v3454 = vld [vmem:[#allocation3 + $0xa8] sm:$0xff]
      %v3455 = vld [vmem:[#allocation3 + $0xb0] sm:$0xff]
      %v3456 = vld [vmem:[#allocation3 + $0xb8] sm:$0xff]
      %v3457 = vld [vmem:[#allocation3 + $0xc0] sm:$0xff]
      %v3458 = vld [vmem:[#allocation3 + $0xc8] sm:$0xff]
      %v3459 = vld [vmem:[#allocation3 + $0xd0] sm:$0xff]
      %v3460 = vld [vmem:[#allocation3 + $0xd8] sm:$0xff]
      %v3461 = vld [vmem:[#allocation3 + $0xe0] sm:$0xff]
      %v3462 = vld [vmem:[#allocation3 + $0xe8] sm:$0xff]
      %v3463 = vld [vmem:[#allocation3 + $0xf0] sm:$0xff]
      %v3464 = vld [vmem:[#allocation3 + $0xf8] sm:$0xff]
      %v3466 = vshrl.u32 %v3385, 16
      %v3468 = vrot.slane %v3466, 4
      %v3469 = vshll.u32 %v3385, 16
      %v3471 = vrot.slane %v3469, 5
      %v3472 = vor.u32 %v3468, %v3471
      %v3473 = vrot.slane %v3472, 4
      %v3475 = vshll.u32 %v3386, 16
      %v3477 = vrot.slane %v3475, 5
      %v3478 = vsel %vm1599, %v3473, %v3477
      %v3479 = vshrl.u32 %v3386, 16
      %v3481 = vrot.slane %v3479, 4
      %v3482 = vor.u32 %v3481, %v3477
      %v3483 = vrot.slane %v3482, 4
      %v3485 = vshll.u32 %v3387, 16
      %v3487 = vrot.slane %v3485, 5
      %v3488 = vsel %vm1599, %v3483, %v3487
      %v3490 = vshrl.u32 %v3388, 16
      %v3492 = vrot.slane %v3490, 4
      %v3493 = vshll.u32 %v3388, 16
      %v3495 = vrot.slane %v3493, 5
      %v3496 = vor.u32 %v3492, %v3495
      %v3497 = vrot.slane %v3496, 4
      %v3499 = vshll.u32 %v3389, 16
      %v3501 = vrot.slane %v3499, 5
      %v3502 = vsel %vm1599, %v3497, %v3501
      %v3503 = vshrl.u32 %v3389, 16
      %v3505 = vrot.slane %v3503, 4
      %v3506 = vor.u32 %v3505, %v3501
      %v3507 = vrot.slane %v3506, 4
      %v3509 = vshll.u32 %v3390, 16
      %v3511 = vrot.slane %v3509, 5
      %v3512 = vsel %vm1599, %v3507, %v3511
      %v3514 = vshrl.u32 %v3391, 16
      %v3516 = vrot.slane %v3514, 4
      %v3517 = vshll.u32 %v3391, 16
      %v3519 = vrot.slane %v3517, 5
      %v3520 = vor.u32 %v3516, %v3519
      %v3521 = vrot.slane %v3520, 4
      %v3523 = vshll.u32 %v3392, 16
      %v3525 = vrot.slane %v3523, 5
      %v3526 = vsel %vm1599, %v3521, %v3525
      %v3527 = vshrl.u32 %v3392, 16
      %v3529 = vrot.slane %v3527, 4
      %v3530 = vor.u32 %v3529, %v3525
      %v3531 = vrot.slane %v3530, 4
      %v3533 = vshll.u32 %v3393, 16
      %v3535 = vrot.slane %v3533, 5
      %v3536 = vsel %vm1599, %v3531, %v3535
      %v3538 = vshrl.u32 %v3394, 16
      %v3540 = vrot.slane %v3538, 4
      %v3541 = vshll.u32 %v3394, 16
      %v3543 = vrot.slane %v3541, 5
      %v3544 = vor.u32 %v3540, %v3543
      %v3545 = vrot.slane %v3544, 4
      %v3547 = vshll.u32 %v3395, 16
      %v3549 = vrot.slane %v3547, 5
      %v3550 = vsel %vm1599, %v3545, %v3549
      %v3551 = vshrl.u32 %v3395, 16
      %v3553 = vrot.slane %v3551, 4
      %v3554 = vor.u32 %v3553, %v3549
      %v3555 = vrot.slane %v3554, 4
      %v3557 = vshll.u32 %v3396, 16
      %v3559 = vrot.slane %v3557, 5
      %v3560 = vsel %vm1599, %v3555, %v3559
      %v3562 = vshrl.u32 %v3397, 16
      %v3564 = vrot.slane %v3562, 4
      %v3565 = vshll.u32 %v3397, 16
      %v3567 = vrot.slane %v3565, 5
      %v3568 = vor.u32 %v3564, %v3567
      %v3569 = vrot.slane %v3568, 4
      %v3571 = vshll.u32 %v3398, 16
      %v3573 = vrot.slane %v3571, 5
      %v3574 = vsel %vm1599, %v3569, %v3573
      %v3575 = vshrl.u32 %v3398, 16
      %v3577 = vrot.slane %v3575, 4
      %v3578 = vor.u32 %v3577, %v3573
      %v3579 = vrot.slane %v3578, 4
      %v3581 = vshll.u32 %v3399, 16
      %v3583 = vrot.slane %v3581, 5
      %v3584 = vsel %vm1599, %v3579, %v3583
      %v3586 = vshrl.u32 %v3400, 16
      %v3588 = vrot.slane %v3586, 4
      %v3589 = vshll.u32 %v3400, 16
      %v3591 = vrot.slane %v3589, 5
      %v3592 = vor.u32 %v3588, %v3591
      %v3593 = vrot.slane %v3592, 4
      %v3595 = vshll.u32 %v3401, 16
      %v3597 = vrot.slane %v3595, 5
      %v3598 = vsel %vm1599, %v3593, %v3597
      %v3599 = vshrl.u32 %v3401, 16
      %v3601 = vrot.slane %v3599, 4
      %v3602 = vor.u32 %v3601, %v3597
      %v3603 = vrot.slane %v3602, 4
      %v3605 = vshll.u32 %v3402, 16
      %v3607 = vrot.slane %v3605, 5
      %v3608 = vsel %vm1599, %v3603, %v3607
      %v3610 = vshrl.u32 %v3403, 16
      %v3612 = vrot.slane %v3610, 4
      %v3613 = vshll.u32 %v3403, 16
      %v3615 = vrot.slane %v3613, 5
      %v3616 = vor.u32 %v3612, %v3615
      %v3617 = vrot.slane %v3616, 4
      %v3619 = vshll.u32 %v3404, 16
      %v3621 = vrot.slane %v3619, 5
      %v3622 = vsel %vm1599, %v3617, %v3621
      %v3623 = vshrl.u32 %v3404, 16
      %v3625 = vrot.slane %v3623, 4
      %v3626 = vor.u32 %v3625, %v3621
      %v3627 = vrot.slane %v3626, 4
      %v3629 = vshll.u32 %v3405, 16
      %v3631 = vrot.slane %v3629, 5
      %v3632 = vsel %vm1599, %v3627, %v3631
      %v3634 = vshrl.u32 %v3406, 16
      %v3636 = vrot.slane %v3634, 4
      %v3637 = vshll.u32 %v3406, 16
      %v3639 = vrot.slane %v3637, 5
      %v3640 = vor.u32 %v3636, %v3639
      %v3641 = vrot.slane %v3640, 4
      %v3643 = vshll.u32 %v3407, 16
      %v3645 = vrot.slane %v3643, 5
      %v3646 = vsel %vm1599, %v3641, %v3645
      %v3647 = vshrl.u32 %v3407, 16
      %v3649 = vrot.slane %v3647, 4
      %v3650 = vor.u32 %v3649, %v3645
      %v3651 = vrot.slane %v3650, 4
      %v3653 = vshll.u32 %v3408, 16
      %v3655 = vrot.slane %v3653, 5
      %v3656 = vsel %vm1599, %v3651, %v3655
      %v3658 = vshrl.u32 %v3409, 16
      %v3660 = vrot.slane %v3658, 4
      %v3661 = vshll.u32 %v3409, 16
      %v3663 = vrot.slane %v3661, 5
      %v3664 = vor.u32 %v3660, %v3663
      %v3665 = vrot.slane %v3664, 4
      %v3667 = vshll.u32 %v3410, 16
      %v3669 = vrot.slane %v3667, 5
      %v3670 = vsel %vm1599, %v3665, %v3669
      %v3671 = vshrl.u32 %v3410, 16
      %v3673 = vrot.slane %v3671, 4
      %v3674 = vor.u32 %v3673, %v3669
      %v3675 = vrot.slane %v3674, 4
      %v3677 = vshll.u32 %v3411, 16
      %v3679 = vrot.slane %v3677, 5
      %v3680 = vsel %vm1599, %v3675, %v3679
      %v3682 = vshrl.u32 %v3412, 16
      %v3684 = vrot.slane %v3682, 4
      %v3685 = vshll.u32 %v3412, 16
      %v3687 = vrot.slane %v3685, 5
      %v3688 = vor.u32 %v3684, %v3687
      %v3689 = vrot.slane %v3688, 4
      %v3691 = vshll.u32 %v3413, 16
      %v3693 = vrot.slane %v3691, 5
      %v3694 = vsel %vm1599, %v3689, %v3693
      %v3695 = vshrl.u32 %v3413, 16
      %v3697 = vrot.slane %v3695, 4
      %v3698 = vor.u32 %v3697, %v3693
      %v3699 = vrot.slane %v3698, 4
      %v3701 = vshll.u32 %v3414, 16
      %v3703 = vrot.slane %v3701, 5
      %v3704 = vsel %vm1599, %v3699, %v3703
      %v3706 = vshrl.u32 %v3415, 16
      %v3708 = vrot.slane %v3706, 4
      %v3709 = vshll.u32 %v3415, 16
      %v3711 = vrot.slane %v3709, 5
      %v3712 = vor.u32 %v3708, %v3711
      %v3713 = vrot.slane %v3712, 4
      %v3715 = vshll.u32 %v3416, 16
      %v3717 = vrot.slane %v3715, 5
      %v3718 = vsel %vm1599, %v3713, %v3717
      %v3719 = vshrl.u32 %v3416, 16
      %v3721 = vrot.slane %v3719, 4
      %v3722 = vor.u32 %v3721, %v3717
      %v3723 = vrot.slane %v3722, 4
      %v3725 = vshll.u32 %v3417, 16
      %v3727 = vrot.slane %v3725, 5
      %v3728 = vsel %vm1599, %v3723, %v3727
      %v3730 = vshrl.u32 %v3418, 16
      %v3732 = vrot.slane %v3730, 4
      %v3733 = vshll.u32 %v3418, 16
      %v3735 = vrot.slane %v3733, 5
      %v3736 = vor.u32 %v3732, %v3735
      %v3737 = vrot.slane %v3736, 4
      %v3739 = vshll.u32 %v3419, 16
      %v3741 = vrot.slane %v3739, 5
      %v3742 = vsel %vm1599, %v3737, %v3741
      %v3743 = vshrl.u32 %v3419, 16
      %v3745 = vrot.slane %v3743, 4
      %v3746 = vor.u32 %v3745, %v3741
      %v3747 = vrot.slane %v3746, 4
      %v3749 = vshll.u32 %v3420, 16
      %v3751 = vrot.slane %v3749, 5
      %v3752 = vsel %vm1599, %v3747, %v3751
      %v3754 = vshrl.u32 %v3421, 16
      %v3756 = vrot.slane %v3754, 4
      %v3757 = vshll.u32 %v3421, 16
      %v3759 = vrot.slane %v3757, 5
      %v3760 = vor.u32 %v3756, %v3759
      %v3761 = vrot.slane %v3760, 4
      %v3763 = vshll.u32 %v3422, 16
      %v3765 = vrot.slane %v3763, 5
      %v3766 = vsel %vm1599, %v3761, %v3765
      %v3767 = vshrl.u32 %v3422, 16
      %v3769 = vrot.slane %v3767, 4
      %v3770 = vor.u32 %v3769, %v3765
      %v3771 = vrot.slane %v3770, 4
      %v3773 = vshll.u32 %v3423, 16
      %v3775 = vrot.slane %v3773, 5
      %v3776 = vsel %vm1599, %v3771, %v3775
      %v3778 = vshrl.u32 %v3424, 16
      %v3780 = vrot.slane %v3778, 4
      %v3781 = vshll.u32 %v3424, 16
      %v3783 = vrot.slane %v3781, 5
      %v3784 = vor.u32 %v3780, %v3783
      %v3785 = vrot.slane %v3784, 4
      %v3787 = vshll.u32 %v3425, 16
      %v3789 = vrot.slane %v3787, 5
      %v3790 = vsel %vm1599, %v3785, %v3789
      %v3791 = vshrl.u32 %v3425, 16
      %v3793 = vrot.slane %v3791, 4
      %v3794 = vor.u32 %v3793, %v3789
      %v3795 = vrot.slane %v3794, 4
      %v3797 = vshll.u32 %v3426, 16
      %v3799 = vrot.slane %v3797, 5
      %v3800 = vsel %vm1599, %v3795, %v3799
      %v3802 = vshrl.u32 %v3427, 16
      %v3804 = vrot.slane %v3802, 4
      %v3805 = vshll.u32 %v3427, 16
      %v3807 = vrot.slane %v3805, 5
      %v3808 = vor.u32 %v3804, %v3807
      %v3809 = vrot.slane %v3808, 4
      %v3811 = vshll.u32 %v3428, 16
      %v3813 = vrot.slane %v3811, 5
      %v3814 = vsel %vm1599, %v3809, %v3813
      %v3815 = vshrl.u32 %v3428, 16
      %v3817 = vrot.slane %v3815, 4
      %v3818 = vor.u32 %v3817, %v3813
      %v3819 = vrot.slane %v3818, 4
      %v3821 = vshll.u32 %v3429, 16
      %v3823 = vrot.slane %v3821, 5
      %v3824 = vsel %vm1599, %v3819, %v3823
      %v3826 = vshrl.u32 %v3430, 16
      %v3828 = vrot.slane %v3826, 4
      %v3829 = vshll.u32 %v3430, 16
      %v3831 = vrot.slane %v3829, 5
      %v3832 = vor.u32 %v3828, %v3831
      %v3833 = vrot.slane %v3832, 4
      %v3835 = vshll.u32 %v3431, 16
      %v3837 = vrot.slane %v3835, 5
      %v3838 = vsel %vm1599, %v3833, %v3837
      %v3839 = vshrl.u32 %v3431, 16
      %v3841 = vrot.slane %v3839, 4
      %v3842 = vor.u32 %v3841, %v3837
      %v3843 = vrot.slane %v3842, 4
      %v3845 = vshll.u32 %v3432, 16
      %v3847 = vrot.slane %v3845, 5
      %v3848 = vsel %vm1599, %v3843, %v3847
      %s3849 = scalar_lea.vmem %s3, 256
      %v3850 = vld [vmem:[%s3849] sm:$0xf]
      %v3851 = vld [vmem:[%s3849 + $0x4] sm:$0xf]
      %v3852 = vld [vmem:[%s3849 + $0x8] sm:$0xf]
      %v3853 = vld [vmem:[%s3849 + $0xc] sm:$0xf]
      %v3854 = vld [vmem:[%s3849 + $0x10] sm:$0xf]
      %v3855 = vld [vmem:[%s3849 + $0x14] sm:$0xf]
      %v3856 = vld [vmem:[%s3849 + $0x18] sm:$0xf]
      %v3857 = vld [vmem:[%s3849 + $0x1c] sm:$0xf]
      %v3858 = vld [vmem:[%s3849 + $0x20] sm:$0xf]
      %v3859 = vld [vmem:[%s3849 + $0x24] sm:$0xf]
      %v3860 = vld [vmem:[%s3849 + $0x28] sm:$0xf]
      %v3861 = vld [vmem:[%s3849 + $0x2c] sm:$0xf]
      %v3862 = vld [vmem:[%s3849 + $0x30] sm:$0xf]
      %v3863 = vld [vmem:[%s3849 + $0x34] sm:$0xf]
      %v3864 = vld [vmem:[%s3849 + $0x38] sm:$0xf]
      %v3865 = vld [vmem:[%s3849 + $0x3c] sm:$0xf]
      %v3866 = vunpack.c.l.b16 %v3478
      %v3867 = vunpack.c.l.b16 %v3488
      %v3868 = vunpack.c.l.b16 %v3502
      %v3869 = vunpack.c.l.b16 %v3512
      %v3870 = vunpack.c.l.b16 %v3526
      %v3871 = vunpack.c.l.b16 %v3536
      %v3872 = vunpack.c.l.b16 %v3550
      %v3873 = vunpack.c.l.b16 %v3560
      %v3874 = vunpack.c.l.b16 %v3574
      %v3875 = vunpack.c.l.b16 %v3584
      %v3876 = vunpack.c.l.b16 %v3598
      %v3877 = vunpack.c.l.b16 %v3608
      %v3878 = vunpack.c.l.b16 %v3622
      %v3879 = vunpack.c.l.b16 %v3632
      %v3880 = vunpack.c.l.b16 %v3646
      %v3881 = vunpack.c.l.b16 %v3656
      %v3882 = vunpack.c.l.b16 %v3670
      %v3883 = vunpack.c.l.b16 %v3680
      %v3884 = vunpack.c.l.b16 %v3694
      %v3885 = vunpack.c.l.b16 %v3704
      %v3886 = vunpack.c.l.b16 %v3718
      %v3887 = vunpack.c.l.b16 %v3728
      %v3888 = vunpack.c.l.b16 %v3742
      %v3889 = vunpack.c.l.b16 %v3752
      %v3890 = vunpack.c.l.b16 %v3766
      %v3891 = vunpack.c.l.b16 %v3776
      %v3892 = vunpack.c.l.b16 %v3790
      %v3893 = vunpack.c.l.b16 %v3800
      %v3894 = vunpack.c.l.b16 %v3814
      %v3895 = vunpack.c.l.b16 %v3824
      %v3896 = vunpack.c.l.b16 %v3838
      %v3897 = vunpack.c.l.b16 %v3848
      %v3898 = vpack.c.b16 %v3867, %v3866
      %v3899 = vpack.c.b16 %v3869, %v3868
      %v3900 = vpack.c.b16 %v3871, %v3870
      %v3901 = vpack.c.b16 %v3873, %v3872
      %v3902 = vpack.c.b16 %v3875, %v3874
      %v3903 = vpack.c.b16 %v3877, %v3876
      %v3904 = vpack.c.b16 %v3879, %v3878
      %v3905 = vpack.c.b16 %v3881, %v3880
      %v3906 = vpack.c.b16 %v3883, %v3882
      %v3907 = vpack.c.b16 %v3885, %v3884
      %v3908 = vpack.c.b16 %v3887, %v3886
      %v3909 = vpack.c.b16 %v3889, %v3888
      %v3910 = vpack.c.b16 %v3891, %v3890
      %v3911 = vpack.c.b16 %v3893, %v3892
      %v3912 = vpack.c.b16 %v3895, %v3894
      %v3913 = vpack.c.b16 %v3897, %v3896
      %v3946 = vunpack.c.l.b16 %v3850
      %v3947 = vunpack.c.l.b16 %v3851
      %v3948 = vunpack.c.l.b16 %v3852
      %v3949 = vunpack.c.l.b16 %v3853
      %v3950 = vunpack.c.l.b16 %v3854
      %v3951 = vunpack.c.l.b16 %v3855
      %v3952 = vunpack.c.l.b16 %v3856
      %v3953 = vunpack.c.l.b16 %v3857
      %v3954 = vunpack.c.l.b16 %v3858
      %v3955 = vunpack.c.l.b16 %v3859
      %v3956 = vunpack.c.l.b16 %v3860
      %v3957 = vunpack.c.l.b16 %v3861
      %v3958 = vunpack.c.l.b16 %v3862
      %v3959 = vunpack.c.l.b16 %v3863
      %v3960 = vunpack.c.l.b16 %v3864
      %v3961 = vunpack.c.l.b16 %v3865
      %v3962 = vpack.c.b16 %v3947, %v3946
      %v3963 = vpack.c.b16 %v3949, %v3948
      %v3964 = vpack.c.b16 %v3951, %v3950
      %v3965 = vpack.c.b16 %v3953, %v3952
      %v3966 = vpack.c.b16 %v3955, %v3954
      %v3967 = vpack.c.b16 %v3957, %v3956
      %v3968 = vpack.c.b16 %v3959, %v3958
      %v3969 = vpack.c.b16 %v3961, %v3960
      %3978 = vmatprep.subr.bf16.mxu0 0
      %3979 = vmatpush1.bf16.msra.mxu0 %v3962
      %3980 = vmatprep.subr.bf16.mxu0 0
      %3981 = vmatpush1.bf16.msra.mxu0 %v3963
      %3982 = vmatprep.subr.bf16.mxu0 0
      %3983 = vmatpush1.bf16.msra.mxu0 %v3964
      %3984 = vmatprep.subr.bf16.mxu0 0
      %3985 = vmatpush1.bf16.msra.mxu0 %v3965
      %3986 = vmatprep.subr.bf16.mxu0 0
      %3987 = vmatpush1.bf16.msra.mxu0 %v3966
      %3988 = vmatprep.subr.bf16.mxu0 0
      %3989 = vmatpush1.bf16.msra.mxu0 %v3967
      %3990 = vmatprep.subr.bf16.mxu0 0
      %3991 = vmatpush1.bf16.msra.mxu0 %v3968
      %3992 = vmatprep.subr.bf16.mxu0 0
      %3993 = vmatpush1.bf16.msra.mxu0 %v3969
      %3994 = vmatprep.subr.bf16.mxu0 0
      %3995 = vmatpush1.bf16.msra.mxu0 0
      %3996 = vmatprep.subr.bf16.mxu0 0
      %3997 = vmatpush1.bf16.msra.mxu0 0
      %3998 = vmatprep.subr.bf16.mxu0 0
      %3999 = vmatpush1.bf16.msra.mxu0 0
      %4000 = vmatprep.subr.bf16.mxu0 0
      %4001 = vmatpush1.bf16.msra.mxu0 0
      %4002 = vmatprep.subr.bf16.mxu0 0
      %4003 = vmatpush1.bf16.msra.mxu0 0
      %4004 = vmatprep.subr.bf16.mxu0 0
      %4005 = vmatpush1.bf16.msra.mxu0 0
      %4006 = vmatprep.subr.bf16.mxu0 0
      %4007 = vmatpush1.bf16.msra.mxu0 0
      %4008 = vmatprep.subr.bf16.mxu0 0
      %4009 = vmatpush1.bf16.msra.mxu0 0
      %4010 = vmatprep.mubr.bf16.mxu0 0
      %4011 = vmatmul.mubr.bf16.gmra.mrb[0].mxu0 %v3898
      %v4012 = vpop.f32.mrb[0].mxu0
      %v4013 = vadd.f32 0.0, %v4012
      %v4014 = vpop.f32.mrb[0].mxu0
      %v4015 = vpop.f32.mrb[0].mxu0
      %v4016 = vadd.f32 0.0, %v4015
      %v4017 = vpop.f32.mrb[0].mxu0
      %4018 = vmatprep.mubr.bf16.mxu0 0
      %4019 = vmatmul.mubr.bf16.gmra.mrb[0].mxu0 %v3899
      %v4020 = vpop.f32.mrb[0].mxu0
      %v4021 = vadd.f32 0.0, %v4020
      %v4022 = vpop.f32.mrb[0].mxu0
      %v4023 = vpop.f32.mrb[0].mxu0
      %v4024 = vadd.f32 0.0, %v4023
      %v4025 = vpop.f32.mrb[0].mxu0
      %4026 = vmatprep.mubr.bf16.mxu0 0
      %4027 = vmatmul.mubr.bf16.gmra.mrb[0].mxu0 %v3900
      %v4028 = vpop.f32.mrb[0].mxu0
      %v4029 = vadd.f32 0.0, %v4028
      %v4030 = vpop.f32.mrb[0].mxu0
      %v4031 = vpop.f32.mrb[0].mxu0
      %v4032 = vadd.f32 0.0, %v4031
      %v4033 = vpop.f32.mrb[0].mxu0
      %4034 = vmatprep.mubr.bf16.mxu0 0
      %4035 = vmatmul.mubr.bf16.gmra.mrb[0].mxu0 %v3901
      %v4036 = vpop.f32.mrb[0].mxu0
      %v4037 = vadd.f32 0.0, %v4036
      %v4038 = vpop.f32.mrb[0].mxu0
      %v4039 = vpop.f32.mrb[0].mxu0
      %v4040 = vadd.f32 0.0, %v4039
      %v4041 = vpop.f32.mrb[0].mxu0
      %4042 = vmatprep.mubr.bf16.mxu0 0
      %4043 = vmatmul.mubr.bf16.gmra.mrb[0].mxu0 %v3902
      %v4044 = vpop.f32.mrb[0].mxu0
      %v4045 = vadd.f32 0.0, %v4044
      %v4046 = vpop.f32.mrb[0].mxu0
      %v4047 = vpop.f32.mrb[0].mxu0
      %v4048 = vadd.f32 0.0, %v4047
      %v4049 = vpop.f32.mrb[0].mxu0
      %4050 = vmatprep.mubr.bf16.mxu0 0
      %4051 = vmatmul.mubr.bf16.gmra.mrb[0].mxu0 %v3903
      %v4052 = vpop.f32.mrb[0].mxu0
      %v4053 = vadd.f32 0.0, %v4052
      %v4054 = vpop.f32.mrb[0].mxu0
      %v4055 = vpop.f32.mrb[0].mxu0
      %v4056 = vadd.f32 0.0, %v4055
      %v4057 = vpop.f32.mrb[0].mxu0
      %4058 = vmatprep.mubr.bf16.mxu0 0
      %4059 = vmatmul.mubr.bf16.gmra.mrb[0].mxu0 %v3904
      %v4060 = vpop.f32.mrb[0].mxu0
      %v4061 = vadd.f32 0.0, %v4060
      %v4062 = vpop.f32.mrb[0].mxu0
      %v4063 = vpop.f32.mrb[0].mxu0
      %v4064 = vadd.f32 0.0, %v4063
      %v4065 = vpop.f32.mrb[0].mxu0
      %4066 = vmatprep.mubr.bf16.mxu0 0
      %4067 = vmatmul.mubr.bf16.gmra.mrb[0].mxu0 %v3905
      %v4068 = vpop.f32.mrb[0].mxu0
      %v4069 = vadd.f32 0.0, %v4068
      %v4070 = vpop.f32.mrb[0].mxu0
      %v4071 = vpop.f32.mrb[0].mxu0
      %v4072 = vadd.f32 0.0, %v4071
      %v4073 = vpop.f32.mrb[0].mxu0
      %4074 = vmatprep.mubr.bf16.mxu0 0
      %4075 = vmatmul.mubr.bf16.gmra.mrb[0].mxu0 %v3906
      %v4076 = vpop.f32.mrb[0].mxu0
      %v4077 = vadd.f32 0.0, %v4076
      %v4078 = vpop.f32.mrb[0].mxu0
      %v4079 = vpop.f32.mrb[0].mxu0
      %v4080 = vadd.f32 0.0, %v4079
      %v4081 = vpop.f32.mrb[0].mxu0
      %4082 = vmatprep.mubr.bf16.mxu0 0
      %4083 = vmatmul.mubr.bf16.gmra.mrb[0].mxu0 %v3907
      %v4084 = vpop.f32.mrb[0].mxu0
      %v4085 = vadd.f32 0.0, %v4084
      %v4086 = vpop.f32.mrb[0].mxu0
      %v4087 = vpop.f32.mrb[0].mxu0
      %v4088 = vadd.f32 0.0, %v4087
      %v4089 = vpop.f32.mrb[0].mxu0
      %4090 = vmatprep.mubr.bf16.mxu0 0
      %4091 = vmatmul.mubr.bf16.gmra.mrb[0].mxu0 %v3908
      %v4092 = vpop.f32.mrb[0].mxu0
      %v4093 = vadd.f32 0.0, %v4092
      %v4094 = vpop.f32.mrb[0].mxu0
      %v4095 = vpop.f32.mrb[0].mxu0
      %v4096 = vadd.f32 0.0, %v4095
      %v4097 = vpop.f32.mrb[0].mxu0
      %4098 = vmatprep.mubr.bf16.mxu0 0
      %4099 = vmatmul.mubr.bf16.gmra.mrb[0].mxu0 %v3909
      %v4100 = vpop.f32.mrb[0].mxu0
      %v4101 = vadd.f32 0.0, %v4100
      %v4102 = vpop.f32.mrb[0].mxu0
      %v4103 = vpop.f32.mrb[0].mxu0
      %v4104 = vadd.f32 0.0, %v4103
      %v4105 = vpop.f32.mrb[0].mxu0
      %4106 = vmatprep.mubr.bf16.mxu0 0
      %4107 = vmatmul.mubr.bf16.gmra.mrb[0].mxu0 %v3910
      %v4108 = vpop.f32.mrb[0].mxu0
      %v4109 = vadd.f32 0.0, %v4108
      %v4110 = vpop.f32.mrb[0].mxu0
      %v4111 = vpop.f32.mrb[0].mxu0
      %v4112 = vadd.f32 0.0, %v4111
      %v4113 = vpop.f32.mrb[0].mxu0
      %4114 = vmatprep.mubr.bf16.mxu0 0
      %4115 = vmatmul.mubr.bf16.gmra.mrb[0].mxu0 %v3911
      %v4116 = vpop.f32.mrb[0].mxu0
      %v4117 = vadd.f32 0.0, %v4116
      %v4118 = vpop.f32.mrb[0].mxu0
      %v4119 = vpop.f32.mrb[0].mxu0
      %v4120 = vadd.f32 0.0, %v4119
      %v4121 = vpop.f32.mrb[0].mxu0
      %4122 = vmatprep.mubr.bf16.mxu0 0
      %4123 = vmatmul.mubr.bf16.gmra.mrb[0].mxu0 %v3912
      %v4124 = vpop.f32.mrb[0].mxu0
      %v4125 = vadd.f32 0.0, %v4124
      %v4126 = vpop.f32.mrb[0].mxu0
      %v4127 = vpop.f32.mrb[0].mxu0
      %v4128 = vadd.f32 0.0, %v4127
      %v4129 = vpop.f32.mrb[0].mxu0
      %4130 = vmatprep.mubr.bf16.mxu0 0
      %4131 = vmatmul.mubr.bf16.gmra.mrb[0].mxu0 %v3913
      %v4132 = vpop.f32.mrb[0].mxu0
      %v4133 = vadd.f32 0.0, %v4132
      %v4134 = vpop.f32.mrb[0].mxu0
      %v4135 = vpop.f32.mrb[0].mxu0
      %v4136 = vadd.f32 0.0, %v4135
      %v4137 = vpop.f32.mrb[0].mxu0
      %4138 = vdwg.mxu0
      %v4139 = vadd.f32 %v3433, %v4013
      %v4140 = vadd.f32 %v3434, %v4016
      %v4141 = vadd.f32 %v3435, %v4021
      %v4142 = vadd.f32 %v3436, %v4024
      %v4143 = vadd.f32 %v3437, %v4029
      %v4144 = vadd.f32 %v3438, %v4032
      %v4145 = vadd.f32 %v3439, %v4037
      %v4146 = vadd.f32 %v3440, %v4040
      %v4147 = vadd.f32 %v3441, %v4045
      %v4148 = vadd.f32 %v3442, %v4048
      %v4149 = vadd.f32 %v3443, %v4053
      %v4150 = vadd.f32 %v3444, %v4056
      %v4151 = vadd.f32 %v3445, %v4061
      %v4152 = vadd.f32 %v3446, %v4064
      %v4153 = vadd.f32 %v3447, %v4069
      %v4154 = vadd.f32 %v3448, %v4072
      %v4155 = vadd.f32 %v3449, %v4077
      %v4156 = vadd.f32 %v3450, %v4080
      %v4157 = vadd.f32 %v3451, %v4085
      %v4158 = vadd.f32 %v3452, %v4088
      %v4159 = vadd.f32 %v3453, %v4093
      %v4160 = vadd.f32 %v3454, %v4096
      %v4161 = vadd.f32 %v3455, %v4101
      %v4162 = vadd.f32 %v3456, %v4104
      %v4163 = vadd.f32 %v3457, %v4109
      %v4164 = vadd.f32 %v3458, %v4112
      %v4165 = vadd.f32 %v3459, %v4117
      %v4166 = vadd.f32 %v3460, %v4120
      %v4167 = vadd.f32 %v3461, %v4125
      %v4168 = vadd.f32 %v3462, %v4128
      %v4169 = vadd.f32 %v3463, %v4133
      %v4170 = vadd.f32 %v3464, %v4136
      %4171 = vst [vmem:[#allocation3] sm:$0xff] %v4139
      %4172 = vst [vmem:[#allocation3 + $0x8] sm:$0xff] %v4140
      %4173 = vst [vmem:[#allocation3 + $0x10] sm:$0xff] %v4141
      %4174 = vst [vmem:[#allocation3 + $0x18] sm:$0xff] %v4142
      %4175 = vst [vmem:[#allocation3 + $0x20] sm:$0xff] %v4143
      %4176 = vst [vmem:[#allocation3 + $0x28] sm:$0xff] %v4144
      %4177 = vst [vmem:[#allocation3 + $0x30] sm:$0xff] %v4145
      %4178 = vst [vmem:[#allocation3 + $0x38] sm:$0xff] %v4146
      %4179 = vst [vmem:[#allocation3 + $0x40] sm:$0xff] %v4147
      %4180 = vst [vmem:[#allocation3 + $0x48] sm:$0xff] %v4148
      %4181 = vst [vmem:[#allocation3 + $0x50] sm:$0xff] %v4149
      %4182 = vst [vmem:[#allocation3 + $0x58] sm:$0xff] %v4150
      %4183 = vst [vmem:[#allocation3 + $0x60] sm:$0xff] %v4151
      %4184 = vst [vmem:[#allocation3 + $0x68] sm:$0xff] %v4152
      %4185 = vst [vmem:[#allocation3 + $0x70] sm:$0xff] %v4153
      %4186 = vst [vmem:[#allocation3 + $0x78] sm:$0xff] %v4154
      %4187 = vst [vmem:[#allocation3 + $0x80] sm:$0xff] %v4155
      %4188 = vst [vmem:[#allocation3 + $0x88] sm:$0xff] %v4156
      %4189 = vst [vmem:[#allocation3 + $0x90] sm:$0xff] %v4157
      %4190 = vst [vmem:[#allocation3 + $0x98] sm:$0xff] %v4158
      %4191 = vst [vmem:[#allocation3 + $0xa0] sm:$0xff] %v4159
      %4192 = vst [vmem:[#allocation3 + $0xa8] sm:$0xff] %v4160
      %4193 = vst [vmem:[#allocation3 + $0xb0] sm:$0xff] %v4161
      %4194 = vst [vmem:[#allocation3 + $0xb8] sm:$0xff] %v4162
      %4195 = vst [vmem:[#allocation3 + $0xc0] sm:$0xff] %v4163
      %4196 = vst [vmem:[#allocation3 + $0xc8] sm:$0xff] %v4164
      %4197 = vst [vmem:[#allocation3 + $0xd0] sm:$0xff] %v4165
      %4198 = vst [vmem:[#allocation3 + $0xd8] sm:$0xff] %v4166
      %4199 = vst [vmem:[#allocation3 + $0xe0] sm:$0xff] %v4167
      %4200 = vst [vmem:[#allocation3 + $0xe8] sm:$0xff] %v4168
      %4201 = vst [vmem:[#allocation3 + $0xf0] sm:$0xff] %v4169
      %4202 = vst [vmem:[#allocation3 + $0xf8] sm:$0xff] %v4170
      %v4203 = vld [vmem:[%s918] sm:$0xe]
      %v4204 = vld [vmem:[%s918 + $0x4] sm:$0xf]
      %v4205 = vld [vmem:[%s918 + $0x8] sm:$0x1]
      %v4206 = vld [vmem:[%s918 + $0xc] sm:$0xe]
      %v4207 = vld [vmem:[%s918 + $0x10] sm:$0xf]
      %v4208 = vld [vmem:[%s918 + $0x14] sm:$0x1]
      %v4209 = vld [vmem:[%s918 + $0x18] sm:$0xe]
      %v4210 = vld [vmem:[%s918 + $0x1c] sm:$0xf]
      %v4211 = vld [vmem:[%s918 + $0x20] sm:$0x1]
      %v4212 = vld [vmem:[%s918 + $0x24] sm:$0xe]
      %v4213 = vld [vmem:[%s918 + $0x28] sm:$0xf]
      %v4214 = vld [vmem:[%s918 + $0x2c] sm:$0x1]
      %v4215 = vld [vmem:[%s918 + $0x30] sm:$0xe]
      %v4216 = vld [vmem:[%s918 + $0x34] sm:$0xf]
      %v4217 = vld [vmem:[%s918 + $0x38] sm:$0x1]
      %v4218 = vld [vmem:[%s918 + $0x3c] sm:$0xe]
      %v4219 = vld [vmem:[%s918 + $0x40] sm:$0xf]
      %v4220 = vld [vmem:[%s918 + $0x44] sm:$0x1]
      %v4221 = vld [vmem:[%s918 + $0x48] sm:$0xe]
      %v4222 = vld [vmem:[%s918 + $0x4c] sm:$0xf]
      %v4223 = vld [vmem:[%s918 + $0x50] sm:$0x1]
      %v4224 = vld [vmem:[%s918 + $0x54] sm:$0xe]
      %v4225 = vld [vmem:[%s918 + $0x58] sm:$0xf]
      %v4226 = vld [vmem:[%s918 + $0x5c] sm:$0x1]
      %v4227 = vld [vmem:[%s918 + $0x60] sm:$0xe]
      %v4228 = vld [vmem:[%s918 + $0x64] sm:$0xf]
      %v4229 = vld [vmem:[%s918 + $0x68] sm:$0x1]
      %v4230 = vld [vmem:[%s918 + $0x6c] sm:$0xe]
      %v4231 = vld [vmem:[%s918 + $0x70] sm:$0xf]
      %v4232 = vld [vmem:[%s918 + $0x74] sm:$0x1]
      %v4233 = vld [vmem:[%s918 + $0x78] sm:$0xe]
      %v4234 = vld [vmem:[%s918 + $0x7c] sm:$0xf]
      %v4235 = vld [vmem:[%s918 + $0x80] sm:$0x1]
      %v4236 = vld [vmem:[%s918 + $0x84] sm:$0xe]
      %v4237 = vld [vmem:[%s918 + $0x88] sm:$0xf]
      %v4238 = vld [vmem:[%s918 + $0x8c] sm:$0x1]
      %v4239 = vld [vmem:[%s918 + $0x90] sm:$0xe]
      %v4240 = vld [vmem:[%s918 + $0x94] sm:$0xf]
      %v4241 = vld [vmem:[%s918 + $0x98] sm:$0x1]
      %v4242 = vld [vmem:[%s918 + $0x9c] sm:$0xe]
      %v4243 = vld [vmem:[%s918 + $0xa0] sm:$0xf]
      %v4244 = vld [vmem:[%s918 + $0xa4] sm:$0x1]
      %v4245 = vld [vmem:[%s918 + $0xa8] sm:$0xe]
      %v4246 = vld [vmem:[%s918 + $0xac] sm:$0xf]
      %v4247 = vld [vmem:[%s918 + $0xb0] sm:$0x1]
      %v4248 = vld [vmem:[%s918 + $0xb4] sm:$0xe]
      %v4249 = vld [vmem:[%s918 + $0xb8] sm:$0xf]
      %v4250 = vld [vmem:[%s918 + $0xbc] sm:$0x1]
      %v4251 = vld [vmem:[#allocation3] sm:$0xff]
      %v4252 = vld [vmem:[#allocation3 + $0x8] sm:$0xff]
      %v4253 = vld [vmem:[#allocation3 + $0x10] sm:$0xff]
      %v4254 = vld [vmem:[#allocation3 + $0x18] sm:$0xff]
      %v4255 = vld [vmem:[#allocation3 + $0x20] sm:$0xff]
      %v4256 = vld [vmem:[#allocation3 + $0x28] sm:$0xff]
      %v4257 = vld [vmem:[#allocation3 + $0x30] sm:$0xff]
      %v4258 = vld [vmem:[#allocation3 + $0x38] sm:$0xff]
      %v4259 = vld [vmem:[#allocation3 + $0x40] sm:$0xff]
      %v4260 = vld [vmem:[#allocation3 + $0x48] sm:$0xff]
      %v4261 = vld [vmem:[#allocation3 + $0x50] sm:$0xff]
      %v4262 = vld [vmem:[#allocation3 + $0x58] sm:$0xff]
      %v4263 = vld [vmem:[#allocation3 + $0x60] sm:$0xff]
      %v4264 = vld [vmem:[#allocation3 + $0x68] sm:$0xff]
      %v4265 = vld [vmem:[#allocation3 + $0x70] sm:$0xff]
      %v4266 = vld [vmem:[#allocation3 + $0x78] sm:$0xff]
      %v4267 = vld [vmem:[#allocation3 + $0x80] sm:$0xff]
      %v4268 = vld [vmem:[#allocation3 + $0x88] sm:$0xff]
      %v4269 = vld [vmem:[#allocation3 + $0x90] sm:$0xff]
      %v4270 = vld [vmem:[#allocation3 + $0x98] sm:$0xff]
      %v4271 = vld [vmem:[#allocation3 + $0xa0] sm:$0xff]
      %v4272 = vld [vmem:[#allocation3 + $0xa8] sm:$0xff]
      %v4273 = vld [vmem:[#allocation3 + $0xb0] sm:$0xff]
      %v4274 = vld [vmem:[#allocation3 + $0xb8] sm:$0xff]
      %v4275 = vld [vmem:[#allocation3 + $0xc0] sm:$0xff]
      %v4276 = vld [vmem:[#allocation3 + $0xc8] sm:$0xff]
      %v4277 = vld [vmem:[#allocation3 + $0xd0] sm:$0xff]
      %v4278 = vld [vmem:[#allocation3 + $0xd8] sm:$0xff]
      %v4279 = vld [vmem:[#allocation3 + $0xe0] sm:$0xff]
      %v4280 = vld [vmem:[#allocation3 + $0xe8] sm:$0xff]
      %v4281 = vld [vmem:[#allocation3 + $0xf0] sm:$0xff]
      %v4282 = vld [vmem:[#allocation3 + $0xf8] sm:$0xff]
      %v4331 = vrot.slane %v4203, 5
      %v4332 = vrot.slane %v4331, 4
      %v4333 = vrot.slane %v4204, 5
      %v4334 = vsel %vm2468, %v4332, %v4333
      %v4335 = vrot.slane %v4333, 4
      %v4336 = vrot.slane %v4205, 5
      %v4337 = vsel %vm2468, %v4335, %v4336
      %v4338 = vrot.slane %v4206, 5
      %v4339 = vrot.slane %v4338, 4
      %v4340 = vrot.slane %v4207, 5
      %v4341 = vsel %vm2468, %v4339, %v4340
      %v4342 = vrot.slane %v4340, 4
      %v4343 = vrot.slane %v4208, 5
      %v4344 = vsel %vm2468, %v4342, %v4343
      %v4345 = vrot.slane %v4209, 5
      %v4346 = vrot.slane %v4345, 4
      %v4347 = vrot.slane %v4210, 5
      %v4348 = vsel %vm2468, %v4346, %v4347
      %v4349 = vrot.slane %v4347, 4
      %v4350 = vrot.slane %v4211, 5
      %v4351 = vsel %vm2468, %v4349, %v4350
      %v4352 = vrot.slane %v4212, 5
      %v4353 = vrot.slane %v4352, 4
      %v4354 = vrot.slane %v4213, 5
      %v4355 = vsel %vm2468, %v4353, %v4354
      %v4356 = vrot.slane %v4354, 4
      %v4357 = vrot.slane %v4214, 5
      %v4358 = vsel %vm2468, %v4356, %v4357
      %v4359 = vrot.slane %v4215, 5
      %v4360 = vrot.slane %v4359, 4
      %v4361 = vrot.slane %v4216, 5
      %v4362 = vsel %vm2468, %v4360, %v4361
      %v4363 = vrot.slane %v4361, 4
      %v4364 = vrot.slane %v4217, 5
      %v4365 = vsel %vm2468, %v4363, %v4364
      %v4366 = vrot.slane %v4218, 5
      %v4367 = vrot.slane %v4366, 4
      %v4368 = vrot.slane %v4219, 5
      %v4369 = vsel %vm2468, %v4367, %v4368
      %v4370 = vrot.slane %v4368, 4
      %v4371 = vrot.slane %v4220, 5
      %v4372 = vsel %vm2468, %v4370, %v4371
      %v4373 = vrot.slane %v4221, 5
      %v4374 = vrot.slane %v4373, 4
      %v4375 = vrot.slane %v4222, 5
      %v4376 = vsel %vm2468, %v4374, %v4375
      %v4377 = vrot.slane %v4375, 4
      %v4378 = vrot.slane %v4223, 5
      %v4379 = vsel %vm2468, %v4377, %v4378
      %v4380 = vrot.slane %v4224, 5
      %v4381 = vrot.slane %v4380, 4
      %v4382 = vrot.slane %v4225, 5
      %v4383 = vsel %vm2468, %v4381, %v4382
      %v4384 = vrot.slane %v4382, 4
      %v4385 = vrot.slane %v4226, 5
      %v4386 = vsel %vm2468, %v4384, %v4385
      %v4387 = vrot.slane %v4227, 5
      %v4388 = vrot.slane %v4387, 4
      %v4389 = vrot.slane %v4228, 5
      %v4390 = vsel %vm2468, %v4388, %v4389
      %v4391 = vrot.slane %v4389, 4
      %v4392 = vrot.slane %v4229, 5
      %v4393 = vsel %vm2468, %v4391, %v4392
      %v4394 = vrot.slane %v4230, 5
      %v4395 = vrot.slane %v4394, 4
      %v4396 = vrot.slane %v4231, 5
      %v4397 = vsel %vm2468, %v4395, %v4396
      %v4398 = vrot.slane %v4396, 4
      %v4399 = vrot.slane %v4232, 5
      %v4400 = vsel %vm2468, %v4398, %v4399
      %v4401 = vrot.slane %v4233, 5
      %v4402 = vrot.slane %v4401, 4
      %v4403 = vrot.slane %v4234, 5
      %v4404 = vsel %vm2468, %v4402, %v4403
      %v4405 = vrot.slane %v4403, 4
      %v4406 = vrot.slane %v4235, 5
      %v4407 = vsel %vm2468, %v4405, %v4406
      %v4408 = vrot.slane %v4236, 5
      %v4409 = vrot.slane %v4408, 4
      %v4410 = vrot.slane %v4237, 5
      %v4411 = vsel %vm2468, %v4409, %v4410
      %v4412 = vrot.slane %v4410, 4
      %v4413 = vrot.slane %v4238, 5
      %v4414 = vsel %vm2468, %v4412, %v4413
      %v4415 = vrot.slane %v4239, 5
      %v4416 = vrot.slane %v4415, 4
      %v4417 = vrot.slane %v4240, 5
      %v4418 = vsel %vm2468, %v4416, %v4417
      %v4419 = vrot.slane %v4417, 4
      %v4420 = vrot.slane %v4241, 5
      %v4421 = vsel %vm2468, %v4419, %v4420
      %v4422 = vrot.slane %v4242, 5
      %v4423 = vrot.slane %v4422, 4
      %v4424 = vrot.slane %v4243, 5
      %v4425 = vsel %vm2468, %v4423, %v4424
      %v4426 = vrot.slane %v4424, 4
      %v4427 = vrot.slane %v4244, 5
      %v4428 = vsel %vm2468, %v4426, %v4427
      %v4429 = vrot.slane %v4245, 5
      %v4430 = vrot.slane %v4429, 4
      %v4431 = vrot.slane %v4246, 5
      %v4432 = vsel %vm2468, %v4430, %v4431
      %v4433 = vrot.slane %v4431, 4
      %v4434 = vrot.slane %v4247, 5
      %v4435 = vsel %vm2468, %v4433, %v4434
      %v4436 = vrot.slane %v4248, 5
      %v4437 = vrot.slane %v4436, 4
      %v4438 = vrot.slane %v4249, 5
      %v4439 = vsel %vm2468, %v4437, %v4438
      %v4440 = vrot.slane %v4438, 4
      %v4441 = vrot.slane %v4250, 5
      %v4442 = vsel %vm2468, %v4440, %v4441
      %s4443 = scalar_lea.vmem %s3, 320
      %v4444 = vld [vmem:[%s4443] sm:$0xf]
      %v4445 = vld [vmem:[%s4443 + $0x4] sm:$0xf]
      %v4446 = vld [vmem:[%s4443 + $0x8] sm:$0xf]
      %v4447 = vld [vmem:[%s4443 + $0xc] sm:$0xf]
      %v4448 = vld [vmem:[%s4443 + $0x10] sm:$0xf]
      %v4449 = vld [vmem:[%s4443 + $0x14] sm:$0xf]
      %v4450 = vld [vmem:[%s4443 + $0x18] sm:$0xf]
      %v4451 = vld [vmem:[%s4443 + $0x1c] sm:$0xf]
      %v4452 = vld [vmem:[%s4443 + $0x20] sm:$0xf]
      %v4453 = vld [vmem:[%s4443 + $0x24] sm:$0xf]
      %v4454 = vld [vmem:[%s4443 + $0x28] sm:$0xf]
      %v4455 = vld [vmem:[%s4443 + $0x2c] sm:$0xf]
      %v4456 = vld [vmem:[%s4443 + $0x30] sm:$0xf]
      %v4457 = vld [vmem:[%s4443 + $0x34] sm:$0xf]
      %v4458 = vld [vmem:[%s4443 + $0x38] sm:$0xf]
      %v4459 = vld [vmem:[%s4443 + $0x3c] sm:$0xf]
      %v4460 = vunpack.c.l.b16 %v4334
      %v4461 = vunpack.c.l.b16 %v4337
      %v4462 = vunpack.c.l.b16 %v4341
      %v4463 = vunpack.c.l.b16 %v4344
      %v4464 = vunpack.c.l.b16 %v4348
      %v4465 = vunpack.c.l.b16 %v4351
      %v4466 = vunpack.c.l.b16 %v4355
      %v4467 = vunpack.c.l.b16 %v4358
      %v4468 = vunpack.c.l.b16 %v4362
      %v4469 = vunpack.c.l.b16 %v4365
      %v4470 = vunpack.c.l.b16 %v4369
      %v4471 = vunpack.c.l.b16 %v4372
      %v4472 = vunpack.c.l.b16 %v4376
      %v4473 = vunpack.c.l.b16 %v4379
      %v4474 = vunpack.c.l.b16 %v4383
      %v4475 = vunpack.c.l.b16 %v4386
      %v4476 = vunpack.c.l.b16 %v4390
      %v4477 = vunpack.c.l.b16 %v4393
      %v4478 = vunpack.c.l.b16 %v4397
      %v4479 = vunpack.c.l.b16 %v4400
      %v4480 = vunpack.c.l.b16 %v4404
      %v4481 = vunpack.c.l.b16 %v4407
      %v4482 = vunpack.c.l.b16 %v4411
      %v4483 = vunpack.c.l.b16 %v4414
      %v4484 = vunpack.c.l.b16 %v4418
      %v4485 = vunpack.c.l.b16 %v4421
      %v4486 = vunpack.c.l.b16 %v4425
      %v4487 = vunpack.c.l.b16 %v4428
      %v4488 = vunpack.c.l.b16 %v4432
      %v4489 = vunpack.c.l.b16 %v4435
      %v4490 = vunpack.c.l.b16 %v4439
      %v4491 = vunpack.c.l.b16 %v4442
      %v4492 = vpack.c.b16 %v4461, %v4460
      %v4493 = vpack.c.b16 %v4463, %v4462
      %v4494 = vpack.c.b16 %v4465, %v4464
      %v4495 = vpack.c.b16 %v4467, %v4466
      %v4496 = vpack.c.b16 %v4469, %v4468
      %v4497 = vpack.c.b16 %v4471, %v4470
      %v4498 = vpack.c.b16 %v4473, %v4472
      %v4499 = vpack.c.b16 %v4475, %v4474
      %v4500 = vpack.c.b16 %v4477, %v4476
      %v4501 = vpack.c.b16 %v4479, %v4478
      %v4502 = vpack.c.b16 %v4481, %v4480
      %v4503 = vpack.c.b16 %v4483, %v4482
      %v4504 = vpack.c.b16 %v4485, %v4484
      %v4505 = vpack.c.b16 %v4487, %v4486
      %v4506 = vpack.c.b16 %v4489, %v4488
      %v4507 = vpack.c.b16 %v4491, %v4490
      %v4540 = vunpack.c.l.b16 %v4444
      %v4541 = vunpack.c.l.b16 %v4445
      %v4542 = vunpack.c.l.b16 %v4446
      %v4543 = vunpack.c.l.b16 %v4447
      %v4544 = vunpack.c.l.b16 %v4448
      %v4545 = vunpack.c.l.b16 %v4449
      %v4546 = vunpack.c.l.b16 %v4450
      %v4547 = vunpack.c.l.b16 %v4451
      %v4548 = vunpack.c.l.b16 %v4452
      %v4549 = vunpack.c.l.b16 %v4453
      %v4550 = vunpack.c.l.b16 %v4454
      %v4551 = vunpack.c.l.b16 %v4455
      %v4552 = vunpack.c.l.b16 %v4456
      %v4553 = vunpack.c.l.b16 %v4457
      %v4554 = vunpack.c.l.b16 %v4458
      %v4555 = vunpack.c.l.b16 %v4459
      %v4556 = vpack.c.b16 %v4541, %v4540
      %v4557 = vpack.c.b16 %v4543, %v4542
      %v4558 = vpack.c.b16 %v4545, %v4544
      %v4559 = vpack.c.b16 %v4547, %v4546
      %v4560 = vpack.c.b16 %v4549, %v4548
      %v4561 = vpack.c.b16 %v4551, %v4550
      %v4562 = vpack.c.b16 %v4553, %v4552
      %v4563 = vpack.c.b16 %v4555, %v4554
      %4572 = vmatprep.subr.bf16.mxu0 0
      %4573 = vmatpush1.bf16.msra.mxu0 %v4556
      %4574 = vmatprep.subr.bf16.mxu0 0
      %4575 = vmatpush1.bf16.msra.mxu0 %v4557
      %4576 = vmatprep.subr.bf16.mxu0 0
      %4577 = vmatpush1.bf16.msra.mxu0 %v4558
      %4578 = vmatprep.subr.bf16.mxu0 0
      %4579 = vmatpush1.bf16.msra.mxu0 %v4559
      %4580 = vmatprep.subr.bf16.mxu0 0
      %4581 = vmatpush1.bf16.msra.mxu0 %v4560
      %4582 = vmatprep.subr.bf16.mxu0 0
      %4583 = vmatpush1.bf16.msra.mxu0 %v4561
      %4584 = vmatprep.subr.bf16.mxu0 0
      %4585 = vmatpush1.bf16.msra.mxu0 %v4562
      %4586 = vmatprep.subr.bf16.mxu0 0
      %4587 = vmatpush1.bf16.msra.mxu0 %v4563
      %4588 = vmatprep.subr.bf16.mxu0 0
      %4589 = vmatpush1.bf16.msra.mxu0 0
      %4590 = vmatprep.subr.bf16.mxu0 0
      %4591 = vmatpush1.bf16.msra.mxu0 0
      %4592 = vmatprep.subr.bf16.mxu0 0
      %4593 = vmatpush1.bf16.msra.mxu0 0
      %4594 = vmatprep.subr.bf16.mxu0 0
      %4595 = vmatpush1.bf16.msra.mxu0 0
      %4596 = vmatprep.subr.bf16.mxu0 0
      %4597 = vmatpush1.bf16.msra.mxu0 0
      %4598 = vmatprep.subr.bf16.mxu0 0
      %4599 = vmatpush1.bf16.msra.mxu0 0
      %4600 = vmatprep.subr.bf16.mxu0 0
      %4601 = vmatpush1.bf16.msra.mxu0 0
      %4602 = vmatprep.subr.bf16.mxu0 0
      %4603 = vmatpush1.bf16.msra.mxu0 0
      %4604 = vmatprep.mubr.bf16.mxu0 0
      %4605 = vmatmul.mubr.bf16.gmra.mrb[0].mxu0 %v4492
      %v4606 = vpop.f32.mrb[0].mxu0
      %v4607 = vadd.f32 0.0, %v4606
      %v4608 = vpop.f32.mrb[0].mxu0
      %v4609 = vpop.f32.mrb[0].mxu0
      %v4610 = vadd.f32 0.0, %v4609
      %v4611 = vpop.f32.mrb[0].mxu0
      %4612 = vmatprep.mubr.bf16.mxu0 0
      %4613 = vmatmul.mubr.bf16.gmra.mrb[0].mxu0 %v4493
      %v4614 = vpop.f32.mrb[0].mxu0
      %v4615 = vadd.f32 0.0, %v4614
      %v4616 = vpop.f32.mrb[0].mxu0
      %v4617 = vpop.f32.mrb[0].mxu0
      %v4618 = vadd.f32 0.0, %v4617
      %v4619 = vpop.f32.mrb[0].mxu0
      %4620 = vmatprep.mubr.bf16.mxu0 0
      %4621 = vmatmul.mubr.bf16.gmra.mrb[0].mxu0 %v4494
      %v4622 = vpop.f32.mrb[0].mxu0
      %v4623 = vadd.f32 0.0, %v4622
      %v4624 = vpop.f32.mrb[0].mxu0
      %v4625 = vpop.f32.mrb[0].mxu0
      %v4626 = vadd.f32 0.0, %v4625
      %v4627 = vpop.f32.mrb[0].mxu0
      %4628 = vmatprep.mubr.bf16.mxu0 0
      %4629 = vmatmul.mubr.bf16.gmra.mrb[0].mxu0 %v4495
      %v4630 = vpop.f32.mrb[0].mxu0
      %v4631 = vadd.f32 0.0, %v4630
      %v4632 = vpop.f32.mrb[0].mxu0
      %v4633 = vpop.f32.mrb[0].mxu0
      %v4634 = vadd.f32 0.0, %v4633
      %v4635 = vpop.f32.mrb[0].mxu0
      %4636 = vmatprep.mubr.bf16.mxu0 0
      %4637 = vmatmul.mubr.bf16.gmra.mrb[0].mxu0 %v4496
      %v4638 = vpop.f32.mrb[0].mxu0
      %v4639 = vadd.f32 0.0, %v4638
      %v4640 = vpop.f32.mrb[0].mxu0
      %v4641 = vpop.f32.mrb[0].mxu0
      %v4642 = vadd.f32 0.0, %v4641
      %v4643 = vpop.f32.mrb[0].mxu0
      %4644 = vmatprep.mubr.bf16.mxu0 0
      %4645 = vmatmul.mubr.bf16.gmra.mrb[0].mxu0 %v4497
      %v4646 = vpop.f32.mrb[0].mxu0
      %v4647 = vadd.f32 0.0, %v4646
      %v4648 = vpop.f32.mrb[0].mxu0
      %v4649 = vpop.f32.mrb[0].mxu0
      %v4650 = vadd.f32 0.0, %v4649
      %v4651 = vpop.f32.mrb[0].mxu0
      %4652 = vmatprep.mubr.bf16.mxu0 0
      %4653 = vmatmul.mubr.bf16.gmra.mrb[0].mxu0 %v4498
      %v4654 = vpop.f32.mrb[0].mxu0
      %v4655 = vadd.f32 0.0, %v4654
      %v4656 = vpop.f32.mrb[0].mxu0
      %v4657 = vpop.f32.mrb[0].mxu0
      %v4658 = vadd.f32 0.0, %v4657
      %v4659 = vpop.f32.mrb[0].mxu0
      %4660 = vmatprep.mubr.bf16.mxu0 0
      %4661 = vmatmul.mubr.bf16.gmra.mrb[0].mxu0 %v4499
      %v4662 = vpop.f32.mrb[0].mxu0
      %v4663 = vadd.f32 0.0, %v4662
      %v4664 = vpop.f32.mrb[0].mxu0
      %v4665 = vpop.f32.mrb[0].mxu0
      %v4666 = vadd.f32 0.0, %v4665
      %v4667 = vpop.f32.mrb[0].mxu0
      %4668 = vmatprep.mubr.bf16.mxu0 0
      %4669 = vmatmul.mubr.bf16.gmra.mrb[0].mxu0 %v4500
      %v4670 = vpop.f32.mrb[0].mxu0
      %v4671 = vadd.f32 0.0, %v4670
      %v4672 = vpop.f32.mrb[0].mxu0
      %v4673 = vpop.f32.mrb[0].mxu0
      %v4674 = vadd.f32 0.0, %v4673
      %v4675 = vpop.f32.mrb[0].mxu0
      %4676 = vmatprep.mubr.bf16.mxu0 0
      %4677 = vmatmul.mubr.bf16.gmra.mrb[0].mxu0 %v4501
      %v4678 = vpop.f32.mrb[0].mxu0
      %v4679 = vadd.f32 0.0, %v4678
      %v4680 = vpop.f32.mrb[0].mxu0
      %v4681 = vpop.f32.mrb[0].mxu0
      %v4682 = vadd.f32 0.0, %v4681
      %v4683 = vpop.f32.mrb[0].mxu0
      %4684 = vmatprep.mubr.bf16.mxu0 0
      %4685 = vmatmul.mubr.bf16.gmra.mrb[0].mxu0 %v4502
      %v4686 = vpop.f32.mrb[0].mxu0
      %v4687 = vadd.f32 0.0, %v4686
      %v4688 = vpop.f32.mrb[0].mxu0
      %v4689 = vpop.f32.mrb[0].mxu0
      %v4690 = vadd.f32 0.0, %v4689
      %v4691 = vpop.f32.mrb[0].mxu0
      %4692 = vmatprep.mubr.bf16.mxu0 0
      %4693 = vmatmul.mubr.bf16.gmra.mrb[0].mxu0 %v4503
      %v4694 = vpop.f32.mrb[0].mxu0
      %v4695 = vadd.f32 0.0, %v4694
      %v4696 = vpop.f32.mrb[0].mxu0
      %v4697 = vpop.f32.mrb[0].mxu0
      %v4698 = vadd.f32 0.0, %v4697
      %v4699 = vpop.f32.mrb[0].mxu0
      %4700 = vmatprep.mubr.bf16.mxu0 0
      %4701 = vmatmul.mubr.bf16.gmra.mrb[0].mxu0 %v4504
      %v4702 = vpop.f32.mrb[0].mxu0
      %v4703 = vadd.f32 0.0, %v4702
      %v4704 = vpop.f32.mrb[0].mxu0
      %v4705 = vpop.f32.mrb[0].mxu0
      %v4706 = vadd.f32 0.0, %v4705
      %v4707 = vpop.f32.mrb[0].mxu0
      %4708 = vmatprep.mubr.bf16.mxu0 0
      %4709 = vmatmul.mubr.bf16.gmra.mrb[0].mxu0 %v4505
      %v4710 = vpop.f32.mrb[0].mxu0
      %v4711 = vadd.f32 0.0, %v4710
      %v4712 = vpop.f32.mrb[0].mxu0
      %v4713 = vpop.f32.mrb[0].mxu0
      %v4714 = vadd.f32 0.0, %v4713
      %v4715 = vpop.f32.mrb[0].mxu0
      %4716 = vmatprep.mubr.bf16.mxu0 0
      %4717 = vmatmul.mubr.bf16.gmra.mrb[0].mxu0 %v4506
      %v4718 = vpop.f32.mrb[0].mxu0
      %v4719 = vadd.f32 0.0, %v4718
      %v4720 = vpop.f32.mrb[0].mxu0
      %v4721 = vpop.f32.mrb[0].mxu0
      %v4722 = vadd.f32 0.0, %v4721
      %v4723 = vpop.f32.mrb[0].mxu0
      %4724 = vmatprep.mubr.bf16.mxu0 0
      %4725 = vmatmul.mubr.bf16.gmra.mrb[0].mxu0 %v4507
      %v4726 = vpop.f32.mrb[0].mxu0
      %v4727 = vadd.f32 0.0, %v4726
      %v4728 = vpop.f32.mrb[0].mxu0
      %v4729 = vpop.f32.mrb[0].mxu0
      %v4730 = vadd.f32 0.0, %v4729
      %v4731 = vpop.f32.mrb[0].mxu0
      %4732 = vdwg.mxu0
      %v4733 = vadd.f32 %v4251, %v4607
      %v4734 = vadd.f32 %v4252, %v4610
      %v4735 = vadd.f32 %v4253, %v4615
      %v4736 = vadd.f32 %v4254, %v4618
      %v4737 = vadd.f32 %v4255, %v4623
      %v4738 = vadd.f32 %v4256, %v4626
      %v4739 = vadd.f32 %v4257, %v4631
      %v4740 = vadd.f32 %v4258, %v4634
      %v4741 = vadd.f32 %v4259, %v4639
      %v4742 = vadd.f32 %v4260, %v4642
      %v4743 = vadd.f32 %v4261, %v4647
      %v4744 = vadd.f32 %v4262, %v4650
      %v4745 = vadd.f32 %v4263, %v4655
      %v4746 = vadd.f32 %v4264, %v4658
      %v4747 = vadd.f32 %v4265, %v4663
      %v4748 = vadd.f32 %v4266, %v4666
      %v4749 = vadd.f32 %v4267, %v4671
      %v4750 = vadd.f32 %v4268, %v4674
      %v4751 = vadd.f32 %v4269, %v4679
      %v4752 = vadd.f32 %v4270, %v4682
      %v4753 = vadd.f32 %v4271, %v4687
      %v4754 = vadd.f32 %v4272, %v4690
      %v4755 = vadd.f32 %v4273, %v4695
      %v4756 = vadd.f32 %v4274, %v4698
      %v4757 = vadd.f32 %v4275, %v4703
      %v4758 = vadd.f32 %v4276, %v4706
      %v4759 = vadd.f32 %v4277, %v4711
      %v4760 = vadd.f32 %v4278, %v4714
      %v4761 = vadd.f32 %v4279, %v4719
      %v4762 = vadd.f32 %v4280, %v4722
      %v4763 = vadd.f32 %v4281, %v4727
      %v4764 = vadd.f32 %v4282, %v4730
      %4765 = vst [vmem:[#allocation3] sm:$0xff] %v4733
      %4766 = vst [vmem:[#allocation3 + $0x8] sm:$0xff] %v4734
      %4767 = vst [vmem:[#allocation3 + $0x10] sm:$0xff] %v4735
      %4768 = vst [vmem:[#allocation3 + $0x18] sm:$0xff] %v4736
      %4769 = vst [vmem:[#allocation3 + $0x20] sm:$0xff] %v4737
      %4770 = vst [vmem:[#allocation3 + $0x28] sm:$0xff] %v4738
      %4771 = vst [vmem:[#allocation3 + $0x30] sm:$0xff] %v4739
      %4772 = vst [vmem:[#allocation3 + $0x38] sm:$0xff] %v4740
      %4773 = vst [vmem:[#allocation3 + $0x40] sm:$0xff] %v4741
      %4774 = vst [vmem:[#allocation3 + $0x48] sm:$0xff] %v4742
      %4775 = vst [vmem:[#allocation3 + $0x50] sm:$0xff] %v4743
      %4776 = vst [vmem:[#allocation3 + $0x58] sm:$0xff] %v4744
      %4777 = vst [vmem:[#allocation3 + $0x60] sm:$0xff] %v4745
      %4778 = vst [vmem:[#allocation3 + $0x68] sm:$0xff] %v4746
      %4779 = vst [vmem:[#allocation3 + $0x70] sm:$0xff] %v4747
      %4780 = vst [vmem:[#allocation3 + $0x78] sm:$0xff] %v4748
      %4781 = vst [vmem:[#allocation3 + $0x80] sm:$0xff] %v4749
      %4782 = vst [vmem:[#allocation3 + $0x88] sm:$0xff] %v4750
      %4783 = vst [vmem:[#allocation3 + $0x90] sm:$0xff] %v4751
      %4784 = vst [vmem:[#allocation3 + $0x98] sm:$0xff] %v4752
      %4785 = vst [vmem:[#allocation3 + $0xa0] sm:$0xff] %v4753
      %4786 = vst [vmem:[#allocation3 + $0xa8] sm:$0xff] %v4754
      %4787 = vst [vmem:[#allocation3 + $0xb0] sm:$0xff] %v4755
      %4788 = vst [vmem:[#allocation3 + $0xb8] sm:$0xff] %v4756
      %4789 = vst [vmem:[#allocation3 + $0xc0] sm:$0xff] %v4757
      %4790 = vst [vmem:[#allocation3 + $0xc8] sm:$0xff] %v4758
      %4791 = vst [vmem:[#allocation3 + $0xd0] sm:$0xff] %v4759
      %4792 = vst [vmem:[#allocation3 + $0xd8] sm:$0xff] %v4760
      %4793 = vst [vmem:[#allocation3 + $0xe0] sm:$0xff] %v4761
      %4794 = vst [vmem:[#allocation3 + $0xe8] sm:$0xff] %v4762
      %4795 = vst [vmem:[#allocation3 + $0xf0] sm:$0xff] %v4763
      %4796 = vst [vmem:[#allocation3 + $0xf8] sm:$0xff] %v4764
      %s4797 = scalar_lea.vmem [#allocation2], 24
      %v4798 = vld [vmem:[%s4797] sm:$0xf]
      %v4799 = vld [vmem:[%s4797 + $0x4] sm:$0xf]
      %v4800 = vld [vmem:[%s4797 + $0xc] sm:$0xf]
      %v4801 = vld [vmem:[%s4797 + $0x10] sm:$0xf]
      %v4802 = vld [vmem:[%s4797 + $0x18] sm:$0xf]
      %v4803 = vld [vmem:[%s4797 + $0x1c] sm:$0xf]
      %v4804 = vld [vmem:[%s4797 + $0x24] sm:$0xf]
      %v4805 = vld [vmem:[%s4797 + $0x28] sm:$0xf]
      %v4806 = vld [vmem:[%s4797 + $0x30] sm:$0xf]
      %v4807 = vld [vmem:[%s4797 + $0x34] sm:$0xf]
      %v4808 = vld [vmem:[%s4797 + $0x3c] sm:$0xf]
      %v4809 = vld [vmem:[%s4797 + $0x40] sm:$0xf]
      %v4810 = vld [vmem:[%s4797 + $0x48] sm:$0xf]
      %v4811 = vld [vmem:[%s4797 + $0x4c] sm:$0xf]
      %v4812 = vld [vmem:[%s4797 + $0x54] sm:$0xf]
      %v4813 = vld [vmem:[%s4797 + $0x58] sm:$0xf]
      %v4814 = vld [vmem:[%s4797 + $0x60] sm:$0xf]
      %v4815 = vld [vmem:[%s4797 + $0x64] sm:$0xf]
      %v4816 = vld [vmem:[%s4797 + $0x6c] sm:$0xf]
      %v4817 = vld [vmem:[%s4797 + $0x70] sm:$0xf]
      %v4818 = vld [vmem:[%s4797 + $0x78] sm:$0xf]
      %v4819 = vld [vmem:[%s4797 + $0x7c] sm:$0xf]
      %v4820 = vld [vmem:[%s4797 + $0x84] sm:$0xf]
      %v4821 = vld [vmem:[%s4797 + $0x88] sm:$0xf]
      %v4822 = vld [vmem:[%s4797 + $0x90] sm:$0xf]
      %v4823 = vld [vmem:[%s4797 + $0x94] sm:$0xf]
      %v4824 = vld [vmem:[%s4797 + $0x9c] sm:$0xf]
      %v4825 = vld [vmem:[%s4797 + $0xa0] sm:$0xf]
      %v4826 = vld [vmem:[%s4797 + $0xa8] sm:$0xf]
      %v4827 = vld [vmem:[%s4797 + $0xac] sm:$0xf]
      %v4828 = vld [vmem:[%s4797 + $0xb4] sm:$0xf]
      %v4829 = vld [vmem:[%s4797 + $0xb8] sm:$0xf]
      %v4830 = vld [vmem:[#allocation3] sm:$0xff]
      %v4831 = vld [vmem:[#allocation3 + $0x8] sm:$0xff]
      %v4832 = vld [vmem:[#allocation3 + $0x10] sm:$0xff]
      %v4833 = vld [vmem:[#allocation3 + $0x18] sm:$0xff]
      %v4834 = vld [vmem:[#allocation3 + $0x20] sm:$0xff]
      %v4835 = vld [vmem:[#allocation3 + $0x28] sm:$0xff]
      %v4836 = vld [vmem:[#allocation3 + $0x30] sm:$0xff]
      %v4837 = vld [vmem:[#allocation3 + $0x38] sm:$0xff]
      %v4838 = vld [vmem:[#allocation3 + $0x40] sm:$0xff]
      %v4839 = vld [vmem:[#allocation3 + $0x48] sm:$0xff]
      %v4840 = vld [vmem:[#allocation3 + $0x50] sm:$0xff]
      %v4841 = vld [vmem:[#allocation3 + $0x58] sm:$0xff]
      %v4842 = vld [vmem:[#allocation3 + $0x60] sm:$0xff]
      %v4843 = vld [vmem:[#allocation3 + $0x68] sm:$0xff]
      %v4844 = vld [vmem:[#allocation3 + $0x70] sm:$0xff]
      %v4845 = vld [vmem:[#allocation3 + $0x78] sm:$0xff]
      %v4846 = vld [vmem:[#allocation3 + $0x80] sm:$0xff]
      %v4847 = vld [vmem:[#allocation3 + $0x88] sm:$0xff]
      %v4848 = vld [vmem:[#allocation3 + $0x90] sm:$0xff]
      %v4849 = vld [vmem:[#allocation3 + $0x98] sm:$0xff]
      %v4850 = vld [vmem:[#allocation3 + $0xa0] sm:$0xff]
      %v4851 = vld [vmem:[#allocation3 + $0xa8] sm:$0xff]
      %v4852 = vld [vmem:[#allocation3 + $0xb0] sm:$0xff]
      %v4853 = vld [vmem:[#allocation3 + $0xb8] sm:$0xff]
      %v4854 = vld [vmem:[#allocation3 + $0xc0] sm:$0xff]
      %v4855 = vld [vmem:[#allocation3 + $0xc8] sm:$0xff]
      %v4856 = vld [vmem:[#allocation3 + $0xd0] sm:$0xff]
      %v4857 = vld [vmem:[#allocation3 + $0xd8] sm:$0xff]
      %v4858 = vld [vmem:[#allocation3 + $0xe0] sm:$0xff]
      %v4859 = vld [vmem:[#allocation3 + $0xe8] sm:$0xff]
      %v4860 = vld [vmem:[#allocation3 + $0xf0] sm:$0xff]
      %v4861 = vld [vmem:[#allocation3 + $0xf8] sm:$0xff]
      %s4862 = scalar_lea.vmem %s3, 384
      %v4863 = vld [vmem:[%s4862] sm:$0xf]
      %v4864 = vld [vmem:[%s4862 + $0x4] sm:$0xf]
      %v4865 = vld [vmem:[%s4862 + $0x8] sm:$0xf]
      %v4866 = vld [vmem:[%s4862 + $0xc] sm:$0xf]
      %v4867 = vld [vmem:[%s4862 + $0x10] sm:$0xf]
      %v4868 = vld [vmem:[%s4862 + $0x14] sm:$0xf]
      %v4869 = vld [vmem:[%s4862 + $0x18] sm:$0xf]
      %v4870 = vld [vmem:[%s4862 + $0x1c] sm:$0xf]
      %v4871 = vld [vmem:[%s4862 + $0x20] sm:$0xf]
      %v4872 = vld [vmem:[%s4862 + $0x24] sm:$0xf]
      %v4873 = vld [vmem:[%s4862 + $0x28] sm:$0xf]
      %v4874 = vld [vmem:[%s4862 + $0x2c] sm:$0xf]
      %v4875 = vld [vmem:[%s4862 + $0x30] sm:$0xf]
      %v4876 = vld [vmem:[%s4862 + $0x34] sm:$0xf]
      %v4877 = vld [vmem:[%s4862 + $0x38] sm:$0xf]
      %v4878 = vld [vmem:[%s4862 + $0x3c] sm:$0xf]
      %v4911 = vunpack.c.l.b16 %v4798
      %v4912 = vunpack.c.l.b16 %v4799
      %v4913 = vunpack.c.l.b16 %v4800
      %v4914 = vunpack.c.l.b16 %v4801
      %v4915 = vunpack.c.l.b16 %v4802
      %v4916 = vunpack.c.l.b16 %v4803
      %v4917 = vunpack.c.l.b16 %v4804
      %v4918 = vunpack.c.l.b16 %v4805
      %v4919 = vunpack.c.l.b16 %v4806
      %v4920 = vunpack.c.l.b16 %v4807
      %v4921 = vunpack.c.l.b16 %v4808
      %v4922 = vunpack.c.l.b16 %v4809
      %v4923 = vunpack.c.l.b16 %v4810
      %v4924 = vunpack.c.l.b16 %v4811
      %v4925 = vunpack.c.l.b16 %v4812
      %v4926 = vunpack.c.l.b16 %v4813
      %v4927 = vunpack.c.l.b16 %v4814
      %v4928 = vunpack.c.l.b16 %v4815
      %v4929 = vunpack.c.l.b16 %v4816
      %v4930 = vunpack.c.l.b16 %v4817
      %v4931 = vunpack.c.l.b16 %v4818
      %v4932 = vunpack.c.l.b16 %v4819
      %v4933 = vunpack.c.l.b16 %v4820
      %v4934 = vunpack.c.l.b16 %v4821
      %v4935 = vunpack.c.l.b16 %v4822
      %v4936 = vunpack.c.l.b16 %v4823
      %v4937 = vunpack.c.l.b16 %v4824
      %v4938 = vunpack.c.l.b16 %v4825
      %v4939 = vunpack.c.l.b16 %v4826
      %v4940 = vunpack.c.l.b16 %v4827
      %v4941 = vunpack.c.l.b16 %v4828
      %v4942 = vunpack.c.l.b16 %v4829
      %v4943 = vpack.c.b16 %v4912, %v4911
      %v4944 = vpack.c.b16 %v4914, %v4913
      %v4945 = vpack.c.b16 %v4916, %v4915
      %v4946 = vpack.c.b16 %v4918, %v4917
      %v4947 = vpack.c.b16 %v4920, %v4919
      %v4948 = vpack.c.b16 %v4922, %v4921
      %v4949 = vpack.c.b16 %v4924, %v4923
      %v4950 = vpack.c.b16 %v4926, %v4925
      %v4951 = vpack.c.b16 %v4928, %v4927
      %v4952 = vpack.c.b16 %v4930, %v4929
      %v4953 = vpack.c.b16 %v4932, %v4931
      %v4954 = vpack.c.b16 %v4934, %v4933
      %v4955 = vpack.c.b16 %v4936, %v4935
      %v4956 = vpack.c.b16 %v4938, %v4937
      %v4957 = vpack.c.b16 %v4940, %v4939
      %v4958 = vpack.c.b16 %v4942, %v4941
      %v4991 = vunpack.c.l.b16 %v4863
      %v4992 = vunpack.c.l.b16 %v4864
      %v4993 = vunpack.c.l.b16 %v4865
      %v4994 = vunpack.c.l.b16 %v4866
      %v4995 = vunpack.c.l.b16 %v4867
      %v4996 = vunpack.c.l.b16 %v4868
      %v4997 = vunpack.c.l.b16 %v4869
      %v4998 = vunpack.c.l.b16 %v4870
      %v4999 = vunpack.c.l.b16 %v4871
      %v5000 = vunpack.c.l.b16 %v4872
      %v5001 = vunpack.c.l.b16 %v4873
      %v5002 = vunpack.c.l.b16 %v4874
      %v5003 = vunpack.c.l.b16 %v4875
      %v5004 = vunpack.c.l.b16 %v4876
      %v5005 = vunpack.c.l.b16 %v4877
      %v5006 = vunpack.c.l.b16 %v4878
      %v5007 = vpack.c.b16 %v4992, %v4991
      %v5008 = vpack.c.b16 %v4994, %v4993
      %v5009 = vpack.c.b16 %v4996, %v4995
      %v5010 = vpack.c.b16 %v4998, %v4997
      %v5011 = vpack.c.b16 %v5000, %v4999
      %v5012 = vpack.c.b16 %v5002, %v5001
      %v5013 = vpack.c.b16 %v5004, %v5003
      %v5014 = vpack.c.b16 %v5006, %v5005
      %5023 = vmatprep.subr.bf16.mxu0 0
      %5024 = vmatpush1.bf16.msra.mxu0 %v5007
      %5025 = vmatprep.subr.bf16.mxu0 0
      %5026 = vmatpush1.bf16.msra.mxu0 %v5008
      %5027 = vmatprep.subr.bf16.mxu0 0
      %5028 = vmatpush1.bf16.msra.mxu0 %v5009
      %5029 = vmatprep.subr.bf16.mxu0 0
      %5030 = vmatpush1.bf16.msra.mxu0 %v5010
      %5031 = vmatprep.subr.bf16.mxu0 0
      %5032 = vmatpush1.bf16.msra.mxu0 %v5011
      %5033 = vmatprep.subr.bf16.mxu0 0
      %5034 = vmatpush1.bf16.msra.mxu0 %v5012
      %5035 = vmatprep.subr.bf16.mxu0 0
      %5036 = vmatpush1.bf16.msra.mxu0 %v5013
      %5037 = vmatprep.subr.bf16.mxu0 0
      %5038 = vmatpush1.bf16.msra.mxu0 %v5014
      %5039 = vmatprep.subr.bf16.mxu0 0
      %5040 = vmatpush1.bf16.msra.mxu0 0
      %5041 = vmatprep.subr.bf16.mxu0 0
      %5042 = vmatpush1.bf16.msra.mxu0 0
      %5043 = vmatprep.subr.bf16.mxu0 0
      %5044 = vmatpush1.bf16.msra.mxu0 0
      %5045 = vmatprep.subr.bf16.mxu0 0
      %5046 = vmatpush1.bf16.msra.mxu0 0
      %5047 = vmatprep.subr.bf16.mxu0 0
      %5048 = vmatpush1.bf16.msra.mxu0 0
      %5049 = vmatprep.subr.bf16.mxu0 0
      %5050 = vmatpush1.bf16.msra.mxu0 0
      %5051 = vmatprep.subr.bf16.mxu0 0
      %5052 = vmatpush1.bf16.msra.mxu0 0
      %5053 = vmatprep.subr.bf16.mxu0 0
      %5054 = vmatpush1.bf16.msra.mxu0 0
      %5055 = vmatprep.mubr.bf16.mxu0 0
      %5056 = vmatmul.mubr.bf16.gmra.mrb[0].mxu0 %v4943
      %v5057 = vpop.f32.mrb[0].mxu0
      %v5058 = vadd.f32 0.0, %v5057
      %v5059 = vpop.f32.mrb[0].mxu0
      %v5060 = vpop.f32.mrb[0].mxu0
      %v5061 = vadd.f32 0.0, %v5060
      %v5062 = vpop.f32.mrb[0].mxu0
      %5063 = vmatprep.mubr.bf16.mxu0 0
      %5064 = vmatmul.mubr.bf16.gmra.mrb[0].mxu0 %v4944
      %v5065 = vpop.f32.mrb[0].mxu0
      %v5066 = vadd.f32 0.0, %v5065
      %v5067 = vpop.f32.mrb[0].mxu0
      %v5068 = vpop.f32.mrb[0].mxu0
      %v5069 = vadd.f32 0.0, %v5068
      %v5070 = vpop.f32.mrb[0].mxu0
      %5071 = vmatprep.mubr.bf16.mxu0 0
      %5072 = vmatmul.mubr.bf16.gmra.mrb[0].mxu0 %v4945
      %v5073 = vpop.f32.mrb[0].mxu0
      %v5074 = vadd.f32 0.0, %v5073
      %v5075 = vpop.f32.mrb[0].mxu0
      %v5076 = vpop.f32.mrb[0].mxu0
      %v5077 = vadd.f32 0.0, %v5076
      %v5078 = vpop.f32.mrb[0].mxu0
      %5079 = vmatprep.mubr.bf16.mxu0 0
      %5080 = vmatmul.mubr.bf16.gmra.mrb[0].mxu0 %v4946
      %v5081 = vpop.f32.mrb[0].mxu0
      %v5082 = vadd.f32 0.0, %v5081
      %v5083 = vpop.f32.mrb[0].mxu0
      %v5084 = vpop.f32.mrb[0].mxu0
      %v5085 = vadd.f32 0.0, %v5084
      %v5086 = vpop.f32.mrb[0].mxu0
      %5087 = vmatprep.mubr.bf16.mxu0 0
      %5088 = vmatmul.mubr.bf16.gmra.mrb[0].mxu0 %v4947
      %v5089 = vpop.f32.mrb[0].mxu0
      %v5090 = vadd.f32 0.0, %v5089
      %v5091 = vpop.f32.mrb[0].mxu0
      %v5092 = vpop.f32.mrb[0].mxu0
      %v5093 = vadd.f32 0.0, %v5092
      %v5094 = vpop.f32.mrb[0].mxu0
      %5095 = vmatprep.mubr.bf16.mxu0 0
      %5096 = vmatmul.mubr.bf16.gmra.mrb[0].mxu0 %v4948
      %v5097 = vpop.f32.mrb[0].mxu0
      %v5098 = vadd.f32 0.0, %v5097
      %v5099 = vpop.f32.mrb[0].mxu0
      %v5100 = vpop.f32.mrb[0].mxu0
      %v5101 = vadd.f32 0.0, %v5100
      %v5102 = vpop.f32.mrb[0].mxu0
      %5103 = vmatprep.mubr.bf16.mxu0 0
      %5104 = vmatmul.mubr.bf16.gmra.mrb[0].mxu0 %v4949
      %v5105 = vpop.f32.mrb[0].mxu0
      %v5106 = vadd.f32 0.0, %v5105
      %v5107 = vpop.f32.mrb[0].mxu0
      %v5108 = vpop.f32.mrb[0].mxu0
      %v5109 = vadd.f32 0.0, %v5108
      %v5110 = vpop.f32.mrb[0].mxu0
      %5111 = vmatprep.mubr.bf16.mxu0 0
      %5112 = vmatmul.mubr.bf16.gmra.mrb[0].mxu0 %v4950
      %v5113 = vpop.f32.mrb[0].mxu0
      %v5114 = vadd.f32 0.0, %v5113
      %v5115 = vpop.f32.mrb[0].mxu0
      %v5116 = vpop.f32.mrb[0].mxu0
      %v5117 = vadd.f32 0.0, %v5116
      %v5118 = vpop.f32.mrb[0].mxu0
      %5119 = vmatprep.mubr.bf16.mxu0 0
      %5120 = vmatmul.mubr.bf16.gmra.mrb[0].mxu0 %v4951
      %v5121 = vpop.f32.mrb[0].mxu0
      %v5122 = vadd.f32 0.0, %v5121
      %v5123 = vpop.f32.mrb[0].mxu0
      %v5124 = vpop.f32.mrb[0].mxu0
      %v5125 = vadd.f32 0.0, %v5124
      %v5126 = vpop.f32.mrb[0].mxu0
      %5127 = vmatprep.mubr.bf16.mxu0 0
      %5128 = vmatmul.mubr.bf16.gmra.mrb[0].mxu0 %v4952
      %v5129 = vpop.f32.mrb[0].mxu0
      %v5130 = vadd.f32 0.0, %v5129
      %v5131 = vpop.f32.mrb[0].mxu0
      %v5132 = vpop.f32.mrb[0].mxu0
      %v5133 = vadd.f32 0.0, %v5132
      %v5134 = vpop.f32.mrb[0].mxu0
      %5135 = vmatprep.mubr.bf16.mxu0 0
      %5136 = vmatmul.mubr.bf16.gmra.mrb[0].mxu0 %v4953
      %v5137 = vpop.f32.mrb[0].mxu0
      %v5138 = vadd.f32 0.0, %v5137
      %v5139 = vpop.f32.mrb[0].mxu0
      %v5140 = vpop.f32.mrb[0].mxu0
      %v5141 = vadd.f32 0.0, %v5140
      %v5142 = vpop.f32.mrb[0].mxu0
      %5143 = vmatprep.mubr.bf16.mxu0 0
      %5144 = vmatmul.mubr.bf16.gmra.mrb[0].mxu0 %v4954
      %v5145 = vpop.f32.mrb[0].mxu0
      %v5146 = vadd.f32 0.0, %v5145
      %v5147 = vpop.f32.mrb[0].mxu0
      %v5148 = vpop.f32.mrb[0].mxu0
      %v5149 = vadd.f32 0.0, %v5148
      %v5150 = vpop.f32.mrb[0].mxu0
      %5151 = vmatprep.mubr.bf16.mxu0 0
      %5152 = vmatmul.mubr.bf16.gmra.mrb[0].mxu0 %v4955
      %v5153 = vpop.f32.mrb[0].mxu0
      %v5154 = vadd.f32 0.0, %v5153
      %v5155 = vpop.f32.mrb[0].mxu0
      %v5156 = vpop.f32.mrb[0].mxu0
      %v5157 = vadd.f32 0.0, %v5156
      %v5158 = vpop.f32.mrb[0].mxu0
      %5159 = vmatprep.mubr.bf16.mxu0 0
      %5160 = vmatmul.mubr.bf16.gmra.mrb[0].mxu0 %v4956
      %v5161 = vpop.f32.mrb[0].mxu0
      %v5162 = vadd.f32 0.0, %v5161
      %v5163 = vpop.f32.mrb[0].mxu0
      %v5164 = vpop.f32.mrb[0].mxu0
      %v5165 = vadd.f32 0.0, %v5164
      %v5166 = vpop.f32.mrb[0].mxu0
      %5167 = vmatprep.mubr.bf16.mxu0 0
      %5168 = vmatmul.mubr.bf16.gmra.mrb[0].mxu0 %v4957
      %v5169 = vpop.f32.mrb[0].mxu0
      %v5170 = vadd.f32 0.0, %v5169
      %v5171 = vpop.f32.mrb[0].mxu0
      %v5172 = vpop.f32.mrb[0].mxu0
      %v5173 = vadd.f32 0.0, %v5172
      %v5174 = vpop.f32.mrb[0].mxu0
      %5175 = vmatprep.mubr.bf16.mxu0 0
      %5176 = vmatmul.mubr.bf16.gmra.mrb[0].mxu0 %v4958
      %v5177 = vpop.f32.mrb[0].mxu0
      %v5178 = vadd.f32 0.0, %v5177
      %v5179 = vpop.f32.mrb[0].mxu0
      %v5180 = vpop.f32.mrb[0].mxu0
      %v5181 = vadd.f32 0.0, %v5180
      %v5182 = vpop.f32.mrb[0].mxu0
      %5183 = vdwg.mxu0
      %v5184 = vadd.f32 %v4830, %v5058
      %v5185 = vadd.f32 %v4831, %v5061
      %v5186 = vadd.f32 %v4832, %v5066
      %v5187 = vadd.f32 %v4833, %v5069
      %v5188 = vadd.f32 %v4834, %v5074
      %v5189 = vadd.f32 %v4835, %v5077
      %v5190 = vadd.f32 %v4836, %v5082
      %v5191 = vadd.f32 %v4837, %v5085
      %v5192 = vadd.f32 %v4838, %v5090
      %v5193 = vadd.f32 %v4839, %v5093
      %v5194 = vadd.f32 %v4840, %v5098
      %v5195 = vadd.f32 %v4841, %v5101
      %v5196 = vadd.f32 %v4842, %v5106
      %v5197 = vadd.f32 %v4843, %v5109
      %v5198 = vadd.f32 %v4844, %v5114
      %v5199 = vadd.f32 %v4845, %v5117
      %v5200 = vadd.f32 %v4846, %v5122
      %v5201 = vadd.f32 %v4847, %v5125
      %v5202 = vadd.f32 %v4848, %v5130
      %v5203 = vadd.f32 %v4849, %v5133
      %v5204 = vadd.f32 %v4850, %v5138
      %v5205 = vadd.f32 %v4851, %v5141
      %v5206 = vadd.f32 %v4852, %v5146
      %v5207 = vadd.f32 %v4853, %v5149
      %v5208 = vadd.f32 %v4854, %v5154
      %v5209 = vadd.f32 %v4855, %v5157
      %v5210 = vadd.f32 %v4856, %v5162
      %v5211 = vadd.f32 %v4857, %v5165
      %v5212 = vadd.f32 %v4858, %v5170
      %v5213 = vadd.f32 %v4859, %v5173
      %v5214 = vadd.f32 %v4860, %v5178
      %v5215 = vadd.f32 %v4861, %v5181
      %5216 = vst [vmem:[#allocation3] sm:$0xff] %v5184
      %5217 = vst [vmem:[#allocation3 + $0x8] sm:$0xff] %v5185
      %5218 = vst [vmem:[#allocation3 + $0x10] sm:$0xff] %v5186
      %5219 = vst [vmem:[#allocation3 + $0x18] sm:$0xff] %v5187
      %5220 = vst [vmem:[#allocation3 + $0x20] sm:$0xff] %v5188
      %5221 = vst [vmem:[#allocation3 + $0x28] sm:$0xff] %v5189
      %5222 = vst [vmem:[#allocation3 + $0x30] sm:$0xff] %v5190
      %5223 = vst [vmem:[#allocation3 + $0x38] sm:$0xff] %v5191
      %5224 = vst [vmem:[#allocation3 + $0x40] sm:$0xff] %v5192
      %5225 = vst [vmem:[#allocation3 + $0x48] sm:$0xff] %v5193
      %5226 = vst [vmem:[#allocation3 + $0x50] sm:$0xff] %v5194
      %5227 = vst [vmem:[#allocation3 + $0x58] sm:$0xff] %v5195
      %5228 = vst [vmem:[#allocation3 + $0x60] sm:$0xff] %v5196
      %5229 = vst [vmem:[#allocation3 + $0x68] sm:$0xff] %v5197
      %5230 = vst [vmem:[#allocation3 + $0x70] sm:$0xff] %v5198
      %5231 = vst [vmem:[#allocation3 + $0x78] sm:$0xff] %v5199
      %5232 = vst [vmem:[#allocation3 + $0x80] sm:$0xff] %v5200
      %5233 = vst [vmem:[#allocation3 + $0x88] sm:$0xff] %v5201
      %5234 = vst [vmem:[#allocation3 + $0x90] sm:$0xff] %v5202
      %5235 = vst [vmem:[#allocation3 + $0x98] sm:$0xff] %v5203
      %5236 = vst [vmem:[#allocation3 + $0xa0] sm:$0xff] %v5204
      %5237 = vst [vmem:[#allocation3 + $0xa8] sm:$0xff] %v5205
      %5238 = vst [vmem:[#allocation3 + $0xb0] sm:$0xff] %v5206
      %5239 = vst [vmem:[#allocation3 + $0xb8] sm:$0xff] %v5207
      %5240 = vst [vmem:[#allocation3 + $0xc0] sm:$0xff] %v5208
      %5241 = vst [vmem:[#allocation3 + $0xc8] sm:$0xff] %v5209
      %5242 = vst [vmem:[#allocation3 + $0xd0] sm:$0xff] %v5210
      %5243 = vst [vmem:[#allocation3 + $0xd8] sm:$0xff] %v5211
      %5244 = vst [vmem:[#allocation3 + $0xe0] sm:$0xff] %v5212
      %5245 = vst [vmem:[#allocation3 + $0xe8] sm:$0xff] %v5213
      %5246 = vst [vmem:[#allocation3 + $0xf0] sm:$0xff] %v5214
      %5247 = vst [vmem:[#allocation3 + $0xf8] sm:$0xff] %v5215
      %v5248 = vld [vmem:[%s4797] sm:$0xf]
      %v5249 = vld [vmem:[%s4797 + $0x4] sm:$0xf]
      %v5250 = vld [vmem:[%s4797 + $0x8] sm:$0x1]
      %v5251 = vld [vmem:[%s4797 + $0xc] sm:$0xf]
      %v5252 = vld [vmem:[%s4797 + $0x10] sm:$0xf]
      %v5253 = vld [vmem:[%s4797 + $0x14] sm:$0x1]
      %v5254 = vld [vmem:[%s4797 + $0x18] sm:$0xf]
      %v5255 = vld [vmem:[%s4797 + $0x1c] sm:$0xf]
      %v5256 = vld [vmem:[%s4797 + $0x20] sm:$0x1]
      %v5257 = vld [vmem:[%s4797 + $0x24] sm:$0xf]
      %v5258 = vld [vmem:[%s4797 + $0x28] sm:$0xf]
      %v5259 = vld [vmem:[%s4797 + $0x2c] sm:$0x1]
      %v5260 = vld [vmem:[%s4797 + $0x30] sm:$0xf]
      %v5261 = vld [vmem:[%s4797 + $0x34] sm:$0xf]
      %v5262 = vld [vmem:[%s4797 + $0x38] sm:$0x1]
      %v5263 = vld [vmem:[%s4797 + $0x3c] sm:$0xf]
      %v5264 = vld [vmem:[%s4797 + $0x40] sm:$0xf]
      %v5265 = vld [vmem:[%s4797 + $0x44] sm:$0x1]
      %v5266 = vld [vmem:[%s4797 + $0x48] sm:$0xf]
      %v5267 = vld [vmem:[%s4797 + $0x4c] sm:$0xf]
      %v5268 = vld [vmem:[%s4797 + $0x50] sm:$0x1]
      %v5269 = vld [vmem:[%s4797 + $0x54] sm:$0xf]
      %v5270 = vld [vmem:[%s4797 + $0x58] sm:$0xf]
      %v5271 = vld [vmem:[%s4797 + $0x5c] sm:$0x1]
      %v5272 = vld [vmem:[%s4797 + $0x60] sm:$0xf]
      %v5273 = vld [vmem:[%s4797 + $0x64] sm:$0xf]
      %v5274 = vld [vmem:[%s4797 + $0x68] sm:$0x1]
      %v5275 = vld [vmem:[%s4797 + $0x6c] sm:$0xf]
      %v5276 = vld [vmem:[%s4797 + $0x70] sm:$0xf]
      %v5277 = vld [vmem:[%s4797 + $0x74] sm:$0x1]
      %v5278 = vld [vmem:[%s4797 + $0x78] sm:$0xf]
      %v5279 = vld [vmem:[%s4797 + $0x7c] sm:$0xf]
      %v5280 = vld [vmem:[%s4797 + $0x80] sm:$0x1]
      %v5281 = vld [vmem:[%s4797 + $0x84] sm:$0xf]
      %v5282 = vld [vmem:[%s4797 + $0x88] sm:$0xf]
      %v5283 = vld [vmem:[%s4797 + $0x8c] sm:$0x1]
      %v5284 = vld [vmem:[%s4797 + $0x90] sm:$0xf]
      %v5285 = vld [vmem:[%s4797 + $0x94] sm:$0xf]
      %v5286 = vld [vmem:[%s4797 + $0x98] sm:$0x1]
      %v5287 = vld [vmem:[%s4797 + $0x9c] sm:$0xf]
      %v5288 = vld [vmem:[%s4797 + $0xa0] sm:$0xf]
      %v5289 = vld [vmem:[%s4797 + $0xa4] sm:$0x1]
      %v5290 = vld [vmem:[%s4797 + $0xa8] sm:$0xf]
      %v5291 = vld [vmem:[%s4797 + $0xac] sm:$0xf]
      %v5292 = vld [vmem:[%s4797 + $0xb0] sm:$0x1]
      %v5293 = vld [vmem:[%s4797 + $0xb4] sm:$0xf]
      %v5294 = vld [vmem:[%s4797 + $0xb8] sm:$0xf]
      %v5295 = vld [vmem:[%s4797 + $0xbc] sm:$0x1]
      %v5296 = vld [vmem:[#allocation3] sm:$0xff]
      %v5297 = vld [vmem:[#allocation3 + $0x8] sm:$0xff]
      %v5298 = vld [vmem:[#allocation3 + $0x10] sm:$0xff]
      %v5299 = vld [vmem:[#allocation3 + $0x18] sm:$0xff]
      %v5300 = vld [vmem:[#allocation3 + $0x20] sm:$0xff]
      %v5301 = vld [vmem:[#allocation3 + $0x28] sm:$0xff]
      %v5302 = vld [vmem:[#allocation3 + $0x30] sm:$0xff]
      %v5303 = vld [vmem:[#allocation3 + $0x38] sm:$0xff]
      %v5304 = vld [vmem:[#allocation3 + $0x40] sm:$0xff]
      %v5305 = vld [vmem:[#allocation3 + $0x48] sm:$0xff]
      %v5306 = vld [vmem:[#allocation3 + $0x50] sm:$0xff]
      %v5307 = vld [vmem:[#allocation3 + $0x58] sm:$0xff]
      %v5308 = vld [vmem:[#allocation3 + $0x60] sm:$0xff]
      %v5309 = vld [vmem:[#allocation3 + $0x68] sm:$0xff]
      %v5310 = vld [vmem:[#allocation3 + $0x70] sm:$0xff]
      %v5311 = vld [vmem:[#allocation3 + $0x78] sm:$0xff]
      %v5312 = vld [vmem:[#allocation3 + $0x80] sm:$0xff]
      %v5313 = vld [vmem:[#allocation3 + $0x88] sm:$0xff]
      %v5314 = vld [vmem:[#allocation3 + $0x90] sm:$0xff]
      %v5315 = vld [vmem:[#allocation3 + $0x98] sm:$0xff]
      %v5316 = vld [vmem:[#allocation3 + $0xa0] sm:$0xff]
      %v5317 = vld [vmem:[#allocation3 + $0xa8] sm:$0xff]
      %v5318 = vld [vmem:[#allocation3 + $0xb0] sm:$0xff]
      %v5319 = vld [vmem:[#allocation3 + $0xb8] sm:$0xff]
      %v5320 = vld [vmem:[#allocation3 + $0xc0] sm:$0xff]
      %v5321 = vld [vmem:[#allocation3 + $0xc8] sm:$0xff]
      %v5322 = vld [vmem:[#allocation3 + $0xd0] sm:$0xff]
      %v5323 = vld [vmem:[#allocation3 + $0xd8] sm:$0xff]
      %v5324 = vld [vmem:[#allocation3 + $0xe0] sm:$0xff]
      %v5325 = vld [vmem:[#allocation3 + $0xe8] sm:$0xff]
      %v5326 = vld [vmem:[#allocation3 + $0xf0] sm:$0xff]
      %v5327 = vld [vmem:[#allocation3 + $0xf8] sm:$0xff]
      %v5329 = vshrl.u32 %v5248, 16
      %v5331 = vrot.slane %v5329, 4
      %v5332 = vshll.u32 %v5248, 16
      %v5334 = vrot.slane %v5332, 5
      %v5335 = vor.u32 %v5331, %v5334
      %v5336 = vrot.slane %v5335, 4
      %v5338 = vshll.u32 %v5249, 16
      %v5340 = vrot.slane %v5338, 5
      %v5341 = vsel %vm1599, %v5336, %v5340
      %v5342 = vshrl.u32 %v5249, 16
      %v5344 = vrot.slane %v5342, 4
      %v5345 = vor.u32 %v5344, %v5340
      %v5346 = vrot.slane %v5345, 4
      %v5348 = vshll.u32 %v5250, 16
      %v5350 = vrot.slane %v5348, 5
      %v5351 = vsel %vm1599, %v5346, %v5350
      %v5353 = vshrl.u32 %v5251, 16
      %v5355 = vrot.slane %v5353, 4
      %v5356 = vshll.u32 %v5251, 16
      %v5358 = vrot.slane %v5356, 5
      %v5359 = vor.u32 %v5355, %v5358
      %v5360 = vrot.slane %v5359, 4
      %v5362 = vshll.u32 %v5252, 16
      %v5364 = vrot.slane %v5362, 5
      %v5365 = vsel %vm1599, %v5360, %v5364
      %v5366 = vshrl.u32 %v5252, 16
      %v5368 = vrot.slane %v5366, 4
      %v5369 = vor.u32 %v5368, %v5364
      %v5370 = vrot.slane %v5369, 4
      %v5372 = vshll.u32 %v5253, 16
      %v5374 = vrot.slane %v5372, 5
      %v5375 = vsel %vm1599, %v5370, %v5374
      %v5377 = vshrl.u32 %v5254, 16
      %v5379 = vrot.slane %v5377, 4
      %v5380 = vshll.u32 %v5254, 16
      %v5382 = vrot.slane %v5380, 5
      %v5383 = vor.u32 %v5379, %v5382
      %v5384 = vrot.slane %v5383, 4
      %v5386 = vshll.u32 %v5255, 16
      %v5388 = vrot.slane %v5386, 5
      %v5389 = vsel %vm1599, %v5384, %v5388
      %v5390 = vshrl.u32 %v5255, 16
      %v5392 = vrot.slane %v5390, 4
      %v5393 = vor.u32 %v5392, %v5388
      %v5394 = vrot.slane %v5393, 4
      %v5396 = vshll.u32 %v5256, 16
      %v5398 = vrot.slane %v5396, 5
      %v5399 = vsel %vm1599, %v5394, %v5398
      %v5401 = vshrl.u32 %v5257, 16
      %v5403 = vrot.slane %v5401, 4
      %v5404 = vshll.u32 %v5257, 16
      %v5406 = vrot.slane %v5404, 5
      %v5407 = vor.u32 %v5403, %v5406
      %v5408 = vrot.slane %v5407, 4
      %v5410 = vshll.u32 %v5258, 16
      %v5412 = vrot.slane %v5410, 5
      %v5413 = vsel %vm1599, %v5408, %v5412
      %v5414 = vshrl.u32 %v5258, 16
      %v5416 = vrot.slane %v5414, 4
      %v5417 = vor.u32 %v5416, %v5412
      %v5418 = vrot.slane %v5417, 4
      %v5420 = vshll.u32 %v5259, 16
      %v5422 = vrot.slane %v5420, 5
      %v5423 = vsel %vm1599, %v5418, %v5422
      %v5425 = vshrl.u32 %v5260, 16
      %v5427 = vrot.slane %v5425, 4
      %v5428 = vshll.u32 %v5260, 16
      %v5430 = vrot.slane %v5428, 5
      %v5431 = vor.u32 %v5427, %v5430
      %v5432 = vrot.slane %v5431, 4
      %v5434 = vshll.u32 %v5261, 16
      %v5436 = vrot.slane %v5434, 5
      %v5437 = vsel %vm1599, %v5432, %v5436
      %v5438 = vshrl.u32 %v5261, 16
      %v5440 = vrot.slane %v5438, 4
      %v5441 = vor.u32 %v5440, %v5436
      %v5442 = vrot.slane %v5441, 4
      %v5444 = vshll.u32 %v5262, 16
      %v5446 = vrot.slane %v5444, 5
      %v5447 = vsel %vm1599, %v5442, %v5446
      %v5449 = vshrl.u32 %v5263, 16
      %v5451 = vrot.slane %v5449, 4
      %v5452 = vshll.u32 %v5263, 16
      %v5454 = vrot.slane %v5452, 5
      %v5455 = vor.u32 %v5451, %v5454
      %v5456 = vrot.slane %v5455, 4
      %v5458 = vshll.u32 %v5264, 16
      %v5460 = vrot.slane %v5458, 5
      %v5461 = vsel %vm1599, %v5456, %v5460
      %v5462 = vshrl.u32 %v5264, 16
      %v5464 = vrot.slane %v5462, 4
      %v5465 = vor.u32 %v5464, %v5460
      %v5466 = vrot.slane %v5465, 4
      %v5468 = vshll.u32 %v5265, 16
      %v5470 = vrot.slane %v5468, 5
      %v5471 = vsel %vm1599, %v5466, %v5470
      %v5473 = vshrl.u32 %v5266, 16
      %v5475 = vrot.slane %v5473, 4
      %v5476 = vshll.u32 %v5266, 16
      %v5478 = vrot.slane %v5476, 5
      %v5479 = vor.u32 %v5475, %v5478
      %v5480 = vrot.slane %v5479, 4
      %v5482 = vshll.u32 %v5267, 16
      %v5484 = vrot.slane %v5482, 5
      %v5485 = vsel %vm1599, %v5480, %v5484
      %v5486 = vshrl.u32 %v5267, 16
      %v5488 = vrot.slane %v5486, 4
      %v5489 = vor.u32 %v5488, %v5484
      %v5490 = vrot.slane %v5489, 4
      %v5492 = vshll.u32 %v5268, 16
      %v5494 = vrot.slane %v5492, 5
      %v5495 = vsel %vm1599, %v5490, %v5494
      %v5497 = vshrl.u32 %v5269, 16
      %v5499 = vrot.slane %v5497, 4
      %v5500 = vshll.u32 %v5269, 16
      %v5502 = vrot.slane %v5500, 5
      %v5503 = vor.u32 %v5499, %v5502
      %v5504 = vrot.slane %v5503, 4
      %v5506 = vshll.u32 %v5270, 16
      %v5508 = vrot.slane %v5506, 5
      %v5509 = vsel %vm1599, %v5504, %v5508
      %v5510 = vshrl.u32 %v5270, 16
      %v5512 = vrot.slane %v5510, 4
      %v5513 = vor.u32 %v5512, %v5508
      %v5514 = vrot.slane %v5513, 4
      %v5516 = vshll.u32 %v5271, 16
      %v5518 = vrot.slane %v5516, 5
      %v5519 = vsel %vm1599, %v5514, %v5518
      %v5521 = vshrl.u32 %v5272, 16
      %v5523 = vrot.slane %v5521, 4
      %v5524 = vshll.u32 %v5272, 16
      %v5526 = vrot.slane %v5524, 5
      %v5527 = vor.u32 %v5523, %v5526
      %v5528 = vrot.slane %v5527, 4
      %v5530 = vshll.u32 %v5273, 16
      %v5532 = vrot.slane %v5530, 5
      %v5533 = vsel %vm1599, %v5528, %v5532
      %v5534 = vshrl.u32 %v5273, 16
      %v5536 = vrot.slane %v5534, 4
      %v5537 = vor.u32 %v5536, %v5532
      %v5538 = vrot.slane %v5537, 4
      %v5540 = vshll.u32 %v5274, 16
      %v5542 = vrot.slane %v5540, 5
      %v5543 = vsel %vm1599, %v5538, %v5542
      %v5545 = vshrl.u32 %v5275, 16
      %v5547 = vrot.slane %v5545, 4
      %v5548 = vshll.u32 %v5275, 16
      %v5550 = vrot.slane %v5548, 5
      %v5551 = vor.u32 %v5547, %v5550
      %v5552 = vrot.slane %v5551, 4
      %v5554 = vshll.u32 %v5276, 16
      %v5556 = vrot.slane %v5554, 5
      %v5557 = vsel %vm1599, %v5552, %v5556
      %v5558 = vshrl.u32 %v5276, 16
      %v5560 = vrot.slane %v5558, 4
      %v5561 = vor.u32 %v5560, %v5556
      %v5562 = vrot.slane %v5561, 4
      %v5564 = vshll.u32 %v5277, 16
      %v5566 = vrot.slane %v5564, 5
      %v5567 = vsel %vm1599, %v5562, %v5566
      %v5569 = vshrl.u32 %v5278, 16
      %v5571 = vrot.slane %v5569, 4
      %v5572 = vshll.u32 %v5278, 16
      %v5574 = vrot.slane %v5572, 5
      %v5575 = vor.u32 %v5571, %v5574
      %v5576 = vrot.slane %v5575, 4
      %v5578 = vshll.u32 %v5279, 16
      %v5580 = vrot.slane %v5578, 5
      %v5581 = vsel %vm1599, %v5576, %v5580
      %v5582 = vshrl.u32 %v5279, 16
      %v5584 = vrot.slane %v5582, 4
      %v5585 = vor.u32 %v5584, %v5580
      %v5586 = vrot.slane %v5585, 4
      %v5588 = vshll.u32 %v5280, 16
      %v5590 = vrot.slane %v5588, 5
      %v5591 = vsel %vm1599, %v5586, %v5590
      %v5593 = vshrl.u32 %v5281, 16
      %v5595 = vrot.slane %v5593, 4
      %v5596 = vshll.u32 %v5281, 16
      %v5598 = vrot.slane %v5596, 5
      %v5599 = vor.u32 %v5595, %v5598
      %v5600 = vrot.slane %v5599, 4
      %v5602 = vshll.u32 %v5282, 16
      %v5604 = vrot.slane %v5602, 5
      %v5605 = vsel %vm1599, %v5600, %v5604
      %v5606 = vshrl.u32 %v5282, 16
      %v5608 = vrot.slane %v5606, 4
      %v5609 = vor.u32 %v5608, %v5604
      %v5610 = vrot.slane %v5609, 4
      %v5612 = vshll.u32 %v5283, 16
      %v5614 = vrot.slane %v5612, 5
      %v5615 = vsel %vm1599, %v5610, %v5614
      %v5617 = vshrl.u32 %v5284, 16
      %v5619 = vrot.slane %v5617, 4
      %v5620 = vshll.u32 %v5284, 16
      %v5622 = vrot.slane %v5620, 5
      %v5623 = vor.u32 %v5619, %v5622
      %v5624 = vrot.slane %v5623, 4
      %v5626 = vshll.u32 %v5285, 16
      %v5628 = vrot.slane %v5626, 5
      %v5629 = vsel %vm1599, %v5624, %v5628
      %v5630 = vshrl.u32 %v5285, 16
      %v5632 = vrot.slane %v5630, 4
      %v5633 = vor.u32 %v5632, %v5628
      %v5634 = vrot.slane %v5633, 4
      %v5636 = vshll.u32 %v5286, 16
      %v5638 = vrot.slane %v5636, 5
      %v5639 = vsel %vm1599, %v5634, %v5638
      %v5641 = vshrl.u32 %v5287, 16
      %v5643 = vrot.slane %v5641, 4
      %v5644 = vshll.u32 %v5287, 16
      %v5646 = vrot.slane %v5644, 5
      %v5647 = vor.u32 %v5643, %v5646
      %v5648 = vrot.slane %v5647, 4
      %v5650 = vshll.u32 %v5288, 16
      %v5652 = vrot.slane %v5650, 5
      %v5653 = vsel %vm1599, %v5648, %v5652
      %v5654 = vshrl.u32 %v5288, 16
      %v5656 = vrot.slane %v5654, 4
      %v5657 = vor.u32 %v5656, %v5652
      %v5658 = vrot.slane %v5657, 4
      %v5660 = vshll.u32 %v5289, 16
      %v5662 = vrot.slane %v5660, 5
      %v5663 = vsel %vm1599, %v5658, %v5662
      %v5665 = vshrl.u32 %v5290, 16
      %v5667 = vrot.slane %v5665, 4
      %v5668 = vshll.u32 %v5290, 16
      %v5670 = vrot.slane %v5668, 5
      %v5671 = vor.u32 %v5667, %v5670
      %v5672 = vrot.slane %v5671, 4
      %v5674 = vshll.u32 %v5291, 16
      %v5676 = vrot.slane %v5674, 5
      %v5677 = vsel %vm1599, %v5672, %v5676
      %v5678 = vshrl.u32 %v5291, 16
      %v5680 = vrot.slane %v5678, 4
      %v5681 = vor.u32 %v5680, %v5676
      %v5682 = vrot.slane %v5681, 4
      %v5684 = vshll.u32 %v5292, 16
      %v5686 = vrot.slane %v5684, 5
      %v5687 = vsel %vm1599, %v5682, %v5686
      %v5689 = vshrl.u32 %v5293, 16
      %v5691 = vrot.slane %v5689, 4
      %v5692 = vshll.u32 %v5293, 16
      %v5694 = vrot.slane %v5692, 5
      %v5695 = vor.u32 %v5691, %v5694
      %v5696 = vrot.slane %v5695, 4
      %v5698 = vshll.u32 %v5294, 16
      %v5700 = vrot.slane %v5698, 5
      %v5701 = vsel %vm1599, %v5696, %v5700
      %v5702 = vshrl.u32 %v5294, 16
      %v5704 = vrot.slane %v5702, 4
      %v5705 = vor.u32 %v5704, %v5700
      %v5706 = vrot.slane %v5705, 4
      %v5708 = vshll.u32 %v5295, 16
      %v5710 = vrot.slane %v5708, 5
      %v5711 = vsel %vm1599, %v5706, %v5710
      %s5712 = scalar_lea.vmem %s3, 448
      %v5713 = vld [vmem:[%s5712] sm:$0xf]
      %v5714 = vld [vmem:[%s5712 + $0x4] sm:$0xf]
      %v5715 = vld [vmem:[%s5712 + $0x8] sm:$0xf]
      %v5716 = vld [vmem:[%s5712 + $0xc] sm:$0xf]
      %v5717 = vld [vmem:[%s5712 + $0x10] sm:$0xf]
      %v5718 = vld [vmem:[%s5712 + $0x14] sm:$0xf]
      %v5719 = vld [vmem:[%s5712 + $0x18] sm:$0xf]
      %v5720 = vld [vmem:[%s5712 + $0x1c] sm:$0xf]
      %v5721 = vld [vmem:[%s5712 + $0x20] sm:$0xf]
      %v5722 = vld [vmem:[%s5712 + $0x24] sm:$0xf]
      %v5723 = vld [vmem:[%s5712 + $0x28] sm:$0xf]
      %v5724 = vld [vmem:[%s5712 + $0x2c] sm:$0xf]
      %v5725 = vld [vmem:[%s5712 + $0x30] sm:$0xf]
      %v5726 = vld [vmem:[%s5712 + $0x34] sm:$0xf]
      %v5727 = vld [vmem:[%s5712 + $0x38] sm:$0xf]
      %v5728 = vld [vmem:[%s5712 + $0x3c] sm:$0xf]
      %v5729 = vunpack.c.l.b16 %v5341
      %v5730 = vunpack.c.l.b16 %v5351
      %v5731 = vunpack.c.l.b16 %v5365
      %v5732 = vunpack.c.l.b16 %v5375
      %v5733 = vunpack.c.l.b16 %v5389
      %v5734 = vunpack.c.l.b16 %v5399
      %v5735 = vunpack.c.l.b16 %v5413
      %v5736 = vunpack.c.l.b16 %v5423
      %v5737 = vunpack.c.l.b16 %v5437
      %v5738 = vunpack.c.l.b16 %v5447
      %v5739 = vunpack.c.l.b16 %v5461
      %v5740 = vunpack.c.l.b16 %v5471
      %v5741 = vunpack.c.l.b16 %v5485
      %v5742 = vunpack.c.l.b16 %v5495
      %v5743 = vunpack.c.l.b16 %v5509
      %v5744 = vunpack.c.l.b16 %v5519
      %v5745 = vunpack.c.l.b16 %v5533
      %v5746 = vunpack.c.l.b16 %v5543
      %v5747 = vunpack.c.l.b16 %v5557
      %v5748 = vunpack.c.l.b16 %v5567
      %v5749 = vunpack.c.l.b16 %v5581
      %v5750 = vunpack.c.l.b16 %v5591
      %v5751 = vunpack.c.l.b16 %v5605
      %v5752 = vunpack.c.l.b16 %v5615
      %v5753 = vunpack.c.l.b16 %v5629
      %v5754 = vunpack.c.l.b16 %v5639
      %v5755 = vunpack.c.l.b16 %v5653
      %v5756 = vunpack.c.l.b16 %v5663
      %v5757 = vunpack.c.l.b16 %v5677
      %v5758 = vunpack.c.l.b16 %v5687
      %v5759 = vunpack.c.l.b16 %v5701
      %v5760 = vunpack.c.l.b16 %v5711
      %v5761 = vpack.c.b16 %v5730, %v5729
      %v5762 = vpack.c.b16 %v5732, %v5731
      %v5763 = vpack.c.b16 %v5734, %v5733
      %v5764 = vpack.c.b16 %v5736, %v5735
      %v5765 = vpack.c.b16 %v5738, %v5737
      %v5766 = vpack.c.b16 %v5740, %v5739
      %v5767 = vpack.c.b16 %v5742, %v5741
      %v5768 = vpack.c.b16 %v5744, %v5743
      %v5769 = vpack.c.b16 %v5746, %v5745
      %v5770 = vpack.c.b16 %v5748, %v5747
      %v5771 = vpack.c.b16 %v5750, %v5749
      %v5772 = vpack.c.b16 %v5752, %v5751
      %v5773 = vpack.c.b16 %v5754, %v5753
      %v5774 = vpack.c.b16 %v5756, %v5755
      %v5775 = vpack.c.b16 %v5758, %v5757
      %v5776 = vpack.c.b16 %v5760, %v5759
      %v5809 = vunpack.c.l.b16 %v5713
      %v5810 = vunpack.c.l.b16 %v5714
      %v5811 = vunpack.c.l.b16 %v5715
      %v5812 = vunpack.c.l.b16 %v5716
      %v5813 = vunpack.c.l.b16 %v5717
      %v5814 = vunpack.c.l.b16 %v5718
      %v5815 = vunpack.c.l.b16 %v5719
      %v5816 = vunpack.c.l.b16 %v5720
      %v5817 = vunpack.c.l.b16 %v5721
      %v5818 = vunpack.c.l.b16 %v5722
      %v5819 = vunpack.c.l.b16 %v5723
      %v5820 = vunpack.c.l.b16 %v5724
      %v5821 = vunpack.c.l.b16 %v5725
      %v5822 = vunpack.c.l.b16 %v5726
      %v5823 = vunpack.c.l.b16 %v5727
      %v5824 = vunpack.c.l.b16 %v5728
      %v5825 = vpack.c.b16 %v5810, %v5809
      %v5826 = vpack.c.b16 %v5812, %v5811
      %v5827 = vpack.c.b16 %v5814, %v5813
      %v5828 = vpack.c.b16 %v5816, %v5815
      %v5829 = vpack.c.b16 %v5818, %v5817
      %v5830 = vpack.c.b16 %v5820, %v5819
      %v5831 = vpack.c.b16 %v5822, %v5821
      %v5832 = vpack.c.b16 %v5824, %v5823
      %5841 = vmatprep.subr.bf16.mxu0 0
      %5842 = vmatpush1.bf16.msra.mxu0 %v5825
      %5843 = vmatprep.subr.bf16.mxu0 0
      %5844 = vmatpush1.bf16.msra.mxu0 %v5826
      %5845 = vmatprep.subr.bf16.mxu0 0
      %5846 = vmatpush1.bf16.msra.mxu0 %v5827
      %5847 = vmatprep.subr.bf16.mxu0 0
      %5848 = vmatpush1.bf16.msra.mxu0 %v5828
      %5849 = vmatprep.subr.bf16.mxu0 0
      %5850 = vmatpush1.bf16.msra.mxu0 %v5829
      %5851 = vmatprep.subr.bf16.mxu0 0
      %5852 = vmatpush1.bf16.msra.mxu0 %v5830
      %5853 = vmatprep.subr.bf16.mxu0 0
      %5854 = vmatpush1.bf16.msra.mxu0 %v5831
      %5855 = vmatprep.subr.bf16.mxu0 0
      %5856 = vmatpush1.bf16.msra.mxu0 %v5832
      %5857 = vmatprep.subr.bf16.mxu0 0
      %5858 = vmatpush1.bf16.msra.mxu0 0
      %5859 = vmatprep.subr.bf16.mxu0 0
      %5860 = vmatpush1.bf16.msra.mxu0 0
      %5861 = vmatprep.subr.bf16.mxu0 0
      %5862 = vmatpush1.bf16.msra.mxu0 0
      %5863 = vmatprep.subr.bf16.mxu0 0
      %5864 = vmatpush1.bf16.msra.mxu0 0
      %5865 = vmatprep.subr.bf16.mxu0 0
      %5866 = vmatpush1.bf16.msra.mxu0 0
      %5867 = vmatprep.subr.bf16.mxu0 0
      %5868 = vmatpush1.bf16.msra.mxu0 0
      %5869 = vmatprep.subr.bf16.mxu0 0
      %5870 = vmatpush1.bf16.msra.mxu0 0
      %5871 = vmatprep.subr.bf16.mxu0 0
      %5872 = vmatpush1.bf16.msra.mxu0 0
      %5873 = vmatprep.mubr.bf16.mxu0 0
      %5874 = vmatmul.mubr.bf16.gmra.mrb[0].mxu0 %v5761
      %v5875 = vpop.f32.mrb[0].mxu0
      %v5876 = vadd.f32 0.0, %v5875
      %v5877 = vpop.f32.mrb[0].mxu0
      %v5878 = vpop.f32.mrb[0].mxu0
      %v5879 = vadd.f32 0.0, %v5878
      %v5880 = vpop.f32.mrb[0].mxu0
      %5881 = vmatprep.mubr.bf16.mxu0 0
      %5882 = vmatmul.mubr.bf16.gmra.mrb[0].mxu0 %v5762
      %v5883 = vpop.f32.mrb[0].mxu0
      %v5884 = vadd.f32 0.0, %v5883
      %v5885 = vpop.f32.mrb[0].mxu0
      %v5886 = vpop.f32.mrb[0].mxu0
      %v5887 = vadd.f32 0.0, %v5886
      %v5888 = vpop.f32.mrb[0].mxu0
      %5889 = vmatprep.mubr.bf16.mxu0 0
      %5890 = vmatmul.mubr.bf16.gmra.mrb[0].mxu0 %v5763
      %v5891 = vpop.f32.mrb[0].mxu0
      %v5892 = vadd.f32 0.0, %v5891
      %v5893 = vpop.f32.mrb[0].mxu0
      %v5894 = vpop.f32.mrb[0].mxu0
      %v5895 = vadd.f32 0.0, %v5894
      %v5896 = vpop.f32.mrb[0].mxu0
      %5897 = vmatprep.mubr.bf16.mxu0 0
      %5898 = vmatmul.mubr.bf16.gmra.mrb[0].mxu0 %v5764
      %v5899 = vpop.f32.mrb[0].mxu0
      %v5900 = vadd.f32 0.0, %v5899
      %v5901 = vpop.f32.mrb[0].mxu0
      %v5902 = vpop.f32.mrb[0].mxu0
      %v5903 = vadd.f32 0.0, %v5902
      %v5904 = vpop.f32.mrb[0].mxu0
      %5905 = vmatprep.mubr.bf16.mxu0 0
      %5906 = vmatmul.mubr.bf16.gmra.mrb[0].mxu0 %v5765
      %v5907 = vpop.f32.mrb[0].mxu0
      %v5908 = vadd.f32 0.0, %v5907
      %v5909 = vpop.f32.mrb[0].mxu0
      %v5910 = vpop.f32.mrb[0].mxu0
      %v5911 = vadd.f32 0.0, %v5910
      %v5912 = vpop.f32.mrb[0].mxu0
      %5913 = vmatprep.mubr.bf16.mxu0 0
      %5914 = vmatmul.mubr.bf16.gmra.mrb[0].mxu0 %v5766
      %v5915 = vpop.f32.mrb[0].mxu0
      %v5916 = vadd.f32 0.0, %v5915
      %v5917 = vpop.f32.mrb[0].mxu0
      %v5918 = vpop.f32.mrb[0].mxu0
      %v5919 = vadd.f32 0.0, %v5918
      %v5920 = vpop.f32.mrb[0].mxu0
      %5921 = vmatprep.mubr.bf16.mxu0 0
      %5922 = vmatmul.mubr.bf16.gmra.mrb[0].mxu0 %v5767
      %v5923 = vpop.f32.mrb[0].mxu0
      %v5924 = vadd.f32 0.0, %v5923
      %v5925 = vpop.f32.mrb[0].mxu0
      %v5926 = vpop.f32.mrb[0].mxu0
      %v5927 = vadd.f32 0.0, %v5926
      %v5928 = vpop.f32.mrb[0].mxu0
      %5929 = vmatprep.mubr.bf16.mxu0 0
      %5930 = vmatmul.mubr.bf16.gmra.mrb[0].mxu0 %v5768
      %v5931 = vpop.f32.mrb[0].mxu0
      %v5932 = vadd.f32 0.0, %v5931
      %v5933 = vpop.f32.mrb[0].mxu0
      %v5934 = vpop.f32.mrb[0].mxu0
      %v5935 = vadd.f32 0.0, %v5934
      %v5936 = vpop.f32.mrb[0].mxu0
      %5937 = vmatprep.mubr.bf16.mxu0 0
      %5938 = vmatmul.mubr.bf16.gmra.mrb[0].mxu0 %v5769
      %v5939 = vpop.f32.mrb[0].mxu0
      %v5940 = vadd.f32 0.0, %v5939
      %v5941 = vpop.f32.mrb[0].mxu0
      %v5942 = vpop.f32.mrb[0].mxu0
      %v5943 = vadd.f32 0.0, %v5942
      %v5944 = vpop.f32.mrb[0].mxu0
      %5945 = vmatprep.mubr.bf16.mxu0 0
      %5946 = vmatmul.mubr.bf16.gmra.mrb[0].mxu0 %v5770
      %v5947 = vpop.f32.mrb[0].mxu0
      %v5948 = vadd.f32 0.0, %v5947
      %v5949 = vpop.f32.mrb[0].mxu0
      %v5950 = vpop.f32.mrb[0].mxu0
      %v5951 = vadd.f32 0.0, %v5950
      %v5952 = vpop.f32.mrb[0].mxu0
      %5953 = vmatprep.mubr.bf16.mxu0 0
      %5954 = vmatmul.mubr.bf16.gmra.mrb[0].mxu0 %v5771
      %v5955 = vpop.f32.mrb[0].mxu0
      %v5956 = vadd.f32 0.0, %v5955
      %v5957 = vpop.f32.mrb[0].mxu0
      %v5958 = vpop.f32.mrb[0].mxu0
      %v5959 = vadd.f32 0.0, %v5958
      %v5960 = vpop.f32.mrb[0].mxu0
      %5961 = vmatprep.mubr.bf16.mxu0 0
      %5962 = vmatmul.mubr.bf16.gmra.mrb[0].mxu0 %v5772
      %v5963 = vpop.f32.mrb[0].mxu0
      %v5964 = vadd.f32 0.0, %v5963
      %v5965 = vpop.f32.mrb[0].mxu0
      %v5966 = vpop.f32.mrb[0].mxu0
      %v5967 = vadd.f32 0.0, %v5966
      %v5968 = vpop.f32.mrb[0].mxu0
      %5969 = vmatprep.mubr.bf16.mxu0 0
      %5970 = vmatmul.mubr.bf16.gmra.mrb[0].mxu0 %v5773
      %v5971 = vpop.f32.mrb[0].mxu0
      %v5972 = vadd.f32 0.0, %v5971
      %v5973 = vpop.f32.mrb[0].mxu0
      %v5974 = vpop.f32.mrb[0].mxu0
      %v5975 = vadd.f32 0.0, %v5974
      %v5976 = vpop.f32.mrb[0].mxu0
      %5977 = vmatprep.mubr.bf16.mxu0 0
      %5978 = vmatmul.mubr.bf16.gmra.mrb[0].mxu0 %v5774
      %v5979 = vpop.f32.mrb[0].mxu0
      %v5980 = vadd.f32 0.0, %v5979
      %v5981 = vpop.f32.mrb[0].mxu0
      %v5982 = vpop.f32.mrb[0].mxu0
      %v5983 = vadd.f32 0.0, %v5982
      %v5984 = vpop.f32.mrb[0].mxu0
      %5985 = vmatprep.mubr.bf16.mxu0 0
      %5986 = vmatmul.mubr.bf16.gmra.mrb[0].mxu0 %v5775
      %v5987 = vpop.f32.mrb[0].mxu0
      %v5988 = vadd.f32 0.0, %v5987
      %v5989 = vpop.f32.mrb[0].mxu0
      %v5990 = vpop.f32.mrb[0].mxu0
      %v5991 = vadd.f32 0.0, %v5990
      %v5992 = vpop.f32.mrb[0].mxu0
      %5993 = vmatprep.mubr.bf16.mxu0 0
      %5994 = vmatmul.mubr.bf16.gmra.mrb[0].mxu0 %v5776
      %v5995 = vpop.f32.mrb[0].mxu0
      %v5996 = vadd.f32 0.0, %v5995
      %v5997 = vpop.f32.mrb[0].mxu0
      %v5998 = vpop.f32.mrb[0].mxu0
      %v5999 = vadd.f32 0.0, %v5998
      %v6000 = vpop.f32.mrb[0].mxu0
      %6001 = vdwg.mxu0
      %v6002 = vadd.f32 %v5296, %v5876
      %v6003 = vadd.f32 %v5297, %v5879
      %v6004 = vadd.f32 %v5298, %v5884
      %v6005 = vadd.f32 %v5299, %v5887
      %v6006 = vadd.f32 %v5300, %v5892
      %v6007 = vadd.f32 %v5301, %v5895
      %v6008 = vadd.f32 %v5302, %v5900
      %v6009 = vadd.f32 %v5303, %v5903
      %v6010 = vadd.f32 %v5304, %v5908
      %v6011 = vadd.f32 %v5305, %v5911
      %v6012 = vadd.f32 %v5306, %v5916
      %v6013 = vadd.f32 %v5307, %v5919
      %v6014 = vadd.f32 %v5308, %v5924
      %v6015 = vadd.f32 %v5309, %v5927
      %v6016 = vadd.f32 %v5310, %v5932
      %v6017 = vadd.f32 %v5311, %v5935
      %v6018 = vadd.f32 %v5312, %v5940
      %v6019 = vadd.f32 %v5313, %v5943
      %v6020 = vadd.f32 %v5314, %v5948
      %v6021 = vadd.f32 %v5315, %v5951
      %v6022 = vadd.f32 %v5316, %v5956
      %v6023 = vadd.f32 %v5317, %v5959
      %v6024 = vadd.f32 %v5318, %v5964
      %v6025 = vadd.f32 %v5319, %v5967
      %v6026 = vadd.f32 %v5320, %v5972
      %v6027 = vadd.f32 %v5321, %v5975
      %v6028 = vadd.f32 %v5322, %v5980
      %v6029 = vadd.f32 %v5323, %v5983
      %v6030 = vadd.f32 %v5324, %v5988
      %v6031 = vadd.f32 %v5325, %v5991
      %v6032 = vadd.f32 %v5326, %v5996
      %v6033 = vadd.f32 %v5327, %v5999
      %6034 = vst [vmem:[#allocation3] sm:$0xff] %v6002
      %6035 = vst [vmem:[#allocation3 + $0x8] sm:$0xff] %v6003
      %6036 = vst [vmem:[#allocation3 + $0x10] sm:$0xff] %v6004
      %6037 = vst [vmem:[#allocation3 + $0x18] sm:$0xff] %v6005
      %6038 = vst [vmem:[#allocation3 + $0x20] sm:$0xff] %v6006
      %6039 = vst [vmem:[#allocation3 + $0x28] sm:$0xff] %v6007
      %6040 = vst [vmem:[#allocation3 + $0x30] sm:$0xff] %v6008
      %6041 = vst [vmem:[#allocation3 + $0x38] sm:$0xff] %v6009
      %6042 = vst [vmem:[#allocation3 + $0x40] sm:$0xff] %v6010
      %6043 = vst [vmem:[#allocation3 + $0x48] sm:$0xff] %v6011
      %6044 = vst [vmem:[#allocation3 + $0x50] sm:$0xff] %v6012
      %6045 = vst [vmem:[#allocation3 + $0x58] sm:$0xff] %v6013
      %6046 = vst [vmem:[#allocation3 + $0x60] sm:$0xff] %v6014
      %6047 = vst [vmem:[#allocation3 + $0x68] sm:$0xff] %v6015
      %6048 = vst [vmem:[#allocation3 + $0x70] sm:$0xff] %v6016
      %6049 = vst [vmem:[#allocation3 + $0x78] sm:$0xff] %v6017
      %6050 = vst [vmem:[#allocation3 + $0x80] sm:$0xff] %v6018
      %6051 = vst [vmem:[#allocation3 + $0x88] sm:$0xff] %v6019
      %6052 = vst [vmem:[#allocation3 + $0x90] sm:$0xff] %v6020
      %6053 = vst [vmem:[#allocation3 + $0x98] sm:$0xff] %v6021
      %6054 = vst [vmem:[#allocation3 + $0xa0] sm:$0xff] %v6022
      %6055 = vst [vmem:[#allocation3 + $0xa8] sm:$0xff] %v6023
      %6056 = vst [vmem:[#allocation3 + $0xb0] sm:$0xff] %v6024
      %6057 = vst [vmem:[#allocation3 + $0xb8] sm:$0xff] %v6025
      %6058 = vst [vmem:[#allocation3 + $0xc0] sm:$0xff] %v6026
      %6059 = vst [vmem:[#allocation3 + $0xc8] sm:$0xff] %v6027
      %6060 = vst [vmem:[#allocation3 + $0xd0] sm:$0xff] %v6028
      %6061 = vst [vmem:[#allocation3 + $0xd8] sm:$0xff] %v6029
      %6062 = vst [vmem:[#allocation3 + $0xe0] sm:$0xff] %v6030
      %6063 = vst [vmem:[#allocation3 + $0xe8] sm:$0xff] %v6031
      %6064 = vst [vmem:[#allocation3 + $0xf0] sm:$0xff] %v6032
      %6065 = vst [vmem:[#allocation3 + $0xf8] sm:$0xff] %v6033
      %v6066 = vld [vmem:[%s4797] sm:$0xe]
      %v6067 = vld [vmem:[%s4797 + $0x4] sm:$0xf]
      %v6068 = vld [vmem:[%s4797 + $0x8] sm:$0x1]
      %v6069 = vld [vmem:[%s4797 + $0xc] sm:$0xe]
      %v6070 = vld [vmem:[%s4797 + $0x10] sm:$0xf]
      %v6071 = vld [vmem:[%s4797 + $0x14] sm:$0x1]
      %v6072 = vld [vmem:[%s4797 + $0x18] sm:$0xe]
      %v6073 = vld [vmem:[%s4797 + $0x1c] sm:$0xf]
      %v6074 = vld [vmem:[%s4797 + $0x20] sm:$0x1]
      %v6075 = vld [vmem:[%s4797 + $0x24] sm:$0xe]
      %v6076 = vld [vmem:[%s4797 + $0x28] sm:$0xf]
      %v6077 = vld [vmem:[%s4797 + $0x2c] sm:$0x1]
      %v6078 = vld [vmem:[%s4797 + $0x30] sm:$0xe]
      %v6079 = vld [vmem:[%s4797 + $0x34] sm:$0xf]
      %v6080 = vld [vmem:[%s4797 + $0x38] sm:$0x1]
      %v6081 = vld [vmem:[%s4797 + $0x3c] sm:$0xe]
      %v6082 = vld [vmem:[%s4797 + $0x40] sm:$0xf]
      %v6083 = vld [vmem:[%s4797 + $0x44] sm:$0x1]
      %v6084 = vld [vmem:[%s4797 + $0x48] sm:$0xe]
      %v6085 = vld [vmem:[%s4797 + $0x4c] sm:$0xf]
      %v6086 = vld [vmem:[%s4797 + $0x50] sm:$0x1]
      %v6087 = vld [vmem:[%s4797 + $0x54] sm:$0xe]
      %v6088 = vld [vmem:[%s4797 + $0x58] sm:$0xf]
      %v6089 = vld [vmem:[%s4797 + $0x5c] sm:$0x1]
      %v6090 = vld [vmem:[%s4797 + $0x60] sm:$0xe]
      %v6091 = vld [vmem:[%s4797 + $0x64] sm:$0xf]
      %v6092 = vld [vmem:[%s4797 + $0x68] sm:$0x1]
      %v6093 = vld [vmem:[%s4797 + $0x6c] sm:$0xe]
      %v6094 = vld [vmem:[%s4797 + $0x70] sm:$0xf]
      %v6095 = vld [vmem:[%s4797 + $0x74] sm:$0x1]
      %v6096 = vld [vmem:[%s4797 + $0x78] sm:$0xe]
      %v6097 = vld [vmem:[%s4797 + $0x7c] sm:$0xf]
      %v6098 = vld [vmem:[%s4797 + $0x80] sm:$0x1]
      %v6099 = vld [vmem:[%s4797 + $0x84] sm:$0xe]
      %v6100 = vld [vmem:[%s4797 + $0x88] sm:$0xf]
      %v6101 = vld [vmem:[%s4797 + $0x8c] sm:$0x1]
      %v6102 = vld [vmem:[%s4797 + $0x90] sm:$0xe]
      %v6103 = vld [vmem:[%s4797 + $0x94] sm:$0xf]
      %v6104 = vld [vmem:[%s4797 + $0x98] sm:$0x1]
      %v6105 = vld [vmem:[%s4797 + $0x9c] sm:$0xe]
      %v6106 = vld [vmem:[%s4797 + $0xa0] sm:$0xf]
      %v6107 = vld [vmem:[%s4797 + $0xa4] sm:$0x1]
      %v6108 = vld [vmem:[%s4797 + $0xa8] sm:$0xe]
      %v6109 = vld [vmem:[%s4797 + $0xac] sm:$0xf]
      %v6110 = vld [vmem:[%s4797 + $0xb0] sm:$0x1]
      %v6111 = vld [vmem:[%s4797 + $0xb4] sm:$0xe]
      %v6112 = vld [vmem:[%s4797 + $0xb8] sm:$0xf]
      %v6113 = vld [vmem:[%s4797 + $0xbc] sm:$0x1]
      %v6114 = vld [vmem:[#allocation3] sm:$0xff]
      %v6115 = vld [vmem:[#allocation3 + $0x8] sm:$0xff]
      %v6116 = vld [vmem:[#allocation3 + $0x10] sm:$0xff]
      %v6117 = vld [vmem:[#allocation3 + $0x18] sm:$0xff]
      %v6118 = vld [vmem:[#allocation3 + $0x20] sm:$0xff]
      %v6119 = vld [vmem:[#allocation3 + $0x28] sm:$0xff]
      %v6120 = vld [vmem:[#allocation3 + $0x30] sm:$0xff]
      %v6121 = vld [vmem:[#allocation3 + $0x38] sm:$0xff]
      %v6122 = vld [vmem:[#allocation3 + $0x40] sm:$0xff]
      %v6123 = vld [vmem:[#allocation3 + $0x48] sm:$0xff]
      %v6124 = vld [vmem:[#allocation3 + $0x50] sm:$0xff]
      %v6125 = vld [vmem:[#allocation3 + $0x58] sm:$0xff]
      %v6126 = vld [vmem:[#allocation3 + $0x60] sm:$0xff]
      %v6127 = vld [vmem:[#allocation3 + $0x68] sm:$0xff]
      %v6128 = vld [vmem:[#allocation3 + $0x70] sm:$0xff]
      %v6129 = vld [vmem:[#allocation3 + $0x78] sm:$0xff]
      %v6130 = vld [vmem:[#allocation3 + $0x80] sm:$0xff]
      %v6131 = vld [vmem:[#allocation3 + $0x88] sm:$0xff]
      %v6132 = vld [vmem:[#allocation3 + $0x90] sm:$0xff]
      %v6133 = vld [vmem:[#allocation3 + $0x98] sm:$0xff]
      %v6134 = vld [vmem:[#allocation3 + $0xa0] sm:$0xff]
      %v6135 = vld [vmem:[#allocation3 + $0xa8] sm:$0xff]
      %v6136 = vld [vmem:[#allocation3 + $0xb0] sm:$0xff]
      %v6137 = vld [vmem:[#allocation3 + $0xb8] sm:$0xff]
      %v6138 = vld [vmem:[#allocation3 + $0xc0] sm:$0xff]
      %v6139 = vld [vmem:[#allocation3 + $0xc8] sm:$0xff]
      %v6140 = vld [vmem:[#allocation3 + $0xd0] sm:$0xff]
      %v6141 = vld [vmem:[#allocation3 + $0xd8] sm:$0xff]
      %v6142 = vld [vmem:[#allocation3 + $0xe0] sm:$0xff]
      %v6143 = vld [vmem:[#allocation3 + $0xe8] sm:$0xff]
      %v6144 = vld [vmem:[#allocation3 + $0xf0] sm:$0xff]
      %v6145 = vld [vmem:[#allocation3 + $0xf8] sm:$0xff]
      %v6194 = vrot.slane %v6066, 5
      %v6195 = vrot.slane %v6194, 4
      %v6196 = vrot.slane %v6067, 5
      %v6197 = vsel %vm2468, %v6195, %v6196
      %v6198 = vrot.slane %v6196, 4
      %v6199 = vrot.slane %v6068, 5
      %v6200 = vsel %vm2468, %v6198, %v6199
      %v6201 = vrot.slane %v6069, 5
      %v6202 = vrot.slane %v6201, 4
      %v6203 = vrot.slane %v6070, 5
      %v6204 = vsel %vm2468, %v6202, %v6203
      %v6205 = vrot.slane %v6203, 4
      %v6206 = vrot.slane %v6071, 5
      %v6207 = vsel %vm2468, %v6205, %v6206
      %v6208 = vrot.slane %v6072, 5
      %v6209 = vrot.slane %v6208, 4
      %v6210 = vrot.slane %v6073, 5
      %v6211 = vsel %vm2468, %v6209, %v6210
      %v6212 = vrot.slane %v6210, 4
      %v6213 = vrot.slane %v6074, 5
      %v6214 = vsel %vm2468, %v6212, %v6213
      %v6215 = vrot.slane %v6075, 5
      %v6216 = vrot.slane %v6215, 4
      %v6217 = vrot.slane %v6076, 5
      %v6218 = vsel %vm2468, %v6216, %v6217
      %v6219 = vrot.slane %v6217, 4
      %v6220 = vrot.slane %v6077, 5
      %v6221 = vsel %vm2468, %v6219, %v6220
      %v6222 = vrot.slane %v6078, 5
      %v6223 = vrot.slane %v6222, 4
      %v6224 = vrot.slane %v6079, 5
      %v6225 = vsel %vm2468, %v6223, %v6224
      %v6226 = vrot.slane %v6224, 4
      %v6227 = vrot.slane %v6080, 5
      %v6228 = vsel %vm2468, %v6226, %v6227
      %v6229 = vrot.slane %v6081, 5
      %v6230 = vrot.slane %v6229, 4
      %v6231 = vrot.slane %v6082, 5
      %v6232 = vsel %vm2468, %v6230, %v6231
      %v6233 = vrot.slane %v6231, 4
      %v6234 = vrot.slane %v6083, 5
      %v6235 = vsel %vm2468, %v6233, %v6234
      %v6236 = vrot.slane %v6084, 5
      %v6237 = vrot.slane %v6236, 4
      %v6238 = vrot.slane %v6085, 5
      %v6239 = vsel %vm2468, %v6237, %v6238
      %v6240 = vrot.slane %v6238, 4
      %v6241 = vrot.slane %v6086, 5
      %v6242 = vsel %vm2468, %v6240, %v6241
      %v6243 = vrot.slane %v6087, 5
      %v6244 = vrot.slane %v6243, 4
      %v6245 = vrot.slane %v6088, 5
      %v6246 = vsel %vm2468, %v6244, %v6245
      %v6247 = vrot.slane %v6245, 4
      %v6248 = vrot.slane %v6089, 5
      %v6249 = vsel %vm2468, %v6247, %v6248
      %v6250 = vrot.slane %v6090, 5
      %v6251 = vrot.slane %v6250, 4
      %v6252 = vrot.slane %v6091, 5
      %v6253 = vsel %vm2468, %v6251, %v6252
      %v6254 = vrot.slane %v6252, 4
      %v6255 = vrot.slane %v6092, 5
      %v6256 = vsel %vm2468, %v6254, %v6255
      %v6257 = vrot.slane %v6093, 5
      %v6258 = vrot.slane %v6257, 4
      %v6259 = vrot.slane %v6094, 5
      %v6260 = vsel %vm2468, %v6258, %v6259
      %v6261 = vrot.slane %v6259, 4
      %v6262 = vrot.slane %v6095, 5
      %v6263 = vsel %vm2468, %v6261, %v6262
      %v6264 = vrot.slane %v6096, 5
      %v6265 = vrot.slane %v6264, 4
      %v6266 = vrot.slane %v6097, 5
      %v6267 = vsel %vm2468, %v6265, %v6266
      %v6268 = vrot.slane %v6266, 4
      %v6269 = vrot.slane %v6098, 5
      %v6270 = vsel %vm2468, %v6268, %v6269
      %v6271 = vrot.slane %v6099, 5
      %v6272 = vrot.slane %v6271, 4
      %v6273 = vrot.slane %v6100, 5
      %v6274 = vsel %vm2468, %v6272, %v6273
      %v6275 = vrot.slane %v6273, 4
      %v6276 = vrot.slane %v6101, 5
      %v6277 = vsel %vm2468, %v6275, %v6276
      %v6278 = vrot.slane %v6102, 5
      %v6279 = vrot.slane %v6278, 4
      %v6280 = vrot.slane %v6103, 5
      %v6281 = vsel %vm2468, %v6279, %v6280
      %v6282 = vrot.slane %v6280, 4
      %v6283 = vrot.slane %v6104, 5
      %v6284 = vsel %vm2468, %v6282, %v6283
      %v6285 = vrot.slane %v6105, 5
      %v6286 = vrot.slane %v6285, 4
      %v6287 = vrot.slane %v6106, 5
      %v6288 = vsel %vm2468, %v6286, %v6287
      %v6289 = vrot.slane %v6287, 4
      %v6290 = vrot.slane %v6107, 5
      %v6291 = vsel %vm2468, %v6289, %v6290
      %v6292 = vrot.slane %v6108, 5
      %v6293 = vrot.slane %v6292, 4
      %v6294 = vrot.slane %v6109, 5
      %v6295 = vsel %vm2468, %v6293, %v6294
      %v6296 = vrot.slane %v6294, 4
      %v6297 = vrot.slane %v6110, 5
      %v6298 = vsel %vm2468, %v6296, %v6297
      %v6299 = vrot.slane %v6111, 5
      %v6300 = vrot.slane %v6299, 4
      %v6301 = vrot.slane %v6112, 5
      %v6302 = vsel %vm2468, %v6300, %v6301
      %v6303 = vrot.slane %v6301, 4
      %v6304 = vrot.slane %v6113, 5
      %v6305 = vsel %vm2468, %v6303, %v6304
      %s6306 = scalar_lea.vmem %s3, 512
      %v6307 = vld [vmem:[%s6306] sm:$0xf]
      %v6308 = vld [vmem:[%s6306 + $0x4] sm:$0xf]
      %v6309 = vld [vmem:[%s6306 + $0x8] sm:$0xf]
      %v6310 = vld [vmem:[%s6306 + $0xc] sm:$0xf]
      %v6311 = vld [vmem:[%s6306 + $0x10] sm:$0xf]
      %v6312 = vld [vmem:[%s6306 + $0x14] sm:$0xf]
      %v6313 = vld [vmem:[%s6306 + $0x18] sm:$0xf]
      %v6314 = vld [vmem:[%s6306 + $0x1c] sm:$0xf]
      %v6315 = vld [vmem:[%s6306 + $0x20] sm:$0xf]
      %v6316 = vld [vmem:[%s6306 + $0x24] sm:$0xf]
      %v6317 = vld [vmem:[%s6306 + $0x28] sm:$0xf]
      %v6318 = vld [vmem:[%s6306 + $0x2c] sm:$0xf]
      %v6319 = vld [vmem:[%s6306 + $0x30] sm:$0xf]
      %v6320 = vld [vmem:[%s6306 + $0x34] sm:$0xf]
      %v6321 = vld [vmem:[%s6306 + $0x38] sm:$0xf]
      %v6322 = vld [vmem:[%s6306 + $0x3c] sm:$0xf]
      %v6323 = vunpack.c.l.b16 %v6197
      %v6324 = vunpack.c.l.b16 %v6200
      %v6325 = vunpack.c.l.b16 %v6204
      %v6326 = vunpack.c.l.b16 %v6207
      %v6327 = vunpack.c.l.b16 %v6211
      %v6328 = vunpack.c.l.b16 %v6214
      %v6329 = vunpack.c.l.b16 %v6218
      %v6330 = vunpack.c.l.b16 %v6221
      %v6331 = vunpack.c.l.b16 %v6225
      %v6332 = vunpack.c.l.b16 %v6228
      %v6333 = vunpack.c.l.b16 %v6232
      %v6334 = vunpack.c.l.b16 %v6235
      %v6335 = vunpack.c.l.b16 %v6239
      %v6336 = vunpack.c.l.b16 %v6242
      %v6337 = vunpack.c.l.b16 %v6246
      %v6338 = vunpack.c.l.b16 %v6249
      %v6339 = vunpack.c.l.b16 %v6253
      %v6340 = vunpack.c.l.b16 %v6256
      %v6341 = vunpack.c.l.b16 %v6260
      %v6342 = vunpack.c.l.b16 %v6263
      %v6343 = vunpack.c.l.b16 %v6267
      %v6344 = vunpack.c.l.b16 %v6270
      %v6345 = vunpack.c.l.b16 %v6274
      %v6346 = vunpack.c.l.b16 %v6277
      %v6347 = vunpack.c.l.b16 %v6281
      %v6348 = vunpack.c.l.b16 %v6284
      %v6349 = vunpack.c.l.b16 %v6288
      %v6350 = vunpack.c.l.b16 %v6291
      %v6351 = vunpack.c.l.b16 %v6295
      %v6352 = vunpack.c.l.b16 %v6298
      %v6353 = vunpack.c.l.b16 %v6302
      %v6354 = vunpack.c.l.b16 %v6305
      %v6355 = vpack.c.b16 %v6324, %v6323
      %v6356 = vpack.c.b16 %v6326, %v6325
      %v6357 = vpack.c.b16 %v6328, %v6327
      %v6358 = vpack.c.b16 %v6330, %v6329
      %v6359 = vpack.c.b16 %v6332, %v6331
      %v6360 = vpack.c.b16 %v6334, %v6333
      %v6361 = vpack.c.b16 %v6336, %v6335
      %v6362 = vpack.c.b16 %v6338, %v6337
      %v6363 = vpack.c.b16 %v6340, %v6339
      %v6364 = vpack.c.b16 %v6342, %v6341
      %v6365 = vpack.c.b16 %v6344, %v6343
      %v6366 = vpack.c.b16 %v6346, %v6345
      %v6367 = vpack.c.b16 %v6348, %v6347
      %v6368 = vpack.c.b16 %v6350, %v6349
      %v6369 = vpack.c.b16 %v6352, %v6351
      %v6370 = vpack.c.b16 %v6354, %v6353
      %v6403 = vunpack.c.l.b16 %v6307
      %v6404 = vunpack.c.l.b16 %v6308
      %v6405 = vunpack.c.l.b16 %v6309
      %v6406 = vunpack.c.l.b16 %v6310
      %v6407 = vunpack.c.l.b16 %v6311
      %v6408 = vunpack.c.l.b16 %v6312
      %v6409 = vunpack.c.l.b16 %v6313
      %v6410 = vunpack.c.l.b16 %v6314
      %v6411 = vunpack.c.l.b16 %v6315
      %v6412 = vunpack.c.l.b16 %v6316
      %v6413 = vunpack.c.l.b16 %v6317
      %v6414 = vunpack.c.l.b16 %v6318
      %v6415 = vunpack.c.l.b16 %v6319
      %v6416 = vunpack.c.l.b16 %v6320
      %v6417 = vunpack.c.l.b16 %v6321
      %v6418 = vunpack.c.l.b16 %v6322
      %v6419 = vpack.c.b16 %v6404, %v6403
      %v6420 = vpack.c.b16 %v6406, %v6405
      %v6421 = vpack.c.b16 %v6408, %v6407
      %v6422 = vpack.c.b16 %v6410, %v6409
      %v6423 = vpack.c.b16 %v6412, %v6411
      %v6424 = vpack.c.b16 %v6414, %v6413
      %v6425 = vpack.c.b16 %v6416, %v6415
      %v6426 = vpack.c.b16 %v6418, %v6417
      %6435 = vmatprep.subr.bf16.mxu0 0
      %6436 = vmatpush1.bf16.msra.mxu0 %v6419
      %6437 = vmatprep.subr.bf16.mxu0 0
      %6438 = vmatpush1.bf16.msra.mxu0 %v6420
      %6439 = vmatprep.subr.bf16.mxu0 0
      %6440 = vmatpush1.bf16.msra.mxu0 %v6421
      %6441 = vmatprep.subr.bf16.mxu0 0
      %6442 = vmatpush1.bf16.msra.mxu0 %v6422
      %6443 = vmatprep.subr.bf16.mxu0 0
      %6444 = vmatpush1.bf16.msra.mxu0 %v6423
      %6445 = vmatprep.subr.bf16.mxu0 0
      %6446 = vmatpush1.bf16.msra.mxu0 %v6424
      %6447 = vmatprep.subr.bf16.mxu0 0
      %6448 = vmatpush1.bf16.msra.mxu0 %v6425
      %6449 = vmatprep.subr.bf16.mxu0 0
      %6450 = vmatpush1.bf16.msra.mxu0 %v6426
      %6451 = vmatprep.subr.bf16.mxu0 0
      %6452 = vmatpush1.bf16.msra.mxu0 0
      %6453 = vmatprep.subr.bf16.mxu0 0
      %6454 = vmatpush1.bf16.msra.mxu0 0
      %6455 = vmatprep.subr.bf16.mxu0 0
      %6456 = vmatpush1.bf16.msra.mxu0 0
      %6457 = vmatprep.subr.bf16.mxu0 0
      %6458 = vmatpush1.bf16.msra.mxu0 0
      %6459 = vmatprep.subr.bf16.mxu0 0
      %6460 = vmatpush1.bf16.msra.mxu0 0
      %6461 = vmatprep.subr.bf16.mxu0 0
      %6462 = vmatpush1.bf16.msra.mxu0 0
      %6463 = vmatprep.subr.bf16.mxu0 0
      %6464 = vmatpush1.bf16.msra.mxu0 0
      %6465 = vmatprep.subr.bf16.mxu0 0
      %6466 = vmatpush1.bf16.msra.mxu0 0
      %6467 = vmatprep.mubr.bf16.mxu0 0
      %6468 = vmatmul.mubr.bf16.gmra.mrb[0].mxu0 %v6355
      %v6469 = vpop.f32.mrb[0].mxu0
      %v6470 = vadd.f32 0.0, %v6469
      %v6471 = vpop.f32.mrb[0].mxu0
      %v6472 = vpop.f32.mrb[0].mxu0
      %v6473 = vadd.f32 0.0, %v6472
      %v6474 = vpop.f32.mrb[0].mxu0
      %6475 = vmatprep.mubr.bf16.mxu0 0
      %6476 = vmatmul.mubr.bf16.gmra.mrb[0].mxu0 %v6356
      %v6477 = vpop.f32.mrb[0].mxu0
      %v6478 = vadd.f32 0.0, %v6477
      %v6479 = vpop.f32.mrb[0].mxu0
      %v6480 = vpop.f32.mrb[0].mxu0
      %v6481 = vadd.f32 0.0, %v6480
      %v6482 = vpop.f32.mrb[0].mxu0
      %6483 = vmatprep.mubr.bf16.mxu0 0
      %6484 = vmatmul.mubr.bf16.gmra.mrb[0].mxu0 %v6357
      %v6485 = vpop.f32.mrb[0].mxu0
      %v6486 = vadd.f32 0.0, %v6485
      %v6487 = vpop.f32.mrb[0].mxu0
      %v6488 = vpop.f32.mrb[0].mxu0
      %v6489 = vadd.f32 0.0, %v6488
      %v6490 = vpop.f32.mrb[0].mxu0
      %6491 = vmatprep.mubr.bf16.mxu0 0
      %6492 = vmatmul.mubr.bf16.gmra.mrb[0].mxu0 %v6358
      %v6493 = vpop.f32.mrb[0].mxu0
      %v6494 = vadd.f32 0.0, %v6493
      %v6495 = vpop.f32.mrb[0].mxu0
      %v6496 = vpop.f32.mrb[0].mxu0
      %v6497 = vadd.f32 0.0, %v6496
      %v6498 = vpop.f32.mrb[0].mxu0
      %6499 = vmatprep.mubr.bf16.mxu0 0
      %6500 = vmatmul.mubr.bf16.gmra.mrb[0].mxu0 %v6359
      %v6501 = vpop.f32.mrb[0].mxu0
      %v6502 = vadd.f32 0.0, %v6501
      %v6503 = vpop.f32.mrb[0].mxu0
      %v6504 = vpop.f32.mrb[0].mxu0
      %v6505 = vadd.f32 0.0, %v6504
      %v6506 = vpop.f32.mrb[0].mxu0
      %6507 = vmatprep.mubr.bf16.mxu0 0
      %6508 = vmatmul.mubr.bf16.gmra.mrb[0].mxu0 %v6360
      %v6509 = vpop.f32.mrb[0].mxu0
      %v6510 = vadd.f32 0.0, %v6509
      %v6511 = vpop.f32.mrb[0].mxu0
      %v6512 = vpop.f32.mrb[0].mxu0
      %v6513 = vadd.f32 0.0, %v6512
      %v6514 = vpop.f32.mrb[0].mxu0
      %6515 = vmatprep.mubr.bf16.mxu0 0
      %6516 = vmatmul.mubr.bf16.gmra.mrb[0].mxu0 %v6361
      %v6517 = vpop.f32.mrb[0].mxu0
      %v6518 = vadd.f32 0.0, %v6517
      %v6519 = vpop.f32.mrb[0].mxu0
      %v6520 = vpop.f32.mrb[0].mxu0
      %v6521 = vadd.f32 0.0, %v6520
      %v6522 = vpop.f32.mrb[0].mxu0
      %6523 = vmatprep.mubr.bf16.mxu0 0
      %6524 = vmatmul.mubr.bf16.gmra.mrb[0].mxu0 %v6362
      %v6525 = vpop.f32.mrb[0].mxu0
      %v6526 = vadd.f32 0.0, %v6525
      %v6527 = vpop.f32.mrb[0].mxu0
      %v6528 = vpop.f32.mrb[0].mxu0
      %v6529 = vadd.f32 0.0, %v6528
      %v6530 = vpop.f32.mrb[0].mxu0
      %6531 = vmatprep.mubr.bf16.mxu0 0
      %6532 = vmatmul.mubr.bf16.gmra.mrb[0].mxu0 %v6363
      %v6533 = vpop.f32.mrb[0].mxu0
      %v6534 = vadd.f32 0.0, %v6533
      %v6535 = vpop.f32.mrb[0].mxu0
      %v6536 = vpop.f32.mrb[0].mxu0
      %v6537 = vadd.f32 0.0, %v6536
      %v6538 = vpop.f32.mrb[0].mxu0
      %6539 = vmatprep.mubr.bf16.mxu0 0
      %6540 = vmatmul.mubr.bf16.gmra.mrb[0].mxu0 %v6364
      %v6541 = vpop.f32.mrb[0].mxu0
      %v6542 = vadd.f32 0.0, %v6541
      %v6543 = vpop.f32.mrb[0].mxu0
      %v6544 = vpop.f32.mrb[0].mxu0
      %v6545 = vadd.f32 0.0, %v6544
      %v6546 = vpop.f32.mrb[0].mxu0
      %6547 = vmatprep.mubr.bf16.mxu0 0
      %6548 = vmatmul.mubr.bf16.gmra.mrb[0].mxu0 %v6365
      %v6549 = vpop.f32.mrb[0].mxu0
      %v6550 = vadd.f32 0.0, %v6549
      %v6551 = vpop.f32.mrb[0].mxu0
      %v6552 = vpop.f32.mrb[0].mxu0
      %v6553 = vadd.f32 0.0, %v6552
      %v6554 = vpop.f32.mrb[0].mxu0
      %6555 = vmatprep.mubr.bf16.mxu0 0
      %6556 = vmatmul.mubr.bf16.gmra.mrb[0].mxu0 %v6366
      %v6557 = vpop.f32.mrb[0].mxu0
      %v6558 = vadd.f32 0.0, %v6557
      %v6559 = vpop.f32.mrb[0].mxu0
      %v6560 = vpop.f32.mrb[0].mxu0
      %v6561 = vadd.f32 0.0, %v6560
      %v6562 = vpop.f32.mrb[0].mxu0
      %6563 = vmatprep.mubr.bf16.mxu0 0
      %6564 = vmatmul.mubr.bf16.gmra.mrb[0].mxu0 %v6367
      %v6565 = vpop.f32.mrb[0].mxu0
      %v6566 = vadd.f32 0.0, %v6565
      %v6567 = vpop.f32.mrb[0].mxu0
      %v6568 = vpop.f32.mrb[0].mxu0
      %v6569 = vadd.f32 0.0, %v6568
      %v6570 = vpop.f32.mrb[0].mxu0
      %6571 = vmatprep.mubr.bf16.mxu0 0
      %6572 = vmatmul.mubr.bf16.gmra.mrb[0].mxu0 %v6368
      %v6573 = vpop.f32.mrb[0].mxu0
      %v6574 = vadd.f32 0.0, %v6573
      %v6575 = vpop.f32.mrb[0].mxu0
      %v6576 = vpop.f32.mrb[0].mxu0
      %v6577 = vadd.f32 0.0, %v6576
      %v6578 = vpop.f32.mrb[0].mxu0
      %6579 = vmatprep.mubr.bf16.mxu0 0
      %6580 = vmatmul.mubr.bf16.gmra.mrb[0].mxu0 %v6369
      %v6581 = vpop.f32.mrb[0].mxu0
      %v6582 = vadd.f32 0.0, %v6581
      %v6583 = vpop.f32.mrb[0].mxu0
      %v6584 = vpop.f32.mrb[0].mxu0
      %v6585 = vadd.f32 0.0, %v6584
      %v6586 = vpop.f32.mrb[0].mxu0
      %6587 = vmatprep.mubr.bf16.mxu0 0
      %6588 = vmatmul.mubr.bf16.gmra.mrb[0].mxu0 %v6370
      %v6589 = vpop.f32.mrb[0].mxu0
      %v6590 = vadd.f32 0.0, %v6589
      %v6591 = vpop.f32.mrb[0].mxu0
      %v6592 = vpop.f32.mrb[0].mxu0
      %v6593 = vadd.f32 0.0, %v6592
      %v6594 = vpop.f32.mrb[0].mxu0
      %6595 = vdwg.mxu0
      %v6596 = vadd.f32 %v6114, %v6470
      %v6597 = vadd.f32 %v6115, %v6473
      %v6598 = vadd.f32 %v6116, %v6478
      %v6599 = vadd.f32 %v6117, %v6481
      %v6600 = vadd.f32 %v6118, %v6486
      %v6601 = vadd.f32 %v6119, %v6489
      %v6602 = vadd.f32 %v6120, %v6494
      %v6603 = vadd.f32 %v6121, %v6497
      %v6604 = vadd.f32 %v6122, %v6502
      %v6605 = vadd.f32 %v6123, %v6505
      %v6606 = vadd.f32 %v6124, %v6510
      %v6607 = vadd.f32 %v6125, %v6513
      %v6608 = vadd.f32 %v6126, %v6518
      %v6609 = vadd.f32 %v6127, %v6521
      %v6610 = vadd.f32 %v6128, %v6526
      %v6611 = vadd.f32 %v6129, %v6529
      %v6612 = vadd.f32 %v6130, %v6534
      %v6613 = vadd.f32 %v6131, %v6537
      %v6614 = vadd.f32 %v6132, %v6542
      %v6615 = vadd.f32 %v6133, %v6545
      %v6616 = vadd.f32 %v6134, %v6550
      %v6617 = vadd.f32 %v6135, %v6553
      %v6618 = vadd.f32 %v6136, %v6558
      %v6619 = vadd.f32 %v6137, %v6561
      %v6620 = vadd.f32 %v6138, %v6566
      %v6621 = vadd.f32 %v6139, %v6569
      %v6622 = vadd.f32 %v6140, %v6574
      %v6623 = vadd.f32 %v6141, %v6577
      %v6624 = vadd.f32 %v6142, %v6582
      %v6625 = vadd.f32 %v6143, %v6585
      %v6626 = vadd.f32 %v6144, %v6590
      %v6627 = vadd.f32 %v6145, %v6593
      %6628 = vst [vmem:[#allocation3] sm:$0xff] %v6596
      %6629 = vst [vmem:[#allocation3 + $0x8] sm:$0xff] %v6597
      %6630 = vst [vmem:[#allocation3 + $0x10] sm:$0xff] %v6598
      %6631 = vst [vmem:[#allocation3 + $0x18] sm:$0xff] %v6599
      %6632 = vst [vmem:[#allocation3 + $0x20] sm:$0xff] %v6600
      %6633 = vst [vmem:[#allocation3 + $0x28] sm:$0xff] %v6601
      %6634 = vst [vmem:[#allocation3 + $0x30] sm:$0xff] %v6602
      %6635 = vst [vmem:[#allocation3 + $0x38] sm:$0xff] %v6603
      %6636 = vst [vmem:[#allocation3 + $0x40] sm:$0xff] %v6604
      %6637 = vst [vmem:[#allocation3 + $0x48] sm:$0xff] %v6605
      %6638 = vst [vmem:[#allocation3 + $0x50] sm:$0xff] %v6606
      %6639 = vst [vmem:[#allocation3 + $0x58] sm:$0xff] %v6607
      %6640 = vst [vmem:[#allocation3 + $0x60] sm:$0xff] %v6608
      %6641 = vst [vmem:[#allocation3 + $0x68] sm:$0xff] %v6609
      %6642 = vst [vmem:[#allocation3 + $0x70] sm:$0xff] %v6610
      %6643 = vst [vmem:[#allocation3 + $0x78] sm:$0xff] %v6611
      %6644 = vst [vmem:[#allocation3 + $0x80] sm:$0xff] %v6612
      %6645 = vst [vmem:[#allocation3 + $0x88] sm:$0xff] %v6613
      %6646 = vst [vmem:[#allocation3 + $0x90] sm:$0xff] %v6614
      %6647 = vst [vmem:[#allocation3 + $0x98] sm:$0xff] %v6615
      %6648 = vst [vmem:[#allocation3 + $0xa0] sm:$0xff] %v6616
      %6649 = vst [vmem:[#allocation3 + $0xa8] sm:$0xff] %v6617
      %6650 = vst [vmem:[#allocation3 + $0xb0] sm:$0xff] %v6618
      %6651 = vst [vmem:[#allocation3 + $0xb8] sm:$0xff] %v6619
      %6652 = vst [vmem:[#allocation3 + $0xc0] sm:$0xff] %v6620
      %6653 = vst [vmem:[#allocation3 + $0xc8] sm:$0xff] %v6621
      %6654 = vst [vmem:[#allocation3 + $0xd0] sm:$0xff] %v6622
      %6655 = vst [vmem:[#allocation3 + $0xd8] sm:$0xff] %v6623
      %6656 = vst [vmem:[#allocation3 + $0xe0] sm:$0xff] %v6624
      %6657 = vst [vmem:[#allocation3 + $0xe8] sm:$0xff] %v6625
      %6658 = vst [vmem:[#allocation3 + $0xf0] sm:$0xff] %v6626
      %6659 = vst [vmem:[#allocation3 + $0xf8] sm:$0xff] %v6627
      %v6660 = vld [vmem:[#allocation3] sm:$0xff]
      %v6661 = vld [vmem:[#allocation3 + $0x8] sm:$0xff]
      %v6662 = vld [vmem:[#allocation3 + $0x10] sm:$0xff]
      %v6663 = vld [vmem:[#allocation3 + $0x18] sm:$0xff]
      %v6664 = vld [vmem:[#allocation3 + $0x20] sm:$0xff]
      %v6665 = vld [vmem:[#allocation3 + $0x28] sm:$0xff]
      %v6666 = vld [vmem:[#allocation3 + $0x30] sm:$0xff]
      %v6667 = vld [vmem:[#allocation3 + $0x38] sm:$0xff]
      %v6668 = vld [vmem:[#allocation3 + $0x40] sm:$0xff]
      %v6669 = vld [vmem:[#allocation3 + $0x48] sm:$0xff]
      %v6670 = vld [vmem:[#allocation3 + $0x50] sm:$0xff]
      %v6671 = vld [vmem:[#allocation3 + $0x58] sm:$0xff]
      %v6672 = vld [vmem:[#allocation3 + $0x60] sm:$0xff]
      %v6673 = vld [vmem:[#allocation3 + $0x68] sm:$0xff]
      %v6674 = vld [vmem:[#allocation3 + $0x70] sm:$0xff]
      %v6675 = vld [vmem:[#allocation3 + $0x78] sm:$0xff]
      %v6676 = vld [vmem:[#allocation3 + $0x80] sm:$0xff]
      %v6677 = vld [vmem:[#allocation3 + $0x88] sm:$0xff]
      %v6678 = vld [vmem:[#allocation3 + $0x90] sm:$0xff]
      %v6679 = vld [vmem:[#allocation3 + $0x98] sm:$0xff]
      %v6680 = vld [vmem:[#allocation3 + $0xa0] sm:$0xff]
      %v6681 = vld [vmem:[#allocation3 + $0xa8] sm:$0xff]
      %v6682 = vld [vmem:[#allocation3 + $0xb0] sm:$0xff]
      %v6683 = vld [vmem:[#allocation3 + $0xb8] sm:$0xff]
      %v6684 = vld [vmem:[#allocation3 + $0xc0] sm:$0xff]
      %v6685 = vld [vmem:[#allocation3 + $0xc8] sm:$0xff]
      %v6686 = vld [vmem:[#allocation3 + $0xd0] sm:$0xff]
      %v6687 = vld [vmem:[#allocation3 + $0xd8] sm:$0xff]
      %v6688 = vld [vmem:[#allocation3 + $0xe0] sm:$0xff]
      %v6689 = vld [vmem:[#allocation3 + $0xe8] sm:$0xff]
      %v6690 = vld [vmem:[#allocation3 + $0xf0] sm:$0xff]
      %v6691 = vld [vmem:[#allocation3 + $0xf8] sm:$0xff]
      %v6692 = vpack.c.bf16 %v6661, %v6660
      %v6693 = vpack.c.bf16 %v6663, %v6662
      %v6694 = vpack.c.bf16 %v6665, %v6664
      %v6695 = vpack.c.bf16 %v6667, %v6666
      %v6696 = vpack.c.bf16 %v6669, %v6668
      %v6697 = vpack.c.bf16 %v6671, %v6670
      %v6698 = vpack.c.bf16 %v6673, %v6672
      %v6699 = vpack.c.bf16 %v6675, %v6674
      %v6700 = vpack.c.bf16 %v6677, %v6676
      %v6701 = vpack.c.bf16 %v6679, %v6678
      %v6702 = vpack.c.bf16 %v6681, %v6680
      %v6703 = vpack.c.bf16 %v6683, %v6682
      %v6704 = vpack.c.bf16 %v6685, %v6684
      %v6705 = vpack.c.bf16 %v6687, %v6686
      %v6706 = vpack.c.bf16 %v6689, %v6688
      %v6707 = vpack.c.bf16 %v6691, %v6690
      %v6724 = vunpack.c.l.b16 %v6692
      %v6725 = vunpack.c.h.b16 %v6692
      %v6726 = vunpack.c.l.b16 %v6693
      %v6727 = vunpack.c.h.b16 %v6693
      %v6728 = vunpack.c.l.b16 %v6694
      %v6729 = vunpack.c.h.b16 %v6694
      %v6730 = vunpack.c.l.b16 %v6695
      %v6731 = vunpack.c.h.b16 %v6695
      %v6732 = vunpack.c.l.b16 %v6696
      %v6733 = vunpack.c.h.b16 %v6696
      %v6734 = vunpack.c.l.b16 %v6697
      %v6735 = vunpack.c.h.b16 %v6697
      %v6736 = vunpack.c.l.b16 %v6698
      %v6737 = vunpack.c.h.b16 %v6698
      %v6738 = vunpack.c.l.b16 %v6699
      %v6739 = vunpack.c.h.b16 %v6699
      %v6740 = vunpack.c.l.b16 %v6700
      %v6741 = vunpack.c.h.b16 %v6700
      %v6742 = vunpack.c.l.b16 %v6701
      %v6743 = vunpack.c.h.b16 %v6701
      %v6744 = vunpack.c.l.b16 %v6702
      %v6745 = vunpack.c.h.b16 %v6702
      %v6746 = vunpack.c.l.b16 %v6703
      %v6747 = vunpack.c.h.b16 %v6703
      %v6748 = vunpack.c.l.b16 %v6704
      %v6749 = vunpack.c.h.b16 %v6704
      %v6750 = vunpack.c.l.b16 %v6705
      %v6751 = vunpack.c.h.b16 %v6705
      %v6752 = vunpack.c.l.b16 %v6706
      %v6753 = vunpack.c.h.b16 %v6706
      %v6754 = vunpack.c.l.b16 %v6707
      %v6755 = vunpack.c.h.b16 %v6707
      %v6756 = vpack.c.b16 %v6724, %v6724
      %v6757 = vpack.c.b16 %v6725, %v6725
      %v6758 = vpack.c.b16 %v6726, %v6726
      %v6759 = vpack.c.b16 %v6727, %v6727
      %v6760 = vpack.c.b16 %v6728, %v6728
      %v6761 = vpack.c.b16 %v6729, %v6729
      %v6762 = vpack.c.b16 %v6730, %v6730
      %v6763 = vpack.c.b16 %v6731, %v6731
      %v6764 = vpack.c.b16 %v6732, %v6732
      %v6765 = vpack.c.b16 %v6733, %v6733
      %v6766 = vpack.c.b16 %v6734, %v6734
      %v6767 = vpack.c.b16 %v6735, %v6735
      %v6768 = vpack.c.b16 %v6736, %v6736
      %v6769 = vpack.c.b16 %v6737, %v6737
      %v6770 = vpack.c.b16 %v6738, %v6738
      %v6771 = vpack.c.b16 %v6739, %v6739
      %v6772 = vpack.c.b16 %v6740, %v6740
      %v6773 = vpack.c.b16 %v6741, %v6741
      %v6774 = vpack.c.b16 %v6742, %v6742
      %v6775 = vpack.c.b16 %v6743, %v6743
      %v6776 = vpack.c.b16 %v6744, %v6744
      %v6777 = vpack.c.b16 %v6745, %v6745
      %v6778 = vpack.c.b16 %v6746, %v6746
      %v6779 = vpack.c.b16 %v6747, %v6747
      %v6780 = vpack.c.b16 %v6748, %v6748
      %v6781 = vpack.c.b16 %v6749, %v6749
      %v6782 = vpack.c.b16 %v6750, %v6750
      %v6783 = vpack.c.b16 %v6751, %v6751
      %v6784 = vpack.c.b16 %v6752, %v6752
      %v6785 = vpack.c.b16 %v6753, %v6753
      %v6786 = vpack.c.b16 %v6754, %v6754
      %v6787 = vpack.c.b16 %v6755, %v6755
      %6820 = vst [vmem:[%s262] sm:$0xf] %v6756
      %6821 = vst [vmem:[%s262 + $0x4] sm:$0xf] %v6757
      %6822 = vst [vmem:[%s262 + $0x8] sm:$0xf] %v6758
      %6823 = vst [vmem:[%s262 + $0xc] sm:$0xf] %v6759
      %6824 = vst [vmem:[%s262 + $0x10] sm:$0xf] %v6760
      %6825 = vst [vmem:[%s262 + $0x14] sm:$0xf] %v6761
      %6826 = vst [vmem:[%s262 + $0x18] sm:$0xf] %v6762
      %6827 = vst [vmem:[%s262 + $0x1c] sm:$0xf] %v6763
      %6828 = vst [vmem:[%s262 + $0x20] sm:$0xf] %v6764
      %6829 = vst [vmem:[%s262 + $0x24] sm:$0xf] %v6765
      %6830 = vst [vmem:[%s262 + $0x28] sm:$0xf] %v6766
      %6831 = vst [vmem:[%s262 + $0x2c] sm:$0xf] %v6767
      %6832 = vst [vmem:[%s262 + $0x30] sm:$0xf] %v6768
      %6833 = vst [vmem:[%s262 + $0x34] sm:$0xf] %v6769
      %6834 = vst [vmem:[%s262 + $0x38] sm:$0xf] %v6770
      %6835 = vst [vmem:[%s262 + $0x3c] sm:$0xf] %v6771
      %6836 = vst [vmem:[%s262 + $0x40] sm:$0xf] %v6772
      %6837 = vst [vmem:[%s262 + $0x44] sm:$0xf] %v6773
      %6838 = vst [vmem:[%s262 + $0x48] sm:$0xf] %v6774
      %6839 = vst [vmem:[%s262 + $0x4c] sm:$0xf] %v6775
      %6840 = vst [vmem:[%s262 + $0x50] sm:$0xf] %v6776
      %6841 = vst [vmem:[%s262 + $0x54] sm:$0xf] %v6777
      %6842 = vst [vmem:[%s262 + $0x58] sm:$0xf] %v6778
      %6843 = vst [vmem:[%s262 + $0x5c] sm:$0xf] %v6779
      %6844 = vst [vmem:[%s262 + $0x60] sm:$0xf] %v6780
      %6845 = vst [vmem:[%s262 + $0x64] sm:$0xf] %v6781
      %6846 = vst [vmem:[%s262 + $0x68] sm:$0xf] %v6782
      %6847 = vst [vmem:[%s262 + $0x6c] sm:$0xf] %v6783
      %6848 = vst [vmem:[%s262 + $0x70] sm:$0xf] %v6784
      %6849 = vst [vmem:[%s262 + $0x74] sm:$0xf] %v6785
      %6850 = vst [vmem:[%s262 + $0x78] sm:$0xf] %v6786
      %6851 = vst [vmem:[%s262 + $0x7c] sm:$0xf] %v6787
      %v6852 = vadd.f32 %v6660, %v6661
      %v6853 = vadd.f32 %v6852, %v6662
      %v6854 = vadd.f32 %v6853, %v6663
      %v6855 = vadd.f32 %v6854, %v6664
      %v6856 = vadd.f32 %v6855, %v6665
      %v6857 = vadd.f32 %v6856, %v6666
      %v6858 = vadd.f32 %v6857, %v6667
      %v6859 = vadd.f32 %v6858, %v6668
      %v6860 = vadd.f32 %v6859, %v6669
      %v6861 = vadd.f32 %v6860, %v6670
      %v6862 = vadd.f32 %v6861, %v6671
      %v6863 = vadd.f32 %v6862, %v6672
      %v6864 = vadd.f32 %v6863, %v6673
      %v6865 = vadd.f32 %v6864, %v6674
      %v6866 = vadd.f32 %v6865, %v6675
      %v6867 = vadd.f32 %v6866, %v6676
      %v6868 = vadd.f32 %v6867, %v6677
      %v6869 = vadd.f32 %v6868, %v6678
      %v6870 = vadd.f32 %v6869, %v6679
      %v6871 = vadd.f32 %v6870, %v6680
      %v6872 = vadd.f32 %v6871, %v6681
      %v6873 = vadd.f32 %v6872, %v6682
      %v6874 = vadd.f32 %v6873, %v6683
      %v6875 = vadd.f32 %v6874, %v6684
      %v6876 = vadd.f32 %v6875, %v6685
      %v6877 = vadd.f32 %v6876, %v6686
      %v6878 = vadd.f32 %v6877, %v6687
      %v6879 = vadd.f32 %v6878, %v6688
      %v6880 = vadd.f32 %v6879, %v6689
      %v6881 = vadd.f32 %v6880, %v6690
      %v6882 = vadd.f32 %v6881, %v6691
      %v6883 = vrot.slane %v6882, 4
      %v6884 = vadd.f32 %v6882, %v6883
      %v6885 = vrot.slane %v6884, 2
      %v6886 = vadd.f32 %v6884, %v6885
      %v6887 = vrot.slane %v6886, 1
      %v6888 = vadd.f32 %v6886, %v6887
      %6889 = vst [vmem:[%s266] sm:$0x1] %v6888
      %v6890 = vmul.f32 %v6660, %v6660
      %v6891 = vmul.f32 %v6661, %v6661
      %v6892 = vmul.f32 %v6662, %v6662
      %v6893 = vmul.f32 %v6663, %v6663
      %v6894 = vmul.f32 %v6664, %v6664
      %v6895 = vmul.f32 %v6665, %v6665
      %v6896 = vmul.f32 %v6666, %v6666
      %v6897 = vmul.f32 %v6667, %v6667
      %v6898 = vmul.f32 %v6668, %v6668
      %v6899 = vmul.f32 %v6669, %v6669
      %v6900 = vmul.f32 %v6670, %v6670
      %v6901 = vmul.f32 %v6671, %v6671
      %v6902 = vmul.f32 %v6672, %v6672
      %v6903 = vmul.f32 %v6673, %v6673
      %v6904 = vmul.f32 %v6674, %v6674
      %v6905 = vmul.f32 %v6675, %v6675
      %v6906 = vmul.f32 %v6676, %v6676
      %v6907 = vmul.f32 %v6677, %v6677
      %v6908 = vmul.f32 %v6678, %v6678
      %v6909 = vmul.f32 %v6679, %v6679
      %v6910 = vmul.f32 %v6680, %v6680
      %v6911 = vmul.f32 %v6681, %v6681
      %v6912 = vmul.f32 %v6682, %v6682
      %v6913 = vmul.f32 %v6683, %v6683
      %v6914 = vmul.f32 %v6684, %v6684
      %v6915 = vmul.f32 %v6685, %v6685
      %v6916 = vmul.f32 %v6686, %v6686
      %v6917 = vmul.f32 %v6687, %v6687
      %v6918 = vmul.f32 %v6688, %v6688
      %v6919 = vmul.f32 %v6689, %v6689
      %v6920 = vmul.f32 %v6690, %v6690
      %v6921 = vmul.f32 %v6691, %v6691
      %v6922 = vadd.f32 %v6890, %v6891
      %v6923 = vadd.f32 %v6922, %v6892
      %v6924 = vadd.f32 %v6923, %v6893
      %v6925 = vadd.f32 %v6924, %v6894
      %v6926 = vadd.f32 %v6925, %v6895
      %v6927 = vadd.f32 %v6926, %v6896
      %v6928 = vadd.f32 %v6927, %v6897
      %v6929 = vadd.f32 %v6928, %v6898
      %v6930 = vadd.f32 %v6929, %v6899
      %v6931 = vadd.f32 %v6930, %v6900
      %v6932 = vadd.f32 %v6931, %v6901
      %v6933 = vadd.f32 %v6932, %v6902
      %v6934 = vadd.f32 %v6933, %v6903
      %v6935 = vadd.f32 %v6934, %v6904
      %v6936 = vadd.f32 %v6935, %v6905
      %v6937 = vadd.f32 %v6936, %v6906
      %v6938 = vadd.f32 %v6937, %v6907
      %v6939 = vadd.f32 %v6938, %v6908
      %v6940 = vadd.f32 %v6939, %v6909
      %v6941 = vadd.f32 %v6940, %v6910
      %v6942 = vadd.f32 %v6941, %v6911
      %v6943 = vadd.f32 %v6942, %v6912
      %v6944 = vadd.f32 %v6943, %v6913
      %v6945 = vadd.f32 %v6944, %v6914
      %v6946 = vadd.f32 %v6945, %v6915
      %v6947 = vadd.f32 %v6946, %v6916
      %v6948 = vadd.f32 %v6947, %v6917
      %v6949 = vadd.f32 %v6948, %v6918
      %v6950 = vadd.f32 %v6949, %v6919
      %v6951 = vadd.f32 %v6950, %v6920
      %v6952 = vadd.f32 %v6951, %v6921
      %v6953 = vrot.slane %v6952, 4
      %v6954 = vadd.f32 %v6952, %v6953
      %v6955 = vrot.slane %v6954, 2
      %v6956 = vadd.f32 %v6954, %v6955
      %v6957 = vrot.slane %v6956, 1
      %v6958 = vadd.f32 %v6956, %v6957
      %6959 = vst [vmem:[%s269] sm:$0x1] %v6958
      %s6960 = smul.u32 32, %s18
      %p6961 = scmp.lt.s32.totalorder %s6960, 63
      %s6962 = scalar_select %p6961, %s6960, 63
      %s6963 = smul.addr %s6962, 4
      %s6964 = scalar_lea.vmem %s4, %s6963
      %p6965 = scmp.lt.s32.totalorder %s18, 1
      %s6966 = scalar_select %p6965, %s18, 1
      %s6967 = scalar_lea.vmem %s5, %s6966
      %p6968 = scmp.lt.s32.totalorder %s18, 1
      %s6969 = scalar_select %p6968, %s18, 1
      %s6970 = scalar_lea.vmem %s6, %s6969
      // Predicated region
      $region37: #{bottleneck_forward.5} parent=35 // pred_check
        %p6971 = pneg %p125
      $region38: #{bottleneck_forward.5} parent=35 // pred_check_branch
        %6973 = sbr.rel (%p6971) target = $region40
      $region39: #{bottleneck_forward.5} parent=35 // pred_region
        %s6974 = smul.u32 32, %s18
      $region40: #{bottleneck_forward.5} parent=35 // pred_fallthru
        _
      // Predicated region
      $region41: #{bottleneck_forward.5} parent=35 // pred_check
        %p6975 = pneg %p151
      $region42: #{bottleneck_forward.5} parent=35 // pred_check_branch
        %6977 = sbr.rel (%p6975) target = $region44
      $region43: #{bottleneck_forward.5} parent=35 // pred_region
        _
      $region44: #{bottleneck_forward.5} parent=35 // pred_fallthru
        _
      // Predicated region
      $region45: #{bottleneck_forward.5} parent=35 // pred_check
        %p6978 = pneg %p177
      $region46: #{bottleneck_forward.5} parent=35 // pred_check_branch
        %6980 = sbr.rel (%p6978) target = $region48
      $region47: #{bottleneck_forward.5} parent=35 // pred_region
        _
      $region48: #{bottleneck_forward.5} parent=35 // pred_fallthru
        _
    $region36: #{bottleneck_forward.5} parent=5 // pred_fallthru
      _
    %p6981 = scmp.le.s32.totalorder 2, %s13
    // Predicated region
    $region49: #{bottleneck_forward.5} parent=5 // pred_check
      %p6982 = pneg %p6981
    $region50: #{bottleneck_forward.5} parent=5 // pred_check_branch
      %6984 = sbr.rel (%p6982) target = $region52
    $region51: #{bottleneck_forward.5} parent=5 // pred_region
      %s6985 = ssub.s32 %s13, 2
      // Predicated region
      $region53: #{bottleneck_forward.5} parent=51 // pred_check
        %p6986 = pneg %p131
      $region54: #{bottleneck_forward.5} parent=51 // pred_check_branch
        %6988 = sbr.rel (%p6986) target = $region56
      $region55: #{bottleneck_forward.5} parent=51 // pred_region
        %s6989 = smul.u32 32, %s19
        %p6990 = scmp.lt.s32.totalorder %s6989, 63
        %s6991 = scalar_select %p6990, %s6989, 63
        %s6992 = smul.addr %s6991, 4
        %s6993 = scalar_lea.vmem %s4, %s6992
      $region56: #{bottleneck_forward.5} parent=51 // pred_fallthru
        _
      // Predicated region
      $region57: #{bottleneck_forward.5} parent=51 // pred_check
        %p6994 = pneg %p157
      $region58: #{bottleneck_forward.5} parent=51 // pred_check_branch
        %6996 = sbr.rel (%p6994) target = $region60
      $region59: #{bottleneck_forward.5} parent=51 // pred_region
        %p6997 = scmp.lt.s32.totalorder %s19, 1
        %s6998 = scalar_select %p6997, %s19, 1
        %s6999 = scalar_lea.vmem %s5, %s6998
      $region60: #{bottleneck_forward.5} parent=51 // pred_fallthru
        _
      // Predicated region
      $region61: #{bottleneck_forward.5} parent=51 // pred_check
        %p7000 = pneg %p183
      $region62: #{bottleneck_forward.5} parent=51 // pred_check_branch
        %7002 = sbr.rel (%p7000) target = $region64
      $region63: #{bottleneck_forward.5} parent=51 // pred_region
        %p7003 = scmp.lt.s32.totalorder %s19, 1
        %s7004 = scalar_select %p7003, %s19, 1
        %s7005 = scalar_lea.vmem %s6, %s7004
      $region64: #{bottleneck_forward.5} parent=51 // pred_fallthru
        _
    $region52: #{bottleneck_forward.5} parent=5 // pred_fallthru
      _
  $region6: #{bottleneck_forward.5} parent=0 // loop_footer
    %s17 = sadd.s32 1, %s13
  $region7: #{bottleneck_forward.5} parent=0 // loop_footer_branch
    %12 = sbr.rel target = $region3
  $region8: #{bottleneck_forward.5} parent=0 // loop_exit
    _

</llo_original>
